<compile_context>
chip_gen: v7x
topology: tpu7x:2x2x1
jax: 0.10.0
libtpu: 0.0.40
codegen_flags: <defaults>
</compile_context>

<pallas_src>
import functools

import jax
import jax.numpy as jnp
from jax.experimental import pallas as pl
from jax.experimental.pallas import tpu as pltpu


N_FEATURES = 64
N_OUT_H = 652
N_OUT_W = 502
N_OUT = N_OUT_H * N_OUT_W                      # 327304
_MAX_TN = 8192                                 # largest N tile used on any chip
N_OUT_PAD = pl.cdiv(N_OUT, _MAX_TN) * _MAX_TN  # 327680, divisible by 4096 & 8192


def _last_layer_config():
    """Pick (N tile, scoped VMEM limit) for the 512 x N_OUT_PAD layer per chip."""
    tn, vmem_limit = 4096, 48 << 20            # safe on v7x (64 MiB VMEM / TC)
    try:
        info = pltpu.get_tpu_info()
        vmem_bytes = int(getattr(info, "vmem_capacity_bytes", 0))
        if vmem_bytes >= (96 << 20):           # v5e / v6e: 128 MiB VMEM
            tn, vmem_limit = 8192, 56 << 20
    except Exception:
        pass
    return tn, vmem_limit


_LAST_TN, _LAST_VMEM_LIMIT = _last_layer_config()


def _leaky(v):
    return jnp.where(v >= 0.0, v, 0.2 * v)


# ---------------------------------------------------------------------------
# Fused head: fc0 -> LeakyReLU -> fc1 -> LeakyReLU -> fc2 -> LeakyReLU
# Everything (weights, biases, intermediates) fits trivially in VMEM.
# ---------------------------------------------------------------------------
def _mlp_head_kernel(x_ref, w0_ref, b0_ref, w1_ref, b1_ref, w2_ref, b2_ref,
                     o_ref):
    h = _leaky(jnp.dot(x_ref[...], w0_ref[...],
                       preferred_element_type=jnp.float32) + b0_ref[...])
    h = _leaky(jnp.dot(h, w1_ref[...],
                       preferred_element_type=jnp.float32) + b1_ref[...])
    h = _leaky(jnp.dot(h, w2_ref[...],
                       preferred_element_type=jnp.float32) + b2_ref[...])
    o_ref[...] = h.astype(o_ref.dtype)


def mlp_head(x, params):
    M = x.shape[0]
    w0, b0 = params["w0"], params["b0"].reshape(1, -1)
    w1, b1 = params["w1"], params["b1"].reshape(1, -1)
    w2, b2 = params["w2"], params["b2"].reshape(1, -1)
    n_hidden = w2.shape[1]

    def full(a):
        nd = a.ndim
        return pl.BlockSpec(a.shape, lambda i, _nd=nd: (0,) * _nd)

    return pl.pallas_call(
        _mlp_head_kernel,
        out_shape=jax.ShapeDtypeStruct((M, n_hidden), jnp.float32),
        grid_spec=pltpu.PrefetchScalarGridSpec(
            num_scalar_prefetch=0,
            grid=(1,),
            in_specs=[full(x), full(w0), full(b0), full(w1), full(b1),
                      full(w2), full(b2)],
            out_specs=pl.BlockSpec((M, n_hidden), lambda i: (0, 0)),
        ),
        compiler_params=pltpu.CompilerParams(
            dimension_semantics=("arbitrary",)),
    )(x, w0, b0, w1, b1, w2, b2)


# ---------------------------------------------------------------------------
# Last layer: fc3 -> Tanh, tiled over the (pre-padded) output feature dim.
# ---------------------------------------------------------------------------
def _linear_tanh_kernel(x_ref, w_ref, b_ref, o_ref):
    # x_ref: (M, K)  w_ref: (K, TN)  b_ref: (1, TN)  o_ref: (M, TN)
    y = jnp.dot(x_ref[...], w_ref[...], preferred_element_type=jnp.float32)
    y = jnp.tanh(y + b_ref[...])
    o_ref[...] = y.astype(o_ref.dtype)


def linear_tanh_tiled(x, w, b2, tn, vmem_limit):
    """tanh(x @ w + b); w/b are already padded so that N % tn == 0."""
    M, K = x.shape
    K2, N = w.shape
    assert K == K2 and N % tn == 0 and b2.shape == (1, N)

    return pl.pallas_call(
        _linear_tanh_kernel,
        out_shape=jax.ShapeDtypeStruct((M, N), jnp.float32),
        grid_spec=pltpu.PrefetchScalarGridSpec(
            num_scalar_prefetch=0,
            grid=(N // tn,),
            in_specs=[
                pl.BlockSpec((M, K), lambda j: (0, 0)),   # activations (resident)
                pl.BlockSpec((K, tn), lambda j: (0, j)),  # weight slab (streamed)
                pl.BlockSpec((1, tn), lambda j: (0, j)),  # bias slab
            ],
            out_specs=pl.BlockSpec((M, tn), lambda j: (0, j)),
        ),
        compiler_params=pltpu.CompilerParams(
            dimension_semantics=("parallel",),   # shards N tiles across v7x's 2 TCs
            vmem_limit_bytes=vmem_limit,
        ),
    )(x, w, b2)


# ---------------------------------------------------------------------------
# Parameters & forward
# ---------------------------------------------------------------------------
def init_params(key):
    """Deterministic init matching nn.Linear's U(-1/sqrt(fan_in), +1/sqrt(fan_in)).

    The huge last-layer weight/bias are zero-padded to N_OUT_PAD HERE, once,
    so the jitted forward never re-copies the ~670 MB weight.
    """
    dims = [(N_FEATURES, 128), (128, 256), (256, 512), (512, N_OUT)]
    params = {}
    for i, (fan_in, fan_out) in enumerate(dims):
        key, kw, kb = jax.random.split(key, 3)
        bound = 1.0 / jnp.sqrt(jnp.float32(fan_in))
        # Stored as (in, out) == transpose of PyTorch's (out, in) weight.
        w = jax.random.uniform(kw, (fan_in, fan_out), jnp.float32, -bound, bound)
        b = jax.random.uniform(kb, (fan_out,), jnp.float32, -bound, bound)
        if i == 3:
            w = jnp.pad(w, ((0, 0), (0, N_OUT_PAD - N_OUT)))
            b = jnp.pad(b, (0, N_OUT_PAD - N_OUT))
        params[f"w{i}"] = w
        params[f"b{i}"] = b
    return params


@jax.jit
def generator_forward(x, params):
    h = mlp_head(x, params)                                   # (M, 512)
    b3 = params["b3"].reshape(1, -1)
    y = linear_tanh_tiled(h, params["w3"], b3,
                          _LAST_TN, _LAST_VMEM_LIMIT)         # (M, N_OUT_PAD)
    y = y[:, :N_OUT]
    return y.reshape(-1, 1, N_OUT_H, N_OUT_W)


def _reference_forward(x, params):
    h = _leaky(x @ params["w0"] + params["b0"])
    h = _leaky(h @ params["w1"] + params["b1"])
    h = _leaky(h @ params["w2"] + params["b2"])
    h = jnp.tanh(h @ params["w3"] + params["b3"])[:, :N_OUT]
    return h.reshape(-1, 1, N_OUT_H, N_OUT_W)


if __name__ == "__main__":
    key = jax.random.PRNGKey(0)
    k_params, k_x = jax.random.split(key)

    params = init_params(k_params)
    batch = 2
    x = jax.random.normal(k_x, (batch, N_FEATURES), jnp.float32)

    out = generator_forward(x, params)
    out = jax.block_until_ready(out)

    assert out.shape == (batch, 1, N_OUT_H, N_OUT_W), out.shape
    assert out.dtype == jnp.float32

    ref = jax.block_until_ready(_reference_forward(x, params))
    assert jnp.allclose(out, ref, atol=2e-5, rtol=2e-5)

    print("KERNEL_OK")
</pallas_src>

<mosaic_0001>
module attributes {stable_mosaic.version = 11 : i64} {
  func.func @_linear_tanh_kernel(%arg0: i32, %arg1: memref<2x512xf32, #tpu.memory_space<vmem>>, %arg2: memref<512x4096xf32, #tpu.memory_space<vmem>>, %arg3: memref<1x4096xf32, #tpu.memory_space<vmem>>, %arg4: memref<2x4096xf32, #tpu.memory_space<vmem>>) attributes {dimension_semantics = [#tpu.dimension_semantics<parallel>], iteration_bounds = array<i64: 80>, scalar_prefetch = 0 : i64, scratch_operands = 0 : i64, tpu.core_type = #tpu.core_type<tc>, window_params = [{pipeline_mode = #tpu.pipeline_mode<synchronous>, transform_indices = @transform_0, window_bounds = array<i64: 2, 512>}, {transform_indices = @transform_1, window_bounds = array<i64: 512, 4096>}, {transform_indices = @transform_2, window_bounds = array<i64: 1, 4096>}, {transform_indices = @transform_3, window_bounds = array<i64: 2, 4096>}]} {
    %c0 = arith.constant 0 : index
    %c0_0 = arith.constant 0 : index
    %0 = vector.load %arg1[%c0, %c0_0] : memref<2x512xf32, #tpu.memory_space<vmem>>, vector<2x512xf32>
    %c0_1 = arith.constant 0 : index
    %c0_2 = arith.constant 0 : index
    %1 = vector.load %arg2[%c0_1, %c0_2] : memref<512x4096xf32, #tpu.memory_space<vmem>>, vector<512x4096xf32>
    %cst = arith.constant dense<0.000000e+00> : vector<2x4096xf32>
    %2 = tpu.matmul %0, %1, %cst {dimension_numbers = #tpu.dot_dimension_numbers<[1], [0], [0], [1], [0, 0, 1, 1], [], []>} : vector<2x512xf32>, vector<512x4096xf32>, vector<2x4096xf32> -> vector<2x4096xf32>
    %c0_3 = arith.constant 0 : index
    %c0_4 = arith.constant 0 : index
    %3 = vector.load %arg3[%c0_3, %c0_4] : memref<1x4096xf32, #tpu.memory_space<vmem>>, vector<1x4096xf32>
    %4 = vector.broadcast %3 : vector<1x4096xf32> to vector<2x4096xf32>
    %5 = arith.addf %2, %4 : vector<2x4096xf32>
    %6 = math.tanh %5 : vector<2x4096xf32>
    %c0_5 = arith.constant 0 : index
    %c0_6 = arith.constant 0 : index
    %7 = vector.load %arg4[%c0_5, %c0_6] : memref<2x4096xf32, #tpu.memory_space<vmem>>, vector<2x4096xf32>
    tpu.vector_store %arg4[%c0_5, %c0_6], %6 {strides = array<i32>} : memref<2x4096xf32, #tpu.memory_space<vmem>>, vector<2x4096xf32>,
    return
  }
  func.func @transform_0(%arg0: i32) -> (i32, i32) {
    %c0_i32 = arith.constant 0 : i32
    %c0_i32_0 = arith.constant 0 : i32
    %c0_i32_1 = arith.constant 0 : i32
    return %c0_i32, %c0_i32_0 : i32, i32
  }
  func.func @transform_1(%arg0: i32) -> (i32, i32) {
    %c0_i32 = arith.constant 0 : i32
    %c0_i32_0 = arith.constant 0 : i32
    return %c0_i32, %arg0 : i32, i32
  }
  func.func @transform_2(%arg0: i32) -> (i32, i32) {
    %c0_i32 = arith.constant 0 : i32
    %c0_i32_0 = arith.constant 0 : i32
    return %c0_i32, %arg0 : i32, i32
  }
  func.func @transform_3(%arg0: i32) -> (i32, i32) {
    %c0_i32 = arith.constant 0 : i32
    %c0_i32_0 = arith.constant 0 : i32
    return %c0_i32, %arg0 : i32, i32
  }
}

module attributes {stable_mosaic.version = 11 : i64} {
  func.func @_mlp_head_kernel(%arg0: i32, %arg1: memref<2x64xf32, #tpu.memory_space<vmem>>, %arg2: memref<64x128xf32, #tpu.memory_space<vmem>>, %arg3: memref<1x128xf32, #tpu.memory_space<vmem>>, %arg4: memref<128x256xf32, #tpu.memory_space<vmem>>, %arg5: memref<1x256xf32, #tpu.memory_space<vmem>>, %arg6: memref<256x512xf32, #tpu.memory_space<vmem>>, %arg7: memref<1x512xf32, #tpu.memory_space<vmem>>, %arg8: memref<2x512xf32, #tpu.memory_space<vmem>>) attributes {dimension_semantics = [#tpu.dimension_semantics<arbitrary>], iteration_bounds = array<i64: 1>, scalar_prefetch = 0 : i64, scratch_operands = 0 : i64, tpu.core_type = #tpu.core_type<tc>, window_params = [{pipeline_mode = #tpu.pipeline_mode<synchronous>, transform_indices = @transform_0, window_bounds = array<i64: 2, 64>}, {pipeline_mode = #tpu.pipeline_mode<synchronous>, transform_indices = @transform_1, window_bounds = array<i64: 64, 128>}, {pipeline_mode = #tpu.pipeline_mode<synchronous>, transform_indices = @transform_2, window_bounds = array<i64: 1, 128>}, {pipeline_mode = #tpu.pipeline_mode<synchronous>, transform_indices = @transform_3, window_bounds = array<i64: 128, 256>}, {pipeline_mode = #tpu.pipeline_mode<synchronous>, transform_indices = @transform_4, window_bounds = array<i64: 1, 256>}, {pipeline_mode = #tpu.pipeline_mode<synchronous>, transform_indices = @transform_5, window_bounds = array<i64: 256, 512>}, {pipeline_mode = #tpu.pipeline_mode<synchronous>, transform_indices = @transform_6, window_bounds = array<i64: 1, 512>}, {pipeline_mode = #tpu.pipeline_mode<synchronous>, transform_indices = @transform_7, window_bounds = array<i64: 2, 512>}]} {
    %c0 = arith.constant 0 : index
    %c0_0 = arith.constant 0 : index
    %0 = vector.load %arg1[%c0, %c0_0] : memref<2x64xf32, #tpu.memory_space<vmem>>, vector<2x64xf32>
    %c0_1 = arith.constant 0 : index
    %c0_2 = arith.constant 0 : index
    %1 = vector.load %arg2[%c0_1, %c0_2] : memref<64x128xf32, #tpu.memory_space<vmem>>, vector<64x128xf32>
    %cst = arith.constant dense<0.000000e+00> : vector<2x128xf32>
    %2 = tpu.matmul %0, %1, %cst {dimension_numbers = #tpu.dot_dimension_numbers<[1], [0], [0], [1], [0, 0, 1, 1], [], []>} : vector<2x64xf32>, vector<64x128xf32>, vector<2x128xf32> -> vector<2x128xf32>
    %c0_3 = arith.constant 0 : index
    %c0_4 = arith.constant 0 : index
    %3 = vector.load %arg3[%c0_3, %c0_4] : memref<1x128xf32, #tpu.memory_space<vmem>>, vector<1x128xf32>
    %4 = vector.broadcast %3 : vector<1x128xf32> to vector<2x128xf32>
    %5 = arith.addf %2, %4 : vector<2x128xf32>
    %cst_5 = arith.constant 0.000000e+00 : f32
    %6 = vector.broadcast %cst_5 : f32 to vector<2x128xf32>
    %7 = arith.cmpf oge, %5, %6 : vector<2x128xf32>
    %cst_6 = arith.constant 2.000000e-01 : f32
    %8 = vector.broadcast %cst_6 : f32 to vector<2x128xf32>
    %9 = arith.mulf %8, %5 : vector<2x128xf32>
    %10 = arith.select %7, %5, %9 : vector<2x128xi1>, vector<2x128xf32>
    %c0_7 = arith.constant 0 : index
    %c0_8 = arith.constant 0 : index
    %11 = vector.load %arg4[%c0_7, %c0_8] : memref<128x256xf32, #tpu.memory_space<vmem>>, vector<128x256xf32>
    %cst_9 = arith.constant dense<0.000000e+00> : vector<2x256xf32>
    %12 = tpu.matmul %10, %11, %cst_9 {dimension_numbers = #tpu.dot_dimension_numbers<[1], [0], [0], [1], [0, 0, 1, 1], [], []>} : vector<2x128xf32>, vector<128x256xf32>, vector<2x256xf32> -> vector<2x256xf32>
    %c0_10 = arith.constant 0 : index
    %c0_11 = arith.constant 0 : index
    %13 = vector.load %arg5[%c0_10, %c0_11] : memref<1x256xf32, #tpu.memory_space<vmem>>, vector<1x256xf32>
    %14 = vector.broadcast %13 : vector<1x256xf32> to vector<2x256xf32>
    %15 = arith.addf %12, %14 : vector<2x256xf32>
    %cst_12 = arith.constant 0.000000e+00 : f32
    %16 = vector.broadcast %cst_12 : f32 to vector<2x256xf32>
    %17 = arith.cmpf oge, %15, %16 : vector<2x256xf32>
    %cst_13 = arith.constant 2.000000e-01 : f32
    %18 = vector.broadcast %cst_13 : f32 to vector<2x256xf32>
    %19 = arith.mulf %18, %15 : vector<2x256xf32>
    %20 = arith.select %17, %15, %19 : vector<2x256xi1>, vector<2x256xf32>
    %c0_14 = arith.constant 0 : index
    %c0_15 = arith.constant 0 : index
    %21 = vector.load %arg6[%c0_14, %c0_15] : memref<256x512xf32, #tpu.memory_space<vmem>>, vector<256x512xf32>
    %cst_16 = arith.constant dense<0.000000e+00> : vector<2x512xf32>
    %22 = tpu.matmul %20, %21, %cst_16 {dimension_numbers = #tpu.dot_dimension_numbers<[1], [0], [0], [1], [0, 0, 1, 1], [], []>} : vector<2x256xf32>, vector<256x512xf32>, vector<2x512xf32> -> vector<2x512xf32>
    %c0_17 = arith.constant 0 : index
    %c0_18 = arith.constant 0 : index
    %23 = vector.load %arg7[%c0_17, %c0_18] : memref<1x512xf32, #tpu.memory_space<vmem>>, vector<1x512xf32>
    %24 = vector.broadcast %23 : vector<1x512xf32> to vector<2x512xf32>
    %25 = arith.addf %22, %24 : vector<2x512xf32>
    %cst_19 = arith.constant 0.000000e+00 : f32
    %26 = vector.broadcast %cst_19 : f32 to vector<2x512xf32>
    %27 = arith.cmpf oge, %25, %26 : vector<2x512xf32>
    %cst_20 = arith.constant 2.000000e-01 : f32
    %28 = vector.broadcast %cst_20 : f32 to vector<2x512xf32>
    %29 = arith.mulf %28, %25 : vector<2x512xf32>
    %30 = arith.select %27, %25, %29 : vector<2x512xi1>, vector<2x512xf32>
    %c0_21 = arith.constant 0 : index
    %c0_22 = arith.constant 0 : index
    %31 = vector.load %arg8[%c0_21, %c0_22] : memref<2x512xf32, #tpu.memory_space<vmem>>, vector<2x512xf32>
    tpu.vector_store %arg8[%c0_21, %c0_22], %30 {strides = array<i32>} : memref<2x512xf32, #tpu.memory_space<vmem>>, vector<2x512xf32>,
    return
  }
  func.func @transform_0(%arg0: i32) -> (i32, i32) {
    %c0_i32 = arith.constant 0 : i32
    %c0_i32_0 = arith.constant 0 : i32
    %c0_i32_1 = arith.constant 0 : i32
    return %c0_i32, %c0_i32_0 : i32, i32
  }
  func.func @transform_1(%arg0: i32) -> (i32, i32) {
    %c0_i32 = arith.constant 0 : i32
    %c0_i32_0 = arith.constant 0 : i32
    %c0_i32_1 = arith.constant 0 : i32
    return %c0_i32, %c0_i32_0 : i32, i32
  }
  func.func @transform_2(%arg0: i32) -> (i32, i32) {
    %c0_i32 = arith.constant 0 : i32
    %c0_i32_0 = arith.constant 0 : i32
    %c0_i32_1 = arith.constant 0 : i32
    return %c0_i32, %c0_i32_0 : i32, i32
  }
  func.func @transform_3(%arg0: i32) -> (i32, i32) {
    %c0_i32 = arith.constant 0 : i32
    %c0_i32_0 = arith.constant 0 : i32
    %c0_i32_1 = arith.constant 0 : i32
    return %c0_i32, %c0_i32_0 : i32, i32
  }
  func.func @transform_4(%arg0: i32) -> (i32, i32) {
    %c0_i32 = arith.constant 0 : i32
    %c0_i32_0 = arith.constant 0 : i32
    %c0_i32_1 = arith.constant 0 : i32
    return %c0_i32, %c0_i32_0 : i32, i32
  }
  func.func @transform_5(%arg0: i32) -> (i32, i32) {
    %c0_i32 = arith.constant 0 : i32
    %c0_i32_0 = arith.constant 0 : i32
    %c0_i32_1 = arith.constant 0 : i32
    return %c0_i32, %c0_i32_0 : i32, i32
  }
  func.func @transform_6(%arg0: i32) -> (i32, i32) {
    %c0_i32 = arith.constant 0 : i32
    %c0_i32_0 = arith.constant 0 : i32
    %c0_i32_1 = arith.constant 0 : i32
    return %c0_i32, %c0_i32_0 : i32, i32
  }
  func.func @transform_7(%arg0: i32) -> (i32, i32) {
    %c0_i32 = arith.constant 0 : i32
    %c0_i32_0 = arith.constant 0 : i32
    %c0_i32_1 = arith.constant 0 : i32
    return %c0_i32, %c0_i32_0 : i32, i32
  }
}

</mosaic_0001>

<llo_original>
// kernel: generator_forward.2
$region0: #{generator_forward.2}
  #allocation0 [shape = 'u32[]', space=smem, size = 0x4, offset = 0x4, fixed_abs, tag = 'smem constant byte address 0x4 - core index']
  #allocation1 [shape = 'u32[144,128]{1,0:T(1,128)}', space=vmem, size = 0x12000, scoped, tag = 'internal scratch']
  %s0 = inlined_call_operand.hbm [shape: f32[2,64], index: 0, kind: input, shape index: {}]
  %s1 = inlined_call_operand.hbm [shape: f32[64,128], index: 1, kind: input, shape index: {}]
  %s2 = inlined_call_operand.hbm [shape: f32[1,128], index: 2, kind: input, shape index: {}]
  %s3 = inlined_call_operand.hbm [shape: f32[128,256], index: 3, kind: input, shape index: {}]
  %s4 = inlined_call_operand.hbm [shape: f32[1,256], index: 4, kind: input, shape index: {}]
  %s5 = inlined_call_operand.hbm [shape: f32[256,512], index: 5, kind: input, shape index: {}]
  %s6 = inlined_call_operand.hbm [shape: f32[1,512], index: 6, kind: input, shape index: {}]
  %s7 = inlined_call_operand.vmem [shape: f32[2,512], index: 7, kind: output, shape index: {}]
  %s8 = sld [smem:[#allocation0]]
  $region66: #{generator_forward.2} parent=0
    _
  %s10 = ssub.s32 1, %s8
  %s11 = scalar_select 0, %s10, %s8
  $region1: #{generator_forward.2} parent=0
    #allocation2 [shape = 'u8[1024]{0}', space=vmem, size = 0x400, scoped, tag = 'input window, operand 0, single buffered']
    #allocation3 [shape = 's32[1]{0}', space=sflag, size = 0x4, scoped, tag = 'scoped memory for generator_forward.2']
    #allocation4 [shape = 'u8[32768]{0}', space=vmem, size = 0x8000, scoped, tag = 'input window, operand 1, single buffered']
    #allocation5 [shape = 's32[1]{0}', space=sflag, size = 0x4, scoped, tag = 'scoped memory for generator_forward.2']
    #allocation6 [shape = 'u8[512]{0}', space=vmem, size = 0x400, scoped, tag = 'input window, operand 2, single buffered']
    #allocation7 [shape = 'u8[131072]{0}', space=vmem, size = 0x20000, scoped, tag = 'input window, operand 3, single buffered']
    #allocation8 [shape = 's32[1]{0}', space=sflag, size = 0x4, scoped, tag = 'scoped memory for generator_forward.2']
    #allocation9 [shape = 'u8[1024]{0}', space=vmem, size = 0x400, scoped, tag = 'input window, operand 4, single buffered']
    #allocation10 [shape = 'u8[524288]{0}', space=vmem, size = 0x80000, scoped, tag = 'input window, operand 5, single buffered']
    #allocation11 [shape = 's32[1]{0}', space=sflag, size = 0x4, scoped, tag = 'scoped memory for generator_forward.2']
    #allocation12 [shape = 'u8[2048]{0}', space=vmem, size = 0x800, scoped, tag = 'input window, operand 6, single buffered']
    %12 = vsyncpa [#allocation3], 0
    %13 = vsyncpa [#allocation5], 0
    %14 = vsyncpa [#allocation8], 0
    %15 = vsyncpa [#allocation11], 0
    // Predicated region
    $region2: #{generator_forward.2} parent=1 // pred_check
      _
    $region3: #{generator_forward.2} parent=1 // pred_check_branch
      %17 = sbr.rel (0) target = $region5
    $region4: #{generator_forward.2} parent=1 // pred_region
      %s19 = ssub.s32 32, 32
      %20 = vsyncadd [#allocation3], %s19
      %s22 = sshll.u32 [#allocation2], 4
      %s23 = int_to_ptr.vmem [resolvable:$true] %s22
      %25 = dma.hbm_to_vmem [thread:$0]  %s0, 32, %s23, [#allocation3]
    $region5: #{generator_forward.2} parent=1 // pred_fallthru
      _
    // Predicated region
    $region6: #{generator_forward.2} parent=1 // pred_check
      _
    $region7: #{generator_forward.2} parent=1 // pred_check_branch
      %27 = sbr.rel (0) target = $region9
    $region8: #{generator_forward.2} parent=1 // pred_region
      %s29 = ssub.s32 1024, 1024
      %30 = vsyncadd [#allocation5], %s29
      %s31 = sshll.u32 [#allocation4], 4
      %s32 = int_to_ptr.vmem [resolvable:$true] %s31
      %37 = dma.hbm_to_vmem [thread:$0]  %s1, 1024, %s32, [#allocation5], 128, 128, 8
    $region9: #{generator_forward.2} parent=1 // pred_fallthru
      _
    // Predicated region
    $region10: #{generator_forward.2} parent=1 // pred_check
      _
    $region11: #{generator_forward.2} parent=1 // pred_check_branch
      %39 = sbr.rel (0) target = $region13
    $region12: #{generator_forward.2} parent=1 // pred_region
      %s41 = ssub.s32 16, 16
      %42 = vsyncadd [#allocation5], %s41
      %s44 = sshll.u32 [#allocation6], 4
      %s45 = int_to_ptr.vmem [resolvable:$true] %s44
      %47 = dma.hbm_to_vmem [thread:$0]  %s2, 16, %s45, [#allocation5]
    $region13: #{generator_forward.2} parent=1 // pred_fallthru
      _
    // Predicated region
    $region14: #{generator_forward.2} parent=1 // pred_check
      _
    $region15: #{generator_forward.2} parent=1 // pred_check_branch
      %49 = sbr.rel (0) target = $region17
    $region16: #{generator_forward.2} parent=1 // pred_region
      %s51 = ssub.s32 4096, 4096
      %52 = vsyncadd [#allocation8], %s51
      %s53 = sshll.u32 [#allocation7], 4
      %s54 = int_to_ptr.vmem [resolvable:$true] %s53
      %59 = dma.hbm_to_vmem [thread:$0]  %s3, 4096, %s54, [#allocation8], 256, 256, 16
    $region17: #{generator_forward.2} parent=1 // pred_fallthru
      _
    // Predicated region
    $region18: #{generator_forward.2} parent=1 // pred_check
      _
    $region19: #{generator_forward.2} parent=1 // pred_check_branch
      %61 = sbr.rel (0) target = $region21
    $region20: #{generator_forward.2} parent=1 // pred_region
      %s63 = ssub.s32 32, 32
      %64 = vsyncadd [#allocation8], %s63
      %s66 = sshll.u32 [#allocation9], 4
      %s67 = int_to_ptr.vmem [resolvable:$true] %s66
      %69 = dma.hbm_to_vmem [thread:$0]  %s4, 32, %s67, [#allocation8]
    $region21: #{generator_forward.2} parent=1 // pred_fallthru
      _
    // Predicated region
    $region22: #{generator_forward.2} parent=1 // pred_check
      _
    $region23: #{generator_forward.2} parent=1 // pred_check_branch
      %71 = sbr.rel (0) target = $region25
    $region24: #{generator_forward.2} parent=1 // pred_region
      %s73 = ssub.s32 16384, 16384
      %74 = vsyncadd [#allocation11], %s73
      %s75 = sshll.u32 [#allocation10], 4
      %s76 = int_to_ptr.vmem [resolvable:$true] %s75
      %81 = dma.hbm_to_vmem [thread:$0]  %s5, 16384, %s76, [#allocation11], 512, 512, 32
    $region25: #{generator_forward.2} parent=1 // pred_fallthru
      _
    // Predicated region
    $region26: #{generator_forward.2} parent=1 // pred_check
      _
    $region27: #{generator_forward.2} parent=1 // pred_check_branch
      %83 = sbr.rel (0) target = $region29
    $region28: #{generator_forward.2} parent=1 // pred_region
      %s85 = ssub.s32 64, 64
      %86 = vsyncadd [#allocation11], %s85
      %s88 = sshll.u32 [#allocation12], 4
      %s89 = int_to_ptr.vmem [resolvable:$true] %s88
      %91 = dma.hbm_to_vmem [thread:$0]  %s6, 64, %s89, [#allocation11]
    $region29: #{generator_forward.2} parent=1 // pred_fallthru
      _
    // Predicated region
    $region30: #{generator_forward.2} parent=1 // pred_check
      _
    $region31: #{generator_forward.2} parent=1 // pred_check_branch
      %93 = sbr.rel (0) target = $region33
    $region32: #{generator_forward.2} parent=1 // pred_region
      %94 = dma.done [#allocation3], 32
    $region33: #{generator_forward.2} parent=1 // pred_fallthru
      _
    // Predicated region
    $region34: #{generator_forward.2} parent=1 // pred_check
      _
    $region35: #{generator_forward.2} parent=1 // pred_check_branch
      %96 = sbr.rel (0) target = $region37
    $region36: #{generator_forward.2} parent=1 // pred_region
      %97 = dma.done [#allocation5], 1024
    $region37: #{generator_forward.2} parent=1 // pred_fallthru
      _
    // Predicated region
    $region38: #{generator_forward.2} parent=1 // pred_check
      _
    $region39: #{generator_forward.2} parent=1 // pred_check_branch
      %99 = sbr.rel (0) target = $region41
    $region40: #{generator_forward.2} parent=1 // pred_region
      %100 = dma.done [#allocation5], 16
    $region41: #{generator_forward.2} parent=1 // pred_fallthru
      _
    // Predicated region
    $region42: #{generator_forward.2} parent=1 // pred_check
      _
    $region43: #{generator_forward.2} parent=1 // pred_check_branch
      %102 = sbr.rel (0) target = $region45
    $region44: #{generator_forward.2} parent=1 // pred_region
      %103 = dma.done [#allocation8], 4096
    $region45: #{generator_forward.2} parent=1 // pred_fallthru
      _
    // Predicated region
    $region46: #{generator_forward.2} parent=1 // pred_check
      _
    $region47: #{generator_forward.2} parent=1 // pred_check_branch
      %105 = sbr.rel (0) target = $region49
    $region48: #{generator_forward.2} parent=1 // pred_region
      %106 = dma.done [#allocation8], 32
    $region49: #{generator_forward.2} parent=1 // pred_fallthru
      _
    // Predicated region
    $region50: #{generator_forward.2} parent=1 // pred_check
      _
    $region51: #{generator_forward.2} parent=1 // pred_check_branch
      %108 = sbr.rel (0) target = $region53
    $region52: #{generator_forward.2} parent=1 // pred_region
      %109 = dma.done [#allocation11], 16384
    $region53: #{generator_forward.2} parent=1 // pred_fallthru
      _
    // Predicated region
    $region54: #{generator_forward.2} parent=1 // pred_check
      _
    $region55: #{generator_forward.2} parent=1 // pred_check_branch
      %111 = sbr.rel (0) target = $region57
    $region56: #{generator_forward.2} parent=1 // pred_region
      %112 = dma.done [#allocation11], 64
    $region57: #{generator_forward.2} parent=1 // pred_fallthru
      _
    %v113 = vld [vmem:[#allocation2] sm:$0x3]
    %v114 = vld [vmem:[#allocation4] sm:$0xff]
    %v115 = vld [vmem:[#allocation4 + $0x8] sm:$0xff]
    %v116 = vld [vmem:[#allocation4 + $0x10] sm:$0xff]
    %v117 = vld [vmem:[#allocation4 + $0x18] sm:$0xff]
    %v118 = vld [vmem:[#allocation4 + $0x20] sm:$0xff]
    %v119 = vld [vmem:[#allocation4 + $0x28] sm:$0xff]
    %v120 = vld [vmem:[#allocation4 + $0x30] sm:$0xff]
    %v121 = vld [vmem:[#allocation4 + $0x38] sm:$0xff]
    %v122 = vld [vmem:[#allocation6] sm:$0x1]
    %v124 = vlaneseq
    %v125 = vshrl.u32 %v124, 7
    %v126 = vsub.s32 0, %v125
    %v127 = vrot.slane %v122, %v126
    %vm129 = vcmask 523264
    %v131 = vsel %vm129, %v113, 0
    %133 = vmatprep.subr.mxu0 0.0
    %134 = vmatpush1.msra.mxu0 %v114
    %135 = vmatprep.subr.mxu0 0.0
    %136 = vmatpush1.msra.mxu0 %v115
    %137 = vmatprep.subr.mxu0 0.0
    %138 = vmatpush1.msra.mxu0 %v116
    %139 = vmatprep.subr.mxu0 0.0
    %140 = vmatpush1.msra.mxu0 %v117
    %141 = vmatprep.subr.mxu0 0.0
    %142 = vmatpush1.msra.mxu0 %v118
    %143 = vmatprep.subr.mxu0 0.0
    %144 = vmatpush1.msra.mxu0 %v119
    %145 = vmatprep.subr.mxu0 0.0
    %146 = vmatpush1.msra.mxu0 %v120
    %147 = vmatprep.subr.mxu0 0.0
    %148 = vmatpush1.msra.mxu0 %v121
    %149 = vmatprep.subr.mxu0 0.0
    %150 = vmatpush1.msra.mxu0 0.0
    %151 = vmatprep.subr.mxu0 0.0
    %152 = vmatpush1.msra.mxu0 0.0
    %153 = vmatprep.subr.mxu0 0.0
    %154 = vmatpush1.msra.mxu0 0.0
    %155 = vmatprep.subr.mxu0 0.0
    %156 = vmatpush1.msra.mxu0 0.0
    %157 = vmatprep.subr.mxu0 0.0
    %158 = vmatpush1.msra.mxu0 0.0
    %159 = vmatprep.subr.mxu0 0.0
    %160 = vmatpush1.msra.mxu0 0.0
    %161 = vmatprep.subr.mxu0 0.0
    %162 = vmatpush1.msra.mxu0 0.0
    %163 = vmatprep.subr.mxu0 0.0
    %164 = vmatpush1.msra.mxu0 0.0
    %165 = vmatprep.subr.mxu0 0.0
    %166 = vmatpush1.msra.mxu0 0.0
    %167 = vmatprep.subr.mxu0 0.0
    %168 = vmatpush1.msra.mxu0 0.0
    %169 = vmatprep.subr.mxu0 0.0
    %170 = vmatpush1.msra.mxu0 0.0
    %171 = vmatprep.subr.mxu0 0.0
    %172 = vmatpush1.msra.mxu0 0.0
    %173 = vmatprep.subr.mxu0 0.0
    %174 = vmatpush1.msra.mxu0 0.0
    %175 = vmatprep.subr.mxu0 0.0
    %176 = vmatpush1.msra.mxu0 0.0
    %177 = vmatprep.subr.mxu0 0.0
    %178 = vmatpush1.msra.mxu0 0.0
    %179 = vmatprep.subr.mxu0 0.0
    %180 = vmatpush1.msra.mxu0 0.0
    %181 = vmatprep.subr.mxu0 0.0
    %182 = vmatpush1.msra.mxu0 0.0
    %183 = vmatprep.subr.mxu0 0.0
    %184 = vmatpush1.msra.mxu0 0.0
    %185 = vmatprep.subr.mxu0 0.0
    %186 = vmatpush1.msra.mxu0 0.0
    %187 = vmatprep.subr.mxu0 0.0
    %188 = vmatpush1.msra.mxu0 0.0
    %189 = vmatprep.subr.mxu0 0.0
    %190 = vmatpush1.msra.mxu0 0.0
    %191 = vmatprep.subr.mxu0 0.0
    %192 = vmatpush1.msra.mxu0 0.0
    %193 = vmatprep.subr.mxu0 0.0
    %194 = vmatpush1.msra.mxu0 0.0
    %195 = vmatprep.subr.mxu0 0.0
    %196 = vmatpush1.msra.mxu0 0.0
    %197 = vmatprep.mubr.f32.mxu0 0.0
    %198 = vmatmul.mubr.f32.gmra.mrb[0].mxu0 %v131
    %v199 = vpop.f32.mrb[0].mxu0
    %v200 = vadd.f32 %v127, %v199
    %v201 = vpop.f32.mrb[0].mxu0
    %202 = vdwg.mxu0
    %vm203 = vcmp.ge.f32.partialorder %v200, 0.0
    %v204 = vmul.f32 %v200, 0.2
    %v205 = vsel %vm203, %v200, %v204
    %v206 = vld [vmem:[#allocation7] sm:$0xff]
    %v207 = vld [vmem:[#allocation7 + $0x8] sm:$0xff]
    %v208 = vld [vmem:[#allocation7 + $0x10] sm:$0xff]
    %v209 = vld [vmem:[#allocation7 + $0x18] sm:$0xff]
    %v210 = vld [vmem:[#allocation7 + $0x20] sm:$0xff]
    %v211 = vld [vmem:[#allocation7 + $0x28] sm:$0xff]
    %v212 = vld [vmem:[#allocation7 + $0x30] sm:$0xff]
    %v213 = vld [vmem:[#allocation7 + $0x38] sm:$0xff]
    %v214 = vld [vmem:[#allocation7 + $0x40] sm:$0xff]
    %v215 = vld [vmem:[#allocation7 + $0x48] sm:$0xff]
    %v216 = vld [vmem:[#allocation7 + $0x50] sm:$0xff]
    %v217 = vld [vmem:[#allocation7 + $0x58] sm:$0xff]
    %v218 = vld [vmem:[#allocation7 + $0x60] sm:$0xff]
    %v219 = vld [vmem:[#allocation7 + $0x68] sm:$0xff]
    %v220 = vld [vmem:[#allocation7 + $0x70] sm:$0xff]
    %v221 = vld [vmem:[#allocation7 + $0x78] sm:$0xff]
    %v222 = vld [vmem:[#allocation7 + $0x80] sm:$0xff]
    %v223 = vld [vmem:[#allocation7 + $0x88] sm:$0xff]
    %v224 = vld [vmem:[#allocation7 + $0x90] sm:$0xff]
    %v225 = vld [vmem:[#allocation7 + $0x98] sm:$0xff]
    %v226 = vld [vmem:[#allocation7 + $0xa0] sm:$0xff]
    %v227 = vld [vmem:[#allocation7 + $0xa8] sm:$0xff]
    %v228 = vld [vmem:[#allocation7 + $0xb0] sm:$0xff]
    %v229 = vld [vmem:[#allocation7 + $0xb8] sm:$0xff]
    %v230 = vld [vmem:[#allocation7 + $0xc0] sm:$0xff]
    %v231 = vld [vmem:[#allocation7 + $0xc8] sm:$0xff]
    %v232 = vld [vmem:[#allocation7 + $0xd0] sm:$0xff]
    %v233 = vld [vmem:[#allocation7 + $0xd8] sm:$0xff]
    %v234 = vld [vmem:[#allocation7 + $0xe0] sm:$0xff]
    %v235 = vld [vmem:[#allocation7 + $0xe8] sm:$0xff]
    %v236 = vld [vmem:[#allocation7 + $0xf0] sm:$0xff]
    %v237 = vld [vmem:[#allocation7 + $0xf8] sm:$0xff]
    %v238 = vld [vmem:[#allocation9] sm:$0x3]
    %v240 = vlaneseq
    %v241 = vshrl.u32 %v240, 7
    %v242 = vsub.s32 0, %v241
    %v243 = vrot.slane %v238, %v242
    %v244 = vlaneseq
    %v245 = vshrl.u32 %v244, 7
    %v246 = vsub.s32 1, %v245
    %v247 = vrot.slane %v238, %v246
    %250 = vmatprep.subr.mxu0 %v207
    %251 = vmatpush1.msra.mxu0 %v206
    %252 = vmatprep.subr.mxu0 %v209
    %253 = vmatpush1.msra.mxu0 %v208
    %254 = vmatprep.subr.mxu0 %v211
    %255 = vmatpush1.msra.mxu0 %v210
    %256 = vmatprep.subr.mxu0 %v213
    %257 = vmatpush1.msra.mxu0 %v212
    %258 = vmatprep.subr.mxu0 %v215
    %259 = vmatpush1.msra.mxu0 %v214
    %260 = vmatprep.subr.mxu0 %v217
    %261 = vmatpush1.msra.mxu0 %v216
    %262 = vmatprep.subr.mxu0 %v219
    %263 = vmatpush1.msra.mxu0 %v218
    %264 = vmatprep.subr.mxu0 %v221
    %265 = vmatpush1.msra.mxu0 %v220
    %266 = vmatprep.subr.mxu0 %v223
    %267 = vmatpush1.msra.mxu0 %v222
    %268 = vmatprep.subr.mxu0 %v225
    %269 = vmatpush1.msra.mxu0 %v224
    %270 = vmatprep.subr.mxu0 %v227
    %271 = vmatpush1.msra.mxu0 %v226
    %272 = vmatprep.subr.mxu0 %v229
    %273 = vmatpush1.msra.mxu0 %v228
    %274 = vmatprep.subr.mxu0 %v231
    %275 = vmatpush1.msra.mxu0 %v230
    %276 = vmatprep.subr.mxu0 %v233
    %277 = vmatpush1.msra.mxu0 %v232
    %278 = vmatprep.subr.mxu0 %v235
    %279 = vmatpush1.msra.mxu0 %v234
    %280 = vmatprep.subr.mxu0 %v237
    %281 = vmatpush1.msra.mxu0 %v236
    %282 = vmatprep.subr.mxu0 0.0
    %283 = vmatpush1.msra.mxu0 0.0
    %284 = vmatprep.subr.mxu0 0.0
    %285 = vmatpush1.msra.mxu0 0.0
    %286 = vmatprep.subr.mxu0 0.0
    %287 = vmatpush1.msra.mxu0 0.0
    %288 = vmatprep.subr.mxu0 0.0
    %289 = vmatpush1.msra.mxu0 0.0
    %290 = vmatprep.subr.mxu0 0.0
    %291 = vmatpush1.msra.mxu0 0.0
    %292 = vmatprep.subr.mxu0 0.0
    %293 = vmatpush1.msra.mxu0 0.0
    %294 = vmatprep.subr.mxu0 0.0
    %295 = vmatpush1.msra.mxu0 0.0
    %296 = vmatprep.subr.mxu0 0.0
    %297 = vmatpush1.msra.mxu0 0.0
    %298 = vmatprep.subr.mxu0 0.0
    %299 = vmatpush1.msra.mxu0 0.0
    %300 = vmatprep.subr.mxu0 0.0
    %301 = vmatpush1.msra.mxu0 0.0
    %302 = vmatprep.subr.mxu0 0.0
    %303 = vmatpush1.msra.mxu0 0.0
    %304 = vmatprep.subr.mxu0 0.0
    %305 = vmatpush1.msra.mxu0 0.0
    %306 = vmatprep.subr.mxu0 0.0
    %307 = vmatpush1.msra.mxu0 0.0
    %308 = vmatprep.subr.mxu0 0.0
    %309 = vmatpush1.msra.mxu0 0.0
    %310 = vmatprep.subr.mxu0 0.0
    %311 = vmatpush1.msra.mxu0 0.0
    %312 = vmatprep.subr.mxu0 0.0
    %313 = vmatpush1.msra.mxu0 0.0
    %314 = vmatprep.mubr.f32.mxu0 0.0
    %315 = vmatmul.mubr.f32.gmra.mrb[0].mxu0 %v205
    %v316 = vpop.f32.mrb[0].mxu0
    %v317 = vadd.f32 %v243, %v316
    %v318 = vpop.f32.mrb[0].mxu0
    %v319 = vadd.f32 %v247, %v318
    %320 = vdwg.mxu0
    %vm321 = vcmp.ge.f32.partialorder %v317, 0.0
    %vm322 = vcmp.ge.f32.partialorder %v319, 0.0
    %v323 = vmul.f32 %v317, 0.2
    %v324 = vmul.f32 %v319, 0.2
    %v325 = vsel %vm321, %v317, %v323
    %v326 = vsel %vm322, %v319, %v324
    %v327 = vld [vmem:[#allocation10] sm:$0xff]
    %v328 = vld [vmem:[#allocation10 + $0x8] sm:$0xff]
    %v329 = vld [vmem:[#allocation10 + $0x10] sm:$0xff]
    %v330 = vld [vmem:[#allocation10 + $0x18] sm:$0xff]
    %v331 = vld [vmem:[#allocation10 + $0x20] sm:$0xff]
    %v332 = vld [vmem:[#allocation10 + $0x28] sm:$0xff]
    %v333 = vld [vmem:[#allocation10 + $0x30] sm:$0xff]
    %v334 = vld [vmem:[#allocation10 + $0x38] sm:$0xff]
    %v335 = vld [vmem:[#allocation10 + $0x40] sm:$0xff]
    %v336 = vld [vmem:[#allocation10 + $0x48] sm:$0xff]
    %v337 = vld [vmem:[#allocation10 + $0x50] sm:$0xff]
    %v338 = vld [vmem:[#allocation10 + $0x58] sm:$0xff]
    %v339 = vld [vmem:[#allocation10 + $0x60] sm:$0xff]
    %v340 = vld [vmem:[#allocation10 + $0x68] sm:$0xff]
    %v341 = vld [vmem:[#allocation10 + $0x70] sm:$0xff]
    %v342 = vld [vmem:[#allocation10 + $0x78] sm:$0xff]
    %v343 = vld [vmem:[#allocation10 + $0x80] sm:$0xff]
    %v344 = vld [vmem:[#allocation10 + $0x88] sm:$0xff]
    %v345 = vld [vmem:[#allocation10 + $0x90] sm:$0xff]
    %v346 = vld [vmem:[#allocation10 + $0x98] sm:$0xff]
    %v347 = vld [vmem:[#allocation10 + $0xa0] sm:$0xff]
    %v348 = vld [vmem:[#allocation10 + $0xa8] sm:$0xff]
    %v349 = vld [vmem:[#allocation10 + $0xb0] sm:$0xff]
    %v350 = vld [vmem:[#allocation10 + $0xb8] sm:$0xff]
    %v351 = vld [vmem:[#allocation10 + $0xc0] sm:$0xff]
    %v352 = vld [vmem:[#allocation10 + $0xc8] sm:$0xff]
    %v353 = vld [vmem:[#allocation10 + $0xd0] sm:$0xff]
    %v354 = vld [vmem:[#allocation10 + $0xd8] sm:$0xff]
    %v355 = vld [vmem:[#allocation10 + $0xe0] sm:$0xff]
    %v356 = vld [vmem:[#allocation10 + $0xe8] sm:$0xff]
    %v357 = vld [vmem:[#allocation10 + $0xf0] sm:$0xff]
    %v358 = vld [vmem:[#allocation10 + $0xf8] sm:$0xff]
    %v359 = vld [vmem:[#allocation10 + $0x100] sm:$0xff]
    %v360 = vld [vmem:[#allocation10 + $0x108] sm:$0xff]
    %v361 = vld [vmem:[#allocation10 + $0x110] sm:$0xff]
    %v362 = vld [vmem:[#allocation10 + $0x118] sm:$0xff]
    %v363 = vld [vmem:[#allocation10 + $0x120] sm:$0xff]
    %v364 = vld [vmem:[#allocation10 + $0x128] sm:$0xff]
    %v365 = vld [vmem:[#allocation10 + $0x130] sm:$0xff]
    %v366 = vld [vmem:[#allocation10 + $0x138] sm:$0xff]
    %v367 = vld [vmem:[#allocation10 + $0x140] sm:$0xff]
    %v368 = vld [vmem:[#allocation10 + $0x148] sm:$0xff]
    %v369 = vld [vmem:[#allocation10 + $0x150] sm:$0xff]
    %v370 = vld [vmem:[#allocation10 + $0x158] sm:$0xff]
    %v371 = vld [vmem:[#allocation10 + $0x160] sm:$0xff]
    %v372 = vld [vmem:[#allocation10 + $0x168] sm:$0xff]
    %v373 = vld [vmem:[#allocation10 + $0x170] sm:$0xff]
    %v374 = vld [vmem:[#allocation10 + $0x178] sm:$0xff]
    %v375 = vld [vmem:[#allocation10 + $0x180] sm:$0xff]
    %v376 = vld [vmem:[#allocation10 + $0x188] sm:$0xff]
    %v377 = vld [vmem:[#allocation10 + $0x190] sm:$0xff]
    %v378 = vld [vmem:[#allocation10 + $0x198] sm:$0xff]
    %v379 = vld [vmem:[#allocation10 + $0x1a0] sm:$0xff]
    %v380 = vld [vmem:[#allocation10 + $0x1a8] sm:$0xff]
    %v381 = vld [vmem:[#allocation10 + $0x1b0] sm:$0xff]
    %v382 = vld [vmem:[#allocation10 + $0x1b8] sm:$0xff]
    %v383 = vld [vmem:[#allocation10 + $0x1c0] sm:$0xff]
    %v384 = vld [vmem:[#allocation10 + $0x1c8] sm:$0xff]
    %v385 = vld [vmem:[#allocation10 + $0x1d0] sm:$0xff]
    %v386 = vld [vmem:[#allocation10 + $0x1d8] sm:$0xff]
    %v387 = vld [vmem:[#allocation10 + $0x1e0] sm:$0xff]
    %v388 = vld [vmem:[#allocation10 + $0x1e8] sm:$0xff]
    %v389 = vld [vmem:[#allocation10 + $0x1f0] sm:$0xff]
    %v390 = vld [vmem:[#allocation10 + $0x1f8] sm:$0xff]
    %v391 = vld [vmem:[#allocation10 + $0x200] sm:$0xff]
    %v392 = vld [vmem:[#allocation10 + $0x208] sm:$0xff]
    %v393 = vld [vmem:[#allocation10 + $0x210] sm:$0xff]
    %v394 = vld [vmem:[#allocation10 + $0x218] sm:$0xff]
    %v395 = vld [vmem:[#allocation10 + $0x220] sm:$0xff]
    %v396 = vld [vmem:[#allocation10 + $0x228] sm:$0xff]
    %v397 = vld [vmem:[#allocation10 + $0x230] sm:$0xff]
    %v398 = vld [vmem:[#allocation10 + $0x238] sm:$0xff]
    %v399 = vld [vmem:[#allocation10 + $0x240] sm:$0xff]
    %v400 = vld [vmem:[#allocation10 + $0x248] sm:$0xff]
    %v401 = vld [vmem:[#allocation10 + $0x250] sm:$0xff]
    %v402 = vld [vmem:[#allocation10 + $0x258] sm:$0xff]
    %v403 = vld [vmem:[#allocation10 + $0x260] sm:$0xff]
    %v404 = vld [vmem:[#allocation10 + $0x268] sm:$0xff]
    %v405 = vld [vmem:[#allocation10 + $0x270] sm:$0xff]
    %v406 = vld [vmem:[#allocation10 + $0x278] sm:$0xff]
    %v407 = vld [vmem:[#allocation10 + $0x280] sm:$0xff]
    %v408 = vld [vmem:[#allocation10 + $0x288] sm:$0xff]
    %v409 = vld [vmem:[#allocation10 + $0x290] sm:$0xff]
    %v410 = vld [vmem:[#allocation10 + $0x298] sm:$0xff]
    %v411 = vld [vmem:[#allocation10 + $0x2a0] sm:$0xff]
    %v412 = vld [vmem:[#allocation10 + $0x2a8] sm:$0xff]
    %v413 = vld [vmem:[#allocation10 + $0x2b0] sm:$0xff]
    %v414 = vld [vmem:[#allocation10 + $0x2b8] sm:$0xff]
    %v415 = vld [vmem:[#allocation10 + $0x2c0] sm:$0xff]
    %v416 = vld [vmem:[#allocation10 + $0x2c8] sm:$0xff]
    %v417 = vld [vmem:[#allocation10 + $0x2d0] sm:$0xff]
    %v418 = vld [vmem:[#allocation10 + $0x2d8] sm:$0xff]
    %v419 = vld [vmem:[#allocation10 + $0x2e0] sm:$0xff]
    %v420 = vld [vmem:[#allocation10 + $0x2e8] sm:$0xff]
    %v421 = vld [vmem:[#allocation10 + $0x2f0] sm:$0xff]
    %v422 = vld [vmem:[#allocation10 + $0x2f8] sm:$0xff]
    %v423 = vld [vmem:[#allocation10 + $0x300] sm:$0xff]
    %v424 = vld [vmem:[#allocation10 + $0x308] sm:$0xff]
    %v425 = vld [vmem:[#allocation10 + $0x310] sm:$0xff]
    %v426 = vld [vmem:[#allocation10 + $0x318] sm:$0xff]
    %v427 = vld [vmem:[#allocation10 + $0x320] sm:$0xff]
    %v428 = vld [vmem:[#allocation10 + $0x328] sm:$0xff]
    %v429 = vld [vmem:[#allocation10 + $0x330] sm:$0xff]
    %v430 = vld [vmem:[#allocation10 + $0x338] sm:$0xff]
    %v431 = vld [vmem:[#allocation10 + $0x340] sm:$0xff]
    %v432 = vld [vmem:[#allocation10 + $0x348] sm:$0xff]
    %v433 = vld [vmem:[#allocation10 + $0x350] sm:$0xff]
    %v434 = vld [vmem:[#allocation10 + $0x358] sm:$0xff]
    %v435 = vld [vmem:[#allocation10 + $0x360] sm:$0xff]
    %v436 = vld [vmem:[#allocation10 + $0x368] sm:$0xff]
    %v437 = vld [vmem:[#allocation10 + $0x370] sm:$0xff]
    %v438 = vld [vmem:[#allocation10 + $0x378] sm:$0xff]
    %v439 = vld [vmem:[#allocation10 + $0x380] sm:$0xff]
    %v440 = vld [vmem:[#allocation10 + $0x388] sm:$0xff]
    %v441 = vld [vmem:[#allocation10 + $0x390] sm:$0xff]
    %v442 = vld [vmem:[#allocation10 + $0x398] sm:$0xff]
    %v443 = vld [vmem:[#allocation10 + $0x3a0] sm:$0xff]
    %v444 = vld [vmem:[#allocation10 + $0x3a8] sm:$0xff]
    %v445 = vld [vmem:[#allocation10 + $0x3b0] sm:$0xff]
    %v446 = vld [vmem:[#allocation10 + $0x3b8] sm:$0xff]
    %v447 = vld [vmem:[#allocation10 + $0x3c0] sm:$0xff]
    %v448 = vld [vmem:[#allocation10 + $0x3c8] sm:$0xff]
    %v449 = vld [vmem:[#allocation10 + $0x3d0] sm:$0xff]
    %v450 = vld [vmem:[#allocation10 + $0x3d8] sm:$0xff]
    %v451 = vld [vmem:[#allocation10 + $0x3e0] sm:$0xff]
    %v452 = vld [vmem:[#allocation10 + $0x3e8] sm:$0xff]
    %v453 = vld [vmem:[#allocation10 + $0x3f0] sm:$0xff]
    %v454 = vld [vmem:[#allocation10 + $0x3f8] sm:$0xff]
    %v455 = vld [vmem:[#allocation12] sm:$0xf]
    %v457 = vlaneseq
    %v458 = vshrl.u32 %v457, 7
    %v459 = vsub.s32 0, %v458
    %v460 = vrot.slane %v455, %v459
    %v461 = vlaneseq
    %v462 = vshrl.u32 %v461, 7
    %v463 = vsub.s32 1, %v462
    %v464 = vrot.slane %v455, %v463
    %v465 = vlaneseq
    %v466 = vshrl.u32 %v465, 7
    %v467 = vsub.s32 2, %v466
    %v468 = vrot.slane %v455, %v467
    %v469 = vlaneseq
    %v470 = vshrl.u32 %v469, 7
    %v471 = vsub.s32 3, %v470
    %v472 = vrot.slane %v455, %v471
    %477 = vmatprep.subr.mxu0 %v328
    %478 = vmatpush1.msra.mxu0 %v327
    %479 = vmatprep.subr.mxu0 %v332
    %480 = vmatpush1.msra.mxu0 %v331
    %481 = vmatprep.subr.mxu0 %v336
    %482 = vmatpush1.msra.mxu0 %v335
    %483 = vmatprep.subr.mxu0 %v340
    %484 = vmatpush1.msra.mxu0 %v339
    %485 = vmatprep.subr.mxu0 %v344
    %486 = vmatpush1.msra.mxu0 %v343
    %487 = vmatprep.subr.mxu0 %v348
    %488 = vmatpush1.msra.mxu0 %v347
    %489 = vmatprep.subr.mxu0 %v352
    %490 = vmatpush1.msra.mxu0 %v351
    %491 = vmatprep.subr.mxu0 %v356
    %492 = vmatpush1.msra.mxu0 %v355
    %493 = vmatprep.subr.mxu0 %v360
    %494 = vmatpush1.msra.mxu0 %v359
    %495 = vmatprep.subr.mxu0 %v364
    %496 = vmatpush1.msra.mxu0 %v363
    %497 = vmatprep.subr.mxu0 %v368
    %498 = vmatpush1.msra.mxu0 %v367
    %499 = vmatprep.subr.mxu0 %v372
    %500 = vmatpush1.msra.mxu0 %v371
    %501 = vmatprep.subr.mxu0 %v376
    %502 = vmatpush1.msra.mxu0 %v375
    %503 = vmatprep.subr.mxu0 %v380
    %504 = vmatpush1.msra.mxu0 %v379
    %505 = vmatprep.subr.mxu0 %v384
    %506 = vmatpush1.msra.mxu0 %v383
    %507 = vmatprep.subr.mxu0 %v388
    %508 = vmatpush1.msra.mxu0 %v387
    %509 = vmatprep.subr.mxu0 %v392
    %510 = vmatpush1.msra.mxu0 %v391
    %511 = vmatprep.subr.mxu0 %v396
    %512 = vmatpush1.msra.mxu0 %v395
    %513 = vmatprep.subr.mxu0 %v400
    %514 = vmatpush1.msra.mxu0 %v399
    %515 = vmatprep.subr.mxu0 %v404
    %516 = vmatpush1.msra.mxu0 %v403
    %517 = vmatprep.subr.mxu0 %v408
    %518 = vmatpush1.msra.mxu0 %v407
    %519 = vmatprep.subr.mxu0 %v412
    %520 = vmatpush1.msra.mxu0 %v411
    %521 = vmatprep.subr.mxu0 %v416
    %522 = vmatpush1.msra.mxu0 %v415
    %523 = vmatprep.subr.mxu0 %v420
    %524 = vmatpush1.msra.mxu0 %v419
    %525 = vmatprep.subr.mxu0 %v424
    %526 = vmatpush1.msra.mxu0 %v423
    %527 = vmatprep.subr.mxu0 %v428
    %528 = vmatpush1.msra.mxu0 %v427
    %529 = vmatprep.subr.mxu0 %v432
    %530 = vmatpush1.msra.mxu0 %v431
    %531 = vmatprep.subr.mxu0 %v436
    %532 = vmatpush1.msra.mxu0 %v435
    %533 = vmatprep.subr.mxu0 %v440
    %534 = vmatpush1.msra.mxu0 %v439
    %535 = vmatprep.subr.mxu0 %v444
    %536 = vmatpush1.msra.mxu0 %v443
    %537 = vmatprep.subr.mxu0 %v448
    %538 = vmatpush1.msra.mxu0 %v447
    %539 = vmatprep.subr.mxu0 %v452
    %540 = vmatpush1.msra.mxu0 %v451
    %541 = vmatprep.mubr.f32.mxu0 %v326
    %542 = vmatmul.mubr.f32.gmra.mrb[0].mxu0 %v325
    %v543 = vpop.f32.mrb[0].mxu0
    %v544 = vadd.f32 %v460, %v543
    %v545 = vpop.f32.mrb[0].mxu0
    %v546 = vadd.f32 %v464, %v545
    %547 = vdwg.mxu0
    %548 = vmatprep.subr.mxu0 %v330
    %549 = vmatpush1.msra.mxu0 %v329
    %550 = vmatprep.subr.mxu0 %v334
    %551 = vmatpush1.msra.mxu0 %v333
    %552 = vmatprep.subr.mxu0 %v338
    %553 = vmatpush1.msra.mxu0 %v337
    %554 = vmatprep.subr.mxu0 %v342
    %555 = vmatpush1.msra.mxu0 %v341
    %556 = vmatprep.subr.mxu0 %v346
    %557 = vmatpush1.msra.mxu0 %v345
    %558 = vmatprep.subr.mxu0 %v350
    %559 = vmatpush1.msra.mxu0 %v349
    %560 = vmatprep.subr.mxu0 %v354
    %561 = vmatpush1.msra.mxu0 %v353
    %562 = vmatprep.subr.mxu0 %v358
    %563 = vmatpush1.msra.mxu0 %v357
    %564 = vmatprep.subr.mxu0 %v362
    %565 = vmatpush1.msra.mxu0 %v361
    %566 = vmatprep.subr.mxu0 %v366
    %567 = vmatpush1.msra.mxu0 %v365
    %568 = vmatprep.subr.mxu0 %v370
    %569 = vmatpush1.msra.mxu0 %v369
    %570 = vmatprep.subr.mxu0 %v374
    %571 = vmatpush1.msra.mxu0 %v373
    %572 = vmatprep.subr.mxu0 %v378
    %573 = vmatpush1.msra.mxu0 %v377
    %574 = vmatprep.subr.mxu0 %v382
    %575 = vmatpush1.msra.mxu0 %v381
    %576 = vmatprep.subr.mxu0 %v386
    %577 = vmatpush1.msra.mxu0 %v385
    %578 = vmatprep.subr.mxu0 %v390
    %579 = vmatpush1.msra.mxu0 %v389
    %580 = vmatprep.subr.mxu0 %v394
    %581 = vmatpush1.msra.mxu0 %v393
    %582 = vmatprep.subr.mxu0 %v398
    %583 = vmatpush1.msra.mxu0 %v397
    %584 = vmatprep.subr.mxu0 %v402
    %585 = vmatpush1.msra.mxu0 %v401
    %586 = vmatprep.subr.mxu0 %v406
    %587 = vmatpush1.msra.mxu0 %v405
    %588 = vmatprep.subr.mxu0 %v410
    %589 = vmatpush1.msra.mxu0 %v409
    %590 = vmatprep.subr.mxu0 %v414
    %591 = vmatpush1.msra.mxu0 %v413
    %592 = vmatprep.subr.mxu0 %v418
    %593 = vmatpush1.msra.mxu0 %v417
    %594 = vmatprep.subr.mxu0 %v422
    %595 = vmatpush1.msra.mxu0 %v421
    %596 = vmatprep.subr.mxu0 %v426
    %597 = vmatpush1.msra.mxu0 %v425
    %598 = vmatprep.subr.mxu0 %v430
    %599 = vmatpush1.msra.mxu0 %v429
    %600 = vmatprep.subr.mxu0 %v434
    %601 = vmatpush1.msra.mxu0 %v433
    %602 = vmatprep.subr.mxu0 %v438
    %603 = vmatpush1.msra.mxu0 %v437
    %604 = vmatprep.subr.mxu0 %v442
    %605 = vmatpush1.msra.mxu0 %v441
    %606 = vmatprep.subr.mxu0 %v446
    %607 = vmatpush1.msra.mxu0 %v445
    %608 = vmatprep.subr.mxu0 %v450
    %609 = vmatpush1.msra.mxu0 %v449
    %610 = vmatprep.subr.mxu0 %v454
    %611 = vmatpush1.msra.mxu0 %v453
    %612 = vmatprep.mubr.f32.mxu0 %v326
    %613 = vmatmul.mubr.f32.gmra.mrb[0].mxu0 %v325
    %v614 = vpop.f32.mrb[0].mxu0
    %v615 = vadd.f32 %v468, %v614
    %v616 = vpop.f32.mrb[0].mxu0
    %v617 = vadd.f32 %v472, %v616
    %618 = vdwg.mxu0
    %vm619 = vcmp.ge.f32.partialorder %v544, 0.0
    %vm620 = vcmp.ge.f32.partialorder %v546, 0.0
    %vm621 = vcmp.ge.f32.partialorder %v615, 0.0
    %vm622 = vcmp.ge.f32.partialorder %v617, 0.0
    %v623 = vmul.f32 %v544, 0.2
    %v624 = vmul.f32 %v546, 0.2
    %v625 = vmul.f32 %v615, 0.2
    %v626 = vmul.f32 %v617, 0.2
    %v627 = vsel %vm619, %v544, %v623
    %v628 = vsel %vm620, %v546, %v624
    %v629 = vsel %vm621, %v615, %v625
    %v630 = vsel %vm622, %v617, %v626
    %v635 = vcombine.low %v627, %v628
    %v636 = vcombine.low %v629, %v630
    %v638 = vunpack.c.l.s4 1983009808
    %v639 = vunpack.c.0.s8 %v638
    %v640 = vlaneseq
    %v641 = vshrl.u32 %v640, 7
    %v642 = vsub.s32 %v639, %v641
    %v643 = vrot.slane %v635, %v642
    %v645 = vunpack.c.l.s4 1983009808
    %v646 = vunpack.c.0.s8 %v645
    %v647 = vlaneseq
    %v648 = vshrl.u32 %v647, 7
    %v649 = vsub.s32 %v646, %v648
    %v650 = vrot.slane %v636, %v649
    %v651 = vcombine.low %v643, %v650
    %653 = vst [vmem:[%s7] sm:$0xff] %v651
    // Predicated region
    $region58: #{generator_forward.2} parent=1 // pred_check
      _
    $region59: #{generator_forward.2} parent=1 // pred_check_branch
      %655 = sbr.rel (0) target = $region61
    $region60: #{generator_forward.2} parent=1 // pred_region
      _
    $region61: #{generator_forward.2} parent=1 // pred_fallthru
      _
    // Predicated region
    $region62: #{generator_forward.2} parent=1 // pred_check
      _
    $region63: #{generator_forward.2} parent=1 // pred_check_branch
      %657 = sbr.rel (0) target = $region65
    $region64: #{generator_forward.2} parent=1 // pred_region
      _
    $region65: #{generator_forward.2} parent=1 // pred_fallthru
      _
    %658 = vsyncpa [#allocation3], 1
    %659 = vsyncpa [#allocation5], 1
    %660 = vsyncpa [#allocation8], 1
    %661 = vsyncpa [#allocation11], 1

// kernel: generator_forward.3
$region0: #{generator_forward.3}
  #allocation0 [shape = 'u32[]', space=smem, size = 0x4, offset = 0x4, fixed_abs, tag = 'smem constant byte address 0x4 - core index']
  #allocation1 [shape = 'u32[144,128]{1,0:T(1,128)}', space=vmem, size = 0x12000, scoped, tag = 'internal scratch']
  %s0 = inlined_call_operand.vmem [shape: f32[2,512], index: 0, kind: input, shape index: {}]
  %s1 = inlined_call_operand.hbm [shape: f32[512,327680], index: 1, kind: input, shape index: {}]
  %s2 = inlined_call_operand.hbm [shape: f32[1,327680], index: 2, kind: input, shape index: {}]
  %s3 = inlined_call_operand.vmem [shape: f32[2,327680], index: 3, kind: output, shape index: {}]
  %s4 = sld [smem:[#allocation0]]
  $region53: #{generator_forward.3} parent=0
    _
  %s6 = ssub.s32 1, %s4
  %s7 = scalar_select 0, %s6, %s4
  $region1: #{generator_forward.3} parent=0
    #allocation2 [shape = 'u8[16777216]{0}', space=vmem, size = 0x1000000, scoped, tag = 'input window, operand 1']
    #allocation3 [shape = 's32[2]{0}', space=sflag, size = 0x8, scoped, tag = 'scoped memory for generator_forward.3']
    #allocation4 [shape = 'u8[32768]{0}', space=vmem, size = 0x8000, scoped, tag = 'input window, operand 2']
    #allocation5 [shape = 's32[2]{0}', space=sflag, size = 0x8, scoped, tag = 'scoped memory for generator_forward.3']
    %8 = vsyncpa [#allocation3], 0
    %s9 = scalar_lea.sflag [#allocation3], 1
    %10 = vsyncpa %s9, 0
    %11 = vsyncpa [#allocation5], 0
    %s12 = scalar_lea.sflag [#allocation5], 1
    %13 = vsyncpa %s12, 0
    loop: start=0, step=1, limit=82
    $region2: #{generator_forward.3} parent=1 // loop_pre_header
      _
    $region3: #{generator_forward.3} parent=1 // loop_header
      %s15 = sphi 0, %s19
      %p16 = scmp.ge.s32.totalorder %s15, 82
      %s23 = sphi 0, %s23
      %s25 = sphi 0, %s23
      %s26 = sphi 0, %s25
      %s40 = sphi 0, %s26
      %s46 = sphi 0, %s48
      %s49 = sphi 0, %s46
      %s50 = sphi 0, %s49
      %s66 = sphi 0, %s50
      %s72 = sphi 0, %s74
      %s75 = sphi 0, %s72
      %s76 = sphi 0, %s75
      %s92 = sphi 0, %s76
      %s98 = sphi 0, %s100
      %s101 = sphi 0, %s98
      %s102 = sphi 0, %s101
      %s118 = sphi 0, %s102
    $region4: #{generator_forward.3} parent=1 // loop_header_branch
      %18 = sbr.rel (%p16) target = $region8
    $region5: #{generator_forward.3} parent=1 // loop_body
      %s20 = ssub.s32 %s15, 1
      %s21 = ssub.s32 %s15, 2
      %s22 = sadd.s32 %s15, 1
      %s24 = sadd.s32 %s23, 1
      %p27 = scmp.eq.s32.totalorder %s15, 79
      %p28 = scmp.ne.s32.totalorder %s23, %s25
      %p29 = scmp.eq.s32.totalorder %s15, 0
      %p30 = por %p28, %p29
      %p31 = scmp.ne.s32.totalorder %s23, %s25
      %p32 = scmp.eq.s32.totalorder %s20, 79
      %p33 = por %p31, %p32
      %p34 = scmp.ne.s32.totalorder %s25, %s26
      %p35 = scmp.eq.s32.totalorder %s20, 0
      %p36 = por %p34, %p35
      %p37 = scmp.ne.s32.totalorder %s25, %s26
      %p38 = scmp.eq.s32.totalorder %s21, 79
      %p39 = por %p37, %p38
      %p41 = scmp.ne.s32.totalorder %s26, %s40
      %p42 = scmp.eq.s32.totalorder %s21, 0
      %p43 = por %p41, %p42
      %s44 = ssub.s32 %s15, %s22
      %p45 = scmp.eq.s32.totalorder %s44, 0
      %s47 = sadd.s32 %s46, 1
      %s48 = scalar_select %p45, %s46, %s47
      %p51 = pneg %p45
      %p52 = scmp.eq.s32.totalorder %s15, 79
      %p53 = por %p51, %p52
      %p54 = scmp.ne.s32.totalorder %s46, %s49
      %p55 = scmp.eq.s32.totalorder %s15, 0
      %p56 = por %p54, %p55
      %p57 = scmp.ne.s32.totalorder %s46, %s49
      %p58 = scmp.eq.s32.totalorder %s20, 79
      %p59 = por %p57, %p58
      %p60 = scmp.ne.s32.totalorder %s49, %s50
      %p61 = scmp.eq.s32.totalorder %s20, 0
      %p62 = por %p60, %p61
      %p63 = scmp.ne.s32.totalorder %s49, %s50
      %p64 = scmp.eq.s32.totalorder %s21, 79
      %p65 = por %p63, %p64
      %p67 = scmp.ne.s32.totalorder %s50, %s66
      %p68 = scmp.eq.s32.totalorder %s21, 0
      %p69 = por %p67, %p68
      %s70 = ssub.s32 %s15, %s22
      %p71 = scmp.eq.s32.totalorder %s70, 0
      %s73 = sadd.s32 %s72, 1
      %s74 = scalar_select %p71, %s72, %s73
      %p77 = pneg %p71
      %p78 = scmp.eq.s32.totalorder %s15, 79
      %p79 = por %p77, %p78
      %p80 = scmp.ne.s32.totalorder %s72, %s75
      %p81 = scmp.eq.s32.totalorder %s15, 0
      %p82 = por %p80, %p81
      %p83 = scmp.ne.s32.totalorder %s72, %s75
      %p84 = scmp.eq.s32.totalorder %s20, 79
      %p85 = por %p83, %p84
      %p86 = scmp.ne.s32.totalorder %s75, %s76
      %p87 = scmp.eq.s32.totalorder %s20, 0
      %p88 = por %p86, %p87
      %p89 = scmp.ne.s32.totalorder %s75, %s76
      %p90 = scmp.eq.s32.totalorder %s21, 79
      %p91 = por %p89, %p90
      %p93 = scmp.ne.s32.totalorder %s76, %s92
      %p94 = scmp.eq.s32.totalorder %s21, 0
      %p95 = por %p93, %p94
      %s96 = ssub.s32 %s15, %s22
      %p97 = scmp.eq.s32.totalorder %s96, 0
      %s99 = sadd.s32 %s98, 1
      %s100 = scalar_select %p97, %s98, %s99
      %p103 = pneg %p97
      %p104 = scmp.eq.s32.totalorder %s15, 79
      %p105 = por %p103, %p104
      %p106 = scmp.ne.s32.totalorder %s98, %s101
      %p107 = scmp.eq.s32.totalorder %s15, 0
      %p108 = por %p106, %p107
      %p109 = scmp.ne.s32.totalorder %s98, %s101
      %p110 = scmp.eq.s32.totalorder %s20, 79
      %p111 = por %p109, %p110
      %p112 = scmp.ne.s32.totalorder %s101, %s102
      %p113 = scmp.eq.s32.totalorder %s20, 0
      %p114 = por %p112, %p113
      %p115 = scmp.ne.s32.totalorder %s101, %s102
      %p116 = scmp.eq.s32.totalorder %s21, 79
      %p117 = por %p115, %p116
      %p119 = scmp.ne.s32.totalorder %s102, %s118
      %p120 = scmp.eq.s32.totalorder %s21, 0
      %p121 = por %p119, %p120
      %p122 = scmp.le.s32.totalorder 1, %s15
      %p123 = scmp.lt.s32.totalorder %s15, 81
      %p124 = pnand %p122, %p123
      %p125 = pneg %p124
      // Predicated region
      $region9: #{generator_forward.3} parent=5 // pred_check
        _
      $region10: #{generator_forward.3} parent=5 // pred_check_branch
        %127 = sbr.rel (%p124) target = $region12
      $region11: #{generator_forward.3} parent=5 // pred_region
        %s128 = ssub.s32 %s15, 1
        // Predicated region
        $region13: #{generator_forward.3} parent=11 // pred_check
          %p129 = pneg %p36
        $region14: #{generator_forward.3} parent=11 // pred_check_branch
          %131 = sbr.rel (%p129) target = $region16
        $region15: #{generator_forward.3} parent=11 // pred_region
          _
        $region16: #{generator_forward.3} parent=11 // pred_fallthru
          _
      $region12: #{generator_forward.3} parent=5 // pred_fallthru
        _
      %p132 = scmp.lt.s32.totalorder %s15, 80
      // Predicated region
      $region17: #{generator_forward.3} parent=5 // pred_check
        %p133 = pneg %p132
      $region18: #{generator_forward.3} parent=5 // pred_check_branch
        %135 = sbr.rel (%p133) target = $region20
      $region19: #{generator_forward.3} parent=5 // pred_region
        // Predicated region
        $region21: #{generator_forward.3} parent=19 // pred_check
          %p136 = pneg %p56
        $region22: #{generator_forward.3} parent=19 // pred_check_branch
          %138 = sbr.rel (%p136) target = $region24
        $region23: #{generator_forward.3} parent=19 // pred_region
          %s139 = sand.u32 %s46, 1
          %s140 = scalar_lea.sflag [#allocation3], %s139
          %s141 = sand.u32 %s46, 1
          %s142 = smul.addr %s141, 16384
          %s143 = scalar_lea.vmem [#allocation2], %s142
          %s144 = smul.u32 32, %s15
          %s146 = ssub.s32 262144, 262144
          %147 = vsyncadd %s140, %s146
          %s148 = smul.addr %s144, 128
          %s149 = scalar_lea.hbm %s1, %s148
          %s150 = sshll.u32 %s143, 4
          %s151 = int_to_ptr.vmem [resolvable:$true] %s150
          %156 = dma.hbm_to_vmem [thread:$0]  %s149, 262144, %s151, %s140, 327680, 4096, 256
        $region24: #{generator_forward.3} parent=19 // pred_fallthru
          _
        // Predicated region
        $region25: #{generator_forward.3} parent=19 // pred_check
          %p157 = pneg %p82
        $region26: #{generator_forward.3} parent=19 // pred_check_branch
          %159 = sbr.rel (%p157) target = $region28
        $region27: #{generator_forward.3} parent=19 // pred_region
          %s160 = sand.u32 %s72, 1
          %s161 = scalar_lea.sflag [#allocation5], %s160
          %s162 = sand.u32 %s72, 1
          %s163 = smul.addr %s162, 32
          %s164 = scalar_lea.vmem [#allocation4], %s163
          %s165 = smul.u32 32, %s15
          %s167 = ssub.s32 512, 512
          %168 = vsyncadd %s161, %s167
          %s169 = smul.addr %s165, 16
          %s170 = scalar_lea.hbm %s2, %s169
          %s172 = sshll.u32 %s164, 4
          %s173 = int_to_ptr.vmem [resolvable:$true] %s172
          %175 = dma.hbm_to_vmem [thread:$0]  %s170, 512, %s173, %s161
        $region28: #{generator_forward.3} parent=19 // pred_fallthru
          _
      $region20: #{generator_forward.3} parent=5 // pred_fallthru
        _
      %p176 = scmp.le.s32.totalorder 1, %s15
      %p177 = scmp.lt.s32.totalorder %s15, 81
      %p178 = pnand %p176, %p177
      %p179 = pneg %p178
      // Predicated region
      $region29: #{generator_forward.3} parent=5 // pred_check
        _
      $region30: #{generator_forward.3} parent=5 // pred_check_branch
        %181 = sbr.rel (%p178) target = $region32
      $region31: #{generator_forward.3} parent=5 // pred_region
        %s182 = ssub.s32 %s15, 1
        %s183 = sand.u32 %s49, 1
        %s184 = scalar_lea.sflag [#allocation3], %s183
        %s185 = sand.u32 %s49, 1
        %s186 = smul.addr %s185, 16384
        %s187 = scalar_lea.vmem [#allocation2], %s186
        // Predicated region
        $region33: #{generator_forward.3} parent=31 // pred_check
          %p188 = pneg %p62
        $region34: #{generator_forward.3} parent=31 // pred_check_branch
          %190 = sbr.rel (%p188) target = $region36
        $region35: #{generator_forward.3} parent=31 // pred_region
          %191 = dma.done %s184, 262144
        $region36: #{generator_forward.3} parent=31 // pred_fallthru
          _
        %s192 = sand.u32 %s75, 1
        %s193 = scalar_lea.sflag [#allocation5], %s192
        %s194 = sand.u32 %s75, 1
        %s195 = smul.addr %s194, 32
        %s196 = scalar_lea.vmem [#allocation4], %s195
        // Predicated region
        $region37: #{generator_forward.3} parent=31 // pred_check
          %p197 = pneg %p88
        $region38: #{generator_forward.3} parent=31 // pred_check_branch
          %199 = sbr.rel (%p197) target = $region40
        $region39: #{generator_forward.3} parent=31 // pred_region
          %200 = dma.done %s193, 512
        $region40: #{generator_forward.3} parent=31 // pred_fallthru
          _
        %p201 = pneg %p36
        %p202 = pneg %p33
        %s203 = sand.u32 %s49, 1
        %s204 = scalar_lea.sflag [#allocation3], %s203
        %s205 = sand.u32 %s49, 1
        %s206 = smul.addr %s205, 16384
        %s207 = scalar_lea.vmem [#allocation2], %s206
        %p208 = pneg %p62
        %p209 = pneg %p59
        %s210 = sand.u32 %s75, 1
        %s211 = scalar_lea.sflag [#allocation5], %s210
        %s212 = sand.u32 %s75, 1
        %s213 = smul.addr %s212, 32
        %s214 = scalar_lea.vmem [#allocation4], %s213
        %p215 = pneg %p88
        %p216 = pneg %p85
        %p217 = pneg %p114
        %p218 = pneg %p111
        %s219 = smul.u32 32, %s20
        %p220 = scmp.lt.s32.totalorder %s219, 2559
        %s221 = scalar_select %p220, %s219, 2559
        %s222 = smul.addr %s221, 2
        %s223 = scalar_lea.vmem %s3, %s222
        %s224 = smul.u32 32, %s20
        %s225 = smul.u32 32, %s20
        %s226 = smul.u32 32, %s20
        %p227 = scmp.lt.s32.totalorder %s226, 2559
        %s228 = scalar_select %p227, %s226, 2559
        %s229 = smul.addr %s228, 2
        %s230 = scalar_lea.vmem %s3, %s229
        %s231 = smul.u32 32, %s20
        %v232 = vld [vmem:[%s0] sm:$0xff]
        %v233 = vld [vmem:[%s187] sm:$0xff]
        %v234 = vld [vmem:[%s187 + $0x8] sm:$0xff]
        %v235 = vld [vmem:[%s187 + $0x10] sm:$0xff]
        %v236 = vld [vmem:[%s187 + $0x18] sm:$0xff]
        %v237 = vld [vmem:[%s187 + $0x20] sm:$0xff]
        %v238 = vld [vmem:[%s187 + $0x28] sm:$0xff]
        %v239 = vld [vmem:[%s187 + $0x30] sm:$0xff]
        %v240 = vld [vmem:[%s187 + $0x38] sm:$0xff]
        %v241 = vld [vmem:[%s187 + $0x40] sm:$0xff]
        %v242 = vld [vmem:[%s187 + $0x48] sm:$0xff]
        %v243 = vld [vmem:[%s187 + $0x50] sm:$0xff]
        %v244 = vld [vmem:[%s187 + $0x58] sm:$0xff]
        %v245 = vld [vmem:[%s187 + $0x60] sm:$0xff]
        %v246 = vld [vmem:[%s187 + $0x68] sm:$0xff]
        %v247 = vld [vmem:[%s187 + $0x70] sm:$0xff]
        %v248 = vld [vmem:[%s187 + $0x78] sm:$0xff]
        %v249 = vld [vmem:[%s187 + $0x80] sm:$0xff]
        %v250 = vld [vmem:[%s187 + $0x88] sm:$0xff]
        %v251 = vld [vmem:[%s187 + $0x90] sm:$0xff]
        %v252 = vld [vmem:[%s187 + $0x98] sm:$0xff]
        %v253 = vld [vmem:[%s187 + $0xa0] sm:$0xff]
        %v254 = vld [vmem:[%s187 + $0xa8] sm:$0xff]
        %v255 = vld [vmem:[%s187 + $0xb0] sm:$0xff]
        %v256 = vld [vmem:[%s187 + $0xb8] sm:$0xff]
        %v257 = vld [vmem:[%s187 + $0xc0] sm:$0xff]
        %v258 = vld [vmem:[%s187 + $0xc8] sm:$0xff]
        %v259 = vld [vmem:[%s187 + $0xd0] sm:$0xff]
        %v260 = vld [vmem:[%s187 + $0xd8] sm:$0xff]
        %v261 = vld [vmem:[%s187 + $0xe0] sm:$0xff]
        %v262 = vld [vmem:[%s187 + $0xe8] sm:$0xff]
        %v263 = vld [vmem:[%s187 + $0xf0] sm:$0xff]
        %v264 = vld [vmem:[%s187 + $0xf8] sm:$0xff]
        %v265 = vld [vmem:[%s187 + $0x100] sm:$0xff]
        %v266 = vld [vmem:[%s187 + $0x108] sm:$0xff]
        %v267 = vld [vmem:[%s187 + $0x110] sm:$0xff]
        %v268 = vld [vmem:[%s187 + $0x118] sm:$0xff]
        %v269 = vld [vmem:[%s187 + $0x120] sm:$0xff]
        %v270 = vld [vmem:[%s187 + $0x128] sm:$0xff]
        %v271 = vld [vmem:[%s187 + $0x130] sm:$0xff]
        %v272 = vld [vmem:[%s187 + $0x138] sm:$0xff]
        %v273 = vld [vmem:[%s187 + $0x140] sm:$0xff]
        %v274 = vld [vmem:[%s187 + $0x148] sm:$0xff]
        %v275 = vld [vmem:[%s187 + $0x150] sm:$0xff]
        %v276 = vld [vmem:[%s187 + $0x158] sm:$0xff]
        %v277 = vld [vmem:[%s187 + $0x160] sm:$0xff]
        %v278 = vld [vmem:[%s187 + $0x168] sm:$0xff]
        %v279 = vld [vmem:[%s187 + $0x170] sm:$0xff]
        %v280 = vld [vmem:[%s187 + $0x178] sm:$0xff]
        %v281 = vld [vmem:[%s187 + $0x180] sm:$0xff]
        %v282 = vld [vmem:[%s187 + $0x188] sm:$0xff]
        %v283 = vld [vmem:[%s187 + $0x190] sm:$0xff]
        %v284 = vld [vmem:[%s187 + $0x198] sm:$0xff]
        %v285 = vld [vmem:[%s187 + $0x1a0] sm:$0xff]
        %v286 = vld [vmem:[%s187 + $0x1a8] sm:$0xff]
        %v287 = vld [vmem:[%s187 + $0x1b0] sm:$0xff]
        %v288 = vld [vmem:[%s187 + $0x1b8] sm:$0xff]
        %v289 = vld [vmem:[%s187 + $0x1c0] sm:$0xff]
        %v290 = vld [vmem:[%s187 + $0x1c8] sm:$0xff]
        %v291 = vld [vmem:[%s187 + $0x1d0] sm:$0xff]
        %v292 = vld [vmem:[%s187 + $0x1d8] sm:$0xff]
        %v293 = vld [vmem:[%s187 + $0x1e0] sm:$0xff]
        %v294 = vld [vmem:[%s187 + $0x1e8] sm:$0xff]
        %v295 = vld [vmem:[%s187 + $0x1f0] sm:$0xff]
        %v296 = vld [vmem:[%s187 + $0x1f8] sm:$0xff]
        %v297 = vld [vmem:[%s187 + $0x200] sm:$0xff]
        %v298 = vld [vmem:[%s187 + $0x208] sm:$0xff]
        %v299 = vld [vmem:[%s187 + $0x210] sm:$0xff]
        %v300 = vld [vmem:[%s187 + $0x218] sm:$0xff]
        %v301 = vld [vmem:[%s187 + $0x220] sm:$0xff]
        %v302 = vld [vmem:[%s187 + $0x228] sm:$0xff]
        %v303 = vld [vmem:[%s187 + $0x230] sm:$0xff]
        %v304 = vld [vmem:[%s187 + $0x238] sm:$0xff]
        %v305 = vld [vmem:[%s187 + $0x240] sm:$0xff]
        %v306 = vld [vmem:[%s187 + $0x248] sm:$0xff]
        %v307 = vld [vmem:[%s187 + $0x250] sm:$0xff]
        %v308 = vld [vmem:[%s187 + $0x258] sm:$0xff]
        %v309 = vld [vmem:[%s187 + $0x260] sm:$0xff]
        %v310 = vld [vmem:[%s187 + $0x268] sm:$0xff]
        %v311 = vld [vmem:[%s187 + $0x270] sm:$0xff]
        %v312 = vld [vmem:[%s187 + $0x278] sm:$0xff]
        %v313 = vld [vmem:[%s187 + $0x280] sm:$0xff]
        %v314 = vld [vmem:[%s187 + $0x288] sm:$0xff]
        %v315 = vld [vmem:[%s187 + $0x290] sm:$0xff]
        %v316 = vld [vmem:[%s187 + $0x298] sm:$0xff]
        %v317 = vld [vmem:[%s187 + $0x2a0] sm:$0xff]
        %v318 = vld [vmem:[%s187 + $0x2a8] sm:$0xff]
        %v319 = vld [vmem:[%s187 + $0x2b0] sm:$0xff]
        %v320 = vld [vmem:[%s187 + $0x2b8] sm:$0xff]
        %v321 = vld [vmem:[%s187 + $0x2c0] sm:$0xff]
        %v322 = vld [vmem:[%s187 + $0x2c8] sm:$0xff]
        %v323 = vld [vmem:[%s187 + $0x2d0] sm:$0xff]
        %v324 = vld [vmem:[%s187 + $0x2d8] sm:$0xff]
        %v325 = vld [vmem:[%s187 + $0x2e0] sm:$0xff]
        %v326 = vld [vmem:[%s187 + $0x2e8] sm:$0xff]
        %v327 = vld [vmem:[%s187 + $0x2f0] sm:$0xff]
        %v328 = vld [vmem:[%s187 + $0x2f8] sm:$0xff]
        %v329 = vld [vmem:[%s187 + $0x300] sm:$0xff]
        %v330 = vld [vmem:[%s187 + $0x308] sm:$0xff]
        %v331 = vld [vmem:[%s187 + $0x310] sm:$0xff]
        %v332 = vld [vmem:[%s187 + $0x318] sm:$0xff]
        %v333 = vld [vmem:[%s187 + $0x320] sm:$0xff]
        %v334 = vld [vmem:[%s187 + $0x328] sm:$0xff]
        %v335 = vld [vmem:[%s187 + $0x330] sm:$0xff]
        %v336 = vld [vmem:[%s187 + $0x338] sm:$0xff]
        %v337 = vld [vmem:[%s187 + $0x340] sm:$0xff]
        %v338 = vld [vmem:[%s187 + $0x348] sm:$0xff]
        %v339 = vld [vmem:[%s187 + $0x350] sm:$0xff]
        %v340 = vld [vmem:[%s187 + $0x358] sm:$0xff]
        %v341 = vld [vmem:[%s187 + $0x360] sm:$0xff]
        %v342 = vld [vmem:[%s187 + $0x368] sm:$0xff]
        %v343 = vld [vmem:[%s187 + $0x370] sm:$0xff]
        %v344 = vld [vmem:[%s187 + $0x378] sm:$0xff]
        %v345 = vld [vmem:[%s187 + $0x380] sm:$0xff]
        %v346 = vld [vmem:[%s187 + $0x388] sm:$0xff]
        %v347 = vld [vmem:[%s187 + $0x390] sm:$0xff]
        %v348 = vld [vmem:[%s187 + $0x398] sm:$0xff]
        %v349 = vld [vmem:[%s187 + $0x3a0] sm:$0xff]
        %v350 = vld [vmem:[%s187 + $0x3a8] sm:$0xff]
        %v351 = vld [vmem:[%s187 + $0x3b0] sm:$0xff]
        %v352 = vld [vmem:[%s187 + $0x3b8] sm:$0xff]
        %v353 = vld [vmem:[%s187 + $0x3c0] sm:$0xff]
        %v354 = vld [vmem:[%s187 + $0x3c8] sm:$0xff]
        %v355 = vld [vmem:[%s187 + $0x3d0] sm:$0xff]
        %v356 = vld [vmem:[%s187 + $0x3d8] sm:$0xff]
        %v357 = vld [vmem:[%s187 + $0x3e0] sm:$0xff]
        %v358 = vld [vmem:[%s187 + $0x3e8] sm:$0xff]
        %v359 = vld [vmem:[%s187 + $0x3f0] sm:$0xff]
        %v360 = vld [vmem:[%s187 + $0x3f8] sm:$0xff]
        %v361 = vld [vmem:[%s187 + $0x400] sm:$0xff]
        %v362 = vld [vmem:[%s187 + $0x408] sm:$0xff]
        %v363 = vld [vmem:[%s187 + $0x410] sm:$0xff]
        %v364 = vld [vmem:[%s187 + $0x418] sm:$0xff]
        %v365 = vld [vmem:[%s187 + $0x420] sm:$0xff]
        %v366 = vld [vmem:[%s187 + $0x428] sm:$0xff]
        %v367 = vld [vmem:[%s187 + $0x430] sm:$0xff]
        %v368 = vld [vmem:[%s187 + $0x438] sm:$0xff]
        %v369 = vld [vmem:[%s187 + $0x440] sm:$0xff]
        %v370 = vld [vmem:[%s187 + $0x448] sm:$0xff]
        %v371 = vld [vmem:[%s187 + $0x450] sm:$0xff]
        %v372 = vld [vmem:[%s187 + $0x458] sm:$0xff]
        %v373 = vld [vmem:[%s187 + $0x460] sm:$0xff]
        %v374 = vld [vmem:[%s187 + $0x468] sm:$0xff]
        %v375 = vld [vmem:[%s187 + $0x470] sm:$0xff]
        %v376 = vld [vmem:[%s187 + $0x478] sm:$0xff]
        %v377 = vld [vmem:[%s187 + $0x480] sm:$0xff]
        %v378 = vld [vmem:[%s187 + $0x488] sm:$0xff]
        %v379 = vld [vmem:[%s187 + $0x490] sm:$0xff]
        %v380 = vld [vmem:[%s187 + $0x498] sm:$0xff]
        %v381 = vld [vmem:[%s187 + $0x4a0] sm:$0xff]
        %v382 = vld [vmem:[%s187 + $0x4a8] sm:$0xff]
        %v383 = vld [vmem:[%s187 + $0x4b0] sm:$0xff]
        %v384 = vld [vmem:[%s187 + $0x4b8] sm:$0xff]
        %v385 = vld [vmem:[%s187 + $0x4c0] sm:$0xff]
        %v386 = vld [vmem:[%s187 + $0x4c8] sm:$0xff]
        %v387 = vld [vmem:[%s187 + $0x4d0] sm:$0xff]
        %v388 = vld [vmem:[%s187 + $0x4d8] sm:$0xff]
        %v389 = vld [vmem:[%s187 + $0x4e0] sm:$0xff]
        %v390 = vld [vmem:[%s187 + $0x4e8] sm:$0xff]
        %v391 = vld [vmem:[%s187 + $0x4f0] sm:$0xff]
        %v392 = vld [vmem:[%s187 + $0x4f8] sm:$0xff]
        %v393 = vld [vmem:[%s187 + $0x500] sm:$0xff]
        %v394 = vld [vmem:[%s187 + $0x508] sm:$0xff]
        %v395 = vld [vmem:[%s187 + $0x510] sm:$0xff]
        %v396 = vld [vmem:[%s187 + $0x518] sm:$0xff]
        %v397 = vld [vmem:[%s187 + $0x520] sm:$0xff]
        %v398 = vld [vmem:[%s187 + $0x528] sm:$0xff]
        %v399 = vld [vmem:[%s187 + $0x530] sm:$0xff]
        %v400 = vld [vmem:[%s187 + $0x538] sm:$0xff]
        %v401 = vld [vmem:[%s187 + $0x540] sm:$0xff]
        %v402 = vld [vmem:[%s187 + $0x548] sm:$0xff]
        %v403 = vld [vmem:[%s187 + $0x550] sm:$0xff]
        %v404 = vld [vmem:[%s187 + $0x558] sm:$0xff]
        %v405 = vld [vmem:[%s187 + $0x560] sm:$0xff]
        %v406 = vld [vmem:[%s187 + $0x568] sm:$0xff]
        %v407 = vld [vmem:[%s187 + $0x570] sm:$0xff]
        %v408 = vld [vmem:[%s187 + $0x578] sm:$0xff]
        %v409 = vld [vmem:[%s187 + $0x580] sm:$0xff]
        %v410 = vld [vmem:[%s187 + $0x588] sm:$0xff]
        %v411 = vld [vmem:[%s187 + $0x590] sm:$0xff]
        %v412 = vld [vmem:[%s187 + $0x598] sm:$0xff]
        %v413 = vld [vmem:[%s187 + $0x5a0] sm:$0xff]
        %v414 = vld [vmem:[%s187 + $0x5a8] sm:$0xff]
        %v415 = vld [vmem:[%s187 + $0x5b0] sm:$0xff]
        %v416 = vld [vmem:[%s187 + $0x5b8] sm:$0xff]
        %v417 = vld [vmem:[%s187 + $0x5c0] sm:$0xff]
        %v418 = vld [vmem:[%s187 + $0x5c8] sm:$0xff]
        %v419 = vld [vmem:[%s187 + $0x5d0] sm:$0xff]
        %v420 = vld [vmem:[%s187 + $0x5d8] sm:$0xff]
        %v421 = vld [vmem:[%s187 + $0x5e0] sm:$0xff]
        %v422 = vld [vmem:[%s187 + $0x5e8] sm:$0xff]
        %v423 = vld [vmem:[%s187 + $0x5f0] sm:$0xff]
        %v424 = vld [vmem:[%s187 + $0x5f8] sm:$0xff]
        %v425 = vld [vmem:[%s187 + $0x600] sm:$0xff]
        %v426 = vld [vmem:[%s187 + $0x608] sm:$0xff]
        %v427 = vld [vmem:[%s187 + $0x610] sm:$0xff]
        %v428 = vld [vmem:[%s187 + $0x618] sm:$0xff]
        %v429 = vld [vmem:[%s187 + $0x620] sm:$0xff]
        %v430 = vld [vmem:[%s187 + $0x628] sm:$0xff]
        %v431 = vld [vmem:[%s187 + $0x630] sm:$0xff]
        %v432 = vld [vmem:[%s187 + $0x638] sm:$0xff]
        %v433 = vld [vmem:[%s187 + $0x640] sm:$0xff]
        %v434 = vld [vmem:[%s187 + $0x648] sm:$0xff]
        %v435 = vld [vmem:[%s187 + $0x650] sm:$0xff]
        %v436 = vld [vmem:[%s187 + $0x658] sm:$0xff]
        %v437 = vld [vmem:[%s187 + $0x660] sm:$0xff]
        %v438 = vld [vmem:[%s187 + $0x668] sm:$0xff]
        %v439 = vld [vmem:[%s187 + $0x670] sm:$0xff]
        %v440 = vld [vmem:[%s187 + $0x678] sm:$0xff]
        %v441 = vld [vmem:[%s187 + $0x680] sm:$0xff]
        %v442 = vld [vmem:[%s187 + $0x688] sm:$0xff]
        %v443 = vld [vmem:[%s187 + $0x690] sm:$0xff]
        %v444 = vld [vmem:[%s187 + $0x698] sm:$0xff]
        %v445 = vld [vmem:[%s187 + $0x6a0] sm:$0xff]
        %v446 = vld [vmem:[%s187 + $0x6a8] sm:$0xff]
        %v447 = vld [vmem:[%s187 + $0x6b0] sm:$0xff]
        %v448 = vld [vmem:[%s187 + $0x6b8] sm:$0xff]
        %v449 = vld [vmem:[%s187 + $0x6c0] sm:$0xff]
        %v450 = vld [vmem:[%s187 + $0x6c8] sm:$0xff]
        %v451 = vld [vmem:[%s187 + $0x6d0] sm:$0xff]
        %v452 = vld [vmem:[%s187 + $0x6d8] sm:$0xff]
        %v453 = vld [vmem:[%s187 + $0x6e0] sm:$0xff]
        %v454 = vld [vmem:[%s187 + $0x6e8] sm:$0xff]
        %v455 = vld [vmem:[%s187 + $0x6f0] sm:$0xff]
        %v456 = vld [vmem:[%s187 + $0x6f8] sm:$0xff]
        %v457 = vld [vmem:[%s187 + $0x700] sm:$0xff]
        %v458 = vld [vmem:[%s187 + $0x708] sm:$0xff]
        %v459 = vld [vmem:[%s187 + $0x710] sm:$0xff]
        %v460 = vld [vmem:[%s187 + $0x718] sm:$0xff]
        %v461 = vld [vmem:[%s187 + $0x720] sm:$0xff]
        %v462 = vld [vmem:[%s187 + $0x728] sm:$0xff]
        %v463 = vld [vmem:[%s187 + $0x730] sm:$0xff]
        %v464 = vld [vmem:[%s187 + $0x738] sm:$0xff]
        %v465 = vld [vmem:[%s187 + $0x740] sm:$0xff]
        %v466 = vld [vmem:[%s187 + $0x748] sm:$0xff]
        %v467 = vld [vmem:[%s187 + $0x750] sm:$0xff]
        %v468 = vld [vmem:[%s187 + $0x758] sm:$0xff]
        %v469 = vld [vmem:[%s187 + $0x760] sm:$0xff]
        %v470 = vld [vmem:[%s187 + $0x768] sm:$0xff]
        %v471 = vld [vmem:[%s187 + $0x770] sm:$0xff]
        %v472 = vld [vmem:[%s187 + $0x778] sm:$0xff]
        %v473 = vld [vmem:[%s187 + $0x780] sm:$0xff]
        %v474 = vld [vmem:[%s187 + $0x788] sm:$0xff]
        %v475 = vld [vmem:[%s187 + $0x790] sm:$0xff]
        %v476 = vld [vmem:[%s187 + $0x798] sm:$0xff]
        %v477 = vld [vmem:[%s187 + $0x7a0] sm:$0xff]
        %v478 = vld [vmem:[%s187 + $0x7a8] sm:$0xff]
        %v479 = vld [vmem:[%s187 + $0x7b0] sm:$0xff]
        %v480 = vld [vmem:[%s187 + $0x7b8] sm:$0xff]
        %v481 = vld [vmem:[%s187 + $0x7c0] sm:$0xff]
        %v482 = vld [vmem:[%s187 + $0x7c8] sm:$0xff]
        %v483 = vld [vmem:[%s187 + $0x7d0] sm:$0xff]
        %v484 = vld [vmem:[%s187 + $0x7d8] sm:$0xff]
        %v485 = vld [vmem:[%s187 + $0x7e0] sm:$0xff]
        %v486 = vld [vmem:[%s187 + $0x7e8] sm:$0xff]
        %v487 = vld [vmem:[%s187 + $0x7f0] sm:$0xff]
        %v488 = vld [vmem:[%s187 + $0x7f8] sm:$0xff]
        %v489 = vld [vmem:[%s187 + $0x800] sm:$0xff]
        %v490 = vld [vmem:[%s187 + $0x808] sm:$0xff]
        %v491 = vld [vmem:[%s187 + $0x810] sm:$0xff]
        %v492 = vld [vmem:[%s187 + $0x818] sm:$0xff]
        %v493 = vld [vmem:[%s187 + $0x820] sm:$0xff]
        %v494 = vld [vmem:[%s187 + $0x828] sm:$0xff]
        %v495 = vld [vmem:[%s187 + $0x830] sm:$0xff]
        %v496 = vld [vmem:[%s187 + $0x838] sm:$0xff]
        %v497 = vld [vmem:[%s187 + $0x840] sm:$0xff]
        %v498 = vld [vmem:[%s187 + $0x848] sm:$0xff]
        %v499 = vld [vmem:[%s187 + $0x850] sm:$0xff]
        %v500 = vld [vmem:[%s187 + $0x858] sm:$0xff]
        %v501 = vld [vmem:[%s187 + $0x860] sm:$0xff]
        %v502 = vld [vmem:[%s187 + $0x868] sm:$0xff]
        %v503 = vld [vmem:[%s187 + $0x870] sm:$0xff]
        %v504 = vld [vmem:[%s187 + $0x878] sm:$0xff]
        %v505 = vld [vmem:[%s187 + $0x880] sm:$0xff]
        %v506 = vld [vmem:[%s187 + $0x888] sm:$0xff]
        %v507 = vld [vmem:[%s187 + $0x890] sm:$0xff]
        %v508 = vld [vmem:[%s187 + $0x898] sm:$0xff]
        %v509 = vld [vmem:[%s187 + $0x8a0] sm:$0xff]
        %v510 = vld [vmem:[%s187 + $0x8a8] sm:$0xff]
        %v511 = vld [vmem:[%s187 + $0x8b0] sm:$0xff]
        %v512 = vld [vmem:[%s187 + $0x8b8] sm:$0xff]
        %v513 = vld [vmem:[%s187 + $0x8c0] sm:$0xff]
        %v514 = vld [vmem:[%s187 + $0x8c8] sm:$0xff]
        %v515 = vld [vmem:[%s187 + $0x8d0] sm:$0xff]
        %v516 = vld [vmem:[%s187 + $0x8d8] sm:$0xff]
        %v517 = vld [vmem:[%s187 + $0x8e0] sm:$0xff]
        %v518 = vld [vmem:[%s187 + $0x8e8] sm:$0xff]
        %v519 = vld [vmem:[%s187 + $0x8f0] sm:$0xff]
        %v520 = vld [vmem:[%s187 + $0x8f8] sm:$0xff]
        %v521 = vld [vmem:[%s187 + $0x900] sm:$0xff]
        %v522 = vld [vmem:[%s187 + $0x908] sm:$0xff]
        %v523 = vld [vmem:[%s187 + $0x910] sm:$0xff]
        %v524 = vld [vmem:[%s187 + $0x918] sm:$0xff]
        %v525 = vld [vmem:[%s187 + $0x920] sm:$0xff]
        %v526 = vld [vmem:[%s187 + $0x928] sm:$0xff]
        %v527 = vld [vmem:[%s187 + $0x930] sm:$0xff]
        %v528 = vld [vmem:[%s187 + $0x938] sm:$0xff]
        %v529 = vld [vmem:[%s187 + $0x940] sm:$0xff]
        %v530 = vld [vmem:[%s187 + $0x948] sm:$0xff]
        %v531 = vld [vmem:[%s187 + $0x950] sm:$0xff]
        %v532 = vld [vmem:[%s187 + $0x958] sm:$0xff]
        %v533 = vld [vmem:[%s187 + $0x960] sm:$0xff]
        %v534 = vld [vmem:[%s187 + $0x968] sm:$0xff]
        %v535 = vld [vmem:[%s187 + $0x970] sm:$0xff]
        %v536 = vld [vmem:[%s187 + $0x978] sm:$0xff]
        %v537 = vld [vmem:[%s187 + $0x980] sm:$0xff]
        %v538 = vld [vmem:[%s187 + $0x988] sm:$0xff]
        %v539 = vld [vmem:[%s187 + $0x990] sm:$0xff]
        %v540 = vld [vmem:[%s187 + $0x998] sm:$0xff]
        %v541 = vld [vmem:[%s187 + $0x9a0] sm:$0xff]
        %v542 = vld [vmem:[%s187 + $0x9a8] sm:$0xff]
        %v543 = vld [vmem:[%s187 + $0x9b0] sm:$0xff]
        %v544 = vld [vmem:[%s187 + $0x9b8] sm:$0xff]
        %v545 = vld [vmem:[%s187 + $0x9c0] sm:$0xff]
        %v546 = vld [vmem:[%s187 + $0x9c8] sm:$0xff]
        %v547 = vld [vmem:[%s187 + $0x9d0] sm:$0xff]
        %v548 = vld [vmem:[%s187 + $0x9d8] sm:$0xff]
        %v549 = vld [vmem:[%s187 + $0x9e0] sm:$0xff]
        %v550 = vld [vmem:[%s187 + $0x9e8] sm:$0xff]
        %v551 = vld [vmem:[%s187 + $0x9f0] sm:$0xff]
        %v552 = vld [vmem:[%s187 + $0x9f8] sm:$0xff]
        %v553 = vld [vmem:[%s187 + $0xa00] sm:$0xff]
        %v554 = vld [vmem:[%s187 + $0xa08] sm:$0xff]
        %v555 = vld [vmem:[%s187 + $0xa10] sm:$0xff]
        %v556 = vld [vmem:[%s187 + $0xa18] sm:$0xff]
        %v557 = vld [vmem:[%s187 + $0xa20] sm:$0xff]
        %v558 = vld [vmem:[%s187 + $0xa28] sm:$0xff]
        %v559 = vld [vmem:[%s187 + $0xa30] sm:$0xff]
        %v560 = vld [vmem:[%s187 + $0xa38] sm:$0xff]
        %v561 = vld [vmem:[%s187 + $0xa40] sm:$0xff]
        %v562 = vld [vmem:[%s187 + $0xa48] sm:$0xff]
        %v563 = vld [vmem:[%s187 + $0xa50] sm:$0xff]
        %v564 = vld [vmem:[%s187 + $0xa58] sm:$0xff]
        %v565 = vld [vmem:[%s187 + $0xa60] sm:$0xff]
        %v566 = vld [vmem:[%s187 + $0xa68] sm:$0xff]
        %v567 = vld [vmem:[%s187 + $0xa70] sm:$0xff]
        %v568 = vld [vmem:[%s187 + $0xa78] sm:$0xff]
        %v569 = vld [vmem:[%s187 + $0xa80] sm:$0xff]
        %v570 = vld [vmem:[%s187 + $0xa88] sm:$0xff]
        %v571 = vld [vmem:[%s187 + $0xa90] sm:$0xff]
        %v572 = vld [vmem:[%s187 + $0xa98] sm:$0xff]
        %v573 = vld [vmem:[%s187 + $0xaa0] sm:$0xff]
        %v574 = vld [vmem:[%s187 + $0xaa8] sm:$0xff]
        %v575 = vld [vmem:[%s187 + $0xab0] sm:$0xff]
        %v576 = vld [vmem:[%s187 + $0xab8] sm:$0xff]
        %v577 = vld [vmem:[%s187 + $0xac0] sm:$0xff]
        %v578 = vld [vmem:[%s187 + $0xac8] sm:$0xff]
        %v579 = vld [vmem:[%s187 + $0xad0] sm:$0xff]
        %v580 = vld [vmem:[%s187 + $0xad8] sm:$0xff]
        %v581 = vld [vmem:[%s187 + $0xae0] sm:$0xff]
        %v582 = vld [vmem:[%s187 + $0xae8] sm:$0xff]
        %v583 = vld [vmem:[%s187 + $0xaf0] sm:$0xff]
        %v584 = vld [vmem:[%s187 + $0xaf8] sm:$0xff]
        %v585 = vld [vmem:[%s187 + $0xb00] sm:$0xff]
        %v586 = vld [vmem:[%s187 + $0xb08] sm:$0xff]
        %v587 = vld [vmem:[%s187 + $0xb10] sm:$0xff]
        %v588 = vld [vmem:[%s187 + $0xb18] sm:$0xff]
        %v589 = vld [vmem:[%s187 + $0xb20] sm:$0xff]
        %v590 = vld [vmem:[%s187 + $0xb28] sm:$0xff]
        %v591 = vld [vmem:[%s187 + $0xb30] sm:$0xff]
        %v592 = vld [vmem:[%s187 + $0xb38] sm:$0xff]
        %v593 = vld [vmem:[%s187 + $0xb40] sm:$0xff]
        %v594 = vld [vmem:[%s187 + $0xb48] sm:$0xff]
        %v595 = vld [vmem:[%s187 + $0xb50] sm:$0xff]
        %v596 = vld [vmem:[%s187 + $0xb58] sm:$0xff]
        %v597 = vld [vmem:[%s187 + $0xb60] sm:$0xff]
        %v598 = vld [vmem:[%s187 + $0xb68] sm:$0xff]
        %v599 = vld [vmem:[%s187 + $0xb70] sm:$0xff]
        %v600 = vld [vmem:[%s187 + $0xb78] sm:$0xff]
        %v601 = vld [vmem:[%s187 + $0xb80] sm:$0xff]
        %v602 = vld [vmem:[%s187 + $0xb88] sm:$0xff]
        %v603 = vld [vmem:[%s187 + $0xb90] sm:$0xff]
        %v604 = vld [vmem:[%s187 + $0xb98] sm:$0xff]
        %v605 = vld [vmem:[%s187 + $0xba0] sm:$0xff]
        %v606 = vld [vmem:[%s187 + $0xba8] sm:$0xff]
        %v607 = vld [vmem:[%s187 + $0xbb0] sm:$0xff]
        %v608 = vld [vmem:[%s187 + $0xbb8] sm:$0xff]
        %v609 = vld [vmem:[%s187 + $0xbc0] sm:$0xff]
        %v610 = vld [vmem:[%s187 + $0xbc8] sm:$0xff]
        %v611 = vld [vmem:[%s187 + $0xbd0] sm:$0xff]
        %v612 = vld [vmem:[%s187 + $0xbd8] sm:$0xff]
        %v613 = vld [vmem:[%s187 + $0xbe0] sm:$0xff]
        %v614 = vld [vmem:[%s187 + $0xbe8] sm:$0xff]
        %v615 = vld [vmem:[%s187 + $0xbf0] sm:$0xff]
        %v616 = vld [vmem:[%s187 + $0xbf8] sm:$0xff]
        %v617 = vld [vmem:[%s187 + $0xc00] sm:$0xff]
        %v618 = vld [vmem:[%s187 + $0xc08] sm:$0xff]
        %v619 = vld [vmem:[%s187 + $0xc10] sm:$0xff]
        %v620 = vld [vmem:[%s187 + $0xc18] sm:$0xff]
        %v621 = vld [vmem:[%s187 + $0xc20] sm:$0xff]
        %v622 = vld [vmem:[%s187 + $0xc28] sm:$0xff]
        %v623 = vld [vmem:[%s187 + $0xc30] sm:$0xff]
        %v624 = vld [vmem:[%s187 + $0xc38] sm:$0xff]
        %v625 = vld [vmem:[%s187 + $0xc40] sm:$0xff]
        %v626 = vld [vmem:[%s187 + $0xc48] sm:$0xff]
        %v627 = vld [vmem:[%s187 + $0xc50] sm:$0xff]
        %v628 = vld [vmem:[%s187 + $0xc58] sm:$0xff]
        %v629 = vld [vmem:[%s187 + $0xc60] sm:$0xff]
        %v630 = vld [vmem:[%s187 + $0xc68] sm:$0xff]
        %v631 = vld [vmem:[%s187 + $0xc70] sm:$0xff]
        %v632 = vld [vmem:[%s187 + $0xc78] sm:$0xff]
        %v633 = vld [vmem:[%s187 + $0xc80] sm:$0xff]
        %v634 = vld [vmem:[%s187 + $0xc88] sm:$0xff]
        %v635 = vld [vmem:[%s187 + $0xc90] sm:$0xff]
        %v636 = vld [vmem:[%s187 + $0xc98] sm:$0xff]
        %v637 = vld [vmem:[%s187 + $0xca0] sm:$0xff]
        %v638 = vld [vmem:[%s187 + $0xca8] sm:$0xff]
        %v639 = vld [vmem:[%s187 + $0xcb0] sm:$0xff]
        %v640 = vld [vmem:[%s187 + $0xcb8] sm:$0xff]
        %v641 = vld [vmem:[%s187 + $0xcc0] sm:$0xff]
        %v642 = vld [vmem:[%s187 + $0xcc8] sm:$0xff]
        %v643 = vld [vmem:[%s187 + $0xcd0] sm:$0xff]
        %v644 = vld [vmem:[%s187 + $0xcd8] sm:$0xff]
        %v645 = vld [vmem:[%s187 + $0xce0] sm:$0xff]
        %v646 = vld [vmem:[%s187 + $0xce8] sm:$0xff]
        %v647 = vld [vmem:[%s187 + $0xcf0] sm:$0xff]
        %v648 = vld [vmem:[%s187 + $0xcf8] sm:$0xff]
        %v649 = vld [vmem:[%s187 + $0xd00] sm:$0xff]
        %v650 = vld [vmem:[%s187 + $0xd08] sm:$0xff]
        %v651 = vld [vmem:[%s187 + $0xd10] sm:$0xff]
        %v652 = vld [vmem:[%s187 + $0xd18] sm:$0xff]
        %v653 = vld [vmem:[%s187 + $0xd20] sm:$0xff]
        %v654 = vld [vmem:[%s187 + $0xd28] sm:$0xff]
        %v655 = vld [vmem:[%s187 + $0xd30] sm:$0xff]
        %v656 = vld [vmem:[%s187 + $0xd38] sm:$0xff]
        %v657 = vld [vmem:[%s187 + $0xd40] sm:$0xff]
        %v658 = vld [vmem:[%s187 + $0xd48] sm:$0xff]
        %v659 = vld [vmem:[%s187 + $0xd50] sm:$0xff]
        %v660 = vld [vmem:[%s187 + $0xd58] sm:$0xff]
        %v661 = vld [vmem:[%s187 + $0xd60] sm:$0xff]
        %v662 = vld [vmem:[%s187 + $0xd68] sm:$0xff]
        %v663 = vld [vmem:[%s187 + $0xd70] sm:$0xff]
        %v664 = vld [vmem:[%s187 + $0xd78] sm:$0xff]
        %v665 = vld [vmem:[%s187 + $0xd80] sm:$0xff]
        %v666 = vld [vmem:[%s187 + $0xd88] sm:$0xff]
        %v667 = vld [vmem:[%s187 + $0xd90] sm:$0xff]
        %v668 = vld [vmem:[%s187 + $0xd98] sm:$0xff]
        %v669 = vld [vmem:[%s187 + $0xda0] sm:$0xff]
        %v670 = vld [vmem:[%s187 + $0xda8] sm:$0xff]
        %v671 = vld [vmem:[%s187 + $0xdb0] sm:$0xff]
        %v672 = vld [vmem:[%s187 + $0xdb8] sm:$0xff]
        %v673 = vld [vmem:[%s187 + $0xdc0] sm:$0xff]
        %v674 = vld [vmem:[%s187 + $0xdc8] sm:$0xff]
        %v675 = vld [vmem:[%s187 + $0xdd0] sm:$0xff]
        %v676 = vld [vmem:[%s187 + $0xdd8] sm:$0xff]
        %v677 = vld [vmem:[%s187 + $0xde0] sm:$0xff]
        %v678 = vld [vmem:[%s187 + $0xde8] sm:$0xff]
        %v679 = vld [vmem:[%s187 + $0xdf0] sm:$0xff]
        %v680 = vld [vmem:[%s187 + $0xdf8] sm:$0xff]
        %v681 = vld [vmem:[%s187 + $0xe00] sm:$0xff]
        %v682 = vld [vmem:[%s187 + $0xe08] sm:$0xff]
        %v683 = vld [vmem:[%s187 + $0xe10] sm:$0xff]
        %v684 = vld [vmem:[%s187 + $0xe18] sm:$0xff]
        %v685 = vld [vmem:[%s187 + $0xe20] sm:$0xff]
        %v686 = vld [vmem:[%s187 + $0xe28] sm:$0xff]
        %v687 = vld [vmem:[%s187 + $0xe30] sm:$0xff]
        %v688 = vld [vmem:[%s187 + $0xe38] sm:$0xff]
        %v689 = vld [vmem:[%s187 + $0xe40] sm:$0xff]
        %v690 = vld [vmem:[%s187 + $0xe48] sm:$0xff]
        %v691 = vld [vmem:[%s187 + $0xe50] sm:$0xff]
        %v692 = vld [vmem:[%s187 + $0xe58] sm:$0xff]
        %v693 = vld [vmem:[%s187 + $0xe60] sm:$0xff]
        %v694 = vld [vmem:[%s187 + $0xe68] sm:$0xff]
        %v695 = vld [vmem:[%s187 + $0xe70] sm:$0xff]
        %v696 = vld [vmem:[%s187 + $0xe78] sm:$0xff]
        %v697 = vld [vmem:[%s187 + $0xe80] sm:$0xff]
        %v698 = vld [vmem:[%s187 + $0xe88] sm:$0xff]
        %v699 = vld [vmem:[%s187 + $0xe90] sm:$0xff]
        %v700 = vld [vmem:[%s187 + $0xe98] sm:$0xff]
        %v701 = vld [vmem:[%s187 + $0xea0] sm:$0xff]
        %v702 = vld [vmem:[%s187 + $0xea8] sm:$0xff]
        %v703 = vld [vmem:[%s187 + $0xeb0] sm:$0xff]
        %v704 = vld [vmem:[%s187 + $0xeb8] sm:$0xff]
        %v705 = vld [vmem:[%s187 + $0xec0] sm:$0xff]
        %v706 = vld [vmem:[%s187 + $0xec8] sm:$0xff]
        %v707 = vld [vmem:[%s187 + $0xed0] sm:$0xff]
        %v708 = vld [vmem:[%s187 + $0xed8] sm:$0xff]
        %v709 = vld [vmem:[%s187 + $0xee0] sm:$0xff]
        %v710 = vld [vmem:[%s187 + $0xee8] sm:$0xff]
        %v711 = vld [vmem:[%s187 + $0xef0] sm:$0xff]
        %v712 = vld [vmem:[%s187 + $0xef8] sm:$0xff]
        %v713 = vld [vmem:[%s187 + $0xf00] sm:$0xff]
        %v714 = vld [vmem:[%s187 + $0xf08] sm:$0xff]
        %v715 = vld [vmem:[%s187 + $0xf10] sm:$0xff]
        %v716 = vld [vmem:[%s187 + $0xf18] sm:$0xff]
        %v717 = vld [vmem:[%s187 + $0xf20] sm:$0xff]
        %v718 = vld [vmem:[%s187 + $0xf28] sm:$0xff]
        %v719 = vld [vmem:[%s187 + $0xf30] sm:$0xff]
        %v720 = vld [vmem:[%s187 + $0xf38] sm:$0xff]
        %v721 = vld [vmem:[%s187 + $0xf40] sm:$0xff]
        %v722 = vld [vmem:[%s187 + $0xf48] sm:$0xff]
        %v723 = vld [vmem:[%s187 + $0xf50] sm:$0xff]
        %v724 = vld [vmem:[%s187 + $0xf58] sm:$0xff]
        %v725 = vld [vmem:[%s187 + $0xf60] sm:$0xff]
        %v726 = vld [vmem:[%s187 + $0xf68] sm:$0xff]
        %v727 = vld [vmem:[%s187 + $0xf70] sm:$0xff]
        %v728 = vld [vmem:[%s187 + $0xf78] sm:$0xff]
        %v729 = vld [vmem:[%s187 + $0xf80] sm:$0xff]
        %v730 = vld [vmem:[%s187 + $0xf88] sm:$0xff]
        %v731 = vld [vmem:[%s187 + $0xf90] sm:$0xff]
        %v732 = vld [vmem:[%s187 + $0xf98] sm:$0xff]
        %v733 = vld [vmem:[%s187 + $0xfa0] sm:$0xff]
        %v734 = vld [vmem:[%s187 + $0xfa8] sm:$0xff]
        %v735 = vld [vmem:[%s187 + $0xfb0] sm:$0xff]
        %v736 = vld [vmem:[%s187 + $0xfb8] sm:$0xff]
        %v737 = vld [vmem:[%s187 + $0xfc0] sm:$0xff]
        %v738 = vld [vmem:[%s187 + $0xfc8] sm:$0xff]
        %v739 = vld [vmem:[%s187 + $0xfd0] sm:$0xff]
        %v740 = vld [vmem:[%s187 + $0xfd8] sm:$0xff]
        %v741 = vld [vmem:[%s187 + $0xfe0] sm:$0xff]
        %v742 = vld [vmem:[%s187 + $0xfe8] sm:$0xff]
        %v743 = vld [vmem:[%s187 + $0xff0] sm:$0xff]
        %v744 = vld [vmem:[%s187 + $0xff8] sm:$0xff]
        %v745 = vld [vmem:[%s187 + $0x1000] sm:$0xff]
        %v746 = vld [vmem:[%s187 + $0x1008] sm:$0xff]
        %v747 = vld [vmem:[%s187 + $0x1010] sm:$0xff]
        %v748 = vld [vmem:[%s187 + $0x1018] sm:$0xff]
        %v749 = vld [vmem:[%s187 + $0x1020] sm:$0xff]
        %v750 = vld [vmem:[%s187 + $0x1028] sm:$0xff]
        %v751 = vld [vmem:[%s187 + $0x1030] sm:$0xff]
        %v752 = vld [vmem:[%s187 + $0x1038] sm:$0xff]
        %v753 = vld [vmem:[%s187 + $0x1040] sm:$0xff]
        %v754 = vld [vmem:[%s187 + $0x1048] sm:$0xff]
        %v755 = vld [vmem:[%s187 + $0x1050] sm:$0xff]
        %v756 = vld [vmem:[%s187 + $0x1058] sm:$0xff]
        %v757 = vld [vmem:[%s187 + $0x1060] sm:$0xff]
        %v758 = vld [vmem:[%s187 + $0x1068] sm:$0xff]
        %v759 = vld [vmem:[%s187 + $0x1070] sm:$0xff]
        %v760 = vld [vmem:[%s187 + $0x1078] sm:$0xff]
        %v761 = vld [vmem:[%s187 + $0x1080] sm:$0xff]
        %v762 = vld [vmem:[%s187 + $0x1088] sm:$0xff]
        %v763 = vld [vmem:[%s187 + $0x1090] sm:$0xff]
        %v764 = vld [vmem:[%s187 + $0x1098] sm:$0xff]
        %v765 = vld [vmem:[%s187 + $0x10a0] sm:$0xff]
        %v766 = vld [vmem:[%s187 + $0x10a8] sm:$0xff]
        %v767 = vld [vmem:[%s187 + $0x10b0] sm:$0xff]
        %v768 = vld [vmem:[%s187 + $0x10b8] sm:$0xff]
        %v769 = vld [vmem:[%s187 + $0x10c0] sm:$0xff]
        %v770 = vld [vmem:[%s187 + $0x10c8] sm:$0xff]
        %v771 = vld [vmem:[%s187 + $0x10d0] sm:$0xff]
        %v772 = vld [vmem:[%s187 + $0x10d8] sm:$0xff]
        %v773 = vld [vmem:[%s187 + $0x10e0] sm:$0xff]
        %v774 = vld [vmem:[%s187 + $0x10e8] sm:$0xff]
        %v775 = vld [vmem:[%s187 + $0x10f0] sm:$0xff]
        %v776 = vld [vmem:[%s187 + $0x10f8] sm:$0xff]
        %v777 = vld [vmem:[%s187 + $0x1100] sm:$0xff]
        %v778 = vld [vmem:[%s187 + $0x1108] sm:$0xff]
        %v779 = vld [vmem:[%s187 + $0x1110] sm:$0xff]
        %v780 = vld [vmem:[%s187 + $0x1118] sm:$0xff]
        %v781 = vld [vmem:[%s187 + $0x1120] sm:$0xff]
        %v782 = vld [vmem:[%s187 + $0x1128] sm:$0xff]
        %v783 = vld [vmem:[%s187 + $0x1130] sm:$0xff]
        %v784 = vld [vmem:[%s187 + $0x1138] sm:$0xff]
        %v785 = vld [vmem:[%s187 + $0x1140] sm:$0xff]
        %v786 = vld [vmem:[%s187 + $0x1148] sm:$0xff]
        %v787 = vld [vmem:[%s187 + $0x1150] sm:$0xff]
        %v788 = vld [vmem:[%s187 + $0x1158] sm:$0xff]
        %v789 = vld [vmem:[%s187 + $0x1160] sm:$0xff]
        %v790 = vld [vmem:[%s187 + $0x1168] sm:$0xff]
        %v791 = vld [vmem:[%s187 + $0x1170] sm:$0xff]
        %v792 = vld [vmem:[%s187 + $0x1178] sm:$0xff]
        %v793 = vld [vmem:[%s187 + $0x1180] sm:$0xff]
        %v794 = vld [vmem:[%s187 + $0x1188] sm:$0xff]
        %v795 = vld [vmem:[%s187 + $0x1190] sm:$0xff]
        %v796 = vld [vmem:[%s187 + $0x1198] sm:$0xff]
        %v797 = vld [vmem:[%s187 + $0x11a0] sm:$0xff]
        %v798 = vld [vmem:[%s187 + $0x11a8] sm:$0xff]
        %v799 = vld [vmem:[%s187 + $0x11b0] sm:$0xff]
        %v800 = vld [vmem:[%s187 + $0x11b8] sm:$0xff]
        %v801 = vld [vmem:[%s187 + $0x11c0] sm:$0xff]
        %v802 = vld [vmem:[%s187 + $0x11c8] sm:$0xff]
        %v803 = vld [vmem:[%s187 + $0x11d0] sm:$0xff]
        %v804 = vld [vmem:[%s187 + $0x11d8] sm:$0xff]
        %v805 = vld [vmem:[%s187 + $0x11e0] sm:$0xff]
        %v806 = vld [vmem:[%s187 + $0x11e8] sm:$0xff]
        %v807 = vld [vmem:[%s187 + $0x11f0] sm:$0xff]
        %v808 = vld [vmem:[%s187 + $0x11f8] sm:$0xff]
        %v809 = vld [vmem:[%s187 + $0x1200] sm:$0xff]
        %v810 = vld [vmem:[%s187 + $0x1208] sm:$0xff]
        %v811 = vld [vmem:[%s187 + $0x1210] sm:$0xff]
        %v812 = vld [vmem:[%s187 + $0x1218] sm:$0xff]
        %v813 = vld [vmem:[%s187 + $0x1220] sm:$0xff]
        %v814 = vld [vmem:[%s187 + $0x1228] sm:$0xff]
        %v815 = vld [vmem:[%s187 + $0x1230] sm:$0xff]
        %v816 = vld [vmem:[%s187 + $0x1238] sm:$0xff]
        %v817 = vld [vmem:[%s187 + $0x1240] sm:$0xff]
        %v818 = vld [vmem:[%s187 + $0x1248] sm:$0xff]
        %v819 = vld [vmem:[%s187 + $0x1250] sm:$0xff]
        %v820 = vld [vmem:[%s187 + $0x1258] sm:$0xff]
        %v821 = vld [vmem:[%s187 + $0x1260] sm:$0xff]
        %v822 = vld [vmem:[%s187 + $0x1268] sm:$0xff]
        %v823 = vld [vmem:[%s187 + $0x1270] sm:$0xff]
        %v824 = vld [vmem:[%s187 + $0x1278] sm:$0xff]
        %v825 = vld [vmem:[%s187 + $0x1280] sm:$0xff]
        %v826 = vld [vmem:[%s187 + $0x1288] sm:$0xff]
        %v827 = vld [vmem:[%s187 + $0x1290] sm:$0xff]
        %v828 = vld [vmem:[%s187 + $0x1298] sm:$0xff]
        %v829 = vld [vmem:[%s187 + $0x12a0] sm:$0xff]
        %v830 = vld [vmem:[%s187 + $0x12a8] sm:$0xff]
        %v831 = vld [vmem:[%s187 + $0x12b0] sm:$0xff]
        %v832 = vld [vmem:[%s187 + $0x12b8] sm:$0xff]
        %v833 = vld [vmem:[%s187 + $0x12c0] sm:$0xff]
        %v834 = vld [vmem:[%s187 + $0x12c8] sm:$0xff]
        %v835 = vld [vmem:[%s187 + $0x12d0] sm:$0xff]
        %v836 = vld [vmem:[%s187 + $0x12d8] sm:$0xff]
        %v837 = vld [vmem:[%s187 + $0x12e0] sm:$0xff]
        %v838 = vld [vmem:[%s187 + $0x12e8] sm:$0xff]
        %v839 = vld [vmem:[%s187 + $0x12f0] sm:$0xff]
        %v840 = vld [vmem:[%s187 + $0x12f8] sm:$0xff]
        %v841 = vld [vmem:[%s187 + $0x1300] sm:$0xff]
        %v842 = vld [vmem:[%s187 + $0x1308] sm:$0xff]
        %v843 = vld [vmem:[%s187 + $0x1310] sm:$0xff]
        %v844 = vld [vmem:[%s187 + $0x1318] sm:$0xff]
        %v845 = vld [vmem:[%s187 + $0x1320] sm:$0xff]
        %v846 = vld [vmem:[%s187 + $0x1328] sm:$0xff]
        %v847 = vld [vmem:[%s187 + $0x1330] sm:$0xff]
        %v848 = vld [vmem:[%s187 + $0x1338] sm:$0xff]
        %v849 = vld [vmem:[%s187 + $0x1340] sm:$0xff]
        %v850 = vld [vmem:[%s187 + $0x1348] sm:$0xff]
        %v851 = vld [vmem:[%s187 + $0x1350] sm:$0xff]
        %v852 = vld [vmem:[%s187 + $0x1358] sm:$0xff]
        %v853 = vld [vmem:[%s187 + $0x1360] sm:$0xff]
        %v854 = vld [vmem:[%s187 + $0x1368] sm:$0xff]
        %v855 = vld [vmem:[%s187 + $0x1370] sm:$0xff]
        %v856 = vld [vmem:[%s187 + $0x1378] sm:$0xff]
        %v857 = vld [vmem:[%s187 + $0x1380] sm:$0xff]
        %v858 = vld [vmem:[%s187 + $0x1388] sm:$0xff]
        %v859 = vld [vmem:[%s187 + $0x1390] sm:$0xff]
        %v860 = vld [vmem:[%s187 + $0x1398] sm:$0xff]
        %v861 = vld [vmem:[%s187 + $0x13a0] sm:$0xff]
        %v862 = vld [vmem:[%s187 + $0x13a8] sm:$0xff]
        %v863 = vld [vmem:[%s187 + $0x13b0] sm:$0xff]
        %v864 = vld [vmem:[%s187 + $0x13b8] sm:$0xff]
        %v865 = vld [vmem:[%s187 + $0x13c0] sm:$0xff]
        %v866 = vld [vmem:[%s187 + $0x13c8] sm:$0xff]
        %v867 = vld [vmem:[%s187 + $0x13d0] sm:$0xff]
        %v868 = vld [vmem:[%s187 + $0x13d8] sm:$0xff]
        %v869 = vld [vmem:[%s187 + $0x13e0] sm:$0xff]
        %v870 = vld [vmem:[%s187 + $0x13e8] sm:$0xff]
        %v871 = vld [vmem:[%s187 + $0x13f0] sm:$0xff]
        %v872 = vld [vmem:[%s187 + $0x13f8] sm:$0xff]
        %v873 = vld [vmem:[%s187 + $0x1400] sm:$0xff]
        %v874 = vld [vmem:[%s187 + $0x1408] sm:$0xff]
        %v875 = vld [vmem:[%s187 + $0x1410] sm:$0xff]
        %v876 = vld [vmem:[%s187 + $0x1418] sm:$0xff]
        %v877 = vld [vmem:[%s187 + $0x1420] sm:$0xff]
        %v878 = vld [vmem:[%s187 + $0x1428] sm:$0xff]
        %v879 = vld [vmem:[%s187 + $0x1430] sm:$0xff]
        %v880 = vld [vmem:[%s187 + $0x1438] sm:$0xff]
        %v881 = vld [vmem:[%s187 + $0x1440] sm:$0xff]
        %v882 = vld [vmem:[%s187 + $0x1448] sm:$0xff]
        %v883 = vld [vmem:[%s187 + $0x1450] sm:$0xff]
        %v884 = vld [vmem:[%s187 + $0x1458] sm:$0xff]
        %v885 = vld [vmem:[%s187 + $0x1460] sm:$0xff]
        %v886 = vld [vmem:[%s187 + $0x1468] sm:$0xff]
        %v887 = vld [vmem:[%s187 + $0x1470] sm:$0xff]
        %v888 = vld [vmem:[%s187 + $0x1478] sm:$0xff]
        %v889 = vld [vmem:[%s187 + $0x1480] sm:$0xff]
        %v890 = vld [vmem:[%s187 + $0x1488] sm:$0xff]
        %v891 = vld [vmem:[%s187 + $0x1490] sm:$0xff]
        %v892 = vld [vmem:[%s187 + $0x1498] sm:$0xff]
        %v893 = vld [vmem:[%s187 + $0x14a0] sm:$0xff]
        %v894 = vld [vmem:[%s187 + $0x14a8] sm:$0xff]
        %v895 = vld [vmem:[%s187 + $0x14b0] sm:$0xff]
        %v896 = vld [vmem:[%s187 + $0x14b8] sm:$0xff]
        %v897 = vld [vmem:[%s187 + $0x14c0] sm:$0xff]
        %v898 = vld [vmem:[%s187 + $0x14c8] sm:$0xff]
        %v899 = vld [vmem:[%s187 + $0x14d0] sm:$0xff]
        %v900 = vld [vmem:[%s187 + $0x14d8] sm:$0xff]
        %v901 = vld [vmem:[%s187 + $0x14e0] sm:$0xff]
        %v902 = vld [vmem:[%s187 + $0x14e8] sm:$0xff]
        %v903 = vld [vmem:[%s187 + $0x14f0] sm:$0xff]
        %v904 = vld [vmem:[%s187 + $0x14f8] sm:$0xff]
        %v905 = vld [vmem:[%s187 + $0x1500] sm:$0xff]
        %v906 = vld [vmem:[%s187 + $0x1508] sm:$0xff]
        %v907 = vld [vmem:[%s187 + $0x1510] sm:$0xff]
        %v908 = vld [vmem:[%s187 + $0x1518] sm:$0xff]
        %v909 = vld [vmem:[%s187 + $0x1520] sm:$0xff]
        %v910 = vld [vmem:[%s187 + $0x1528] sm:$0xff]
        %v911 = vld [vmem:[%s187 + $0x1530] sm:$0xff]
        %v912 = vld [vmem:[%s187 + $0x1538] sm:$0xff]
        %v913 = vld [vmem:[%s187 + $0x1540] sm:$0xff]
        %v914 = vld [vmem:[%s187 + $0x1548] sm:$0xff]
        %v915 = vld [vmem:[%s187 + $0x1550] sm:$0xff]
        %v916 = vld [vmem:[%s187 + $0x1558] sm:$0xff]
        %v917 = vld [vmem:[%s187 + $0x1560] sm:$0xff]
        %v918 = vld [vmem:[%s187 + $0x1568] sm:$0xff]
        %v919 = vld [vmem:[%s187 + $0x1570] sm:$0xff]
        %v920 = vld [vmem:[%s187 + $0x1578] sm:$0xff]
        %v921 = vld [vmem:[%s187 + $0x1580] sm:$0xff]
        %v922 = vld [vmem:[%s187 + $0x1588] sm:$0xff]
        %v923 = vld [vmem:[%s187 + $0x1590] sm:$0xff]
        %v924 = vld [vmem:[%s187 + $0x1598] sm:$0xff]
        %v925 = vld [vmem:[%s187 + $0x15a0] sm:$0xff]
        %v926 = vld [vmem:[%s187 + $0x15a8] sm:$0xff]
        %v927 = vld [vmem:[%s187 + $0x15b0] sm:$0xff]
        %v928 = vld [vmem:[%s187 + $0x15b8] sm:$0xff]
        %v929 = vld [vmem:[%s187 + $0x15c0] sm:$0xff]
        %v930 = vld [vmem:[%s187 + $0x15c8] sm:$0xff]
        %v931 = vld [vmem:[%s187 + $0x15d0] sm:$0xff]
        %v932 = vld [vmem:[%s187 + $0x15d8] sm:$0xff]
        %v933 = vld [vmem:[%s187 + $0x15e0] sm:$0xff]
        %v934 = vld [vmem:[%s187 + $0x15e8] sm:$0xff]
        %v935 = vld [vmem:[%s187 + $0x15f0] sm:$0xff]
        %v936 = vld [vmem:[%s187 + $0x15f8] sm:$0xff]
        %v937 = vld [vmem:[%s187 + $0x1600] sm:$0xff]
        %v938 = vld [vmem:[%s187 + $0x1608] sm:$0xff]
        %v939 = vld [vmem:[%s187 + $0x1610] sm:$0xff]
        %v940 = vld [vmem:[%s187 + $0x1618] sm:$0xff]
        %v941 = vld [vmem:[%s187 + $0x1620] sm:$0xff]
        %v942 = vld [vmem:[%s187 + $0x1628] sm:$0xff]
        %v943 = vld [vmem:[%s187 + $0x1630] sm:$0xff]
        %v944 = vld [vmem:[%s187 + $0x1638] sm:$0xff]
        %v945 = vld [vmem:[%s187 + $0x1640] sm:$0xff]
        %v946 = vld [vmem:[%s187 + $0x1648] sm:$0xff]
        %v947 = vld [vmem:[%s187 + $0x1650] sm:$0xff]
        %v948 = vld [vmem:[%s187 + $0x1658] sm:$0xff]
        %v949 = vld [vmem:[%s187 + $0x1660] sm:$0xff]
        %v950 = vld [vmem:[%s187 + $0x1668] sm:$0xff]
        %v951 = vld [vmem:[%s187 + $0x1670] sm:$0xff]
        %v952 = vld [vmem:[%s187 + $0x1678] sm:$0xff]
        %v953 = vld [vmem:[%s187 + $0x1680] sm:$0xff]
        %v954 = vld [vmem:[%s187 + $0x1688] sm:$0xff]
        %v955 = vld [vmem:[%s187 + $0x1690] sm:$0xff]
        %v956 = vld [vmem:[%s187 + $0x1698] sm:$0xff]
        %v957 = vld [vmem:[%s187 + $0x16a0] sm:$0xff]
        %v958 = vld [vmem:[%s187 + $0x16a8] sm:$0xff]
        %v959 = vld [vmem:[%s187 + $0x16b0] sm:$0xff]
        %v960 = vld [vmem:[%s187 + $0x16b8] sm:$0xff]
        %v961 = vld [vmem:[%s187 + $0x16c0] sm:$0xff]
        %v962 = vld [vmem:[%s187 + $0x16c8] sm:$0xff]
        %v963 = vld [vmem:[%s187 + $0x16d0] sm:$0xff]
        %v964 = vld [vmem:[%s187 + $0x16d8] sm:$0xff]
        %v965 = vld [vmem:[%s187 + $0x16e0] sm:$0xff]
        %v966 = vld [vmem:[%s187 + $0x16e8] sm:$0xff]
        %v967 = vld [vmem:[%s187 + $0x16f0] sm:$0xff]
        %v968 = vld [vmem:[%s187 + $0x16f8] sm:$0xff]
        %v969 = vld [vmem:[%s187 + $0x1700] sm:$0xff]
        %v970 = vld [vmem:[%s187 + $0x1708] sm:$0xff]
        %v971 = vld [vmem:[%s187 + $0x1710] sm:$0xff]
        %v972 = vld [vmem:[%s187 + $0x1718] sm:$0xff]
        %v973 = vld [vmem:[%s187 + $0x1720] sm:$0xff]
        %v974 = vld [vmem:[%s187 + $0x1728] sm:$0xff]
        %v975 = vld [vmem:[%s187 + $0x1730] sm:$0xff]
        %v976 = vld [vmem:[%s187 + $0x1738] sm:$0xff]
        %v977 = vld [vmem:[%s187 + $0x1740] sm:$0xff]
        %v978 = vld [vmem:[%s187 + $0x1748] sm:$0xff]
        %v979 = vld [vmem:[%s187 + $0x1750] sm:$0xff]
        %v980 = vld [vmem:[%s187 + $0x1758] sm:$0xff]
        %v981 = vld [vmem:[%s187 + $0x1760] sm:$0xff]
        %v982 = vld [vmem:[%s187 + $0x1768] sm:$0xff]
        %v983 = vld [vmem:[%s187 + $0x1770] sm:$0xff]
        %v984 = vld [vmem:[%s187 + $0x1778] sm:$0xff]
        %v985 = vld [vmem:[%s187 + $0x1780] sm:$0xff]
        %v986 = vld [vmem:[%s187 + $0x1788] sm:$0xff]
        %v987 = vld [vmem:[%s187 + $0x1790] sm:$0xff]
        %v988 = vld [vmem:[%s187 + $0x1798] sm:$0xff]
        %v989 = vld [vmem:[%s187 + $0x17a0] sm:$0xff]
        %v990 = vld [vmem:[%s187 + $0x17a8] sm:$0xff]
        %v991 = vld [vmem:[%s187 + $0x17b0] sm:$0xff]
        %v992 = vld [vmem:[%s187 + $0x17b8] sm:$0xff]
        %v993 = vld [vmem:[%s187 + $0x17c0] sm:$0xff]
        %v994 = vld [vmem:[%s187 + $0x17c8] sm:$0xff]
        %v995 = vld [vmem:[%s187 + $0x17d0] sm:$0xff]
        %v996 = vld [vmem:[%s187 + $0x17d8] sm:$0xff]
        %v997 = vld [vmem:[%s187 + $0x17e0] sm:$0xff]
        %v998 = vld [vmem:[%s187 + $0x17e8] sm:$0xff]
        %v999 = vld [vmem:[%s187 + $0x17f0] sm:$0xff]
        %v1000 = vld [vmem:[%s187 + $0x17f8] sm:$0xff]
        %v1001 = vld [vmem:[%s187 + $0x1800] sm:$0xff]
        %v1002 = vld [vmem:[%s187 + $0x1808] sm:$0xff]
        %v1003 = vld [vmem:[%s187 + $0x1810] sm:$0xff]
        %v1004 = vld [vmem:[%s187 + $0x1818] sm:$0xff]
        %v1005 = vld [vmem:[%s187 + $0x1820] sm:$0xff]
        %v1006 = vld [vmem:[%s187 + $0x1828] sm:$0xff]
        %v1007 = vld [vmem:[%s187 + $0x1830] sm:$0xff]
        %v1008 = vld [vmem:[%s187 + $0x1838] sm:$0xff]
        %v1009 = vld [vmem:[%s187 + $0x1840] sm:$0xff]
        %v1010 = vld [vmem:[%s187 + $0x1848] sm:$0xff]
        %v1011 = vld [vmem:[%s187 + $0x1850] sm:$0xff]
        %v1012 = vld [vmem:[%s187 + $0x1858] sm:$0xff]
        %v1013 = vld [vmem:[%s187 + $0x1860] sm:$0xff]
        %v1014 = vld [vmem:[%s187 + $0x1868] sm:$0xff]
        %v1015 = vld [vmem:[%s187 + $0x1870] sm:$0xff]
        %v1016 = vld [vmem:[%s187 + $0x1878] sm:$0xff]
        %v1017 = vld [vmem:[%s187 + $0x1880] sm:$0xff]
        %v1018 = vld [vmem:[%s187 + $0x1888] sm:$0xff]
        %v1019 = vld [vmem:[%s187 + $0x1890] sm:$0xff]
        %v1020 = vld [vmem:[%s187 + $0x1898] sm:$0xff]
        %v1021 = vld [vmem:[%s187 + $0x18a0] sm:$0xff]
        %v1022 = vld [vmem:[%s187 + $0x18a8] sm:$0xff]
        %v1023 = vld [vmem:[%s187 + $0x18b0] sm:$0xff]
        %v1024 = vld [vmem:[%s187 + $0x18b8] sm:$0xff]
        %v1025 = vld [vmem:[%s187 + $0x18c0] sm:$0xff]
        %v1026 = vld [vmem:[%s187 + $0x18c8] sm:$0xff]
        %v1027 = vld [vmem:[%s187 + $0x18d0] sm:$0xff]
        %v1028 = vld [vmem:[%s187 + $0x18d8] sm:$0xff]
        %v1029 = vld [vmem:[%s187 + $0x18e0] sm:$0xff]
        %v1030 = vld [vmem:[%s187 + $0x18e8] sm:$0xff]
        %v1031 = vld [vmem:[%s187 + $0x18f0] sm:$0xff]
        %v1032 = vld [vmem:[%s187 + $0x18f8] sm:$0xff]
        %v1033 = vld [vmem:[%s187 + $0x1900] sm:$0xff]
        %v1034 = vld [vmem:[%s187 + $0x1908] sm:$0xff]
        %v1035 = vld [vmem:[%s187 + $0x1910] sm:$0xff]
        %v1036 = vld [vmem:[%s187 + $0x1918] sm:$0xff]
        %v1037 = vld [vmem:[%s187 + $0x1920] sm:$0xff]
        %v1038 = vld [vmem:[%s187 + $0x1928] sm:$0xff]
        %v1039 = vld [vmem:[%s187 + $0x1930] sm:$0xff]
        %v1040 = vld [vmem:[%s187 + $0x1938] sm:$0xff]
        %v1041 = vld [vmem:[%s187 + $0x1940] sm:$0xff]
        %v1042 = vld [vmem:[%s187 + $0x1948] sm:$0xff]
        %v1043 = vld [vmem:[%s187 + $0x1950] sm:$0xff]
        %v1044 = vld [vmem:[%s187 + $0x1958] sm:$0xff]
        %v1045 = vld [vmem:[%s187 + $0x1960] sm:$0xff]
        %v1046 = vld [vmem:[%s187 + $0x1968] sm:$0xff]
        %v1047 = vld [vmem:[%s187 + $0x1970] sm:$0xff]
        %v1048 = vld [vmem:[%s187 + $0x1978] sm:$0xff]
        %v1049 = vld [vmem:[%s187 + $0x1980] sm:$0xff]
        %v1050 = vld [vmem:[%s187 + $0x1988] sm:$0xff]
        %v1051 = vld [vmem:[%s187 + $0x1990] sm:$0xff]
        %v1052 = vld [vmem:[%s187 + $0x1998] sm:$0xff]
        %v1053 = vld [vmem:[%s187 + $0x19a0] sm:$0xff]
        %v1054 = vld [vmem:[%s187 + $0x19a8] sm:$0xff]
        %v1055 = vld [vmem:[%s187 + $0x19b0] sm:$0xff]
        %v1056 = vld [vmem:[%s187 + $0x19b8] sm:$0xff]
        %v1057 = vld [vmem:[%s187 + $0x19c0] sm:$0xff]
        %v1058 = vld [vmem:[%s187 + $0x19c8] sm:$0xff]
        %v1059 = vld [vmem:[%s187 + $0x19d0] sm:$0xff]
        %v1060 = vld [vmem:[%s187 + $0x19d8] sm:$0xff]
        %v1061 = vld [vmem:[%s187 + $0x19e0] sm:$0xff]
        %v1062 = vld [vmem:[%s187 + $0x19e8] sm:$0xff]
        %v1063 = vld [vmem:[%s187 + $0x19f0] sm:$0xff]
        %v1064 = vld [vmem:[%s187 + $0x19f8] sm:$0xff]
        %v1065 = vld [vmem:[%s187 + $0x1a00] sm:$0xff]
        %v1066 = vld [vmem:[%s187 + $0x1a08] sm:$0xff]
        %v1067 = vld [vmem:[%s187 + $0x1a10] sm:$0xff]
        %v1068 = vld [vmem:[%s187 + $0x1a18] sm:$0xff]
        %v1069 = vld [vmem:[%s187 + $0x1a20] sm:$0xff]
        %v1070 = vld [vmem:[%s187 + $0x1a28] sm:$0xff]
        %v1071 = vld [vmem:[%s187 + $0x1a30] sm:$0xff]
        %v1072 = vld [vmem:[%s187 + $0x1a38] sm:$0xff]
        %v1073 = vld [vmem:[%s187 + $0x1a40] sm:$0xff]
        %v1074 = vld [vmem:[%s187 + $0x1a48] sm:$0xff]
        %v1075 = vld [vmem:[%s187 + $0x1a50] sm:$0xff]
        %v1076 = vld [vmem:[%s187 + $0x1a58] sm:$0xff]
        %v1077 = vld [vmem:[%s187 + $0x1a60] sm:$0xff]
        %v1078 = vld [vmem:[%s187 + $0x1a68] sm:$0xff]
        %v1079 = vld [vmem:[%s187 + $0x1a70] sm:$0xff]
        %v1080 = vld [vmem:[%s187 + $0x1a78] sm:$0xff]
        %v1081 = vld [vmem:[%s187 + $0x1a80] sm:$0xff]
        %v1082 = vld [vmem:[%s187 + $0x1a88] sm:$0xff]
        %v1083 = vld [vmem:[%s187 + $0x1a90] sm:$0xff]
        %v1084 = vld [vmem:[%s187 + $0x1a98] sm:$0xff]
        %v1085 = vld [vmem:[%s187 + $0x1aa0] sm:$0xff]
        %v1086 = vld [vmem:[%s187 + $0x1aa8] sm:$0xff]
        %v1087 = vld [vmem:[%s187 + $0x1ab0] sm:$0xff]
        %v1088 = vld [vmem:[%s187 + $0x1ab8] sm:$0xff]
        %v1089 = vld [vmem:[%s187 + $0x1ac0] sm:$0xff]
        %v1090 = vld [vmem:[%s187 + $0x1ac8] sm:$0xff]
        %v1091 = vld [vmem:[%s187 + $0x1ad0] sm:$0xff]
        %v1092 = vld [vmem:[%s187 + $0x1ad8] sm:$0xff]
        %v1093 = vld [vmem:[%s187 + $0x1ae0] sm:$0xff]
        %v1094 = vld [vmem:[%s187 + $0x1ae8] sm:$0xff]
        %v1095 = vld [vmem:[%s187 + $0x1af0] sm:$0xff]
        %v1096 = vld [vmem:[%s187 + $0x1af8] sm:$0xff]
        %v1097 = vld [vmem:[%s187 + $0x1b00] sm:$0xff]
        %v1098 = vld [vmem:[%s187 + $0x1b08] sm:$0xff]
        %v1099 = vld [vmem:[%s187 + $0x1b10] sm:$0xff]
        %v1100 = vld [vmem:[%s187 + $0x1b18] sm:$0xff]
        %v1101 = vld [vmem:[%s187 + $0x1b20] sm:$0xff]
        %v1102 = vld [vmem:[%s187 + $0x1b28] sm:$0xff]
        %v1103 = vld [vmem:[%s187 + $0x1b30] sm:$0xff]
        %v1104 = vld [vmem:[%s187 + $0x1b38] sm:$0xff]
        %v1105 = vld [vmem:[%s187 + $0x1b40] sm:$0xff]
        %v1106 = vld [vmem:[%s187 + $0x1b48] sm:$0xff]
        %v1107 = vld [vmem:[%s187 + $0x1b50] sm:$0xff]
        %v1108 = vld [vmem:[%s187 + $0x1b58] sm:$0xff]
        %v1109 = vld [vmem:[%s187 + $0x1b60] sm:$0xff]
        %v1110 = vld [vmem:[%s187 + $0x1b68] sm:$0xff]
        %v1111 = vld [vmem:[%s187 + $0x1b70] sm:$0xff]
        %v1112 = vld [vmem:[%s187 + $0x1b78] sm:$0xff]
        %v1113 = vld [vmem:[%s187 + $0x1b80] sm:$0xff]
        %v1114 = vld [vmem:[%s187 + $0x1b88] sm:$0xff]
        %v1115 = vld [vmem:[%s187 + $0x1b90] sm:$0xff]
        %v1116 = vld [vmem:[%s187 + $0x1b98] sm:$0xff]
        %v1117 = vld [vmem:[%s187 + $0x1ba0] sm:$0xff]
        %v1118 = vld [vmem:[%s187 + $0x1ba8] sm:$0xff]
        %v1119 = vld [vmem:[%s187 + $0x1bb0] sm:$0xff]
        %v1120 = vld [vmem:[%s187 + $0x1bb8] sm:$0xff]
        %v1121 = vld [vmem:[%s187 + $0x1bc0] sm:$0xff]
        %v1122 = vld [vmem:[%s187 + $0x1bc8] sm:$0xff]
        %v1123 = vld [vmem:[%s187 + $0x1bd0] sm:$0xff]
        %v1124 = vld [vmem:[%s187 + $0x1bd8] sm:$0xff]
        %v1125 = vld [vmem:[%s187 + $0x1be0] sm:$0xff]
        %v1126 = vld [vmem:[%s187 + $0x1be8] sm:$0xff]
        %v1127 = vld [vmem:[%s187 + $0x1bf0] sm:$0xff]
        %v1128 = vld [vmem:[%s187 + $0x1bf8] sm:$0xff]
        %v1129 = vld [vmem:[%s187 + $0x1c00] sm:$0xff]
        %v1130 = vld [vmem:[%s187 + $0x1c08] sm:$0xff]
        %v1131 = vld [vmem:[%s187 + $0x1c10] sm:$0xff]
        %v1132 = vld [vmem:[%s187 + $0x1c18] sm:$0xff]
        %v1133 = vld [vmem:[%s187 + $0x1c20] sm:$0xff]
        %v1134 = vld [vmem:[%s187 + $0x1c28] sm:$0xff]
        %v1135 = vld [vmem:[%s187 + $0x1c30] sm:$0xff]
        %v1136 = vld [vmem:[%s187 + $0x1c38] sm:$0xff]
        %v1137 = vld [vmem:[%s187 + $0x1c40] sm:$0xff]
        %v1138 = vld [vmem:[%s187 + $0x1c48] sm:$0xff]
        %v1139 = vld [vmem:[%s187 + $0x1c50] sm:$0xff]
        %v1140 = vld [vmem:[%s187 + $0x1c58] sm:$0xff]
        %v1141 = vld [vmem:[%s187 + $0x1c60] sm:$0xff]
        %v1142 = vld [vmem:[%s187 + $0x1c68] sm:$0xff]
        %v1143 = vld [vmem:[%s187 + $0x1c70] sm:$0xff]
        %v1144 = vld [vmem:[%s187 + $0x1c78] sm:$0xff]
        %v1145 = vld [vmem:[%s187 + $0x1c80] sm:$0xff]
        %v1146 = vld [vmem:[%s187 + $0x1c88] sm:$0xff]
        %v1147 = vld [vmem:[%s187 + $0x1c90] sm:$0xff]
        %v1148 = vld [vmem:[%s187 + $0x1c98] sm:$0xff]
        %v1149 = vld [vmem:[%s187 + $0x1ca0] sm:$0xff]
        %v1150 = vld [vmem:[%s187 + $0x1ca8] sm:$0xff]
        %v1151 = vld [vmem:[%s187 + $0x1cb0] sm:$0xff]
        %v1152 = vld [vmem:[%s187 + $0x1cb8] sm:$0xff]
        %v1153 = vld [vmem:[%s187 + $0x1cc0] sm:$0xff]
        %v1154 = vld [vmem:[%s187 + $0x1cc8] sm:$0xff]
        %v1155 = vld [vmem:[%s187 + $0x1cd0] sm:$0xff]
        %v1156 = vld [vmem:[%s187 + $0x1cd8] sm:$0xff]
        %v1157 = vld [vmem:[%s187 + $0x1ce0] sm:$0xff]
        %v1158 = vld [vmem:[%s187 + $0x1ce8] sm:$0xff]
        %v1159 = vld [vmem:[%s187 + $0x1cf0] sm:$0xff]
        %v1160 = vld [vmem:[%s187 + $0x1cf8] sm:$0xff]
        %v1161 = vld [vmem:[%s187 + $0x1d00] sm:$0xff]
        %v1162 = vld [vmem:[%s187 + $0x1d08] sm:$0xff]
        %v1163 = vld [vmem:[%s187 + $0x1d10] sm:$0xff]
        %v1164 = vld [vmem:[%s187 + $0x1d18] sm:$0xff]
        %v1165 = vld [vmem:[%s187 + $0x1d20] sm:$0xff]
        %v1166 = vld [vmem:[%s187 + $0x1d28] sm:$0xff]
        %v1167 = vld [vmem:[%s187 + $0x1d30] sm:$0xff]
        %v1168 = vld [vmem:[%s187 + $0x1d38] sm:$0xff]
        %v1169 = vld [vmem:[%s187 + $0x1d40] sm:$0xff]
        %v1170 = vld [vmem:[%s187 + $0x1d48] sm:$0xff]
        %v1171 = vld [vmem:[%s187 + $0x1d50] sm:$0xff]
        %v1172 = vld [vmem:[%s187 + $0x1d58] sm:$0xff]
        %v1173 = vld [vmem:[%s187 + $0x1d60] sm:$0xff]
        %v1174 = vld [vmem:[%s187 + $0x1d68] sm:$0xff]
        %v1175 = vld [vmem:[%s187 + $0x1d70] sm:$0xff]
        %v1176 = vld [vmem:[%s187 + $0x1d78] sm:$0xff]
        %v1177 = vld [vmem:[%s187 + $0x1d80] sm:$0xff]
        %v1178 = vld [vmem:[%s187 + $0x1d88] sm:$0xff]
        %v1179 = vld [vmem:[%s187 + $0x1d90] sm:$0xff]
        %v1180 = vld [vmem:[%s187 + $0x1d98] sm:$0xff]
        %v1181 = vld [vmem:[%s187 + $0x1da0] sm:$0xff]
        %v1182 = vld [vmem:[%s187 + $0x1da8] sm:$0xff]
        %v1183 = vld [vmem:[%s187 + $0x1db0] sm:$0xff]
        %v1184 = vld [vmem:[%s187 + $0x1db8] sm:$0xff]
        %v1185 = vld [vmem:[%s187 + $0x1dc0] sm:$0xff]
        %v1186 = vld [vmem:[%s187 + $0x1dc8] sm:$0xff]
        %v1187 = vld [vmem:[%s187 + $0x1dd0] sm:$0xff]
        %v1188 = vld [vmem:[%s187 + $0x1dd8] sm:$0xff]
        %v1189 = vld [vmem:[%s187 + $0x1de0] sm:$0xff]
        %v1190 = vld [vmem:[%s187 + $0x1de8] sm:$0xff]
        %v1191 = vld [vmem:[%s187 + $0x1df0] sm:$0xff]
        %v1192 = vld [vmem:[%s187 + $0x1df8] sm:$0xff]
        %v1193 = vld [vmem:[%s187 + $0x1e00] sm:$0xff]
        %v1194 = vld [vmem:[%s187 + $0x1e08] sm:$0xff]
        %v1195 = vld [vmem:[%s187 + $0x1e10] sm:$0xff]
        %v1196 = vld [vmem:[%s187 + $0x1e18] sm:$0xff]
        %v1197 = vld [vmem:[%s187 + $0x1e20] sm:$0xff]
        %v1198 = vld [vmem:[%s187 + $0x1e28] sm:$0xff]
        %v1199 = vld [vmem:[%s187 + $0x1e30] sm:$0xff]
        %v1200 = vld [vmem:[%s187 + $0x1e38] sm:$0xff]
        %v1201 = vld [vmem:[%s187 + $0x1e40] sm:$0xff]
        %v1202 = vld [vmem:[%s187 + $0x1e48] sm:$0xff]
        %v1203 = vld [vmem:[%s187 + $0x1e50] sm:$0xff]
        %v1204 = vld [vmem:[%s187 + $0x1e58] sm:$0xff]
        %v1205 = vld [vmem:[%s187 + $0x1e60] sm:$0xff]
        %v1206 = vld [vmem:[%s187 + $0x1e68] sm:$0xff]
        %v1207 = vld [vmem:[%s187 + $0x1e70] sm:$0xff]
        %v1208 = vld [vmem:[%s187 + $0x1e78] sm:$0xff]
        %v1209 = vld [vmem:[%s187 + $0x1e80] sm:$0xff]
        %v1210 = vld [vmem:[%s187 + $0x1e88] sm:$0xff]
        %v1211 = vld [vmem:[%s187 + $0x1e90] sm:$0xff]
        %v1212 = vld [vmem:[%s187 + $0x1e98] sm:$0xff]
        %v1213 = vld [vmem:[%s187 + $0x1ea0] sm:$0xff]
        %v1214 = vld [vmem:[%s187 + $0x1ea8] sm:$0xff]
        %v1215 = vld [vmem:[%s187 + $0x1eb0] sm:$0xff]
        %v1216 = vld [vmem:[%s187 + $0x1eb8] sm:$0xff]
        %v1217 = vld [vmem:[%s187 + $0x1ec0] sm:$0xff]
        %v1218 = vld [vmem:[%s187 + $0x1ec8] sm:$0xff]
        %v1219 = vld [vmem:[%s187 + $0x1ed0] sm:$0xff]
        %v1220 = vld [vmem:[%s187 + $0x1ed8] sm:$0xff]
        %v1221 = vld [vmem:[%s187 + $0x1ee0] sm:$0xff]
        %v1222 = vld [vmem:[%s187 + $0x1ee8] sm:$0xff]
        %v1223 = vld [vmem:[%s187 + $0x1ef0] sm:$0xff]
        %v1224 = vld [vmem:[%s187 + $0x1ef8] sm:$0xff]
        %v1225 = vld [vmem:[%s187 + $0x1f00] sm:$0xff]
        %v1226 = vld [vmem:[%s187 + $0x1f08] sm:$0xff]
        %v1227 = vld [vmem:[%s187 + $0x1f10] sm:$0xff]
        %v1228 = vld [vmem:[%s187 + $0x1f18] sm:$0xff]
        %v1229 = vld [vmem:[%s187 + $0x1f20] sm:$0xff]
        %v1230 = vld [vmem:[%s187 + $0x1f28] sm:$0xff]
        %v1231 = vld [vmem:[%s187 + $0x1f30] sm:$0xff]
        %v1232 = vld [vmem:[%s187 + $0x1f38] sm:$0xff]
        %v1233 = vld [vmem:[%s187 + $0x1f40] sm:$0xff]
        %v1234 = vld [vmem:[%s187 + $0x1f48] sm:$0xff]
        %v1235 = vld [vmem:[%s187 + $0x1f50] sm:$0xff]
        %v1236 = vld [vmem:[%s187 + $0x1f58] sm:$0xff]
        %v1237 = vld [vmem:[%s187 + $0x1f60] sm:$0xff]
        %v1238 = vld [vmem:[%s187 + $0x1f68] sm:$0xff]
        %v1239 = vld [vmem:[%s187 + $0x1f70] sm:$0xff]
        %v1240 = vld [vmem:[%s187 + $0x1f78] sm:$0xff]
        %v1241 = vld [vmem:[%s187 + $0x1f80] sm:$0xff]
        %v1242 = vld [vmem:[%s187 + $0x1f88] sm:$0xff]
        %v1243 = vld [vmem:[%s187 + $0x1f90] sm:$0xff]
        %v1244 = vld [vmem:[%s187 + $0x1f98] sm:$0xff]
        %v1245 = vld [vmem:[%s187 + $0x1fa0] sm:$0xff]
        %v1246 = vld [vmem:[%s187 + $0x1fa8] sm:$0xff]
        %v1247 = vld [vmem:[%s187 + $0x1fb0] sm:$0xff]
        %v1248 = vld [vmem:[%s187 + $0x1fb8] sm:$0xff]
        %v1249 = vld [vmem:[%s187 + $0x1fc0] sm:$0xff]
        %v1250 = vld [vmem:[%s187 + $0x1fc8] sm:$0xff]
        %v1251 = vld [vmem:[%s187 + $0x1fd0] sm:$0xff]
        %v1252 = vld [vmem:[%s187 + $0x1fd8] sm:$0xff]
        %v1253 = vld [vmem:[%s187 + $0x1fe0] sm:$0xff]
        %v1254 = vld [vmem:[%s187 + $0x1fe8] sm:$0xff]
        %v1255 = vld [vmem:[%s187 + $0x1ff0] sm:$0xff]
        %v1256 = vld [vmem:[%s187 + $0x1ff8] sm:$0xff]
        %v1257 = vld [vmem:[%s187 + $0x2000] sm:$0xff]
        %v1258 = vld [vmem:[%s187 + $0x2008] sm:$0xff]
        %v1259 = vld [vmem:[%s187 + $0x2010] sm:$0xff]
        %v1260 = vld [vmem:[%s187 + $0x2018] sm:$0xff]
        %v1261 = vld [vmem:[%s187 + $0x2020] sm:$0xff]
        %v1262 = vld [vmem:[%s187 + $0x2028] sm:$0xff]
        %v1263 = vld [vmem:[%s187 + $0x2030] sm:$0xff]
        %v1264 = vld [vmem:[%s187 + $0x2038] sm:$0xff]
        %v1265 = vld [vmem:[%s187 + $0x2040] sm:$0xff]
        %v1266 = vld [vmem:[%s187 + $0x2048] sm:$0xff]
        %v1267 = vld [vmem:[%s187 + $0x2050] sm:$0xff]
        %v1268 = vld [vmem:[%s187 + $0x2058] sm:$0xff]
        %v1269 = vld [vmem:[%s187 + $0x2060] sm:$0xff]
        %v1270 = vld [vmem:[%s187 + $0x2068] sm:$0xff]
        %v1271 = vld [vmem:[%s187 + $0x2070] sm:$0xff]
        %v1272 = vld [vmem:[%s187 + $0x2078] sm:$0xff]
        %v1273 = vld [vmem:[%s187 + $0x2080] sm:$0xff]
        %v1274 = vld [vmem:[%s187 + $0x2088] sm:$0xff]
        %v1275 = vld [vmem:[%s187 + $0x2090] sm:$0xff]
        %v1276 = vld [vmem:[%s187 + $0x2098] sm:$0xff]
        %v1277 = vld [vmem:[%s187 + $0x20a0] sm:$0xff]
        %v1278 = vld [vmem:[%s187 + $0x20a8] sm:$0xff]
        %v1279 = vld [vmem:[%s187 + $0x20b0] sm:$0xff]
        %v1280 = vld [vmem:[%s187 + $0x20b8] sm:$0xff]
        %v1281 = vld [vmem:[%s187 + $0x20c0] sm:$0xff]
        %v1282 = vld [vmem:[%s187 + $0x20c8] sm:$0xff]
        %v1283 = vld [vmem:[%s187 + $0x20d0] sm:$0xff]
        %v1284 = vld [vmem:[%s187 + $0x20d8] sm:$0xff]
        %v1285 = vld [vmem:[%s187 + $0x20e0] sm:$0xff]
        %v1286 = vld [vmem:[%s187 + $0x20e8] sm:$0xff]
        %v1287 = vld [vmem:[%s187 + $0x20f0] sm:$0xff]
        %v1288 = vld [vmem:[%s187 + $0x20f8] sm:$0xff]
        %v1289 = vld [vmem:[%s187 + $0x2100] sm:$0xff]
        %v1290 = vld [vmem:[%s187 + $0x2108] sm:$0xff]
        %v1291 = vld [vmem:[%s187 + $0x2110] sm:$0xff]
        %v1292 = vld [vmem:[%s187 + $0x2118] sm:$0xff]
        %v1293 = vld [vmem:[%s187 + $0x2120] sm:$0xff]
        %v1294 = vld [vmem:[%s187 + $0x2128] sm:$0xff]
        %v1295 = vld [vmem:[%s187 + $0x2130] sm:$0xff]
        %v1296 = vld [vmem:[%s187 + $0x2138] sm:$0xff]
        %v1297 = vld [vmem:[%s187 + $0x2140] sm:$0xff]
        %v1298 = vld [vmem:[%s187 + $0x2148] sm:$0xff]
        %v1299 = vld [vmem:[%s187 + $0x2150] sm:$0xff]
        %v1300 = vld [vmem:[%s187 + $0x2158] sm:$0xff]
        %v1301 = vld [vmem:[%s187 + $0x2160] sm:$0xff]
        %v1302 = vld [vmem:[%s187 + $0x2168] sm:$0xff]
        %v1303 = vld [vmem:[%s187 + $0x2170] sm:$0xff]
        %v1304 = vld [vmem:[%s187 + $0x2178] sm:$0xff]
        %v1305 = vld [vmem:[%s187 + $0x2180] sm:$0xff]
        %v1306 = vld [vmem:[%s187 + $0x2188] sm:$0xff]
        %v1307 = vld [vmem:[%s187 + $0x2190] sm:$0xff]
        %v1308 = vld [vmem:[%s187 + $0x2198] sm:$0xff]
        %v1309 = vld [vmem:[%s187 + $0x21a0] sm:$0xff]
        %v1310 = vld [vmem:[%s187 + $0x21a8] sm:$0xff]
        %v1311 = vld [vmem:[%s187 + $0x21b0] sm:$0xff]
        %v1312 = vld [vmem:[%s187 + $0x21b8] sm:$0xff]
        %v1313 = vld [vmem:[%s187 + $0x21c0] sm:$0xff]
        %v1314 = vld [vmem:[%s187 + $0x21c8] sm:$0xff]
        %v1315 = vld [vmem:[%s187 + $0x21d0] sm:$0xff]
        %v1316 = vld [vmem:[%s187 + $0x21d8] sm:$0xff]
        %v1317 = vld [vmem:[%s187 + $0x21e0] sm:$0xff]
        %v1318 = vld [vmem:[%s187 + $0x21e8] sm:$0xff]
        %v1319 = vld [vmem:[%s187 + $0x21f0] sm:$0xff]
        %v1320 = vld [vmem:[%s187 + $0x21f8] sm:$0xff]
        %v1321 = vld [vmem:[%s187 + $0x2200] sm:$0xff]
        %v1322 = vld [vmem:[%s187 + $0x2208] sm:$0xff]
        %v1323 = vld [vmem:[%s187 + $0x2210] sm:$0xff]
        %v1324 = vld [vmem:[%s187 + $0x2218] sm:$0xff]
        %v1325 = vld [vmem:[%s187 + $0x2220] sm:$0xff]
        %v1326 = vld [vmem:[%s187 + $0x2228] sm:$0xff]
        %v1327 = vld [vmem:[%s187 + $0x2230] sm:$0xff]
        %v1328 = vld [vmem:[%s187 + $0x2238] sm:$0xff]
        %v1329 = vld [vmem:[%s187 + $0x2240] sm:$0xff]
        %v1330 = vld [vmem:[%s187 + $0x2248] sm:$0xff]
        %v1331 = vld [vmem:[%s187 + $0x2250] sm:$0xff]
        %v1332 = vld [vmem:[%s187 + $0x2258] sm:$0xff]
        %v1333 = vld [vmem:[%s187 + $0x2260] sm:$0xff]
        %v1334 = vld [vmem:[%s187 + $0x2268] sm:$0xff]
        %v1335 = vld [vmem:[%s187 + $0x2270] sm:$0xff]
        %v1336 = vld [vmem:[%s187 + $0x2278] sm:$0xff]
        %v1337 = vld [vmem:[%s187 + $0x2280] sm:$0xff]
        %v1338 = vld [vmem:[%s187 + $0x2288] sm:$0xff]
        %v1339 = vld [vmem:[%s187 + $0x2290] sm:$0xff]
        %v1340 = vld [vmem:[%s187 + $0x2298] sm:$0xff]
        %v1341 = vld [vmem:[%s187 + $0x22a0] sm:$0xff]
        %v1342 = vld [vmem:[%s187 + $0x22a8] sm:$0xff]
        %v1343 = vld [vmem:[%s187 + $0x22b0] sm:$0xff]
        %v1344 = vld [vmem:[%s187 + $0x22b8] sm:$0xff]
        %v1345 = vld [vmem:[%s187 + $0x22c0] sm:$0xff]
        %v1346 = vld [vmem:[%s187 + $0x22c8] sm:$0xff]
        %v1347 = vld [vmem:[%s187 + $0x22d0] sm:$0xff]
        %v1348 = vld [vmem:[%s187 + $0x22d8] sm:$0xff]
        %v1349 = vld [vmem:[%s187 + $0x22e0] sm:$0xff]
        %v1350 = vld [vmem:[%s187 + $0x22e8] sm:$0xff]
        %v1351 = vld [vmem:[%s187 + $0x22f0] sm:$0xff]
        %v1352 = vld [vmem:[%s187 + $0x22f8] sm:$0xff]
        %v1353 = vld [vmem:[%s187 + $0x2300] sm:$0xff]
        %v1354 = vld [vmem:[%s187 + $0x2308] sm:$0xff]
        %v1355 = vld [vmem:[%s187 + $0x2310] sm:$0xff]
        %v1356 = vld [vmem:[%s187 + $0x2318] sm:$0xff]
        %v1357 = vld [vmem:[%s187 + $0x2320] sm:$0xff]
        %v1358 = vld [vmem:[%s187 + $0x2328] sm:$0xff]
        %v1359 = vld [vmem:[%s187 + $0x2330] sm:$0xff]
        %v1360 = vld [vmem:[%s187 + $0x2338] sm:$0xff]
        %v1361 = vld [vmem:[%s187 + $0x2340] sm:$0xff]
        %v1362 = vld [vmem:[%s187 + $0x2348] sm:$0xff]
        %v1363 = vld [vmem:[%s187 + $0x2350] sm:$0xff]
        %v1364 = vld [vmem:[%s187 + $0x2358] sm:$0xff]
        %v1365 = vld [vmem:[%s187 + $0x2360] sm:$0xff]
        %v1366 = vld [vmem:[%s187 + $0x2368] sm:$0xff]
        %v1367 = vld [vmem:[%s187 + $0x2370] sm:$0xff]
        %v1368 = vld [vmem:[%s187 + $0x2378] sm:$0xff]
        %v1369 = vld [vmem:[%s187 + $0x2380] sm:$0xff]
        %v1370 = vld [vmem:[%s187 + $0x2388] sm:$0xff]
        %v1371 = vld [vmem:[%s187 + $0x2390] sm:$0xff]
        %v1372 = vld [vmem:[%s187 + $0x2398] sm:$0xff]
        %v1373 = vld [vmem:[%s187 + $0x23a0] sm:$0xff]
        %v1374 = vld [vmem:[%s187 + $0x23a8] sm:$0xff]
        %v1375 = vld [vmem:[%s187 + $0x23b0] sm:$0xff]
        %v1376 = vld [vmem:[%s187 + $0x23b8] sm:$0xff]
        %v1377 = vld [vmem:[%s187 + $0x23c0] sm:$0xff]
        %v1378 = vld [vmem:[%s187 + $0x23c8] sm:$0xff]
        %v1379 = vld [vmem:[%s187 + $0x23d0] sm:$0xff]
        %v1380 = vld [vmem:[%s187 + $0x23d8] sm:$0xff]
        %v1381 = vld [vmem:[%s187 + $0x23e0] sm:$0xff]
        %v1382 = vld [vmem:[%s187 + $0x23e8] sm:$0xff]
        %v1383 = vld [vmem:[%s187 + $0x23f0] sm:$0xff]
        %v1384 = vld [vmem:[%s187 + $0x23f8] sm:$0xff]
        %v1385 = vld [vmem:[%s187 + $0x2400] sm:$0xff]
        %v1386 = vld [vmem:[%s187 + $0x2408] sm:$0xff]
        %v1387 = vld [vmem:[%s187 + $0x2410] sm:$0xff]
        %v1388 = vld [vmem:[%s187 + $0x2418] sm:$0xff]
        %v1389 = vld [vmem:[%s187 + $0x2420] sm:$0xff]
        %v1390 = vld [vmem:[%s187 + $0x2428] sm:$0xff]
        %v1391 = vld [vmem:[%s187 + $0x2430] sm:$0xff]
        %v1392 = vld [vmem:[%s187 + $0x2438] sm:$0xff]
        %v1393 = vld [vmem:[%s187 + $0x2440] sm:$0xff]
        %v1394 = vld [vmem:[%s187 + $0x2448] sm:$0xff]
        %v1395 = vld [vmem:[%s187 + $0x2450] sm:$0xff]
        %v1396 = vld [vmem:[%s187 + $0x2458] sm:$0xff]
        %v1397 = vld [vmem:[%s187 + $0x2460] sm:$0xff]
        %v1398 = vld [vmem:[%s187 + $0x2468] sm:$0xff]
        %v1399 = vld [vmem:[%s187 + $0x2470] sm:$0xff]
        %v1400 = vld [vmem:[%s187 + $0x2478] sm:$0xff]
        %v1401 = vld [vmem:[%s187 + $0x2480] sm:$0xff]
        %v1402 = vld [vmem:[%s187 + $0x2488] sm:$0xff]
        %v1403 = vld [vmem:[%s187 + $0x2490] sm:$0xff]
        %v1404 = vld [vmem:[%s187 + $0x2498] sm:$0xff]
        %v1405 = vld [vmem:[%s187 + $0x24a0] sm:$0xff]
        %v1406 = vld [vmem:[%s187 + $0x24a8] sm:$0xff]
        %v1407 = vld [vmem:[%s187 + $0x24b0] sm:$0xff]
        %v1408 = vld [vmem:[%s187 + $0x24b8] sm:$0xff]
        %v1409 = vld [vmem:[%s187 + $0x24c0] sm:$0xff]
        %v1410 = vld [vmem:[%s187 + $0x24c8] sm:$0xff]
        %v1411 = vld [vmem:[%s187 + $0x24d0] sm:$0xff]
        %v1412 = vld [vmem:[%s187 + $0x24d8] sm:$0xff]
        %v1413 = vld [vmem:[%s187 + $0x24e0] sm:$0xff]
        %v1414 = vld [vmem:[%s187 + $0x24e8] sm:$0xff]
        %v1415 = vld [vmem:[%s187 + $0x24f0] sm:$0xff]
        %v1416 = vld [vmem:[%s187 + $0x24f8] sm:$0xff]
        %v1417 = vld [vmem:[%s187 + $0x2500] sm:$0xff]
        %v1418 = vld [vmem:[%s187 + $0x2508] sm:$0xff]
        %v1419 = vld [vmem:[%s187 + $0x2510] sm:$0xff]
        %v1420 = vld [vmem:[%s187 + $0x2518] sm:$0xff]
        %v1421 = vld [vmem:[%s187 + $0x2520] sm:$0xff]
        %v1422 = vld [vmem:[%s187 + $0x2528] sm:$0xff]
        %v1423 = vld [vmem:[%s187 + $0x2530] sm:$0xff]
        %v1424 = vld [vmem:[%s187 + $0x2538] sm:$0xff]
        %v1425 = vld [vmem:[%s187 + $0x2540] sm:$0xff]
        %v1426 = vld [vmem:[%s187 + $0x2548] sm:$0xff]
        %v1427 = vld [vmem:[%s187 + $0x2550] sm:$0xff]
        %v1428 = vld [vmem:[%s187 + $0x2558] sm:$0xff]
        %v1429 = vld [vmem:[%s187 + $0x2560] sm:$0xff]
        %v1430 = vld [vmem:[%s187 + $0x2568] sm:$0xff]
        %v1431 = vld [vmem:[%s187 + $0x2570] sm:$0xff]
        %v1432 = vld [vmem:[%s187 + $0x2578] sm:$0xff]
        %v1433 = vld [vmem:[%s187 + $0x2580] sm:$0xff]
        %v1434 = vld [vmem:[%s187 + $0x2588] sm:$0xff]
        %v1435 = vld [vmem:[%s187 + $0x2590] sm:$0xff]
        %v1436 = vld [vmem:[%s187 + $0x2598] sm:$0xff]
        %v1437 = vld [vmem:[%s187 + $0x25a0] sm:$0xff]
        %v1438 = vld [vmem:[%s187 + $0x25a8] sm:$0xff]
        %v1439 = vld [vmem:[%s187 + $0x25b0] sm:$0xff]
        %v1440 = vld [vmem:[%s187 + $0x25b8] sm:$0xff]
        %v1441 = vld [vmem:[%s187 + $0x25c0] sm:$0xff]
        %v1442 = vld [vmem:[%s187 + $0x25c8] sm:$0xff]
        %v1443 = vld [vmem:[%s187 + $0x25d0] sm:$0xff]
        %v1444 = vld [vmem:[%s187 + $0x25d8] sm:$0xff]
        %v1445 = vld [vmem:[%s187 + $0x25e0] sm:$0xff]
        %v1446 = vld [vmem:[%s187 + $0x25e8] sm:$0xff]
        %v1447 = vld [vmem:[%s187 + $0x25f0] sm:$0xff]
        %v1448 = vld [vmem:[%s187 + $0x25f8] sm:$0xff]
        %v1449 = vld [vmem:[%s187 + $0x2600] sm:$0xff]
        %v1450 = vld [vmem:[%s187 + $0x2608] sm:$0xff]
        %v1451 = vld [vmem:[%s187 + $0x2610] sm:$0xff]
        %v1452 = vld [vmem:[%s187 + $0x2618] sm:$0xff]
        %v1453 = vld [vmem:[%s187 + $0x2620] sm:$0xff]
        %v1454 = vld [vmem:[%s187 + $0x2628] sm:$0xff]
        %v1455 = vld [vmem:[%s187 + $0x2630] sm:$0xff]
        %v1456 = vld [vmem:[%s187 + $0x2638] sm:$0xff]
        %v1457 = vld [vmem:[%s187 + $0x2640] sm:$0xff]
        %v1458 = vld [vmem:[%s187 + $0x2648] sm:$0xff]
        %v1459 = vld [vmem:[%s187 + $0x2650] sm:$0xff]
        %v1460 = vld [vmem:[%s187 + $0x2658] sm:$0xff]
        %v1461 = vld [vmem:[%s187 + $0x2660] sm:$0xff]
        %v1462 = vld [vmem:[%s187 + $0x2668] sm:$0xff]
        %v1463 = vld [vmem:[%s187 + $0x2670] sm:$0xff]
        %v1464 = vld [vmem:[%s187 + $0x2678] sm:$0xff]
        %v1465 = vld [vmem:[%s187 + $0x2680] sm:$0xff]
        %v1466 = vld [vmem:[%s187 + $0x2688] sm:$0xff]
        %v1467 = vld [vmem:[%s187 + $0x2690] sm:$0xff]
        %v1468 = vld [vmem:[%s187 + $0x2698] sm:$0xff]
        %v1469 = vld [vmem:[%s187 + $0x26a0] sm:$0xff]
        %v1470 = vld [vmem:[%s187 + $0x26a8] sm:$0xff]
        %v1471 = vld [vmem:[%s187 + $0x26b0] sm:$0xff]
        %v1472 = vld [vmem:[%s187 + $0x26b8] sm:$0xff]
        %v1473 = vld [vmem:[%s187 + $0x26c0] sm:$0xff]
        %v1474 = vld [vmem:[%s187 + $0x26c8] sm:$0xff]
        %v1475 = vld [vmem:[%s187 + $0x26d0] sm:$0xff]
        %v1476 = vld [vmem:[%s187 + $0x26d8] sm:$0xff]
        %v1477 = vld [vmem:[%s187 + $0x26e0] sm:$0xff]
        %v1478 = vld [vmem:[%s187 + $0x26e8] sm:$0xff]
        %v1479 = vld [vmem:[%s187 + $0x26f0] sm:$0xff]
        %v1480 = vld [vmem:[%s187 + $0x26f8] sm:$0xff]
        %v1481 = vld [vmem:[%s187 + $0x2700] sm:$0xff]
        %v1482 = vld [vmem:[%s187 + $0x2708] sm:$0xff]
        %v1483 = vld [vmem:[%s187 + $0x2710] sm:$0xff]
        %v1484 = vld [vmem:[%s187 + $0x2718] sm:$0xff]
        %v1485 = vld [vmem:[%s187 + $0x2720] sm:$0xff]
        %v1486 = vld [vmem:[%s187 + $0x2728] sm:$0xff]
        %v1487 = vld [vmem:[%s187 + $0x2730] sm:$0xff]
        %v1488 = vld [vmem:[%s187 + $0x2738] sm:$0xff]
        %v1489 = vld [vmem:[%s187 + $0x2740] sm:$0xff]
        %v1490 = vld [vmem:[%s187 + $0x2748] sm:$0xff]
        %v1491 = vld [vmem:[%s187 + $0x2750] sm:$0xff]
        %v1492 = vld [vmem:[%s187 + $0x2758] sm:$0xff]
        %v1493 = vld [vmem:[%s187 + $0x2760] sm:$0xff]
        %v1494 = vld [vmem:[%s187 + $0x2768] sm:$0xff]
        %v1495 = vld [vmem:[%s187 + $0x2770] sm:$0xff]
        %v1496 = vld [vmem:[%s187 + $0x2778] sm:$0xff]
        %v1497 = vld [vmem:[%s187 + $0x2780] sm:$0xff]
        %v1498 = vld [vmem:[%s187 + $0x2788] sm:$0xff]
        %v1499 = vld [vmem:[%s187 + $0x2790] sm:$0xff]
        %v1500 = vld [vmem:[%s187 + $0x2798] sm:$0xff]
        %v1501 = vld [vmem:[%s187 + $0x27a0] sm:$0xff]
        %v1502 = vld [vmem:[%s187 + $0x27a8] sm:$0xff]
        %v1503 = vld [vmem:[%s187 + $0x27b0] sm:$0xff]
        %v1504 = vld [vmem:[%s187 + $0x27b8] sm:$0xff]
        %v1505 = vld [vmem:[%s187 + $0x27c0] sm:$0xff]
        %v1506 = vld [vmem:[%s187 + $0x27c8] sm:$0xff]
        %v1507 = vld [vmem:[%s187 + $0x27d0] sm:$0xff]
        %v1508 = vld [vmem:[%s187 + $0x27d8] sm:$0xff]
        %v1509 = vld [vmem:[%s187 + $0x27e0] sm:$0xff]
        %v1510 = vld [vmem:[%s187 + $0x27e8] sm:$0xff]
        %v1511 = vld [vmem:[%s187 + $0x27f0] sm:$0xff]
        %v1512 = vld [vmem:[%s187 + $0x27f8] sm:$0xff]
        %v1513 = vld [vmem:[%s187 + $0x2800] sm:$0xff]
        %v1514 = vld [vmem:[%s187 + $0x2808] sm:$0xff]
        %v1515 = vld [vmem:[%s187 + $0x2810] sm:$0xff]
        %v1516 = vld [vmem:[%s187 + $0x2818] sm:$0xff]
        %v1517 = vld [vmem:[%s187 + $0x2820] sm:$0xff]
        %v1518 = vld [vmem:[%s187 + $0x2828] sm:$0xff]
        %v1519 = vld [vmem:[%s187 + $0x2830] sm:$0xff]
        %v1520 = vld [vmem:[%s187 + $0x2838] sm:$0xff]
        %v1521 = vld [vmem:[%s187 + $0x2840] sm:$0xff]
        %v1522 = vld [vmem:[%s187 + $0x2848] sm:$0xff]
        %v1523 = vld [vmem:[%s187 + $0x2850] sm:$0xff]
        %v1524 = vld [vmem:[%s187 + $0x2858] sm:$0xff]
        %v1525 = vld [vmem:[%s187 + $0x2860] sm:$0xff]
        %v1526 = vld [vmem:[%s187 + $0x2868] sm:$0xff]
        %v1527 = vld [vmem:[%s187 + $0x2870] sm:$0xff]
        %v1528 = vld [vmem:[%s187 + $0x2878] sm:$0xff]
        %v1529 = vld [vmem:[%s187 + $0x2880] sm:$0xff]
        %v1530 = vld [vmem:[%s187 + $0x2888] sm:$0xff]
        %v1531 = vld [vmem:[%s187 + $0x2890] sm:$0xff]
        %v1532 = vld [vmem:[%s187 + $0x2898] sm:$0xff]
        %v1533 = vld [vmem:[%s187 + $0x28a0] sm:$0xff]
        %v1534 = vld [vmem:[%s187 + $0x28a8] sm:$0xff]
        %v1535 = vld [vmem:[%s187 + $0x28b0] sm:$0xff]
        %v1536 = vld [vmem:[%s187 + $0x28b8] sm:$0xff]
        %v1537 = vld [vmem:[%s187 + $0x28c0] sm:$0xff]
        %v1538 = vld [vmem:[%s187 + $0x28c8] sm:$0xff]
        %v1539 = vld [vmem:[%s187 + $0x28d0] sm:$0xff]
        %v1540 = vld [vmem:[%s187 + $0x28d8] sm:$0xff]
        %v1541 = vld [vmem:[%s187 + $0x28e0] sm:$0xff]
        %v1542 = vld [vmem:[%s187 + $0x28e8] sm:$0xff]
        %v1543 = vld [vmem:[%s187 + $0x28f0] sm:$0xff]
        %v1544 = vld [vmem:[%s187 + $0x28f8] sm:$0xff]
        %v1545 = vld [vmem:[%s187 + $0x2900] sm:$0xff]
        %v1546 = vld [vmem:[%s187 + $0x2908] sm:$0xff]
        %v1547 = vld [vmem:[%s187 + $0x2910] sm:$0xff]
        %v1548 = vld [vmem:[%s187 + $0x2918] sm:$0xff]
        %v1549 = vld [vmem:[%s187 + $0x2920] sm:$0xff]
        %v1550 = vld [vmem:[%s187 + $0x2928] sm:$0xff]
        %v1551 = vld [vmem:[%s187 + $0x2930] sm:$0xff]
        %v1552 = vld [vmem:[%s187 + $0x2938] sm:$0xff]
        %v1553 = vld [vmem:[%s187 + $0x2940] sm:$0xff]
        %v1554 = vld [vmem:[%s187 + $0x2948] sm:$0xff]
        %v1555 = vld [vmem:[%s187 + $0x2950] sm:$0xff]
        %v1556 = vld [vmem:[%s187 + $0x2958] sm:$0xff]
        %v1557 = vld [vmem:[%s187 + $0x2960] sm:$0xff]
        %v1558 = vld [vmem:[%s187 + $0x2968] sm:$0xff]
        %v1559 = vld [vmem:[%s187 + $0x2970] sm:$0xff]
        %v1560 = vld [vmem:[%s187 + $0x2978] sm:$0xff]
        %v1561 = vld [vmem:[%s187 + $0x2980] sm:$0xff]
        %v1562 = vld [vmem:[%s187 + $0x2988] sm:$0xff]
        %v1563 = vld [vmem:[%s187 + $0x2990] sm:$0xff]
        %v1564 = vld [vmem:[%s187 + $0x2998] sm:$0xff]
        %v1565 = vld [vmem:[%s187 + $0x29a0] sm:$0xff]
        %v1566 = vld [vmem:[%s187 + $0x29a8] sm:$0xff]
        %v1567 = vld [vmem:[%s187 + $0x29b0] sm:$0xff]
        %v1568 = vld [vmem:[%s187 + $0x29b8] sm:$0xff]
        %v1569 = vld [vmem:[%s187 + $0x29c0] sm:$0xff]
        %v1570 = vld [vmem:[%s187 + $0x29c8] sm:$0xff]
        %v1571 = vld [vmem:[%s187 + $0x29d0] sm:$0xff]
        %v1572 = vld [vmem:[%s187 + $0x29d8] sm:$0xff]
        %v1573 = vld [vmem:[%s187 + $0x29e0] sm:$0xff]
        %v1574 = vld [vmem:[%s187 + $0x29e8] sm:$0xff]
        %v1575 = vld [vmem:[%s187 + $0x29f0] sm:$0xff]
        %v1576 = vld [vmem:[%s187 + $0x29f8] sm:$0xff]
        %v1577 = vld [vmem:[%s187 + $0x2a00] sm:$0xff]
        %v1578 = vld [vmem:[%s187 + $0x2a08] sm:$0xff]
        %v1579 = vld [vmem:[%s187 + $0x2a10] sm:$0xff]
        %v1580 = vld [vmem:[%s187 + $0x2a18] sm:$0xff]
        %v1581 = vld [vmem:[%s187 + $0x2a20] sm:$0xff]
        %v1582 = vld [vmem:[%s187 + $0x2a28] sm:$0xff]
        %v1583 = vld [vmem:[%s187 + $0x2a30] sm:$0xff]
        %v1584 = vld [vmem:[%s187 + $0x2a38] sm:$0xff]
        %v1585 = vld [vmem:[%s187 + $0x2a40] sm:$0xff]
        %v1586 = vld [vmem:[%s187 + $0x2a48] sm:$0xff]
        %v1587 = vld [vmem:[%s187 + $0x2a50] sm:$0xff]
        %v1588 = vld [vmem:[%s187 + $0x2a58] sm:$0xff]
        %v1589 = vld [vmem:[%s187 + $0x2a60] sm:$0xff]
        %v1590 = vld [vmem:[%s187 + $0x2a68] sm:$0xff]
        %v1591 = vld [vmem:[%s187 + $0x2a70] sm:$0xff]
        %v1592 = vld [vmem:[%s187 + $0x2a78] sm:$0xff]
        %v1593 = vld [vmem:[%s187 + $0x2a80] sm:$0xff]
        %v1594 = vld [vmem:[%s187 + $0x2a88] sm:$0xff]
        %v1595 = vld [vmem:[%s187 + $0x2a90] sm:$0xff]
        %v1596 = vld [vmem:[%s187 + $0x2a98] sm:$0xff]
        %v1597 = vld [vmem:[%s187 + $0x2aa0] sm:$0xff]
        %v1598 = vld [vmem:[%s187 + $0x2aa8] sm:$0xff]
        %v1599 = vld [vmem:[%s187 + $0x2ab0] sm:$0xff]
        %v1600 = vld [vmem:[%s187 + $0x2ab8] sm:$0xff]
        %v1601 = vld [vmem:[%s187 + $0x2ac0] sm:$0xff]
        %v1602 = vld [vmem:[%s187 + $0x2ac8] sm:$0xff]
        %v1603 = vld [vmem:[%s187 + $0x2ad0] sm:$0xff]
        %v1604 = vld [vmem:[%s187 + $0x2ad8] sm:$0xff]
        %v1605 = vld [vmem:[%s187 + $0x2ae0] sm:$0xff]
        %v1606 = vld [vmem:[%s187 + $0x2ae8] sm:$0xff]
        %v1607 = vld [vmem:[%s187 + $0x2af0] sm:$0xff]
        %v1608 = vld [vmem:[%s187 + $0x2af8] sm:$0xff]
        %v1609 = vld [vmem:[%s187 + $0x2b00] sm:$0xff]
        %v1610 = vld [vmem:[%s187 + $0x2b08] sm:$0xff]
        %v1611 = vld [vmem:[%s187 + $0x2b10] sm:$0xff]
        %v1612 = vld [vmem:[%s187 + $0x2b18] sm:$0xff]
        %v1613 = vld [vmem:[%s187 + $0x2b20] sm:$0xff]
        %v1614 = vld [vmem:[%s187 + $0x2b28] sm:$0xff]
        %v1615 = vld [vmem:[%s187 + $0x2b30] sm:$0xff]
        %v1616 = vld [vmem:[%s187 + $0x2b38] sm:$0xff]
        %v1617 = vld [vmem:[%s187 + $0x2b40] sm:$0xff]
        %v1618 = vld [vmem:[%s187 + $0x2b48] sm:$0xff]
        %v1619 = vld [vmem:[%s187 + $0x2b50] sm:$0xff]
        %v1620 = vld [vmem:[%s187 + $0x2b58] sm:$0xff]
        %v1621 = vld [vmem:[%s187 + $0x2b60] sm:$0xff]
        %v1622 = vld [vmem:[%s187 + $0x2b68] sm:$0xff]
        %v1623 = vld [vmem:[%s187 + $0x2b70] sm:$0xff]
        %v1624 = vld [vmem:[%s187 + $0x2b78] sm:$0xff]
        %v1625 = vld [vmem:[%s187 + $0x2b80] sm:$0xff]
        %v1626 = vld [vmem:[%s187 + $0x2b88] sm:$0xff]
        %v1627 = vld [vmem:[%s187 + $0x2b90] sm:$0xff]
        %v1628 = vld [vmem:[%s187 + $0x2b98] sm:$0xff]
        %v1629 = vld [vmem:[%s187 + $0x2ba0] sm:$0xff]
        %v1630 = vld [vmem:[%s187 + $0x2ba8] sm:$0xff]
        %v1631 = vld [vmem:[%s187 + $0x2bb0] sm:$0xff]
        %v1632 = vld [vmem:[%s187 + $0x2bb8] sm:$0xff]
        %v1633 = vld [vmem:[%s187 + $0x2bc0] sm:$0xff]
        %v1634 = vld [vmem:[%s187 + $0x2bc8] sm:$0xff]
        %v1635 = vld [vmem:[%s187 + $0x2bd0] sm:$0xff]
        %v1636 = vld [vmem:[%s187 + $0x2bd8] sm:$0xff]
        %v1637 = vld [vmem:[%s187 + $0x2be0] sm:$0xff]
        %v1638 = vld [vmem:[%s187 + $0x2be8] sm:$0xff]
        %v1639 = vld [vmem:[%s187 + $0x2bf0] sm:$0xff]
        %v1640 = vld [vmem:[%s187 + $0x2bf8] sm:$0xff]
        %v1641 = vld [vmem:[%s187 + $0x2c00] sm:$0xff]
        %v1642 = vld [vmem:[%s187 + $0x2c08] sm:$0xff]
        %v1643 = vld [vmem:[%s187 + $0x2c10] sm:$0xff]
        %v1644 = vld [vmem:[%s187 + $0x2c18] sm:$0xff]
        %v1645 = vld [vmem:[%s187 + $0x2c20] sm:$0xff]
        %v1646 = vld [vmem:[%s187 + $0x2c28] sm:$0xff]
        %v1647 = vld [vmem:[%s187 + $0x2c30] sm:$0xff]
        %v1648 = vld [vmem:[%s187 + $0x2c38] sm:$0xff]
        %v1649 = vld [vmem:[%s187 + $0x2c40] sm:$0xff]
        %v1650 = vld [vmem:[%s187 + $0x2c48] sm:$0xff]
        %v1651 = vld [vmem:[%s187 + $0x2c50] sm:$0xff]
        %v1652 = vld [vmem:[%s187 + $0x2c58] sm:$0xff]
        %v1653 = vld [vmem:[%s187 + $0x2c60] sm:$0xff]
        %v1654 = vld [vmem:[%s187 + $0x2c68] sm:$0xff]
        %v1655 = vld [vmem:[%s187 + $0x2c70] sm:$0xff]
        %v1656 = vld [vmem:[%s187 + $0x2c78] sm:$0xff]
        %v1657 = vld [vmem:[%s187 + $0x2c80] sm:$0xff]
        %v1658 = vld [vmem:[%s187 + $0x2c88] sm:$0xff]
        %v1659 = vld [vmem:[%s187 + $0x2c90] sm:$0xff]
        %v1660 = vld [vmem:[%s187 + $0x2c98] sm:$0xff]
        %v1661 = vld [vmem:[%s187 + $0x2ca0] sm:$0xff]
        %v1662 = vld [vmem:[%s187 + $0x2ca8] sm:$0xff]
        %v1663 = vld [vmem:[%s187 + $0x2cb0] sm:$0xff]
        %v1664 = vld [vmem:[%s187 + $0x2cb8] sm:$0xff]
        %v1665 = vld [vmem:[%s187 + $0x2cc0] sm:$0xff]
        %v1666 = vld [vmem:[%s187 + $0x2cc8] sm:$0xff]
        %v1667 = vld [vmem:[%s187 + $0x2cd0] sm:$0xff]
        %v1668 = vld [vmem:[%s187 + $0x2cd8] sm:$0xff]
        %v1669 = vld [vmem:[%s187 + $0x2ce0] sm:$0xff]
        %v1670 = vld [vmem:[%s187 + $0x2ce8] sm:$0xff]
        %v1671 = vld [vmem:[%s187 + $0x2cf0] sm:$0xff]
        %v1672 = vld [vmem:[%s187 + $0x2cf8] sm:$0xff]
        %v1673 = vld [vmem:[%s187 + $0x2d00] sm:$0xff]
        %v1674 = vld [vmem:[%s187 + $0x2d08] sm:$0xff]
        %v1675 = vld [vmem:[%s187 + $0x2d10] sm:$0xff]
        %v1676 = vld [vmem:[%s187 + $0x2d18] sm:$0xff]
        %v1677 = vld [vmem:[%s187 + $0x2d20] sm:$0xff]
        %v1678 = vld [vmem:[%s187 + $0x2d28] sm:$0xff]
        %v1679 = vld [vmem:[%s187 + $0x2d30] sm:$0xff]
        %v1680 = vld [vmem:[%s187 + $0x2d38] sm:$0xff]
        %v1681 = vld [vmem:[%s187 + $0x2d40] sm:$0xff]
        %v1682 = vld [vmem:[%s187 + $0x2d48] sm:$0xff]
        %v1683 = vld [vmem:[%s187 + $0x2d50] sm:$0xff]
        %v1684 = vld [vmem:[%s187 + $0x2d58] sm:$0xff]
        %v1685 = vld [vmem:[%s187 + $0x2d60] sm:$0xff]
        %v1686 = vld [vmem:[%s187 + $0x2d68] sm:$0xff]
        %v1687 = vld [vmem:[%s187 + $0x2d70] sm:$0xff]
        %v1688 = vld [vmem:[%s187 + $0x2d78] sm:$0xff]
        %v1689 = vld [vmem:[%s187 + $0x2d80] sm:$0xff]
        %v1690 = vld [vmem:[%s187 + $0x2d88] sm:$0xff]
        %v1691 = vld [vmem:[%s187 + $0x2d90] sm:$0xff]
        %v1692 = vld [vmem:[%s187 + $0x2d98] sm:$0xff]
        %v1693 = vld [vmem:[%s187 + $0x2da0] sm:$0xff]
        %v1694 = vld [vmem:[%s187 + $0x2da8] sm:$0xff]
        %v1695 = vld [vmem:[%s187 + $0x2db0] sm:$0xff]
        %v1696 = vld [vmem:[%s187 + $0x2db8] sm:$0xff]
        %v1697 = vld [vmem:[%s187 + $0x2dc0] sm:$0xff]
        %v1698 = vld [vmem:[%s187 + $0x2dc8] sm:$0xff]
        %v1699 = vld [vmem:[%s187 + $0x2dd0] sm:$0xff]
        %v1700 = vld [vmem:[%s187 + $0x2dd8] sm:$0xff]
        %v1701 = vld [vmem:[%s187 + $0x2de0] sm:$0xff]
        %v1702 = vld [vmem:[%s187 + $0x2de8] sm:$0xff]
        %v1703 = vld [vmem:[%s187 + $0x2df0] sm:$0xff]
        %v1704 = vld [vmem:[%s187 + $0x2df8] sm:$0xff]
        %v1705 = vld [vmem:[%s187 + $0x2e00] sm:$0xff]
        %v1706 = vld [vmem:[%s187 + $0x2e08] sm:$0xff]
        %v1707 = vld [vmem:[%s187 + $0x2e10] sm:$0xff]
        %v1708 = vld [vmem:[%s187 + $0x2e18] sm:$0xff]
        %v1709 = vld [vmem:[%s187 + $0x2e20] sm:$0xff]
        %v1710 = vld [vmem:[%s187 + $0x2e28] sm:$0xff]
        %v1711 = vld [vmem:[%s187 + $0x2e30] sm:$0xff]
        %v1712 = vld [vmem:[%s187 + $0x2e38] sm:$0xff]
        %v1713 = vld [vmem:[%s187 + $0x2e40] sm:$0xff]
        %v1714 = vld [vmem:[%s187 + $0x2e48] sm:$0xff]
        %v1715 = vld [vmem:[%s187 + $0x2e50] sm:$0xff]
        %v1716 = vld [vmem:[%s187 + $0x2e58] sm:$0xff]
        %v1717 = vld [vmem:[%s187 + $0x2e60] sm:$0xff]
        %v1718 = vld [vmem:[%s187 + $0x2e68] sm:$0xff]
        %v1719 = vld [vmem:[%s187 + $0x2e70] sm:$0xff]
        %v1720 = vld [vmem:[%s187 + $0x2e78] sm:$0xff]
        %v1721 = vld [vmem:[%s187 + $0x2e80] sm:$0xff]
        %v1722 = vld [vmem:[%s187 + $0x2e88] sm:$0xff]
        %v1723 = vld [vmem:[%s187 + $0x2e90] sm:$0xff]
        %v1724 = vld [vmem:[%s187 + $0x2e98] sm:$0xff]
        %v1725 = vld [vmem:[%s187 + $0x2ea0] sm:$0xff]
        %v1726 = vld [vmem:[%s187 + $0x2ea8] sm:$0xff]
        %v1727 = vld [vmem:[%s187 + $0x2eb0] sm:$0xff]
        %v1728 = vld [vmem:[%s187 + $0x2eb8] sm:$0xff]
        %v1729 = vld [vmem:[%s187 + $0x2ec0] sm:$0xff]
        %v1730 = vld [vmem:[%s187 + $0x2ec8] sm:$0xff]
        %v1731 = vld [vmem:[%s187 + $0x2ed0] sm:$0xff]
        %v1732 = vld [vmem:[%s187 + $0x2ed8] sm:$0xff]
        %v1733 = vld [vmem:[%s187 + $0x2ee0] sm:$0xff]
        %v1734 = vld [vmem:[%s187 + $0x2ee8] sm:$0xff]
        %v1735 = vld [vmem:[%s187 + $0x2ef0] sm:$0xff]
        %v1736 = vld [vmem:[%s187 + $0x2ef8] sm:$0xff]
        %v1737 = vld [vmem:[%s187 + $0x2f00] sm:$0xff]
        %v1738 = vld [vmem:[%s187 + $0x2f08] sm:$0xff]
        %v1739 = vld [vmem:[%s187 + $0x2f10] sm:$0xff]
        %v1740 = vld [vmem:[%s187 + $0x2f18] sm:$0xff]
        %v1741 = vld [vmem:[%s187 + $0x2f20] sm:$0xff]
        %v1742 = vld [vmem:[%s187 + $0x2f28] sm:$0xff]
        %v1743 = vld [vmem:[%s187 + $0x2f30] sm:$0xff]
        %v1744 = vld [vmem:[%s187 + $0x2f38] sm:$0xff]
        %v1745 = vld [vmem:[%s187 + $0x2f40] sm:$0xff]
        %v1746 = vld [vmem:[%s187 + $0x2f48] sm:$0xff]
        %v1747 = vld [vmem:[%s187 + $0x2f50] sm:$0xff]
        %v1748 = vld [vmem:[%s187 + $0x2f58] sm:$0xff]
        %v1749 = vld [vmem:[%s187 + $0x2f60] sm:$0xff]
        %v1750 = vld [vmem:[%s187 + $0x2f68] sm:$0xff]
        %v1751 = vld [vmem:[%s187 + $0x2f70] sm:$0xff]
        %v1752 = vld [vmem:[%s187 + $0x2f78] sm:$0xff]
        %v1753 = vld [vmem:[%s187 + $0x2f80] sm:$0xff]
        %v1754 = vld [vmem:[%s187 + $0x2f88] sm:$0xff]
        %v1755 = vld [vmem:[%s187 + $0x2f90] sm:$0xff]
        %v1756 = vld [vmem:[%s187 + $0x2f98] sm:$0xff]
        %v1757 = vld [vmem:[%s187 + $0x2fa0] sm:$0xff]
        %v1758 = vld [vmem:[%s187 + $0x2fa8] sm:$0xff]
        %v1759 = vld [vmem:[%s187 + $0x2fb0] sm:$0xff]
        %v1760 = vld [vmem:[%s187 + $0x2fb8] sm:$0xff]
        %v1761 = vld [vmem:[%s187 + $0x2fc0] sm:$0xff]
        %v1762 = vld [vmem:[%s187 + $0x2fc8] sm:$0xff]
        %v1763 = vld [vmem:[%s187 + $0x2fd0] sm:$0xff]
        %v1764 = vld [vmem:[%s187 + $0x2fd8] sm:$0xff]
        %v1765 = vld [vmem:[%s187 + $0x2fe0] sm:$0xff]
        %v1766 = vld [vmem:[%s187 + $0x2fe8] sm:$0xff]
        %v1767 = vld [vmem:[%s187 + $0x2ff0] sm:$0xff]
        %v1768 = vld [vmem:[%s187 + $0x2ff8] sm:$0xff]
        %v1769 = vld [vmem:[%s187 + $0x3000] sm:$0xff]
        %v1770 = vld [vmem:[%s187 + $0x3008] sm:$0xff]
        %v1771 = vld [vmem:[%s187 + $0x3010] sm:$0xff]
        %v1772 = vld [vmem:[%s187 + $0x3018] sm:$0xff]
        %v1773 = vld [vmem:[%s187 + $0x3020] sm:$0xff]
        %v1774 = vld [vmem:[%s187 + $0x3028] sm:$0xff]
        %v1775 = vld [vmem:[%s187 + $0x3030] sm:$0xff]
        %v1776 = vld [vmem:[%s187 + $0x3038] sm:$0xff]
        %v1777 = vld [vmem:[%s187 + $0x3040] sm:$0xff]
        %v1778 = vld [vmem:[%s187 + $0x3048] sm:$0xff]
        %v1779 = vld [vmem:[%s187 + $0x3050] sm:$0xff]
        %v1780 = vld [vmem:[%s187 + $0x3058] sm:$0xff]
        %v1781 = vld [vmem:[%s187 + $0x3060] sm:$0xff]
        %v1782 = vld [vmem:[%s187 + $0x3068] sm:$0xff]
        %v1783 = vld [vmem:[%s187 + $0x3070] sm:$0xff]
        %v1784 = vld [vmem:[%s187 + $0x3078] sm:$0xff]
        %v1785 = vld [vmem:[%s187 + $0x3080] sm:$0xff]
        %v1786 = vld [vmem:[%s187 + $0x3088] sm:$0xff]
        %v1787 = vld [vmem:[%s187 + $0x3090] sm:$0xff]
        %v1788 = vld [vmem:[%s187 + $0x3098] sm:$0xff]
        %v1789 = vld [vmem:[%s187 + $0x30a0] sm:$0xff]
        %v1790 = vld [vmem:[%s187 + $0x30a8] sm:$0xff]
        %v1791 = vld [vmem:[%s187 + $0x30b0] sm:$0xff]
        %v1792 = vld [vmem:[%s187 + $0x30b8] sm:$0xff]
        %v1793 = vld [vmem:[%s187 + $0x30c0] sm:$0xff]
        %v1794 = vld [vmem:[%s187 + $0x30c8] sm:$0xff]
        %v1795 = vld [vmem:[%s187 + $0x30d0] sm:$0xff]
        %v1796 = vld [vmem:[%s187 + $0x30d8] sm:$0xff]
        %v1797 = vld [vmem:[%s187 + $0x30e0] sm:$0xff]
        %v1798 = vld [vmem:[%s187 + $0x30e8] sm:$0xff]
        %v1799 = vld [vmem:[%s187 + $0x30f0] sm:$0xff]
        %v1800 = vld [vmem:[%s187 + $0x30f8] sm:$0xff]
        %v1801 = vld [vmem:[%s187 + $0x3100] sm:$0xff]
        %v1802 = vld [vmem:[%s187 + $0x3108] sm:$0xff]
        %v1803 = vld [vmem:[%s187 + $0x3110] sm:$0xff]
        %v1804 = vld [vmem:[%s187 + $0x3118] sm:$0xff]
        %v1805 = vld [vmem:[%s187 + $0x3120] sm:$0xff]
        %v1806 = vld [vmem:[%s187 + $0x3128] sm:$0xff]
        %v1807 = vld [vmem:[%s187 + $0x3130] sm:$0xff]
        %v1808 = vld [vmem:[%s187 + $0x3138] sm:$0xff]
        %v1809 = vld [vmem:[%s187 + $0x3140] sm:$0xff]
        %v1810 = vld [vmem:[%s187 + $0x3148] sm:$0xff]
        %v1811 = vld [vmem:[%s187 + $0x3150] sm:$0xff]
        %v1812 = vld [vmem:[%s187 + $0x3158] sm:$0xff]
        %v1813 = vld [vmem:[%s187 + $0x3160] sm:$0xff]
        %v1814 = vld [vmem:[%s187 + $0x3168] sm:$0xff]
        %v1815 = vld [vmem:[%s187 + $0x3170] sm:$0xff]
        %v1816 = vld [vmem:[%s187 + $0x3178] sm:$0xff]
        %v1817 = vld [vmem:[%s187 + $0x3180] sm:$0xff]
        %v1818 = vld [vmem:[%s187 + $0x3188] sm:$0xff]
        %v1819 = vld [vmem:[%s187 + $0x3190] sm:$0xff]
        %v1820 = vld [vmem:[%s187 + $0x3198] sm:$0xff]
        %v1821 = vld [vmem:[%s187 + $0x31a0] sm:$0xff]
        %v1822 = vld [vmem:[%s187 + $0x31a8] sm:$0xff]
        %v1823 = vld [vmem:[%s187 + $0x31b0] sm:$0xff]
        %v1824 = vld [vmem:[%s187 + $0x31b8] sm:$0xff]
        %v1825 = vld [vmem:[%s187 + $0x31c0] sm:$0xff]
        %v1826 = vld [vmem:[%s187 + $0x31c8] sm:$0xff]
        %v1827 = vld [vmem:[%s187 + $0x31d0] sm:$0xff]
        %v1828 = vld [vmem:[%s187 + $0x31d8] sm:$0xff]
        %v1829 = vld [vmem:[%s187 + $0x31e0] sm:$0xff]
        %v1830 = vld [vmem:[%s187 + $0x31e8] sm:$0xff]
        %v1831 = vld [vmem:[%s187 + $0x31f0] sm:$0xff]
        %v1832 = vld [vmem:[%s187 + $0x31f8] sm:$0xff]
        %v1833 = vld [vmem:[%s187 + $0x3200] sm:$0xff]
        %v1834 = vld [vmem:[%s187 + $0x3208] sm:$0xff]
        %v1835 = vld [vmem:[%s187 + $0x3210] sm:$0xff]
        %v1836 = vld [vmem:[%s187 + $0x3218] sm:$0xff]
        %v1837 = vld [vmem:[%s187 + $0x3220] sm:$0xff]
        %v1838 = vld [vmem:[%s187 + $0x3228] sm:$0xff]
        %v1839 = vld [vmem:[%s187 + $0x3230] sm:$0xff]
        %v1840 = vld [vmem:[%s187 + $0x3238] sm:$0xff]
        %v1841 = vld [vmem:[%s187 + $0x3240] sm:$0xff]
        %v1842 = vld [vmem:[%s187 + $0x3248] sm:$0xff]
        %v1843 = vld [vmem:[%s187 + $0x3250] sm:$0xff]
        %v1844 = vld [vmem:[%s187 + $0x3258] sm:$0xff]
        %v1845 = vld [vmem:[%s187 + $0x3260] sm:$0xff]
        %v1846 = vld [vmem:[%s187 + $0x3268] sm:$0xff]
        %v1847 = vld [vmem:[%s187 + $0x3270] sm:$0xff]
        %v1848 = vld [vmem:[%s187 + $0x3278] sm:$0xff]
        %v1849 = vld [vmem:[%s187 + $0x3280] sm:$0xff]
        %v1850 = vld [vmem:[%s187 + $0x3288] sm:$0xff]
        %v1851 = vld [vmem:[%s187 + $0x3290] sm:$0xff]
        %v1852 = vld [vmem:[%s187 + $0x3298] sm:$0xff]
        %v1853 = vld [vmem:[%s187 + $0x32a0] sm:$0xff]
        %v1854 = vld [vmem:[%s187 + $0x32a8] sm:$0xff]
        %v1855 = vld [vmem:[%s187 + $0x32b0] sm:$0xff]
        %v1856 = vld [vmem:[%s187 + $0x32b8] sm:$0xff]
        %v1857 = vld [vmem:[%s187 + $0x32c0] sm:$0xff]
        %v1858 = vld [vmem:[%s187 + $0x32c8] sm:$0xff]
        %v1859 = vld [vmem:[%s187 + $0x32d0] sm:$0xff]
        %v1860 = vld [vmem:[%s187 + $0x32d8] sm:$0xff]
        %v1861 = vld [vmem:[%s187 + $0x32e0] sm:$0xff]
        %v1862 = vld [vmem:[%s187 + $0x32e8] sm:$0xff]
        %v1863 = vld [vmem:[%s187 + $0x32f0] sm:$0xff]
        %v1864 = vld [vmem:[%s187 + $0x32f8] sm:$0xff]
        %v1865 = vld [vmem:[%s187 + $0x3300] sm:$0xff]
        %v1866 = vld [vmem:[%s187 + $0x3308] sm:$0xff]
        %v1867 = vld [vmem:[%s187 + $0x3310] sm:$0xff]
        %v1868 = vld [vmem:[%s187 + $0x3318] sm:$0xff]
        %v1869 = vld [vmem:[%s187 + $0x3320] sm:$0xff]
        %v1870 = vld [vmem:[%s187 + $0x3328] sm:$0xff]
        %v1871 = vld [vmem:[%s187 + $0x3330] sm:$0xff]
        %v1872 = vld [vmem:[%s187 + $0x3338] sm:$0xff]
        %v1873 = vld [vmem:[%s187 + $0x3340] sm:$0xff]
        %v1874 = vld [vmem:[%s187 + $0x3348] sm:$0xff]
        %v1875 = vld [vmem:[%s187 + $0x3350] sm:$0xff]
        %v1876 = vld [vmem:[%s187 + $0x3358] sm:$0xff]
        %v1877 = vld [vmem:[%s187 + $0x3360] sm:$0xff]
        %v1878 = vld [vmem:[%s187 + $0x3368] sm:$0xff]
        %v1879 = vld [vmem:[%s187 + $0x3370] sm:$0xff]
        %v1880 = vld [vmem:[%s187 + $0x3378] sm:$0xff]
        %v1881 = vld [vmem:[%s187 + $0x3380] sm:$0xff]
        %v1882 = vld [vmem:[%s187 + $0x3388] sm:$0xff]
        %v1883 = vld [vmem:[%s187 + $0x3390] sm:$0xff]
        %v1884 = vld [vmem:[%s187 + $0x3398] sm:$0xff]
        %v1885 = vld [vmem:[%s187 + $0x33a0] sm:$0xff]
        %v1886 = vld [vmem:[%s187 + $0x33a8] sm:$0xff]
        %v1887 = vld [vmem:[%s187 + $0x33b0] sm:$0xff]
        %v1888 = vld [vmem:[%s187 + $0x33b8] sm:$0xff]
        %v1889 = vld [vmem:[%s187 + $0x33c0] sm:$0xff]
        %v1890 = vld [vmem:[%s187 + $0x33c8] sm:$0xff]
        %v1891 = vld [vmem:[%s187 + $0x33d0] sm:$0xff]
        %v1892 = vld [vmem:[%s187 + $0x33d8] sm:$0xff]
        %v1893 = vld [vmem:[%s187 + $0x33e0] sm:$0xff]
        %v1894 = vld [vmem:[%s187 + $0x33e8] sm:$0xff]
        %v1895 = vld [vmem:[%s187 + $0x33f0] sm:$0xff]
        %v1896 = vld [vmem:[%s187 + $0x33f8] sm:$0xff]
        %v1897 = vld [vmem:[%s187 + $0x3400] sm:$0xff]
        %v1898 = vld [vmem:[%s187 + $0x3408] sm:$0xff]
        %v1899 = vld [vmem:[%s187 + $0x3410] sm:$0xff]
        %v1900 = vld [vmem:[%s187 + $0x3418] sm:$0xff]
        %v1901 = vld [vmem:[%s187 + $0x3420] sm:$0xff]
        %v1902 = vld [vmem:[%s187 + $0x3428] sm:$0xff]
        %v1903 = vld [vmem:[%s187 + $0x3430] sm:$0xff]
        %v1904 = vld [vmem:[%s187 + $0x3438] sm:$0xff]
        %v1905 = vld [vmem:[%s187 + $0x3440] sm:$0xff]
        %v1906 = vld [vmem:[%s187 + $0x3448] sm:$0xff]
        %v1907 = vld [vmem:[%s187 + $0x3450] sm:$0xff]
        %v1908 = vld [vmem:[%s187 + $0x3458] sm:$0xff]
        %v1909 = vld [vmem:[%s187 + $0x3460] sm:$0xff]
        %v1910 = vld [vmem:[%s187 + $0x3468] sm:$0xff]
        %v1911 = vld [vmem:[%s187 + $0x3470] sm:$0xff]
        %v1912 = vld [vmem:[%s187 + $0x3478] sm:$0xff]
        %v1913 = vld [vmem:[%s187 + $0x3480] sm:$0xff]
        %v1914 = vld [vmem:[%s187 + $0x3488] sm:$0xff]
        %v1915 = vld [vmem:[%s187 + $0x3490] sm:$0xff]
        %v1916 = vld [vmem:[%s187 + $0x3498] sm:$0xff]
        %v1917 = vld [vmem:[%s187 + $0x34a0] sm:$0xff]
        %v1918 = vld [vmem:[%s187 + $0x34a8] sm:$0xff]
        %v1919 = vld [vmem:[%s187 + $0x34b0] sm:$0xff]
        %v1920 = vld [vmem:[%s187 + $0x34b8] sm:$0xff]
        %v1921 = vld [vmem:[%s187 + $0x34c0] sm:$0xff]
        %v1922 = vld [vmem:[%s187 + $0x34c8] sm:$0xff]
        %v1923 = vld [vmem:[%s187 + $0x34d0] sm:$0xff]
        %v1924 = vld [vmem:[%s187 + $0x34d8] sm:$0xff]
        %v1925 = vld [vmem:[%s187 + $0x34e0] sm:$0xff]
        %v1926 = vld [vmem:[%s187 + $0x34e8] sm:$0xff]
        %v1927 = vld [vmem:[%s187 + $0x34f0] sm:$0xff]
        %v1928 = vld [vmem:[%s187 + $0x34f8] sm:$0xff]
        %v1929 = vld [vmem:[%s187 + $0x3500] sm:$0xff]
        %v1930 = vld [vmem:[%s187 + $0x3508] sm:$0xff]
        %v1931 = vld [vmem:[%s187 + $0x3510] sm:$0xff]
        %v1932 = vld [vmem:[%s187 + $0x3518] sm:$0xff]
        %v1933 = vld [vmem:[%s187 + $0x3520] sm:$0xff]
        %v1934 = vld [vmem:[%s187 + $0x3528] sm:$0xff]
        %v1935 = vld [vmem:[%s187 + $0x3530] sm:$0xff]
        %v1936 = vld [vmem:[%s187 + $0x3538] sm:$0xff]
        %v1937 = vld [vmem:[%s187 + $0x3540] sm:$0xff]
        %v1938 = vld [vmem:[%s187 + $0x3548] sm:$0xff]
        %v1939 = vld [vmem:[%s187 + $0x3550] sm:$0xff]
        %v1940 = vld [vmem:[%s187 + $0x3558] sm:$0xff]
        %v1941 = vld [vmem:[%s187 + $0x3560] sm:$0xff]
        %v1942 = vld [vmem:[%s187 + $0x3568] sm:$0xff]
        %v1943 = vld [vmem:[%s187 + $0x3570] sm:$0xff]
        %v1944 = vld [vmem:[%s187 + $0x3578] sm:$0xff]
        %v1945 = vld [vmem:[%s187 + $0x3580] sm:$0xff]
        %v1946 = vld [vmem:[%s187 + $0x3588] sm:$0xff]
        %v1947 = vld [vmem:[%s187 + $0x3590] sm:$0xff]
        %v1948 = vld [vmem:[%s187 + $0x3598] sm:$0xff]
        %v1949 = vld [vmem:[%s187 + $0x35a0] sm:$0xff]
        %v1950 = vld [vmem:[%s187 + $0x35a8] sm:$0xff]
        %v1951 = vld [vmem:[%s187 + $0x35b0] sm:$0xff]
        %v1952 = vld [vmem:[%s187 + $0x35b8] sm:$0xff]
        %v1953 = vld [vmem:[%s187 + $0x35c0] sm:$0xff]
        %v1954 = vld [vmem:[%s187 + $0x35c8] sm:$0xff]
        %v1955 = vld [vmem:[%s187 + $0x35d0] sm:$0xff]
        %v1956 = vld [vmem:[%s187 + $0x35d8] sm:$0xff]
        %v1957 = vld [vmem:[%s187 + $0x35e0] sm:$0xff]
        %v1958 = vld [vmem:[%s187 + $0x35e8] sm:$0xff]
        %v1959 = vld [vmem:[%s187 + $0x35f0] sm:$0xff]
        %v1960 = vld [vmem:[%s187 + $0x35f8] sm:$0xff]
        %v1961 = vld [vmem:[%s187 + $0x3600] sm:$0xff]
        %v1962 = vld [vmem:[%s187 + $0x3608] sm:$0xff]
        %v1963 = vld [vmem:[%s187 + $0x3610] sm:$0xff]
        %v1964 = vld [vmem:[%s187 + $0x3618] sm:$0xff]
        %v1965 = vld [vmem:[%s187 + $0x3620] sm:$0xff]
        %v1966 = vld [vmem:[%s187 + $0x3628] sm:$0xff]
        %v1967 = vld [vmem:[%s187 + $0x3630] sm:$0xff]
        %v1968 = vld [vmem:[%s187 + $0x3638] sm:$0xff]
        %v1969 = vld [vmem:[%s187 + $0x3640] sm:$0xff]
        %v1970 = vld [vmem:[%s187 + $0x3648] sm:$0xff]
        %v1971 = vld [vmem:[%s187 + $0x3650] sm:$0xff]
        %v1972 = vld [vmem:[%s187 + $0x3658] sm:$0xff]
        %v1973 = vld [vmem:[%s187 + $0x3660] sm:$0xff]
        %v1974 = vld [vmem:[%s187 + $0x3668] sm:$0xff]
        %v1975 = vld [vmem:[%s187 + $0x3670] sm:$0xff]
        %v1976 = vld [vmem:[%s187 + $0x3678] sm:$0xff]
        %v1977 = vld [vmem:[%s187 + $0x3680] sm:$0xff]
        %v1978 = vld [vmem:[%s187 + $0x3688] sm:$0xff]
        %v1979 = vld [vmem:[%s187 + $0x3690] sm:$0xff]
        %v1980 = vld [vmem:[%s187 + $0x3698] sm:$0xff]
        %v1981 = vld [vmem:[%s187 + $0x36a0] sm:$0xff]
        %v1982 = vld [vmem:[%s187 + $0x36a8] sm:$0xff]
        %v1983 = vld [vmem:[%s187 + $0x36b0] sm:$0xff]
        %v1984 = vld [vmem:[%s187 + $0x36b8] sm:$0xff]
        %v1985 = vld [vmem:[%s187 + $0x36c0] sm:$0xff]
        %v1986 = vld [vmem:[%s187 + $0x36c8] sm:$0xff]
        %v1987 = vld [vmem:[%s187 + $0x36d0] sm:$0xff]
        %v1988 = vld [vmem:[%s187 + $0x36d8] sm:$0xff]
        %v1989 = vld [vmem:[%s187 + $0x36e0] sm:$0xff]
        %v1990 = vld [vmem:[%s187 + $0x36e8] sm:$0xff]
        %v1991 = vld [vmem:[%s187 + $0x36f0] sm:$0xff]
        %v1992 = vld [vmem:[%s187 + $0x36f8] sm:$0xff]
        %v1993 = vld [vmem:[%s187 + $0x3700] sm:$0xff]
        %v1994 = vld [vmem:[%s187 + $0x3708] sm:$0xff]
        %v1995 = vld [vmem:[%s187 + $0x3710] sm:$0xff]
        %v1996 = vld [vmem:[%s187 + $0x3718] sm:$0xff]
        %v1997 = vld [vmem:[%s187 + $0x3720] sm:$0xff]
        %v1998 = vld [vmem:[%s187 + $0x3728] sm:$0xff]
        %v1999 = vld [vmem:[%s187 + $0x3730] sm:$0xff]
        %v2000 = vld [vmem:[%s187 + $0x3738] sm:$0xff]
        %v2001 = vld [vmem:[%s187 + $0x3740] sm:$0xff]
        %v2002 = vld [vmem:[%s187 + $0x3748] sm:$0xff]
        %v2003 = vld [vmem:[%s187 + $0x3750] sm:$0xff]
        %v2004 = vld [vmem:[%s187 + $0x3758] sm:$0xff]
        %v2005 = vld [vmem:[%s187 + $0x3760] sm:$0xff]
        %v2006 = vld [vmem:[%s187 + $0x3768] sm:$0xff]
        %v2007 = vld [vmem:[%s187 + $0x3770] sm:$0xff]
        %v2008 = vld [vmem:[%s187 + $0x3778] sm:$0xff]
        %v2009 = vld [vmem:[%s187 + $0x3780] sm:$0xff]
        %v2010 = vld [vmem:[%s187 + $0x3788] sm:$0xff]
        %v2011 = vld [vmem:[%s187 + $0x3790] sm:$0xff]
        %v2012 = vld [vmem:[%s187 + $0x3798] sm:$0xff]
        %v2013 = vld [vmem:[%s187 + $0x37a0] sm:$0xff]
        %v2014 = vld [vmem:[%s187 + $0x37a8] sm:$0xff]
        %v2015 = vld [vmem:[%s187 + $0x37b0] sm:$0xff]
        %v2016 = vld [vmem:[%s187 + $0x37b8] sm:$0xff]
        %v2017 = vld [vmem:[%s187 + $0x37c0] sm:$0xff]
        %v2018 = vld [vmem:[%s187 + $0x37c8] sm:$0xff]
        %v2019 = vld [vmem:[%s187 + $0x37d0] sm:$0xff]
        %v2020 = vld [vmem:[%s187 + $0x37d8] sm:$0xff]
        %v2021 = vld [vmem:[%s187 + $0x37e0] sm:$0xff]
        %v2022 = vld [vmem:[%s187 + $0x37e8] sm:$0xff]
        %v2023 = vld [vmem:[%s187 + $0x37f0] sm:$0xff]
        %v2024 = vld [vmem:[%s187 + $0x37f8] sm:$0xff]
        %v2025 = vld [vmem:[%s187 + $0x3800] sm:$0xff]
        %v2026 = vld [vmem:[%s187 + $0x3808] sm:$0xff]
        %v2027 = vld [vmem:[%s187 + $0x3810] sm:$0xff]
        %v2028 = vld [vmem:[%s187 + $0x3818] sm:$0xff]
        %v2029 = vld [vmem:[%s187 + $0x3820] sm:$0xff]
        %v2030 = vld [vmem:[%s187 + $0x3828] sm:$0xff]
        %v2031 = vld [vmem:[%s187 + $0x3830] sm:$0xff]
        %v2032 = vld [vmem:[%s187 + $0x3838] sm:$0xff]
        %v2033 = vld [vmem:[%s187 + $0x3840] sm:$0xff]
        %v2034 = vld [vmem:[%s187 + $0x3848] sm:$0xff]
        %v2035 = vld [vmem:[%s187 + $0x3850] sm:$0xff]
        %v2036 = vld [vmem:[%s187 + $0x3858] sm:$0xff]
        %v2037 = vld [vmem:[%s187 + $0x3860] sm:$0xff]
        %v2038 = vld [vmem:[%s187 + $0x3868] sm:$0xff]
        %v2039 = vld [vmem:[%s187 + $0x3870] sm:$0xff]
        %v2040 = vld [vmem:[%s187 + $0x3878] sm:$0xff]
        %v2041 = vld [vmem:[%s187 + $0x3880] sm:$0xff]
        %v2042 = vld [vmem:[%s187 + $0x3888] sm:$0xff]
        %v2043 = vld [vmem:[%s187 + $0x3890] sm:$0xff]
        %v2044 = vld [vmem:[%s187 + $0x3898] sm:$0xff]
        %v2045 = vld [vmem:[%s187 + $0x38a0] sm:$0xff]
        %v2046 = vld [vmem:[%s187 + $0x38a8] sm:$0xff]
        %v2047 = vld [vmem:[%s187 + $0x38b0] sm:$0xff]
        %v2048 = vld [vmem:[%s187 + $0x38b8] sm:$0xff]
        %v2049 = vld [vmem:[%s187 + $0x38c0] sm:$0xff]
        %v2050 = vld [vmem:[%s187 + $0x38c8] sm:$0xff]
        %v2051 = vld [vmem:[%s187 + $0x38d0] sm:$0xff]
        %v2052 = vld [vmem:[%s187 + $0x38d8] sm:$0xff]
        %v2053 = vld [vmem:[%s187 + $0x38e0] sm:$0xff]
        %v2054 = vld [vmem:[%s187 + $0x38e8] sm:$0xff]
        %v2055 = vld [vmem:[%s187 + $0x38f0] sm:$0xff]
        %v2056 = vld [vmem:[%s187 + $0x38f8] sm:$0xff]
        %v2057 = vld [vmem:[%s187 + $0x3900] sm:$0xff]
        %v2058 = vld [vmem:[%s187 + $0x3908] sm:$0xff]
        %v2059 = vld [vmem:[%s187 + $0x3910] sm:$0xff]
        %v2060 = vld [vmem:[%s187 + $0x3918] sm:$0xff]
        %v2061 = vld [vmem:[%s187 + $0x3920] sm:$0xff]
        %v2062 = vld [vmem:[%s187 + $0x3928] sm:$0xff]
        %v2063 = vld [vmem:[%s187 + $0x3930] sm:$0xff]
        %v2064 = vld [vmem:[%s187 + $0x3938] sm:$0xff]
        %v2065 = vld [vmem:[%s187 + $0x3940] sm:$0xff]
        %v2066 = vld [vmem:[%s187 + $0x3948] sm:$0xff]
        %v2067 = vld [vmem:[%s187 + $0x3950] sm:$0xff]
        %v2068 = vld [vmem:[%s187 + $0x3958] sm:$0xff]
        %v2069 = vld [vmem:[%s187 + $0x3960] sm:$0xff]
        %v2070 = vld [vmem:[%s187 + $0x3968] sm:$0xff]
        %v2071 = vld [vmem:[%s187 + $0x3970] sm:$0xff]
        %v2072 = vld [vmem:[%s187 + $0x3978] sm:$0xff]
        %v2073 = vld [vmem:[%s187 + $0x3980] sm:$0xff]
        %v2074 = vld [vmem:[%s187 + $0x3988] sm:$0xff]
        %v2075 = vld [vmem:[%s187 + $0x3990] sm:$0xff]
        %v2076 = vld [vmem:[%s187 + $0x3998] sm:$0xff]
        %v2077 = vld [vmem:[%s187 + $0x39a0] sm:$0xff]
        %v2078 = vld [vmem:[%s187 + $0x39a8] sm:$0xff]
        %v2079 = vld [vmem:[%s187 + $0x39b0] sm:$0xff]
        %v2080 = vld [vmem:[%s187 + $0x39b8] sm:$0xff]
        %v2081 = vld [vmem:[%s187 + $0x39c0] sm:$0xff]
        %v2082 = vld [vmem:[%s187 + $0x39c8] sm:$0xff]
        %v2083 = vld [vmem:[%s187 + $0x39d0] sm:$0xff]
        %v2084 = vld [vmem:[%s187 + $0x39d8] sm:$0xff]
        %v2085 = vld [vmem:[%s187 + $0x39e0] sm:$0xff]
        %v2086 = vld [vmem:[%s187 + $0x39e8] sm:$0xff]
        %v2087 = vld [vmem:[%s187 + $0x39f0] sm:$0xff]
        %v2088 = vld [vmem:[%s187 + $0x39f8] sm:$0xff]
        %v2089 = vld [vmem:[%s187 + $0x3a00] sm:$0xff]
        %v2090 = vld [vmem:[%s187 + $0x3a08] sm:$0xff]
        %v2091 = vld [vmem:[%s187 + $0x3a10] sm:$0xff]
        %v2092 = vld [vmem:[%s187 + $0x3a18] sm:$0xff]
        %v2093 = vld [vmem:[%s187 + $0x3a20] sm:$0xff]
        %v2094 = vld [vmem:[%s187 + $0x3a28] sm:$0xff]
        %v2095 = vld [vmem:[%s187 + $0x3a30] sm:$0xff]
        %v2096 = vld [vmem:[%s187 + $0x3a38] sm:$0xff]
        %v2097 = vld [vmem:[%s187 + $0x3a40] sm:$0xff]
        %v2098 = vld [vmem:[%s187 + $0x3a48] sm:$0xff]
        %v2099 = vld [vmem:[%s187 + $0x3a50] sm:$0xff]
        %v2100 = vld [vmem:[%s187 + $0x3a58] sm:$0xff]
        %v2101 = vld [vmem:[%s187 + $0x3a60] sm:$0xff]
        %v2102 = vld [vmem:[%s187 + $0x3a68] sm:$0xff]
        %v2103 = vld [vmem:[%s187 + $0x3a70] sm:$0xff]
        %v2104 = vld [vmem:[%s187 + $0x3a78] sm:$0xff]
        %v2105 = vld [vmem:[%s187 + $0x3a80] sm:$0xff]
        %v2106 = vld [vmem:[%s187 + $0x3a88] sm:$0xff]
        %v2107 = vld [vmem:[%s187 + $0x3a90] sm:$0xff]
        %v2108 = vld [vmem:[%s187 + $0x3a98] sm:$0xff]
        %v2109 = vld [vmem:[%s187 + $0x3aa0] sm:$0xff]
        %v2110 = vld [vmem:[%s187 + $0x3aa8] sm:$0xff]
        %v2111 = vld [vmem:[%s187 + $0x3ab0] sm:$0xff]
        %v2112 = vld [vmem:[%s187 + $0x3ab8] sm:$0xff]
        %v2113 = vld [vmem:[%s187 + $0x3ac0] sm:$0xff]
        %v2114 = vld [vmem:[%s187 + $0x3ac8] sm:$0xff]
        %v2115 = vld [vmem:[%s187 + $0x3ad0] sm:$0xff]
        %v2116 = vld [vmem:[%s187 + $0x3ad8] sm:$0xff]
        %v2117 = vld [vmem:[%s187 + $0x3ae0] sm:$0xff]
        %v2118 = vld [vmem:[%s187 + $0x3ae8] sm:$0xff]
        %v2119 = vld [vmem:[%s187 + $0x3af0] sm:$0xff]
        %v2120 = vld [vmem:[%s187 + $0x3af8] sm:$0xff]
        %v2121 = vld [vmem:[%s187 + $0x3b00] sm:$0xff]
        %v2122 = vld [vmem:[%s187 + $0x3b08] sm:$0xff]
        %v2123 = vld [vmem:[%s187 + $0x3b10] sm:$0xff]
        %v2124 = vld [vmem:[%s187 + $0x3b18] sm:$0xff]
        %v2125 = vld [vmem:[%s187 + $0x3b20] sm:$0xff]
        %v2126 = vld [vmem:[%s187 + $0x3b28] sm:$0xff]
        %v2127 = vld [vmem:[%s187 + $0x3b30] sm:$0xff]
        %v2128 = vld [vmem:[%s187 + $0x3b38] sm:$0xff]
        %v2129 = vld [vmem:[%s187 + $0x3b40] sm:$0xff]
        %v2130 = vld [vmem:[%s187 + $0x3b48] sm:$0xff]
        %v2131 = vld [vmem:[%s187 + $0x3b50] sm:$0xff]
        %v2132 = vld [vmem:[%s187 + $0x3b58] sm:$0xff]
        %v2133 = vld [vmem:[%s187 + $0x3b60] sm:$0xff]
        %v2134 = vld [vmem:[%s187 + $0x3b68] sm:$0xff]
        %v2135 = vld [vmem:[%s187 + $0x3b70] sm:$0xff]
        %v2136 = vld [vmem:[%s187 + $0x3b78] sm:$0xff]
        %v2137 = vld [vmem:[%s187 + $0x3b80] sm:$0xff]
        %v2138 = vld [vmem:[%s187 + $0x3b88] sm:$0xff]
        %v2139 = vld [vmem:[%s187 + $0x3b90] sm:$0xff]
        %v2140 = vld [vmem:[%s187 + $0x3b98] sm:$0xff]
        %v2141 = vld [vmem:[%s187 + $0x3ba0] sm:$0xff]
        %v2142 = vld [vmem:[%s187 + $0x3ba8] sm:$0xff]
        %v2143 = vld [vmem:[%s187 + $0x3bb0] sm:$0xff]
        %v2144 = vld [vmem:[%s187 + $0x3bb8] sm:$0xff]
        %v2145 = vld [vmem:[%s187 + $0x3bc0] sm:$0xff]
        %v2146 = vld [vmem:[%s187 + $0x3bc8] sm:$0xff]
        %v2147 = vld [vmem:[%s187 + $0x3bd0] sm:$0xff]
        %v2148 = vld [vmem:[%s187 + $0x3bd8] sm:$0xff]
        %v2149 = vld [vmem:[%s187 + $0x3be0] sm:$0xff]
        %v2150 = vld [vmem:[%s187 + $0x3be8] sm:$0xff]
        %v2151 = vld [vmem:[%s187 + $0x3bf0] sm:$0xff]
        %v2152 = vld [vmem:[%s187 + $0x3bf8] sm:$0xff]
        %v2153 = vld [vmem:[%s187 + $0x3c00] sm:$0xff]
        %v2154 = vld [vmem:[%s187 + $0x3c08] sm:$0xff]
        %v2155 = vld [vmem:[%s187 + $0x3c10] sm:$0xff]
        %v2156 = vld [vmem:[%s187 + $0x3c18] sm:$0xff]
        %v2157 = vld [vmem:[%s187 + $0x3c20] sm:$0xff]
        %v2158 = vld [vmem:[%s187 + $0x3c28] sm:$0xff]
        %v2159 = vld [vmem:[%s187 + $0x3c30] sm:$0xff]
        %v2160 = vld [vmem:[%s187 + $0x3c38] sm:$0xff]
        %v2161 = vld [vmem:[%s187 + $0x3c40] sm:$0xff]
        %v2162 = vld [vmem:[%s187 + $0x3c48] sm:$0xff]
        %v2163 = vld [vmem:[%s187 + $0x3c50] sm:$0xff]
        %v2164 = vld [vmem:[%s187 + $0x3c58] sm:$0xff]
        %v2165 = vld [vmem:[%s187 + $0x3c60] sm:$0xff]
        %v2166 = vld [vmem:[%s187 + $0x3c68] sm:$0xff]
        %v2167 = vld [vmem:[%s187 + $0x3c70] sm:$0xff]
        %v2168 = vld [vmem:[%s187 + $0x3c78] sm:$0xff]
        %v2169 = vld [vmem:[%s187 + $0x3c80] sm:$0xff]
        %v2170 = vld [vmem:[%s187 + $0x3c88] sm:$0xff]
        %v2171 = vld [vmem:[%s187 + $0x3c90] sm:$0xff]
        %v2172 = vld [vmem:[%s187 + $0x3c98] sm:$0xff]
        %v2173 = vld [vmem:[%s187 + $0x3ca0] sm:$0xff]
        %v2174 = vld [vmem:[%s187 + $0x3ca8] sm:$0xff]
        %v2175 = vld [vmem:[%s187 + $0x3cb0] sm:$0xff]
        %v2176 = vld [vmem:[%s187 + $0x3cb8] sm:$0xff]
        %v2177 = vld [vmem:[%s187 + $0x3cc0] sm:$0xff]
        %v2178 = vld [vmem:[%s187 + $0x3cc8] sm:$0xff]
        %v2179 = vld [vmem:[%s187 + $0x3cd0] sm:$0xff]
        %v2180 = vld [vmem:[%s187 + $0x3cd8] sm:$0xff]
        %v2181 = vld [vmem:[%s187 + $0x3ce0] sm:$0xff]
        %v2182 = vld [vmem:[%s187 + $0x3ce8] sm:$0xff]
        %v2183 = vld [vmem:[%s187 + $0x3cf0] sm:$0xff]
        %v2184 = vld [vmem:[%s187 + $0x3cf8] sm:$0xff]
        %v2185 = vld [vmem:[%s187 + $0x3d00] sm:$0xff]
        %v2186 = vld [vmem:[%s187 + $0x3d08] sm:$0xff]
        %v2187 = vld [vmem:[%s187 + $0x3d10] sm:$0xff]
        %v2188 = vld [vmem:[%s187 + $0x3d18] sm:$0xff]
        %v2189 = vld [vmem:[%s187 + $0x3d20] sm:$0xff]
        %v2190 = vld [vmem:[%s187 + $0x3d28] sm:$0xff]
        %v2191 = vld [vmem:[%s187 + $0x3d30] sm:$0xff]
        %v2192 = vld [vmem:[%s187 + $0x3d38] sm:$0xff]
        %v2193 = vld [vmem:[%s187 + $0x3d40] sm:$0xff]
        %v2194 = vld [vmem:[%s187 + $0x3d48] sm:$0xff]
        %v2195 = vld [vmem:[%s187 + $0x3d50] sm:$0xff]
        %v2196 = vld [vmem:[%s187 + $0x3d58] sm:$0xff]
        %v2197 = vld [vmem:[%s187 + $0x3d60] sm:$0xff]
        %v2198 = vld [vmem:[%s187 + $0x3d68] sm:$0xff]
        %v2199 = vld [vmem:[%s187 + $0x3d70] sm:$0xff]
        %v2200 = vld [vmem:[%s187 + $0x3d78] sm:$0xff]
        %v2201 = vld [vmem:[%s187 + $0x3d80] sm:$0xff]
        %v2202 = vld [vmem:[%s187 + $0x3d88] sm:$0xff]
        %v2203 = vld [vmem:[%s187 + $0x3d90] sm:$0xff]
        %v2204 = vld [vmem:[%s187 + $0x3d98] sm:$0xff]
        %v2205 = vld [vmem:[%s187 + $0x3da0] sm:$0xff]
        %v2206 = vld [vmem:[%s187 + $0x3da8] sm:$0xff]
        %v2207 = vld [vmem:[%s187 + $0x3db0] sm:$0xff]
        %v2208 = vld [vmem:[%s187 + $0x3db8] sm:$0xff]
        %v2209 = vld [vmem:[%s187 + $0x3dc0] sm:$0xff]
        %v2210 = vld [vmem:[%s187 + $0x3dc8] sm:$0xff]
        %v2211 = vld [vmem:[%s187 + $0x3dd0] sm:$0xff]
        %v2212 = vld [vmem:[%s187 + $0x3dd8] sm:$0xff]
        %v2213 = vld [vmem:[%s187 + $0x3de0] sm:$0xff]
        %v2214 = vld [vmem:[%s187 + $0x3de8] sm:$0xff]
        %v2215 = vld [vmem:[%s187 + $0x3df0] sm:$0xff]
        %v2216 = vld [vmem:[%s187 + $0x3df8] sm:$0xff]
        %v2217 = vld [vmem:[%s187 + $0x3e00] sm:$0xff]
        %v2218 = vld [vmem:[%s187 + $0x3e08] sm:$0xff]
        %v2219 = vld [vmem:[%s187 + $0x3e10] sm:$0xff]
        %v2220 = vld [vmem:[%s187 + $0x3e18] sm:$0xff]
        %v2221 = vld [vmem:[%s187 + $0x3e20] sm:$0xff]
        %v2222 = vld [vmem:[%s187 + $0x3e28] sm:$0xff]
        %v2223 = vld [vmem:[%s187 + $0x3e30] sm:$0xff]
        %v2224 = vld [vmem:[%s187 + $0x3e38] sm:$0xff]
        %v2225 = vld [vmem:[%s187 + $0x3e40] sm:$0xff]
        %v2226 = vld [vmem:[%s187 + $0x3e48] sm:$0xff]
        %v2227 = vld [vmem:[%s187 + $0x3e50] sm:$0xff]
        %v2228 = vld [vmem:[%s187 + $0x3e58] sm:$0xff]
        %v2229 = vld [vmem:[%s187 + $0x3e60] sm:$0xff]
        %v2230 = vld [vmem:[%s187 + $0x3e68] sm:$0xff]
        %v2231 = vld [vmem:[%s187 + $0x3e70] sm:$0xff]
        %v2232 = vld [vmem:[%s187 + $0x3e78] sm:$0xff]
        %v2233 = vld [vmem:[%s187 + $0x3e80] sm:$0xff]
        %v2234 = vld [vmem:[%s187 + $0x3e88] sm:$0xff]
        %v2235 = vld [vmem:[%s187 + $0x3e90] sm:$0xff]
        %v2236 = vld [vmem:[%s187 + $0x3e98] sm:$0xff]
        %v2237 = vld [vmem:[%s187 + $0x3ea0] sm:$0xff]
        %v2238 = vld [vmem:[%s187 + $0x3ea8] sm:$0xff]
        %v2239 = vld [vmem:[%s187 + $0x3eb0] sm:$0xff]
        %v2240 = vld [vmem:[%s187 + $0x3eb8] sm:$0xff]
        %v2241 = vld [vmem:[%s187 + $0x3ec0] sm:$0xff]
        %v2242 = vld [vmem:[%s187 + $0x3ec8] sm:$0xff]
        %v2243 = vld [vmem:[%s187 + $0x3ed0] sm:$0xff]
        %v2244 = vld [vmem:[%s187 + $0x3ed8] sm:$0xff]
        %v2245 = vld [vmem:[%s187 + $0x3ee0] sm:$0xff]
        %v2246 = vld [vmem:[%s187 + $0x3ee8] sm:$0xff]
        %v2247 = vld [vmem:[%s187 + $0x3ef0] sm:$0xff]
        %v2248 = vld [vmem:[%s187 + $0x3ef8] sm:$0xff]
        %v2249 = vld [vmem:[%s187 + $0x3f00] sm:$0xff]
        %v2250 = vld [vmem:[%s187 + $0x3f08] sm:$0xff]
        %v2251 = vld [vmem:[%s187 + $0x3f10] sm:$0xff]
        %v2252 = vld [vmem:[%s187 + $0x3f18] sm:$0xff]
        %v2253 = vld [vmem:[%s187 + $0x3f20] sm:$0xff]
        %v2254 = vld [vmem:[%s187 + $0x3f28] sm:$0xff]
        %v2255 = vld [vmem:[%s187 + $0x3f30] sm:$0xff]
        %v2256 = vld [vmem:[%s187 + $0x3f38] sm:$0xff]
        %v2257 = vld [vmem:[%s187 + $0x3f40] sm:$0xff]
        %v2258 = vld [vmem:[%s187 + $0x3f48] sm:$0xff]
        %v2259 = vld [vmem:[%s187 + $0x3f50] sm:$0xff]
        %v2260 = vld [vmem:[%s187 + $0x3f58] sm:$0xff]
        %v2261 = vld [vmem:[%s187 + $0x3f60] sm:$0xff]
        %v2262 = vld [vmem:[%s187 + $0x3f68] sm:$0xff]
        %v2263 = vld [vmem:[%s187 + $0x3f70] sm:$0xff]
        %v2264 = vld [vmem:[%s187 + $0x3f78] sm:$0xff]
        %v2265 = vld [vmem:[%s187 + $0x3f80] sm:$0xff]
        %v2266 = vld [vmem:[%s187 + $0x3f88] sm:$0xff]
        %v2267 = vld [vmem:[%s187 + $0x3f90] sm:$0xff]
        %v2268 = vld [vmem:[%s187 + $0x3f98] sm:$0xff]
        %v2269 = vld [vmem:[%s187 + $0x3fa0] sm:$0xff]
        %v2270 = vld [vmem:[%s187 + $0x3fa8] sm:$0xff]
        %v2271 = vld [vmem:[%s187 + $0x3fb0] sm:$0xff]
        %v2272 = vld [vmem:[%s187 + $0x3fb8] sm:$0xff]
        %v2273 = vld [vmem:[%s187 + $0x3fc0] sm:$0xff]
        %v2274 = vld [vmem:[%s187 + $0x3fc8] sm:$0xff]
        %v2275 = vld [vmem:[%s187 + $0x3fd0] sm:$0xff]
        %v2276 = vld [vmem:[%s187 + $0x3fd8] sm:$0xff]
        %v2277 = vld [vmem:[%s187 + $0x3fe0] sm:$0xff]
        %v2278 = vld [vmem:[%s187 + $0x3fe8] sm:$0xff]
        %v2279 = vld [vmem:[%s187 + $0x3ff0] sm:$0xff]
        %v2280 = vld [vmem:[%s187 + $0x3ff8] sm:$0xff]
        %v2281 = vld [vmem:[%s196] sm:$0xff]
        %v2282 = vld [vmem:[%s196 + $0x8] sm:$0xff]
        %v2283 = vld [vmem:[%s196 + $0x10] sm:$0xff]
        %v2284 = vld [vmem:[%s196 + $0x18] sm:$0xff]
        %v2289 = vlaneseq
        %v2290 = vshrl.u32 %v2289, 7
        %v2291 = vsub.s32 0, %v2290
        %v2292 = vrot.slane %v2281, %v2291
        %v2293 = vlaneseq
        %v2294 = vshrl.u32 %v2293, 7
        %v2295 = vsub.s32 1, %v2294
        %v2296 = vrot.slane %v2281, %v2295
        %v2297 = vlaneseq
        %v2298 = vshrl.u32 %v2297, 7
        %v2299 = vsub.s32 2, %v2298
        %v2300 = vrot.slane %v2281, %v2299
        %v2301 = vlaneseq
        %v2302 = vshrl.u32 %v2301, 7
        %v2303 = vsub.s32 3, %v2302
        %v2304 = vrot.slane %v2281, %v2303
        %v2305 = vlaneseq
        %v2306 = vshrl.u32 %v2305, 7
        %v2307 = vsub.s32 4, %v2306
        %v2308 = vrot.slane %v2281, %v2307
        %v2309 = vlaneseq
        %v2310 = vshrl.u32 %v2309, 7
        %v2311 = vsub.s32 5, %v2310
        %v2312 = vrot.slane %v2281, %v2311
        %v2313 = vlaneseq
        %v2314 = vshrl.u32 %v2313, 7
        %v2315 = vsub.s32 6, %v2314
        %v2316 = vrot.slane %v2281, %v2315
        %v2317 = vlaneseq
        %v2318 = vshrl.u32 %v2317, 7
        %v2319 = vsub.s32 7, %v2318
        %v2320 = vrot.slane %v2281, %v2319
        %v2321 = vlaneseq
        %v2322 = vshrl.u32 %v2321, 7
        %v2323 = vsub.s32 0, %v2322
        %v2324 = vrot.slane %v2282, %v2323
        %v2325 = vlaneseq
        %v2326 = vshrl.u32 %v2325, 7
        %v2327 = vsub.s32 1, %v2326
        %v2328 = vrot.slane %v2282, %v2327
        %v2329 = vlaneseq
        %v2330 = vshrl.u32 %v2329, 7
        %v2331 = vsub.s32 2, %v2330
        %v2332 = vrot.slane %v2282, %v2331
        %v2333 = vlaneseq
        %v2334 = vshrl.u32 %v2333, 7
        %v2335 = vsub.s32 3, %v2334
        %v2336 = vrot.slane %v2282, %v2335
        %v2337 = vlaneseq
        %v2338 = vshrl.u32 %v2337, 7
        %v2339 = vsub.s32 4, %v2338
        %v2340 = vrot.slane %v2282, %v2339
        %v2341 = vlaneseq
        %v2342 = vshrl.u32 %v2341, 7
        %v2343 = vsub.s32 5, %v2342
        %v2344 = vrot.slane %v2282, %v2343
        %v2345 = vlaneseq
        %v2346 = vshrl.u32 %v2345, 7
        %v2347 = vsub.s32 6, %v2346
        %v2348 = vrot.slane %v2282, %v2347
        %v2349 = vlaneseq
        %v2350 = vshrl.u32 %v2349, 7
        %v2351 = vsub.s32 7, %v2350
        %v2352 = vrot.slane %v2282, %v2351
        %v2353 = vlaneseq
        %v2354 = vshrl.u32 %v2353, 7
        %v2355 = vsub.s32 0, %v2354
        %v2356 = vrot.slane %v2283, %v2355
        %v2357 = vlaneseq
        %v2358 = vshrl.u32 %v2357, 7
        %v2359 = vsub.s32 1, %v2358
        %v2360 = vrot.slane %v2283, %v2359
        %v2361 = vlaneseq
        %v2362 = vshrl.u32 %v2361, 7
        %v2363 = vsub.s32 2, %v2362
        %v2364 = vrot.slane %v2283, %v2363
        %v2365 = vlaneseq
        %v2366 = vshrl.u32 %v2365, 7
        %v2367 = vsub.s32 3, %v2366
        %v2368 = vrot.slane %v2283, %v2367
        %v2369 = vlaneseq
        %v2370 = vshrl.u32 %v2369, 7
        %v2371 = vsub.s32 4, %v2370
        %v2372 = vrot.slane %v2283, %v2371
        %v2373 = vlaneseq
        %v2374 = vshrl.u32 %v2373, 7
        %v2375 = vsub.s32 5, %v2374
        %v2376 = vrot.slane %v2283, %v2375
        %v2377 = vlaneseq
        %v2378 = vshrl.u32 %v2377, 7
        %v2379 = vsub.s32 6, %v2378
        %v2380 = vrot.slane %v2283, %v2379
        %v2381 = vlaneseq
        %v2382 = vshrl.u32 %v2381, 7
        %v2383 = vsub.s32 7, %v2382
        %v2384 = vrot.slane %v2283, %v2383
        %v2385 = vlaneseq
        %v2386 = vshrl.u32 %v2385, 7
        %v2387 = vsub.s32 0, %v2386
        %v2388 = vrot.slane %v2284, %v2387
        %v2389 = vlaneseq
        %v2390 = vshrl.u32 %v2389, 7
        %v2391 = vsub.s32 1, %v2390
        %v2392 = vrot.slane %v2284, %v2391
        %v2393 = vlaneseq
        %v2394 = vshrl.u32 %v2393, 7
        %v2395 = vsub.s32 2, %v2394
        %v2396 = vrot.slane %v2284, %v2395
        %v2397 = vlaneseq
        %v2398 = vshrl.u32 %v2397, 7
        %v2399 = vsub.s32 3, %v2398
        %v2400 = vrot.slane %v2284, %v2399
        %v2401 = vlaneseq
        %v2402 = vshrl.u32 %v2401, 7
        %v2403 = vsub.s32 4, %v2402
        %v2404 = vrot.slane %v2284, %v2403
        %v2405 = vlaneseq
        %v2406 = vshrl.u32 %v2405, 7
        %v2407 = vsub.s32 5, %v2406
        %v2408 = vrot.slane %v2284, %v2407
        %v2409 = vlaneseq
        %v2410 = vshrl.u32 %v2409, 7
        %v2411 = vsub.s32 6, %v2410
        %v2412 = vrot.slane %v2284, %v2411
        %v2413 = vlaneseq
        %v2414 = vshrl.u32 %v2413, 7
        %v2415 = vsub.s32 7, %v2414
        %v2416 = vrot.slane %v2284, %v2415
        %v2450 = vcombine.high %v232, %v232
        %v2452 = vunpack.c.l.s4 1983009808
        %v2453 = vunpack.c.0.s8 %v2452
        %v2454 = vlaneseq
        %v2455 = vshrl.u32 %v2454, 7
        %v2456 = vsub.s32 %v2453, %v2455
        %v2457 = vrot.slane %v232, %v2456
        %v2459 = vunpack.c.l.s4 1983009808
        %v2460 = vunpack.c.0.s8 %v2459
        %v2461 = vlaneseq
        %v2462 = vshrl.u32 %v2461, 7
        %v2463 = vsub.s32 %v2460, %v2462
        %v2464 = vrot.slane %v2450, %v2463
        %v2465 = vcombine.high %v2457, %v2457
        %v2466 = vcombine.high %v2464, %v2464
        %2471 = vmatprep.subr.mxu0 %v234
        %2472 = vmatpush1.msra.mxu0 %v233
        %2473 = vmatprep.subr.mxu0 %v266
        %2474 = vmatpush1.msra.mxu0 %v265
        %2475 = vmatprep.subr.mxu0 %v298
        %2476 = vmatpush1.msra.mxu0 %v297
        %2477 = vmatprep.subr.mxu0 %v330
        %2478 = vmatpush1.msra.mxu0 %v329
        %2479 = vmatprep.subr.mxu0 %v362
        %2480 = vmatpush1.msra.mxu0 %v361
        %2481 = vmatprep.subr.mxu0 %v394
        %2482 = vmatpush1.msra.mxu0 %v393
        %2483 = vmatprep.subr.mxu0 %v426
        %2484 = vmatpush1.msra.mxu0 %v425
        %2485 = vmatprep.subr.mxu0 %v458
        %2486 = vmatpush1.msra.mxu0 %v457
        %2487 = vmatprep.subr.mxu0 %v490
        %2488 = vmatpush1.msra.mxu0 %v489
        %2489 = vmatprep.subr.mxu0 %v522
        %2490 = vmatpush1.msra.mxu0 %v521
        %2491 = vmatprep.subr.mxu0 %v554
        %2492 = vmatpush1.msra.mxu0 %v553
        %2493 = vmatprep.subr.mxu0 %v586
        %2494 = vmatpush1.msra.mxu0 %v585
        %2495 = vmatprep.subr.mxu0 %v618
        %2496 = vmatpush1.msra.mxu0 %v617
        %2497 = vmatprep.subr.mxu0 %v650
        %2498 = vmatpush1.msra.mxu0 %v649
        %2499 = vmatprep.subr.mxu0 %v682
        %2500 = vmatpush1.msra.mxu0 %v681
        %2501 = vmatprep.subr.mxu0 %v714
        %2502 = vmatpush1.msra.mxu0 %v713
        %2503 = vmatprep.subr.mxu0 %v746
        %2504 = vmatpush1.msra.mxu0 %v745
        %2505 = vmatprep.subr.mxu0 %v778
        %2506 = vmatpush1.msra.mxu0 %v777
        %2507 = vmatprep.subr.mxu0 %v810
        %2508 = vmatpush1.msra.mxu0 %v809
        %2509 = vmatprep.subr.mxu0 %v842
        %2510 = vmatpush1.msra.mxu0 %v841
        %2511 = vmatprep.subr.mxu0 %v874
        %2512 = vmatpush1.msra.mxu0 %v873
        %2513 = vmatprep.subr.mxu0 %v906
        %2514 = vmatpush1.msra.mxu0 %v905
        %2515 = vmatprep.subr.mxu0 %v938
        %2516 = vmatpush1.msra.mxu0 %v937
        %2517 = vmatprep.subr.mxu0 %v970
        %2518 = vmatpush1.msra.mxu0 %v969
        %2519 = vmatprep.subr.mxu0 %v1002
        %2520 = vmatpush1.msra.mxu0 %v1001
        %2521 = vmatprep.subr.mxu0 %v1034
        %2522 = vmatpush1.msra.mxu0 %v1033
        %2523 = vmatprep.subr.mxu0 %v1066
        %2524 = vmatpush1.msra.mxu0 %v1065
        %2525 = vmatprep.subr.mxu0 %v1098
        %2526 = vmatpush1.msra.mxu0 %v1097
        %2527 = vmatprep.subr.mxu0 %v1130
        %2528 = vmatpush1.msra.mxu0 %v1129
        %2529 = vmatprep.subr.mxu0 %v1162
        %2530 = vmatpush1.msra.mxu0 %v1161
        %2531 = vmatprep.subr.mxu0 %v1194
        %2532 = vmatpush1.msra.mxu0 %v1193
        %2533 = vmatprep.subr.mxu0 %v1226
        %2534 = vmatpush1.msra.mxu0 %v1225
        %2535 = vmatprep.mubr.f32.mxu0 %v2465
        %2536 = vmatmul.mubr.f32.gmra.mrb[0].mxu0 %v2457
        %v2537 = vpop.f32.mrb[0].mxu0
        %v2538 = vadd.f32 %v2292, %v2537
        %v2539 = vpop.f32.mrb[0].mxu0
        %v2540 = vadd.f32 %v2296, %v2539
        %2541 = vdwg.mxu0
        %2542 = vmatprep.subr.mxu0 %v1258
        %2543 = vmatpush1.msra.mxu0 %v1257
        %2544 = vmatprep.subr.mxu0 %v1290
        %2545 = vmatpush1.msra.mxu0 %v1289
        %2546 = vmatprep.subr.mxu0 %v1322
        %2547 = vmatpush1.msra.mxu0 %v1321
        %2548 = vmatprep.subr.mxu0 %v1354
        %2549 = vmatpush1.msra.mxu0 %v1353
        %2550 = vmatprep.subr.mxu0 %v1386
        %2551 = vmatpush1.msra.mxu0 %v1385
        %2552 = vmatprep.subr.mxu0 %v1418
        %2553 = vmatpush1.msra.mxu0 %v1417
        %2554 = vmatprep.subr.mxu0 %v1450
        %2555 = vmatpush1.msra.mxu0 %v1449
        %2556 = vmatprep.subr.mxu0 %v1482
        %2557 = vmatpush1.msra.mxu0 %v1481
        %2558 = vmatprep.subr.mxu0 %v1514
        %2559 = vmatpush1.msra.mxu0 %v1513
        %2560 = vmatprep.subr.mxu0 %v1546
        %2561 = vmatpush1.msra.mxu0 %v1545
        %2562 = vmatprep.subr.mxu0 %v1578
        %2563 = vmatpush1.msra.mxu0 %v1577
        %2564 = vmatprep.subr.mxu0 %v1610
        %2565 = vmatpush1.msra.mxu0 %v1609
        %2566 = vmatprep.subr.mxu0 %v1642
        %2567 = vmatpush1.msra.mxu0 %v1641
        %2568 = vmatprep.subr.mxu0 %v1674
        %2569 = vmatpush1.msra.mxu0 %v1673
        %2570 = vmatprep.subr.mxu0 %v1706
        %2571 = vmatpush1.msra.mxu0 %v1705
        %2572 = vmatprep.subr.mxu0 %v1738
        %2573 = vmatpush1.msra.mxu0 %v1737
        %2574 = vmatprep.subr.mxu0 %v1770
        %2575 = vmatpush1.msra.mxu0 %v1769
        %2576 = vmatprep.subr.mxu0 %v1802
        %2577 = vmatpush1.msra.mxu0 %v1801
        %2578 = vmatprep.subr.mxu0 %v1834
        %2579 = vmatpush1.msra.mxu0 %v1833
        %2580 = vmatprep.subr.mxu0 %v1866
        %2581 = vmatpush1.msra.mxu0 %v1865
        %2582 = vmatprep.subr.mxu0 %v1898
        %2583 = vmatpush1.msra.mxu0 %v1897
        %2584 = vmatprep.subr.mxu0 %v1930
        %2585 = vmatpush1.msra.mxu0 %v1929
        %2586 = vmatprep.subr.mxu0 %v1962
        %2587 = vmatpush1.msra.mxu0 %v1961
        %2588 = vmatprep.subr.mxu0 %v1994
        %2589 = vmatpush1.msra.mxu0 %v1993
        %2590 = vmatprep.subr.mxu0 %v2026
        %2591 = vmatpush1.msra.mxu0 %v2025
        %2592 = vmatprep.subr.mxu0 %v2058
        %2593 = vmatpush1.msra.mxu0 %v2057
        %2594 = vmatprep.subr.mxu0 %v2090
        %2595 = vmatpush1.msra.mxu0 %v2089
        %2596 = vmatprep.subr.mxu0 %v2122
        %2597 = vmatpush1.msra.mxu0 %v2121
        %2598 = vmatprep.subr.mxu0 %v2154
        %2599 = vmatpush1.msra.mxu0 %v2153
        %2600 = vmatprep.subr.mxu0 %v2186
        %2601 = vmatpush1.msra.mxu0 %v2185
        %2602 = vmatprep.subr.mxu0 %v2218
        %2603 = vmatpush1.msra.mxu0 %v2217
        %2604 = vmatprep.subr.mxu0 %v2250
        %2605 = vmatpush1.msra.mxu0 %v2249
        %2606 = vmatprep.mubr.f32.mxu0 %v2466
        %2607 = vmatmul.mubr.f32.gmra.mrb[0].mxu0 %v2464
        %v2608 = vpop.f32.mrb[0].mxu0
        %v2609 = vadd.f32 %v2538, %v2608
        %v2610 = vpop.f32.mrb[0].mxu0
        %v2611 = vadd.f32 %v2540, %v2610
        %2612 = vdwg.mxu0
        %2613 = vmatprep.subr.mxu0 %v236
        %2614 = vmatpush1.msra.mxu0 %v235
        %2615 = vmatprep.subr.mxu0 %v268
        %2616 = vmatpush1.msra.mxu0 %v267
        %2617 = vmatprep.subr.mxu0 %v300
        %2618 = vmatpush1.msra.mxu0 %v299
        %2619 = vmatprep.subr.mxu0 %v332
        %2620 = vmatpush1.msra.mxu0 %v331
        %2621 = vmatprep.subr.mxu0 %v364
        %2622 = vmatpush1.msra.mxu0 %v363
        %2623 = vmatprep.subr.mxu0 %v396
        %2624 = vmatpush1.msra.mxu0 %v395
        %2625 = vmatprep.subr.mxu0 %v428
        %2626 = vmatpush1.msra.mxu0 %v427
        %2627 = vmatprep.subr.mxu0 %v460
        %2628 = vmatpush1.msra.mxu0 %v459
        %2629 = vmatprep.subr.mxu0 %v492
        %2630 = vmatpush1.msra.mxu0 %v491
        %2631 = vmatprep.subr.mxu0 %v524
        %2632 = vmatpush1.msra.mxu0 %v523
        %2633 = vmatprep.subr.mxu0 %v556
        %2634 = vmatpush1.msra.mxu0 %v555
        %2635 = vmatprep.subr.mxu0 %v588
        %2636 = vmatpush1.msra.mxu0 %v587
        %2637 = vmatprep.subr.mxu0 %v620
        %2638 = vmatpush1.msra.mxu0 %v619
        %2639 = vmatprep.subr.mxu0 %v652
        %2640 = vmatpush1.msra.mxu0 %v651
        %2641 = vmatprep.subr.mxu0 %v684
        %2642 = vmatpush1.msra.mxu0 %v683
        %2643 = vmatprep.subr.mxu0 %v716
        %2644 = vmatpush1.msra.mxu0 %v715
        %2645 = vmatprep.subr.mxu0 %v748
        %2646 = vmatpush1.msra.mxu0 %v747
        %2647 = vmatprep.subr.mxu0 %v780
        %2648 = vmatpush1.msra.mxu0 %v779
        %2649 = vmatprep.subr.mxu0 %v812
        %2650 = vmatpush1.msra.mxu0 %v811
        %2651 = vmatprep.subr.mxu0 %v844
        %2652 = vmatpush1.msra.mxu0 %v843
        %2653 = vmatprep.subr.mxu0 %v876
        %2654 = vmatpush1.msra.mxu0 %v875
        %2655 = vmatprep.subr.mxu0 %v908
        %2656 = vmatpush1.msra.mxu0 %v907
        %2657 = vmatprep.subr.mxu0 %v940
        %2658 = vmatpush1.msra.mxu0 %v939
        %2659 = vmatprep.subr.mxu0 %v972
        %2660 = vmatpush1.msra.mxu0 %v971
        %2661 = vmatprep.subr.mxu0 %v1004
        %2662 = vmatpush1.msra.mxu0 %v1003
        %2663 = vmatprep.subr.mxu0 %v1036
        %2664 = vmatpush1.msra.mxu0 %v1035
        %2665 = vmatprep.subr.mxu0 %v1068
        %2666 = vmatpush1.msra.mxu0 %v1067
        %2667 = vmatprep.subr.mxu0 %v1100
        %2668 = vmatpush1.msra.mxu0 %v1099
        %2669 = vmatprep.subr.mxu0 %v1132
        %2670 = vmatpush1.msra.mxu0 %v1131
        %2671 = vmatprep.subr.mxu0 %v1164
        %2672 = vmatpush1.msra.mxu0 %v1163
        %2673 = vmatprep.subr.mxu0 %v1196
        %2674 = vmatpush1.msra.mxu0 %v1195
        %2675 = vmatprep.subr.mxu0 %v1228
        %2676 = vmatpush1.msra.mxu0 %v1227
        %2677 = vmatprep.mubr.f32.mxu0 %v2465
        %2678 = vmatmul.mubr.f32.gmra.mrb[0].mxu0 %v2457
        %v2679 = vpop.f32.mrb[0].mxu0
        %v2680 = vadd.f32 %v2300, %v2679
        %v2681 = vpop.f32.mrb[0].mxu0
        %v2682 = vadd.f32 %v2304, %v2681
        %2683 = vdwg.mxu0
        %2684 = vmatprep.subr.mxu0 %v1260
        %2685 = vmatpush1.msra.mxu0 %v1259
        %2686 = vmatprep.subr.mxu0 %v1292
        %2687 = vmatpush1.msra.mxu0 %v1291
        %2688 = vmatprep.subr.mxu0 %v1324
        %2689 = vmatpush1.msra.mxu0 %v1323
        %2690 = vmatprep.subr.mxu0 %v1356
        %2691 = vmatpush1.msra.mxu0 %v1355
        %2692 = vmatprep.subr.mxu0 %v1388
        %2693 = vmatpush1.msra.mxu0 %v1387
        %2694 = vmatprep.subr.mxu0 %v1420
        %2695 = vmatpush1.msra.mxu0 %v1419
        %2696 = vmatprep.subr.mxu0 %v1452
        %2697 = vmatpush1.msra.mxu0 %v1451
        %2698 = vmatprep.subr.mxu0 %v1484
        %2699 = vmatpush1.msra.mxu0 %v1483
        %2700 = vmatprep.subr.mxu0 %v1516
        %2701 = vmatpush1.msra.mxu0 %v1515
        %2702 = vmatprep.subr.mxu0 %v1548
        %2703 = vmatpush1.msra.mxu0 %v1547
        %2704 = vmatprep.subr.mxu0 %v1580
        %2705 = vmatpush1.msra.mxu0 %v1579
        %2706 = vmatprep.subr.mxu0 %v1612
        %2707 = vmatpush1.msra.mxu0 %v1611
        %2708 = vmatprep.subr.mxu0 %v1644
        %2709 = vmatpush1.msra.mxu0 %v1643
        %2710 = vmatprep.subr.mxu0 %v1676
        %2711 = vmatpush1.msra.mxu0 %v1675
        %2712 = vmatprep.subr.mxu0 %v1708
        %2713 = vmatpush1.msra.mxu0 %v1707
        %2714 = vmatprep.subr.mxu0 %v1740
        %2715 = vmatpush1.msra.mxu0 %v1739
        %2716 = vmatprep.subr.mxu0 %v1772
        %2717 = vmatpush1.msra.mxu0 %v1771
        %2718 = vmatprep.subr.mxu0 %v1804
        %2719 = vmatpush1.msra.mxu0 %v1803
        %2720 = vmatprep.subr.mxu0 %v1836
        %2721 = vmatpush1.msra.mxu0 %v1835
        %2722 = vmatprep.subr.mxu0 %v1868
        %2723 = vmatpush1.msra.mxu0 %v1867
        %2724 = vmatprep.subr.mxu0 %v1900
        %2725 = vmatpush1.msra.mxu0 %v1899
        %2726 = vmatprep.subr.mxu0 %v1932
        %2727 = vmatpush1.msra.mxu0 %v1931
        %2728 = vmatprep.subr.mxu0 %v1964
        %2729 = vmatpush1.msra.mxu0 %v1963
        %2730 = vmatprep.subr.mxu0 %v1996
        %2731 = vmatpush1.msra.mxu0 %v1995
        %2732 = vmatprep.subr.mxu0 %v2028
        %2733 = vmatpush1.msra.mxu0 %v2027
        %2734 = vmatprep.subr.mxu0 %v2060
        %2735 = vmatpush1.msra.mxu0 %v2059
        %2736 = vmatprep.subr.mxu0 %v2092
        %2737 = vmatpush1.msra.mxu0 %v2091
        %2738 = vmatprep.subr.mxu0 %v2124
        %2739 = vmatpush1.msra.mxu0 %v2123
        %2740 = vmatprep.subr.mxu0 %v2156
        %2741 = vmatpush1.msra.mxu0 %v2155
        %2742 = vmatprep.subr.mxu0 %v2188
        %2743 = vmatpush1.msra.mxu0 %v2187
        %2744 = vmatprep.subr.mxu0 %v2220
        %2745 = vmatpush1.msra.mxu0 %v2219
        %2746 = vmatprep.subr.mxu0 %v2252
        %2747 = vmatpush1.msra.mxu0 %v2251
        %2748 = vmatprep.mubr.f32.mxu0 %v2466
        %2749 = vmatmul.mubr.f32.gmra.mrb[0].mxu0 %v2464
        %v2750 = vpop.f32.mrb[0].mxu0
        %v2751 = vadd.f32 %v2680, %v2750
        %v2752 = vpop.f32.mrb[0].mxu0
        %v2753 = vadd.f32 %v2682, %v2752
        %2754 = vdwg.mxu0
        %2755 = vmatprep.subr.mxu0 %v238
        %2756 = vmatpush1.msra.mxu0 %v237
        %2757 = vmatprep.subr.mxu0 %v270
        %2758 = vmatpush1.msra.mxu0 %v269
        %2759 = vmatprep.subr.mxu0 %v302
        %2760 = vmatpush1.msra.mxu0 %v301
        %2761 = vmatprep.subr.mxu0 %v334
        %2762 = vmatpush1.msra.mxu0 %v333
        %2763 = vmatprep.subr.mxu0 %v366
        %2764 = vmatpush1.msra.mxu0 %v365
        %2765 = vmatprep.subr.mxu0 %v398
        %2766 = vmatpush1.msra.mxu0 %v397
        %2767 = vmatprep.subr.mxu0 %v430
        %2768 = vmatpush1.msra.mxu0 %v429
        %2769 = vmatprep.subr.mxu0 %v462
        %2770 = vmatpush1.msra.mxu0 %v461
        %2771 = vmatprep.subr.mxu0 %v494
        %2772 = vmatpush1.msra.mxu0 %v493
        %2773 = vmatprep.subr.mxu0 %v526
        %2774 = vmatpush1.msra.mxu0 %v525
        %2775 = vmatprep.subr.mxu0 %v558
        %2776 = vmatpush1.msra.mxu0 %v557
        %2777 = vmatprep.subr.mxu0 %v590
        %2778 = vmatpush1.msra.mxu0 %v589
        %2779 = vmatprep.subr.mxu0 %v622
        %2780 = vmatpush1.msra.mxu0 %v621
        %2781 = vmatprep.subr.mxu0 %v654
        %2782 = vmatpush1.msra.mxu0 %v653
        %2783 = vmatprep.subr.mxu0 %v686
        %2784 = vmatpush1.msra.mxu0 %v685
        %2785 = vmatprep.subr.mxu0 %v718
        %2786 = vmatpush1.msra.mxu0 %v717
        %2787 = vmatprep.subr.mxu0 %v750
        %2788 = vmatpush1.msra.mxu0 %v749
        %2789 = vmatprep.subr.mxu0 %v782
        %2790 = vmatpush1.msra.mxu0 %v781
        %2791 = vmatprep.subr.mxu0 %v814
        %2792 = vmatpush1.msra.mxu0 %v813
        %2793 = vmatprep.subr.mxu0 %v846
        %2794 = vmatpush1.msra.mxu0 %v845
        %2795 = vmatprep.subr.mxu0 %v878
        %2796 = vmatpush1.msra.mxu0 %v877
        %2797 = vmatprep.subr.mxu0 %v910
        %2798 = vmatpush1.msra.mxu0 %v909
        %2799 = vmatprep.subr.mxu0 %v942
        %2800 = vmatpush1.msra.mxu0 %v941
        %2801 = vmatprep.subr.mxu0 %v974
        %2802 = vmatpush1.msra.mxu0 %v973
        %2803 = vmatprep.subr.mxu0 %v1006
        %2804 = vmatpush1.msra.mxu0 %v1005
        %2805 = vmatprep.subr.mxu0 %v1038
        %2806 = vmatpush1.msra.mxu0 %v1037
        %2807 = vmatprep.subr.mxu0 %v1070
        %2808 = vmatpush1.msra.mxu0 %v1069
        %2809 = vmatprep.subr.mxu0 %v1102
        %2810 = vmatpush1.msra.mxu0 %v1101
        %2811 = vmatprep.subr.mxu0 %v1134
        %2812 = vmatpush1.msra.mxu0 %v1133
        %2813 = vmatprep.subr.mxu0 %v1166
        %2814 = vmatpush1.msra.mxu0 %v1165
        %2815 = vmatprep.subr.mxu0 %v1198
        %2816 = vmatpush1.msra.mxu0 %v1197
        %2817 = vmatprep.subr.mxu0 %v1230
        %2818 = vmatpush1.msra.mxu0 %v1229
        %2819 = vmatprep.mubr.f32.mxu0 %v2465
        %2820 = vmatmul.mubr.f32.gmra.mrb[0].mxu0 %v2457
        %v2821 = vpop.f32.mrb[0].mxu0
        %v2822 = vadd.f32 %v2308, %v2821
        %v2823 = vpop.f32.mrb[0].mxu0
        %v2824 = vadd.f32 %v2312, %v2823
        %2825 = vdwg.mxu0
        %2826 = vmatprep.subr.mxu0 %v1262
        %2827 = vmatpush1.msra.mxu0 %v1261
        %2828 = vmatprep.subr.mxu0 %v1294
        %2829 = vmatpush1.msra.mxu0 %v1293
        %2830 = vmatprep.subr.mxu0 %v1326
        %2831 = vmatpush1.msra.mxu0 %v1325
        %2832 = vmatprep.subr.mxu0 %v1358
        %2833 = vmatpush1.msra.mxu0 %v1357
        %2834 = vmatprep.subr.mxu0 %v1390
        %2835 = vmatpush1.msra.mxu0 %v1389
        %2836 = vmatprep.subr.mxu0 %v1422
        %2837 = vmatpush1.msra.mxu0 %v1421
        %2838 = vmatprep.subr.mxu0 %v1454
        %2839 = vmatpush1.msra.mxu0 %v1453
        %2840 = vmatprep.subr.mxu0 %v1486
        %2841 = vmatpush1.msra.mxu0 %v1485
        %2842 = vmatprep.subr.mxu0 %v1518
        %2843 = vmatpush1.msra.mxu0 %v1517
        %2844 = vmatprep.subr.mxu0 %v1550
        %2845 = vmatpush1.msra.mxu0 %v1549
        %2846 = vmatprep.subr.mxu0 %v1582
        %2847 = vmatpush1.msra.mxu0 %v1581
        %2848 = vmatprep.subr.mxu0 %v1614
        %2849 = vmatpush1.msra.mxu0 %v1613
        %2850 = vmatprep.subr.mxu0 %v1646
        %2851 = vmatpush1.msra.mxu0 %v1645
        %2852 = vmatprep.subr.mxu0 %v1678
        %2853 = vmatpush1.msra.mxu0 %v1677
        %2854 = vmatprep.subr.mxu0 %v1710
        %2855 = vmatpush1.msra.mxu0 %v1709
        %2856 = vmatprep.subr.mxu0 %v1742
        %2857 = vmatpush1.msra.mxu0 %v1741
        %2858 = vmatprep.subr.mxu0 %v1774
        %2859 = vmatpush1.msra.mxu0 %v1773
        %2860 = vmatprep.subr.mxu0 %v1806
        %2861 = vmatpush1.msra.mxu0 %v1805
        %2862 = vmatprep.subr.mxu0 %v1838
        %2863 = vmatpush1.msra.mxu0 %v1837
        %2864 = vmatprep.subr.mxu0 %v1870
        %2865 = vmatpush1.msra.mxu0 %v1869
        %2866 = vmatprep.subr.mxu0 %v1902
        %2867 = vmatpush1.msra.mxu0 %v1901
        %2868 = vmatprep.subr.mxu0 %v1934
        %2869 = vmatpush1.msra.mxu0 %v1933
        %2870 = vmatprep.subr.mxu0 %v1966
        %2871 = vmatpush1.msra.mxu0 %v1965
        %2872 = vmatprep.subr.mxu0 %v1998
        %2873 = vmatpush1.msra.mxu0 %v1997
        %2874 = vmatprep.subr.mxu0 %v2030
        %2875 = vmatpush1.msra.mxu0 %v2029
        %2876 = vmatprep.subr.mxu0 %v2062
        %2877 = vmatpush1.msra.mxu0 %v2061
        %2878 = vmatprep.subr.mxu0 %v2094
        %2879 = vmatpush1.msra.mxu0 %v2093
        %2880 = vmatprep.subr.mxu0 %v2126
        %2881 = vmatpush1.msra.mxu0 %v2125
        %2882 = vmatprep.subr.mxu0 %v2158
        %2883 = vmatpush1.msra.mxu0 %v2157
        %2884 = vmatprep.subr.mxu0 %v2190
        %2885 = vmatpush1.msra.mxu0 %v2189
        %2886 = vmatprep.subr.mxu0 %v2222
        %2887 = vmatpush1.msra.mxu0 %v2221
        %2888 = vmatprep.subr.mxu0 %v2254
        %2889 = vmatpush1.msra.mxu0 %v2253
        %2890 = vmatprep.mubr.f32.mxu0 %v2466
        %2891 = vmatmul.mubr.f32.gmra.mrb[0].mxu0 %v2464
        %v2892 = vpop.f32.mrb[0].mxu0
        %v2893 = vadd.f32 %v2822, %v2892
        %v2894 = vpop.f32.mrb[0].mxu0
        %v2895 = vadd.f32 %v2824, %v2894
        %2896 = vdwg.mxu0
        %2897 = vmatprep.subr.mxu0 %v240
        %2898 = vmatpush1.msra.mxu0 %v239
        %2899 = vmatprep.subr.mxu0 %v272
        %2900 = vmatpush1.msra.mxu0 %v271
        %2901 = vmatprep.subr.mxu0 %v304
        %2902 = vmatpush1.msra.mxu0 %v303
        %2903 = vmatprep.subr.mxu0 %v336
        %2904 = vmatpush1.msra.mxu0 %v335
        %2905 = vmatprep.subr.mxu0 %v368
        %2906 = vmatpush1.msra.mxu0 %v367
        %2907 = vmatprep.subr.mxu0 %v400
        %2908 = vmatpush1.msra.mxu0 %v399
        %2909 = vmatprep.subr.mxu0 %v432
        %2910 = vmatpush1.msra.mxu0 %v431
        %2911 = vmatprep.subr.mxu0 %v464
        %2912 = vmatpush1.msra.mxu0 %v463
        %2913 = vmatprep.subr.mxu0 %v496
        %2914 = vmatpush1.msra.mxu0 %v495
        %2915 = vmatprep.subr.mxu0 %v528
        %2916 = vmatpush1.msra.mxu0 %v527
        %2917 = vmatprep.subr.mxu0 %v560
        %2918 = vmatpush1.msra.mxu0 %v559
        %2919 = vmatprep.subr.mxu0 %v592
        %2920 = vmatpush1.msra.mxu0 %v591
        %2921 = vmatprep.subr.mxu0 %v624
        %2922 = vmatpush1.msra.mxu0 %v623
        %2923 = vmatprep.subr.mxu0 %v656
        %2924 = vmatpush1.msra.mxu0 %v655
        %2925 = vmatprep.subr.mxu0 %v688
        %2926 = vmatpush1.msra.mxu0 %v687
        %2927 = vmatprep.subr.mxu0 %v720
        %2928 = vmatpush1.msra.mxu0 %v719
        %2929 = vmatprep.subr.mxu0 %v752
        %2930 = vmatpush1.msra.mxu0 %v751
        %2931 = vmatprep.subr.mxu0 %v784
        %2932 = vmatpush1.msra.mxu0 %v783
        %2933 = vmatprep.subr.mxu0 %v816
        %2934 = vmatpush1.msra.mxu0 %v815
        %2935 = vmatprep.subr.mxu0 %v848
        %2936 = vmatpush1.msra.mxu0 %v847
        %2937 = vmatprep.subr.mxu0 %v880
        %2938 = vmatpush1.msra.mxu0 %v879
        %2939 = vmatprep.subr.mxu0 %v912
        %2940 = vmatpush1.msra.mxu0 %v911
        %2941 = vmatprep.subr.mxu0 %v944
        %2942 = vmatpush1.msra.mxu0 %v943
        %2943 = vmatprep.subr.mxu0 %v976
        %2944 = vmatpush1.msra.mxu0 %v975
        %2945 = vmatprep.subr.mxu0 %v1008
        %2946 = vmatpush1.msra.mxu0 %v1007
        %2947 = vmatprep.subr.mxu0 %v1040
        %2948 = vmatpush1.msra.mxu0 %v1039
        %2949 = vmatprep.subr.mxu0 %v1072
        %2950 = vmatpush1.msra.mxu0 %v1071
        %2951 = vmatprep.subr.mxu0 %v1104
        %2952 = vmatpush1.msra.mxu0 %v1103
        %2953 = vmatprep.subr.mxu0 %v1136
        %2954 = vmatpush1.msra.mxu0 %v1135
        %2955 = vmatprep.subr.mxu0 %v1168
        %2956 = vmatpush1.msra.mxu0 %v1167
        %2957 = vmatprep.subr.mxu0 %v1200
        %2958 = vmatpush1.msra.mxu0 %v1199
        %2959 = vmatprep.subr.mxu0 %v1232
        %2960 = vmatpush1.msra.mxu0 %v1231
        %2961 = vmatprep.mubr.f32.mxu0 %v2465
        %2962 = vmatmul.mubr.f32.gmra.mrb[0].mxu0 %v2457
        %v2963 = vpop.f32.mrb[0].mxu0
        %v2964 = vadd.f32 %v2316, %v2963
        %v2965 = vpop.f32.mrb[0].mxu0
        %v2966 = vadd.f32 %v2320, %v2965
        %2967 = vdwg.mxu0
        %2968 = vmatprep.subr.mxu0 %v1264
        %2969 = vmatpush1.msra.mxu0 %v1263
        %2970 = vmatprep.subr.mxu0 %v1296
        %2971 = vmatpush1.msra.mxu0 %v1295
        %2972 = vmatprep.subr.mxu0 %v1328
        %2973 = vmatpush1.msra.mxu0 %v1327
        %2974 = vmatprep.subr.mxu0 %v1360
        %2975 = vmatpush1.msra.mxu0 %v1359
        %2976 = vmatprep.subr.mxu0 %v1392
        %2977 = vmatpush1.msra.mxu0 %v1391
        %2978 = vmatprep.subr.mxu0 %v1424
        %2979 = vmatpush1.msra.mxu0 %v1423
        %2980 = vmatprep.subr.mxu0 %v1456
        %2981 = vmatpush1.msra.mxu0 %v1455
        %2982 = vmatprep.subr.mxu0 %v1488
        %2983 = vmatpush1.msra.mxu0 %v1487
        %2984 = vmatprep.subr.mxu0 %v1520
        %2985 = vmatpush1.msra.mxu0 %v1519
        %2986 = vmatprep.subr.mxu0 %v1552
        %2987 = vmatpush1.msra.mxu0 %v1551
        %2988 = vmatprep.subr.mxu0 %v1584
        %2989 = vmatpush1.msra.mxu0 %v1583
        %2990 = vmatprep.subr.mxu0 %v1616
        %2991 = vmatpush1.msra.mxu0 %v1615
        %2992 = vmatprep.subr.mxu0 %v1648
        %2993 = vmatpush1.msra.mxu0 %v1647
        %2994 = vmatprep.subr.mxu0 %v1680
        %2995 = vmatpush1.msra.mxu0 %v1679
        %2996 = vmatprep.subr.mxu0 %v1712
        %2997 = vmatpush1.msra.mxu0 %v1711
        %2998 = vmatprep.subr.mxu0 %v1744
        %2999 = vmatpush1.msra.mxu0 %v1743
        %3000 = vmatprep.subr.mxu0 %v1776
        %3001 = vmatpush1.msra.mxu0 %v1775
        %3002 = vmatprep.subr.mxu0 %v1808
        %3003 = vmatpush1.msra.mxu0 %v1807
        %3004 = vmatprep.subr.mxu0 %v1840
        %3005 = vmatpush1.msra.mxu0 %v1839
        %3006 = vmatprep.subr.mxu0 %v1872
        %3007 = vmatpush1.msra.mxu0 %v1871
        %3008 = vmatprep.subr.mxu0 %v1904
        %3009 = vmatpush1.msra.mxu0 %v1903
        %3010 = vmatprep.subr.mxu0 %v1936
        %3011 = vmatpush1.msra.mxu0 %v1935
        %3012 = vmatprep.subr.mxu0 %v1968
        %3013 = vmatpush1.msra.mxu0 %v1967
        %3014 = vmatprep.subr.mxu0 %v2000
        %3015 = vmatpush1.msra.mxu0 %v1999
        %3016 = vmatprep.subr.mxu0 %v2032
        %3017 = vmatpush1.msra.mxu0 %v2031
        %3018 = vmatprep.subr.mxu0 %v2064
        %3019 = vmatpush1.msra.mxu0 %v2063
        %3020 = vmatprep.subr.mxu0 %v2096
        %3021 = vmatpush1.msra.mxu0 %v2095
        %3022 = vmatprep.subr.mxu0 %v2128
        %3023 = vmatpush1.msra.mxu0 %v2127
        %3024 = vmatprep.subr.mxu0 %v2160
        %3025 = vmatpush1.msra.mxu0 %v2159
        %3026 = vmatprep.subr.mxu0 %v2192
        %3027 = vmatpush1.msra.mxu0 %v2191
        %3028 = vmatprep.subr.mxu0 %v2224
        %3029 = vmatpush1.msra.mxu0 %v2223
        %3030 = vmatprep.subr.mxu0 %v2256
        %3031 = vmatpush1.msra.mxu0 %v2255
        %3032 = vmatprep.mubr.f32.mxu0 %v2466
        %3033 = vmatmul.mubr.f32.gmra.mrb[0].mxu0 %v2464
        %v3034 = vpop.f32.mrb[0].mxu0
        %v3035 = vadd.f32 %v2964, %v3034
        %v3036 = vpop.f32.mrb[0].mxu0
        %v3037 = vadd.f32 %v2966, %v3036
        %3038 = vdwg.mxu0
        %3039 = vmatprep.subr.mxu0 %v242
        %3040 = vmatpush1.msra.mxu0 %v241
        %3041 = vmatprep.subr.mxu0 %v274
        %3042 = vmatpush1.msra.mxu0 %v273
        %3043 = vmatprep.subr.mxu0 %v306
        %3044 = vmatpush1.msra.mxu0 %v305
        %3045 = vmatprep.subr.mxu0 %v338
        %3046 = vmatpush1.msra.mxu0 %v337
        %3047 = vmatprep.subr.mxu0 %v370
        %3048 = vmatpush1.msra.mxu0 %v369
        %3049 = vmatprep.subr.mxu0 %v402
        %3050 = vmatpush1.msra.mxu0 %v401
        %3051 = vmatprep.subr.mxu0 %v434
        %3052 = vmatpush1.msra.mxu0 %v433
        %3053 = vmatprep.subr.mxu0 %v466
        %3054 = vmatpush1.msra.mxu0 %v465
        %3055 = vmatprep.subr.mxu0 %v498
        %3056 = vmatpush1.msra.mxu0 %v497
        %3057 = vmatprep.subr.mxu0 %v530
        %3058 = vmatpush1.msra.mxu0 %v529
        %3059 = vmatprep.subr.mxu0 %v562
        %3060 = vmatpush1.msra.mxu0 %v561
        %3061 = vmatprep.subr.mxu0 %v594
        %3062 = vmatpush1.msra.mxu0 %v593
        %3063 = vmatprep.subr.mxu0 %v626
        %3064 = vmatpush1.msra.mxu0 %v625
        %3065 = vmatprep.subr.mxu0 %v658
        %3066 = vmatpush1.msra.mxu0 %v657
        %3067 = vmatprep.subr.mxu0 %v690
        %3068 = vmatpush1.msra.mxu0 %v689
        %3069 = vmatprep.subr.mxu0 %v722
        %3070 = vmatpush1.msra.mxu0 %v721
        %3071 = vmatprep.subr.mxu0 %v754
        %3072 = vmatpush1.msra.mxu0 %v753
        %3073 = vmatprep.subr.mxu0 %v786
        %3074 = vmatpush1.msra.mxu0 %v785
        %3075 = vmatprep.subr.mxu0 %v818
        %3076 = vmatpush1.msra.mxu0 %v817
        %3077 = vmatprep.subr.mxu0 %v850
        %3078 = vmatpush1.msra.mxu0 %v849
        %3079 = vmatprep.subr.mxu0 %v882
        %3080 = vmatpush1.msra.mxu0 %v881
        %3081 = vmatprep.subr.mxu0 %v914
        %3082 = vmatpush1.msra.mxu0 %v913
        %3083 = vmatprep.subr.mxu0 %v946
        %3084 = vmatpush1.msra.mxu0 %v945
        %3085 = vmatprep.subr.mxu0 %v978
        %3086 = vmatpush1.msra.mxu0 %v977
        %3087 = vmatprep.subr.mxu0 %v1010
        %3088 = vmatpush1.msra.mxu0 %v1009
        %3089 = vmatprep.subr.mxu0 %v1042
        %3090 = vmatpush1.msra.mxu0 %v1041
        %3091 = vmatprep.subr.mxu0 %v1074
        %3092 = vmatpush1.msra.mxu0 %v1073
        %3093 = vmatprep.subr.mxu0 %v1106
        %3094 = vmatpush1.msra.mxu0 %v1105
        %3095 = vmatprep.subr.mxu0 %v1138
        %3096 = vmatpush1.msra.mxu0 %v1137
        %3097 = vmatprep.subr.mxu0 %v1170
        %3098 = vmatpush1.msra.mxu0 %v1169
        %3099 = vmatprep.subr.mxu0 %v1202
        %3100 = vmatpush1.msra.mxu0 %v1201
        %3101 = vmatprep.subr.mxu0 %v1234
        %3102 = vmatpush1.msra.mxu0 %v1233
        %3103 = vmatprep.mubr.f32.mxu0 %v2465
        %3104 = vmatmul.mubr.f32.gmra.mrb[0].mxu0 %v2457
        %v3105 = vpop.f32.mrb[0].mxu0
        %v3106 = vadd.f32 %v2324, %v3105
        %v3107 = vpop.f32.mrb[0].mxu0
        %v3108 = vadd.f32 %v2328, %v3107
        %3109 = vdwg.mxu0
        %3110 = vmatprep.subr.mxu0 %v1266
        %3111 = vmatpush1.msra.mxu0 %v1265
        %3112 = vmatprep.subr.mxu0 %v1298
        %3113 = vmatpush1.msra.mxu0 %v1297
        %3114 = vmatprep.subr.mxu0 %v1330
        %3115 = vmatpush1.msra.mxu0 %v1329
        %3116 = vmatprep.subr.mxu0 %v1362
        %3117 = vmatpush1.msra.mxu0 %v1361
        %3118 = vmatprep.subr.mxu0 %v1394
        %3119 = vmatpush1.msra.mxu0 %v1393
        %3120 = vmatprep.subr.mxu0 %v1426
        %3121 = vmatpush1.msra.mxu0 %v1425
        %3122 = vmatprep.subr.mxu0 %v1458
        %3123 = vmatpush1.msra.mxu0 %v1457
        %3124 = vmatprep.subr.mxu0 %v1490
        %3125 = vmatpush1.msra.mxu0 %v1489
        %3126 = vmatprep.subr.mxu0 %v1522
        %3127 = vmatpush1.msra.mxu0 %v1521
        %3128 = vmatprep.subr.mxu0 %v1554
        %3129 = vmatpush1.msra.mxu0 %v1553
        %3130 = vmatprep.subr.mxu0 %v1586
        %3131 = vmatpush1.msra.mxu0 %v1585
        %3132 = vmatprep.subr.mxu0 %v1618
        %3133 = vmatpush1.msra.mxu0 %v1617
        %3134 = vmatprep.subr.mxu0 %v1650
        %3135 = vmatpush1.msra.mxu0 %v1649
        %3136 = vmatprep.subr.mxu0 %v1682
        %3137 = vmatpush1.msra.mxu0 %v1681
        %3138 = vmatprep.subr.mxu0 %v1714
        %3139 = vmatpush1.msra.mxu0 %v1713
        %3140 = vmatprep.subr.mxu0 %v1746
        %3141 = vmatpush1.msra.mxu0 %v1745
        %3142 = vmatprep.subr.mxu0 %v1778
        %3143 = vmatpush1.msra.mxu0 %v1777
        %3144 = vmatprep.subr.mxu0 %v1810
        %3145 = vmatpush1.msra.mxu0 %v1809
        %3146 = vmatprep.subr.mxu0 %v1842
        %3147 = vmatpush1.msra.mxu0 %v1841
        %3148 = vmatprep.subr.mxu0 %v1874
        %3149 = vmatpush1.msra.mxu0 %v1873
        %3150 = vmatprep.subr.mxu0 %v1906
        %3151 = vmatpush1.msra.mxu0 %v1905
        %3152 = vmatprep.subr.mxu0 %v1938
        %3153 = vmatpush1.msra.mxu0 %v1937
        %3154 = vmatprep.subr.mxu0 %v1970
        %3155 = vmatpush1.msra.mxu0 %v1969
        %3156 = vmatprep.subr.mxu0 %v2002
        %3157 = vmatpush1.msra.mxu0 %v2001
        %3158 = vmatprep.subr.mxu0 %v2034
        %3159 = vmatpush1.msra.mxu0 %v2033
        %3160 = vmatprep.subr.mxu0 %v2066
        %3161 = vmatpush1.msra.mxu0 %v2065
        %3162 = vmatprep.subr.mxu0 %v2098
        %3163 = vmatpush1.msra.mxu0 %v2097
        %3164 = vmatprep.subr.mxu0 %v2130
        %3165 = vmatpush1.msra.mxu0 %v2129
        %3166 = vmatprep.subr.mxu0 %v2162
        %3167 = vmatpush1.msra.mxu0 %v2161
        %3168 = vmatprep.subr.mxu0 %v2194
        %3169 = vmatpush1.msra.mxu0 %v2193
        %3170 = vmatprep.subr.mxu0 %v2226
        %3171 = vmatpush1.msra.mxu0 %v2225
        %3172 = vmatprep.subr.mxu0 %v2258
        %3173 = vmatpush1.msra.mxu0 %v2257
        %3174 = vmatprep.mubr.f32.mxu0 %v2466
        %3175 = vmatmul.mubr.f32.gmra.mrb[0].mxu0 %v2464
        %v3176 = vpop.f32.mrb[0].mxu0
        %v3177 = vadd.f32 %v3106, %v3176
        %v3178 = vpop.f32.mrb[0].mxu0
        %v3179 = vadd.f32 %v3108, %v3178
        %3180 = vdwg.mxu0
        %3181 = vmatprep.subr.mxu0 %v244
        %3182 = vmatpush1.msra.mxu0 %v243
        %3183 = vmatprep.subr.mxu0 %v276
        %3184 = vmatpush1.msra.mxu0 %v275
        %3185 = vmatprep.subr.mxu0 %v308
        %3186 = vmatpush1.msra.mxu0 %v307
        %3187 = vmatprep.subr.mxu0 %v340
        %3188 = vmatpush1.msra.mxu0 %v339
        %3189 = vmatprep.subr.mxu0 %v372
        %3190 = vmatpush1.msra.mxu0 %v371
        %3191 = vmatprep.subr.mxu0 %v404
        %3192 = vmatpush1.msra.mxu0 %v403
        %3193 = vmatprep.subr.mxu0 %v436
        %3194 = vmatpush1.msra.mxu0 %v435
        %3195 = vmatprep.subr.mxu0 %v468
        %3196 = vmatpush1.msra.mxu0 %v467
        %3197 = vmatprep.subr.mxu0 %v500
        %3198 = vmatpush1.msra.mxu0 %v499
        %3199 = vmatprep.subr.mxu0 %v532
        %3200 = vmatpush1.msra.mxu0 %v531
        %3201 = vmatprep.subr.mxu0 %v564
        %3202 = vmatpush1.msra.mxu0 %v563
        %3203 = vmatprep.subr.mxu0 %v596
        %3204 = vmatpush1.msra.mxu0 %v595
        %3205 = vmatprep.subr.mxu0 %v628
        %3206 = vmatpush1.msra.mxu0 %v627
        %3207 = vmatprep.subr.mxu0 %v660
        %3208 = vmatpush1.msra.mxu0 %v659
        %3209 = vmatprep.subr.mxu0 %v692
        %3210 = vmatpush1.msra.mxu0 %v691
        %3211 = vmatprep.subr.mxu0 %v724
        %3212 = vmatpush1.msra.mxu0 %v723
        %3213 = vmatprep.subr.mxu0 %v756
        %3214 = vmatpush1.msra.mxu0 %v755
        %3215 = vmatprep.subr.mxu0 %v788
        %3216 = vmatpush1.msra.mxu0 %v787
        %3217 = vmatprep.subr.mxu0 %v820
        %3218 = vmatpush1.msra.mxu0 %v819
        %3219 = vmatprep.subr.mxu0 %v852
        %3220 = vmatpush1.msra.mxu0 %v851
        %3221 = vmatprep.subr.mxu0 %v884
        %3222 = vmatpush1.msra.mxu0 %v883
        %3223 = vmatprep.subr.mxu0 %v916
        %3224 = vmatpush1.msra.mxu0 %v915
        %3225 = vmatprep.subr.mxu0 %v948
        %3226 = vmatpush1.msra.mxu0 %v947
        %3227 = vmatprep.subr.mxu0 %v980
        %3228 = vmatpush1.msra.mxu0 %v979
        %3229 = vmatprep.subr.mxu0 %v1012
        %3230 = vmatpush1.msra.mxu0 %v1011
        %3231 = vmatprep.subr.mxu0 %v1044
        %3232 = vmatpush1.msra.mxu0 %v1043
        %3233 = vmatprep.subr.mxu0 %v1076
        %3234 = vmatpush1.msra.mxu0 %v1075
        %3235 = vmatprep.subr.mxu0 %v1108
        %3236 = vmatpush1.msra.mxu0 %v1107
        %3237 = vmatprep.subr.mxu0 %v1140
        %3238 = vmatpush1.msra.mxu0 %v1139
        %3239 = vmatprep.subr.mxu0 %v1172
        %3240 = vmatpush1.msra.mxu0 %v1171
        %3241 = vmatprep.subr.mxu0 %v1204
        %3242 = vmatpush1.msra.mxu0 %v1203
        %3243 = vmatprep.subr.mxu0 %v1236
        %3244 = vmatpush1.msra.mxu0 %v1235
        %3245 = vmatprep.mubr.f32.mxu0 %v2465
        %3246 = vmatmul.mubr.f32.gmra.mrb[0].mxu0 %v2457
        %v3247 = vpop.f32.mrb[0].mxu0
        %v3248 = vadd.f32 %v2332, %v3247
        %v3249 = vpop.f32.mrb[0].mxu0
        %v3250 = vadd.f32 %v2336, %v3249
        %3251 = vdwg.mxu0
        %3252 = vmatprep.subr.mxu0 %v1268
        %3253 = vmatpush1.msra.mxu0 %v1267
        %3254 = vmatprep.subr.mxu0 %v1300
        %3255 = vmatpush1.msra.mxu0 %v1299
        %3256 = vmatprep.subr.mxu0 %v1332
        %3257 = vmatpush1.msra.mxu0 %v1331
        %3258 = vmatprep.subr.mxu0 %v1364
        %3259 = vmatpush1.msra.mxu0 %v1363
        %3260 = vmatprep.subr.mxu0 %v1396
        %3261 = vmatpush1.msra.mxu0 %v1395
        %3262 = vmatprep.subr.mxu0 %v1428
        %3263 = vmatpush1.msra.mxu0 %v1427
        %3264 = vmatprep.subr.mxu0 %v1460
        %3265 = vmatpush1.msra.mxu0 %v1459
        %3266 = vmatprep.subr.mxu0 %v1492
        %3267 = vmatpush1.msra.mxu0 %v1491
        %3268 = vmatprep.subr.mxu0 %v1524
        %3269 = vmatpush1.msra.mxu0 %v1523
        %3270 = vmatprep.subr.mxu0 %v1556
        %3271 = vmatpush1.msra.mxu0 %v1555
        %3272 = vmatprep.subr.mxu0 %v1588
        %3273 = vmatpush1.msra.mxu0 %v1587
        %3274 = vmatprep.subr.mxu0 %v1620
        %3275 = vmatpush1.msra.mxu0 %v1619
        %3276 = vmatprep.subr.mxu0 %v1652
        %3277 = vmatpush1.msra.mxu0 %v1651
        %3278 = vmatprep.subr.mxu0 %v1684
        %3279 = vmatpush1.msra.mxu0 %v1683
        %3280 = vmatprep.subr.mxu0 %v1716
        %3281 = vmatpush1.msra.mxu0 %v1715
        %3282 = vmatprep.subr.mxu0 %v1748
        %3283 = vmatpush1.msra.mxu0 %v1747
        %3284 = vmatprep.subr.mxu0 %v1780
        %3285 = vmatpush1.msra.mxu0 %v1779
        %3286 = vmatprep.subr.mxu0 %v1812
        %3287 = vmatpush1.msra.mxu0 %v1811
        %3288 = vmatprep.subr.mxu0 %v1844
        %3289 = vmatpush1.msra.mxu0 %v1843
        %3290 = vmatprep.subr.mxu0 %v1876
        %3291 = vmatpush1.msra.mxu0 %v1875
        %3292 = vmatprep.subr.mxu0 %v1908
        %3293 = vmatpush1.msra.mxu0 %v1907
        %3294 = vmatprep.subr.mxu0 %v1940
        %3295 = vmatpush1.msra.mxu0 %v1939
        %3296 = vmatprep.subr.mxu0 %v1972
        %3297 = vmatpush1.msra.mxu0 %v1971
        %3298 = vmatprep.subr.mxu0 %v2004
        %3299 = vmatpush1.msra.mxu0 %v2003
        %3300 = vmatprep.subr.mxu0 %v2036
        %3301 = vmatpush1.msra.mxu0 %v2035
        %3302 = vmatprep.subr.mxu0 %v2068
        %3303 = vmatpush1.msra.mxu0 %v2067
        %3304 = vmatprep.subr.mxu0 %v2100
        %3305 = vmatpush1.msra.mxu0 %v2099
        %3306 = vmatprep.subr.mxu0 %v2132
        %3307 = vmatpush1.msra.mxu0 %v2131
        %3308 = vmatprep.subr.mxu0 %v2164
        %3309 = vmatpush1.msra.mxu0 %v2163
        %3310 = vmatprep.subr.mxu0 %v2196
        %3311 = vmatpush1.msra.mxu0 %v2195
        %3312 = vmatprep.subr.mxu0 %v2228
        %3313 = vmatpush1.msra.mxu0 %v2227
        %3314 = vmatprep.subr.mxu0 %v2260
        %3315 = vmatpush1.msra.mxu0 %v2259
        %3316 = vmatprep.mubr.f32.mxu0 %v2466
        %3317 = vmatmul.mubr.f32.gmra.mrb[0].mxu0 %v2464
        %v3318 = vpop.f32.mrb[0].mxu0
        %v3319 = vadd.f32 %v3248, %v3318
        %v3320 = vpop.f32.mrb[0].mxu0
        %v3321 = vadd.f32 %v3250, %v3320
        %3322 = vdwg.mxu0
        %3323 = vmatprep.subr.mxu0 %v246
        %3324 = vmatpush1.msra.mxu0 %v245
        %3325 = vmatprep.subr.mxu0 %v278
        %3326 = vmatpush1.msra.mxu0 %v277
        %3327 = vmatprep.subr.mxu0 %v310
        %3328 = vmatpush1.msra.mxu0 %v309
        %3329 = vmatprep.subr.mxu0 %v342
        %3330 = vmatpush1.msra.mxu0 %v341
        %3331 = vmatprep.subr.mxu0 %v374
        %3332 = vmatpush1.msra.mxu0 %v373
        %3333 = vmatprep.subr.mxu0 %v406
        %3334 = vmatpush1.msra.mxu0 %v405
        %3335 = vmatprep.subr.mxu0 %v438
        %3336 = vmatpush1.msra.mxu0 %v437
        %3337 = vmatprep.subr.mxu0 %v470
        %3338 = vmatpush1.msra.mxu0 %v469
        %3339 = vmatprep.subr.mxu0 %v502
        %3340 = vmatpush1.msra.mxu0 %v501
        %3341 = vmatprep.subr.mxu0 %v534
        %3342 = vmatpush1.msra.mxu0 %v533
        %3343 = vmatprep.subr.mxu0 %v566
        %3344 = vmatpush1.msra.mxu0 %v565
        %3345 = vmatprep.subr.mxu0 %v598
        %3346 = vmatpush1.msra.mxu0 %v597
        %3347 = vmatprep.subr.mxu0 %v630
        %3348 = vmatpush1.msra.mxu0 %v629
        %3349 = vmatprep.subr.mxu0 %v662
        %3350 = vmatpush1.msra.mxu0 %v661
        %3351 = vmatprep.subr.mxu0 %v694
        %3352 = vmatpush1.msra.mxu0 %v693
        %3353 = vmatprep.subr.mxu0 %v726
        %3354 = vmatpush1.msra.mxu0 %v725
        %3355 = vmatprep.subr.mxu0 %v758
        %3356 = vmatpush1.msra.mxu0 %v757
        %3357 = vmatprep.subr.mxu0 %v790
        %3358 = vmatpush1.msra.mxu0 %v789
        %3359 = vmatprep.subr.mxu0 %v822
        %3360 = vmatpush1.msra.mxu0 %v821
        %3361 = vmatprep.subr.mxu0 %v854
        %3362 = vmatpush1.msra.mxu0 %v853
        %3363 = vmatprep.subr.mxu0 %v886
        %3364 = vmatpush1.msra.mxu0 %v885
        %3365 = vmatprep.subr.mxu0 %v918
        %3366 = vmatpush1.msra.mxu0 %v917
        %3367 = vmatprep.subr.mxu0 %v950
        %3368 = vmatpush1.msra.mxu0 %v949
        %3369 = vmatprep.subr.mxu0 %v982
        %3370 = vmatpush1.msra.mxu0 %v981
        %3371 = vmatprep.subr.mxu0 %v1014
        %3372 = vmatpush1.msra.mxu0 %v1013
        %3373 = vmatprep.subr.mxu0 %v1046
        %3374 = vmatpush1.msra.mxu0 %v1045
        %3375 = vmatprep.subr.mxu0 %v1078
        %3376 = vmatpush1.msra.mxu0 %v1077
        %3377 = vmatprep.subr.mxu0 %v1110
        %3378 = vmatpush1.msra.mxu0 %v1109
        %3379 = vmatprep.subr.mxu0 %v1142
        %3380 = vmatpush1.msra.mxu0 %v1141
        %3381 = vmatprep.subr.mxu0 %v1174
        %3382 = vmatpush1.msra.mxu0 %v1173
        %3383 = vmatprep.subr.mxu0 %v1206
        %3384 = vmatpush1.msra.mxu0 %v1205
        %3385 = vmatprep.subr.mxu0 %v1238
        %3386 = vmatpush1.msra.mxu0 %v1237
        %3387 = vmatprep.mubr.f32.mxu0 %v2465
        %3388 = vmatmul.mubr.f32.gmra.mrb[0].mxu0 %v2457
        %v3389 = vpop.f32.mrb[0].mxu0
        %v3390 = vadd.f32 %v2340, %v3389
        %v3391 = vpop.f32.mrb[0].mxu0
        %v3392 = vadd.f32 %v2344, %v3391
        %3393 = vdwg.mxu0
        %3394 = vmatprep.subr.mxu0 %v1270
        %3395 = vmatpush1.msra.mxu0 %v1269
        %3396 = vmatprep.subr.mxu0 %v1302
        %3397 = vmatpush1.msra.mxu0 %v1301
        %3398 = vmatprep.subr.mxu0 %v1334
        %3399 = vmatpush1.msra.mxu0 %v1333
        %3400 = vmatprep.subr.mxu0 %v1366
        %3401 = vmatpush1.msra.mxu0 %v1365
        %3402 = vmatprep.subr.mxu0 %v1398
        %3403 = vmatpush1.msra.mxu0 %v1397
        %3404 = vmatprep.subr.mxu0 %v1430
        %3405 = vmatpush1.msra.mxu0 %v1429
        %3406 = vmatprep.subr.mxu0 %v1462
        %3407 = vmatpush1.msra.mxu0 %v1461
        %3408 = vmatprep.subr.mxu0 %v1494
        %3409 = vmatpush1.msra.mxu0 %v1493
        %3410 = vmatprep.subr.mxu0 %v1526
        %3411 = vmatpush1.msra.mxu0 %v1525
        %3412 = vmatprep.subr.mxu0 %v1558
        %3413 = vmatpush1.msra.mxu0 %v1557
        %3414 = vmatprep.subr.mxu0 %v1590
        %3415 = vmatpush1.msra.mxu0 %v1589
        %3416 = vmatprep.subr.mxu0 %v1622
        %3417 = vmatpush1.msra.mxu0 %v1621
        %3418 = vmatprep.subr.mxu0 %v1654
        %3419 = vmatpush1.msra.mxu0 %v1653
        %3420 = vmatprep.subr.mxu0 %v1686
        %3421 = vmatpush1.msra.mxu0 %v1685
        %3422 = vmatprep.subr.mxu0 %v1718
        %3423 = vmatpush1.msra.mxu0 %v1717
        %3424 = vmatprep.subr.mxu0 %v1750
        %3425 = vmatpush1.msra.mxu0 %v1749
        %3426 = vmatprep.subr.mxu0 %v1782
        %3427 = vmatpush1.msra.mxu0 %v1781
        %3428 = vmatprep.subr.mxu0 %v1814
        %3429 = vmatpush1.msra.mxu0 %v1813
        %3430 = vmatprep.subr.mxu0 %v1846
        %3431 = vmatpush1.msra.mxu0 %v1845
        %3432 = vmatprep.subr.mxu0 %v1878
        %3433 = vmatpush1.msra.mxu0 %v1877
        %3434 = vmatprep.subr.mxu0 %v1910
        %3435 = vmatpush1.msra.mxu0 %v1909
        %3436 = vmatprep.subr.mxu0 %v1942
        %3437 = vmatpush1.msra.mxu0 %v1941
        %3438 = vmatprep.subr.mxu0 %v1974
        %3439 = vmatpush1.msra.mxu0 %v1973
        %3440 = vmatprep.subr.mxu0 %v2006
        %3441 = vmatpush1.msra.mxu0 %v2005
        %3442 = vmatprep.subr.mxu0 %v2038
        %3443 = vmatpush1.msra.mxu0 %v2037
        %3444 = vmatprep.subr.mxu0 %v2070
        %3445 = vmatpush1.msra.mxu0 %v2069
        %3446 = vmatprep.subr.mxu0 %v2102
        %3447 = vmatpush1.msra.mxu0 %v2101
        %3448 = vmatprep.subr.mxu0 %v2134
        %3449 = vmatpush1.msra.mxu0 %v2133
        %3450 = vmatprep.subr.mxu0 %v2166
        %3451 = vmatpush1.msra.mxu0 %v2165
        %3452 = vmatprep.subr.mxu0 %v2198
        %3453 = vmatpush1.msra.mxu0 %v2197
        %3454 = vmatprep.subr.mxu0 %v2230
        %3455 = vmatpush1.msra.mxu0 %v2229
        %3456 = vmatprep.subr.mxu0 %v2262
        %3457 = vmatpush1.msra.mxu0 %v2261
        %3458 = vmatprep.mubr.f32.mxu0 %v2466
        %3459 = vmatmul.mubr.f32.gmra.mrb[0].mxu0 %v2464
        %v3460 = vpop.f32.mrb[0].mxu0
        %v3461 = vadd.f32 %v3390, %v3460
        %v3462 = vpop.f32.mrb[0].mxu0
        %v3463 = vadd.f32 %v3392, %v3462
        %3464 = vdwg.mxu0
        %3465 = vmatprep.subr.mxu0 %v248
        %3466 = vmatpush1.msra.mxu0 %v247
        %3467 = vmatprep.subr.mxu0 %v280
        %3468 = vmatpush1.msra.mxu0 %v279
        %3469 = vmatprep.subr.mxu0 %v312
        %3470 = vmatpush1.msra.mxu0 %v311
        %3471 = vmatprep.subr.mxu0 %v344
        %3472 = vmatpush1.msra.mxu0 %v343
        %3473 = vmatprep.subr.mxu0 %v376
        %3474 = vmatpush1.msra.mxu0 %v375
        %3475 = vmatprep.subr.mxu0 %v408
        %3476 = vmatpush1.msra.mxu0 %v407
        %3477 = vmatprep.subr.mxu0 %v440
        %3478 = vmatpush1.msra.mxu0 %v439
        %3479 = vmatprep.subr.mxu0 %v472
        %3480 = vmatpush1.msra.mxu0 %v471
        %3481 = vmatprep.subr.mxu0 %v504
        %3482 = vmatpush1.msra.mxu0 %v503
        %3483 = vmatprep.subr.mxu0 %v536
        %3484 = vmatpush1.msra.mxu0 %v535
        %3485 = vmatprep.subr.mxu0 %v568
        %3486 = vmatpush1.msra.mxu0 %v567
        %3487 = vmatprep.subr.mxu0 %v600
        %3488 = vmatpush1.msra.mxu0 %v599
        %3489 = vmatprep.subr.mxu0 %v632
        %3490 = vmatpush1.msra.mxu0 %v631
        %3491 = vmatprep.subr.mxu0 %v664
        %3492 = vmatpush1.msra.mxu0 %v663
        %3493 = vmatprep.subr.mxu0 %v696
        %3494 = vmatpush1.msra.mxu0 %v695
        %3495 = vmatprep.subr.mxu0 %v728
        %3496 = vmatpush1.msra.mxu0 %v727
        %3497 = vmatprep.subr.mxu0 %v760
        %3498 = vmatpush1.msra.mxu0 %v759
        %3499 = vmatprep.subr.mxu0 %v792
        %3500 = vmatpush1.msra.mxu0 %v791
        %3501 = vmatprep.subr.mxu0 %v824
        %3502 = vmatpush1.msra.mxu0 %v823
        %3503 = vmatprep.subr.mxu0 %v856
        %3504 = vmatpush1.msra.mxu0 %v855
        %3505 = vmatprep.subr.mxu0 %v888
        %3506 = vmatpush1.msra.mxu0 %v887
        %3507 = vmatprep.subr.mxu0 %v920
        %3508 = vmatpush1.msra.mxu0 %v919
        %3509 = vmatprep.subr.mxu0 %v952
        %3510 = vmatpush1.msra.mxu0 %v951
        %3511 = vmatprep.subr.mxu0 %v984
        %3512 = vmatpush1.msra.mxu0 %v983
        %3513 = vmatprep.subr.mxu0 %v1016
        %3514 = vmatpush1.msra.mxu0 %v1015
        %3515 = vmatprep.subr.mxu0 %v1048
        %3516 = vmatpush1.msra.mxu0 %v1047
        %3517 = vmatprep.subr.mxu0 %v1080
        %3518 = vmatpush1.msra.mxu0 %v1079
        %3519 = vmatprep.subr.mxu0 %v1112
        %3520 = vmatpush1.msra.mxu0 %v1111
        %3521 = vmatprep.subr.mxu0 %v1144
        %3522 = vmatpush1.msra.mxu0 %v1143
        %3523 = vmatprep.subr.mxu0 %v1176
        %3524 = vmatpush1.msra.mxu0 %v1175
        %3525 = vmatprep.subr.mxu0 %v1208
        %3526 = vmatpush1.msra.mxu0 %v1207
        %3527 = vmatprep.subr.mxu0 %v1240
        %3528 = vmatpush1.msra.mxu0 %v1239
        %3529 = vmatprep.mubr.f32.mxu0 %v2465
        %3530 = vmatmul.mubr.f32.gmra.mrb[0].mxu0 %v2457
        %v3531 = vpop.f32.mrb[0].mxu0
        %v3532 = vadd.f32 %v2348, %v3531
        %v3533 = vpop.f32.mrb[0].mxu0
        %v3534 = vadd.f32 %v2352, %v3533
        %3535 = vdwg.mxu0
        %3536 = vmatprep.subr.mxu0 %v1272
        %3537 = vmatpush1.msra.mxu0 %v1271
        %3538 = vmatprep.subr.mxu0 %v1304
        %3539 = vmatpush1.msra.mxu0 %v1303
        %3540 = vmatprep.subr.mxu0 %v1336
        %3541 = vmatpush1.msra.mxu0 %v1335
        %3542 = vmatprep.subr.mxu0 %v1368
        %3543 = vmatpush1.msra.mxu0 %v1367
        %3544 = vmatprep.subr.mxu0 %v1400
        %3545 = vmatpush1.msra.mxu0 %v1399
        %3546 = vmatprep.subr.mxu0 %v1432
        %3547 = vmatpush1.msra.mxu0 %v1431
        %3548 = vmatprep.subr.mxu0 %v1464
        %3549 = vmatpush1.msra.mxu0 %v1463
        %3550 = vmatprep.subr.mxu0 %v1496
        %3551 = vmatpush1.msra.mxu0 %v1495
        %3552 = vmatprep.subr.mxu0 %v1528
        %3553 = vmatpush1.msra.mxu0 %v1527
        %3554 = vmatprep.subr.mxu0 %v1560
        %3555 = vmatpush1.msra.mxu0 %v1559
        %3556 = vmatprep.subr.mxu0 %v1592
        %3557 = vmatpush1.msra.mxu0 %v1591
        %3558 = vmatprep.subr.mxu0 %v1624
        %3559 = vmatpush1.msra.mxu0 %v1623
        %3560 = vmatprep.subr.mxu0 %v1656
        %3561 = vmatpush1.msra.mxu0 %v1655
        %3562 = vmatprep.subr.mxu0 %v1688
        %3563 = vmatpush1.msra.mxu0 %v1687
        %3564 = vmatprep.subr.mxu0 %v1720
        %3565 = vmatpush1.msra.mxu0 %v1719
        %3566 = vmatprep.subr.mxu0 %v1752
        %3567 = vmatpush1.msra.mxu0 %v1751
        %3568 = vmatprep.subr.mxu0 %v1784
        %3569 = vmatpush1.msra.mxu0 %v1783
        %3570 = vmatprep.subr.mxu0 %v1816
        %3571 = vmatpush1.msra.mxu0 %v1815
        %3572 = vmatprep.subr.mxu0 %v1848
        %3573 = vmatpush1.msra.mxu0 %v1847
        %3574 = vmatprep.subr.mxu0 %v1880
        %3575 = vmatpush1.msra.mxu0 %v1879
        %3576 = vmatprep.subr.mxu0 %v1912
        %3577 = vmatpush1.msra.mxu0 %v1911
        %3578 = vmatprep.subr.mxu0 %v1944
        %3579 = vmatpush1.msra.mxu0 %v1943
        %3580 = vmatprep.subr.mxu0 %v1976
        %3581 = vmatpush1.msra.mxu0 %v1975
        %3582 = vmatprep.subr.mxu0 %v2008
        %3583 = vmatpush1.msra.mxu0 %v2007
        %3584 = vmatprep.subr.mxu0 %v2040
        %3585 = vmatpush1.msra.mxu0 %v2039
        %3586 = vmatprep.subr.mxu0 %v2072
        %3587 = vmatpush1.msra.mxu0 %v2071
        %3588 = vmatprep.subr.mxu0 %v2104
        %3589 = vmatpush1.msra.mxu0 %v2103
        %3590 = vmatprep.subr.mxu0 %v2136
        %3591 = vmatpush1.msra.mxu0 %v2135
        %3592 = vmatprep.subr.mxu0 %v2168
        %3593 = vmatpush1.msra.mxu0 %v2167
        %3594 = vmatprep.subr.mxu0 %v2200
        %3595 = vmatpush1.msra.mxu0 %v2199
        %3596 = vmatprep.subr.mxu0 %v2232
        %3597 = vmatpush1.msra.mxu0 %v2231
        %3598 = vmatprep.subr.mxu0 %v2264
        %3599 = vmatpush1.msra.mxu0 %v2263
        %3600 = vmatprep.mubr.f32.mxu0 %v2466
        %3601 = vmatmul.mubr.f32.gmra.mrb[0].mxu0 %v2464
        %v3602 = vpop.f32.mrb[0].mxu0
        %v3603 = vadd.f32 %v3532, %v3602
        %v3604 = vpop.f32.mrb[0].mxu0
        %v3605 = vadd.f32 %v3534, %v3604
        %3606 = vdwg.mxu0
        %3607 = vmatprep.subr.mxu0 %v250
        %3608 = vmatpush1.msra.mxu0 %v249
        %3609 = vmatprep.subr.mxu0 %v282
        %3610 = vmatpush1.msra.mxu0 %v281
        %3611 = vmatprep.subr.mxu0 %v314
        %3612 = vmatpush1.msra.mxu0 %v313
        %3613 = vmatprep.subr.mxu0 %v346
        %3614 = vmatpush1.msra.mxu0 %v345
        %3615 = vmatprep.subr.mxu0 %v378
        %3616 = vmatpush1.msra.mxu0 %v377
        %3617 = vmatprep.subr.mxu0 %v410
        %3618 = vmatpush1.msra.mxu0 %v409
        %3619 = vmatprep.subr.mxu0 %v442
        %3620 = vmatpush1.msra.mxu0 %v441
        %3621 = vmatprep.subr.mxu0 %v474
        %3622 = vmatpush1.msra.mxu0 %v473
        %3623 = vmatprep.subr.mxu0 %v506
        %3624 = vmatpush1.msra.mxu0 %v505
        %3625 = vmatprep.subr.mxu0 %v538
        %3626 = vmatpush1.msra.mxu0 %v537
        %3627 = vmatprep.subr.mxu0 %v570
        %3628 = vmatpush1.msra.mxu0 %v569
        %3629 = vmatprep.subr.mxu0 %v602
        %3630 = vmatpush1.msra.mxu0 %v601
        %3631 = vmatprep.subr.mxu0 %v634
        %3632 = vmatpush1.msra.mxu0 %v633
        %3633 = vmatprep.subr.mxu0 %v666
        %3634 = vmatpush1.msra.mxu0 %v665
        %3635 = vmatprep.subr.mxu0 %v698
        %3636 = vmatpush1.msra.mxu0 %v697
        %3637 = vmatprep.subr.mxu0 %v730
        %3638 = vmatpush1.msra.mxu0 %v729
        %3639 = vmatprep.subr.mxu0 %v762
        %3640 = vmatpush1.msra.mxu0 %v761
        %3641 = vmatprep.subr.mxu0 %v794
        %3642 = vmatpush1.msra.mxu0 %v793
        %3643 = vmatprep.subr.mxu0 %v826
        %3644 = vmatpush1.msra.mxu0 %v825
        %3645 = vmatprep.subr.mxu0 %v858
        %3646 = vmatpush1.msra.mxu0 %v857
        %3647 = vmatprep.subr.mxu0 %v890
        %3648 = vmatpush1.msra.mxu0 %v889
        %3649 = vmatprep.subr.mxu0 %v922
        %3650 = vmatpush1.msra.mxu0 %v921
        %3651 = vmatprep.subr.mxu0 %v954
        %3652 = vmatpush1.msra.mxu0 %v953
        %3653 = vmatprep.subr.mxu0 %v986
        %3654 = vmatpush1.msra.mxu0 %v985
        %3655 = vmatprep.subr.mxu0 %v1018
        %3656 = vmatpush1.msra.mxu0 %v1017
        %3657 = vmatprep.subr.mxu0 %v1050
        %3658 = vmatpush1.msra.mxu0 %v1049
        %3659 = vmatprep.subr.mxu0 %v1082
        %3660 = vmatpush1.msra.mxu0 %v1081
        %3661 = vmatprep.subr.mxu0 %v1114
        %3662 = vmatpush1.msra.mxu0 %v1113
        %3663 = vmatprep.subr.mxu0 %v1146
        %3664 = vmatpush1.msra.mxu0 %v1145
        %3665 = vmatprep.subr.mxu0 %v1178
        %3666 = vmatpush1.msra.mxu0 %v1177
        %3667 = vmatprep.subr.mxu0 %v1210
        %3668 = vmatpush1.msra.mxu0 %v1209
        %3669 = vmatprep.subr.mxu0 %v1242
        %3670 = vmatpush1.msra.mxu0 %v1241
        %3671 = vmatprep.mubr.f32.mxu0 %v2465
        %3672 = vmatmul.mubr.f32.gmra.mrb[0].mxu0 %v2457
        %v3673 = vpop.f32.mrb[0].mxu0
        %v3674 = vadd.f32 %v2356, %v3673
        %v3675 = vpop.f32.mrb[0].mxu0
        %v3676 = vadd.f32 %v2360, %v3675
        %3677 = vdwg.mxu0
        %3678 = vmatprep.subr.mxu0 %v1274
        %3679 = vmatpush1.msra.mxu0 %v1273
        %3680 = vmatprep.subr.mxu0 %v1306
        %3681 = vmatpush1.msra.mxu0 %v1305
        %3682 = vmatprep.subr.mxu0 %v1338
        %3683 = vmatpush1.msra.mxu0 %v1337
        %3684 = vmatprep.subr.mxu0 %v1370
        %3685 = vmatpush1.msra.mxu0 %v1369
        %3686 = vmatprep.subr.mxu0 %v1402
        %3687 = vmatpush1.msra.mxu0 %v1401
        %3688 = vmatprep.subr.mxu0 %v1434
        %3689 = vmatpush1.msra.mxu0 %v1433
        %3690 = vmatprep.subr.mxu0 %v1466
        %3691 = vmatpush1.msra.mxu0 %v1465
        %3692 = vmatprep.subr.mxu0 %v1498
        %3693 = vmatpush1.msra.mxu0 %v1497
        %3694 = vmatprep.subr.mxu0 %v1530
        %3695 = vmatpush1.msra.mxu0 %v1529
        %3696 = vmatprep.subr.mxu0 %v1562
        %3697 = vmatpush1.msra.mxu0 %v1561
        %3698 = vmatprep.subr.mxu0 %v1594
        %3699 = vmatpush1.msra.mxu0 %v1593
        %3700 = vmatprep.subr.mxu0 %v1626
        %3701 = vmatpush1.msra.mxu0 %v1625
        %3702 = vmatprep.subr.mxu0 %v1658
        %3703 = vmatpush1.msra.mxu0 %v1657
        %3704 = vmatprep.subr.mxu0 %v1690
        %3705 = vmatpush1.msra.mxu0 %v1689
        %3706 = vmatprep.subr.mxu0 %v1722
        %3707 = vmatpush1.msra.mxu0 %v1721
        %3708 = vmatprep.subr.mxu0 %v1754
        %3709 = vmatpush1.msra.mxu0 %v1753
        %3710 = vmatprep.subr.mxu0 %v1786
        %3711 = vmatpush1.msra.mxu0 %v1785
        %3712 = vmatprep.subr.mxu0 %v1818
        %3713 = vmatpush1.msra.mxu0 %v1817
        %3714 = vmatprep.subr.mxu0 %v1850
        %3715 = vmatpush1.msra.mxu0 %v1849
        %3716 = vmatprep.subr.mxu0 %v1882
        %3717 = vmatpush1.msra.mxu0 %v1881
        %3718 = vmatprep.subr.mxu0 %v1914
        %3719 = vmatpush1.msra.mxu0 %v1913
        %3720 = vmatprep.subr.mxu0 %v1946
        %3721 = vmatpush1.msra.mxu0 %v1945
        %3722 = vmatprep.subr.mxu0 %v1978
        %3723 = vmatpush1.msra.mxu0 %v1977
        %3724 = vmatprep.subr.mxu0 %v2010
        %3725 = vmatpush1.msra.mxu0 %v2009
        %3726 = vmatprep.subr.mxu0 %v2042
        %3727 = vmatpush1.msra.mxu0 %v2041
        %3728 = vmatprep.subr.mxu0 %v2074
        %3729 = vmatpush1.msra.mxu0 %v2073
        %3730 = vmatprep.subr.mxu0 %v2106
        %3731 = vmatpush1.msra.mxu0 %v2105
        %3732 = vmatprep.subr.mxu0 %v2138
        %3733 = vmatpush1.msra.mxu0 %v2137
        %3734 = vmatprep.subr.mxu0 %v2170
        %3735 = vmatpush1.msra.mxu0 %v2169
        %3736 = vmatprep.subr.mxu0 %v2202
        %3737 = vmatpush1.msra.mxu0 %v2201
        %3738 = vmatprep.subr.mxu0 %v2234
        %3739 = vmatpush1.msra.mxu0 %v2233
        %3740 = vmatprep.subr.mxu0 %v2266
        %3741 = vmatpush1.msra.mxu0 %v2265
        %3742 = vmatprep.mubr.f32.mxu0 %v2466
        %3743 = vmatmul.mubr.f32.gmra.mrb[0].mxu0 %v2464
        %v3744 = vpop.f32.mrb[0].mxu0
        %v3745 = vadd.f32 %v3674, %v3744
        %v3746 = vpop.f32.mrb[0].mxu0
        %v3747 = vadd.f32 %v3676, %v3746
        %3748 = vdwg.mxu0
        %3749 = vmatprep.subr.mxu0 %v252
        %3750 = vmatpush1.msra.mxu0 %v251
        %3751 = vmatprep.subr.mxu0 %v284
        %3752 = vmatpush1.msra.mxu0 %v283
        %3753 = vmatprep.subr.mxu0 %v316
        %3754 = vmatpush1.msra.mxu0 %v315
        %3755 = vmatprep.subr.mxu0 %v348
        %3756 = vmatpush1.msra.mxu0 %v347
        %3757 = vmatprep.subr.mxu0 %v380
        %3758 = vmatpush1.msra.mxu0 %v379
        %3759 = vmatprep.subr.mxu0 %v412
        %3760 = vmatpush1.msra.mxu0 %v411
        %3761 = vmatprep.subr.mxu0 %v444
        %3762 = vmatpush1.msra.mxu0 %v443
        %3763 = vmatprep.subr.mxu0 %v476
        %3764 = vmatpush1.msra.mxu0 %v475
        %3765 = vmatprep.subr.mxu0 %v508
        %3766 = vmatpush1.msra.mxu0 %v507
        %3767 = vmatprep.subr.mxu0 %v540
        %3768 = vmatpush1.msra.mxu0 %v539
        %3769 = vmatprep.subr.mxu0 %v572
        %3770 = vmatpush1.msra.mxu0 %v571
        %3771 = vmatprep.subr.mxu0 %v604
        %3772 = vmatpush1.msra.mxu0 %v603
        %3773 = vmatprep.subr.mxu0 %v636
        %3774 = vmatpush1.msra.mxu0 %v635
        %3775 = vmatprep.subr.mxu0 %v668
        %3776 = vmatpush1.msra.mxu0 %v667
        %3777 = vmatprep.subr.mxu0 %v700
        %3778 = vmatpush1.msra.mxu0 %v699
        %3779 = vmatprep.subr.mxu0 %v732
        %3780 = vmatpush1.msra.mxu0 %v731
        %3781 = vmatprep.subr.mxu0 %v764
        %3782 = vmatpush1.msra.mxu0 %v763
        %3783 = vmatprep.subr.mxu0 %v796
        %3784 = vmatpush1.msra.mxu0 %v795
        %3785 = vmatprep.subr.mxu0 %v828
        %3786 = vmatpush1.msra.mxu0 %v827
        %3787 = vmatprep.subr.mxu0 %v860
        %3788 = vmatpush1.msra.mxu0 %v859
        %3789 = vmatprep.subr.mxu0 %v892
        %3790 = vmatpush1.msra.mxu0 %v891
        %3791 = vmatprep.subr.mxu0 %v924
        %3792 = vmatpush1.msra.mxu0 %v923
        %3793 = vmatprep.subr.mxu0 %v956
        %3794 = vmatpush1.msra.mxu0 %v955
        %3795 = vmatprep.subr.mxu0 %v988
        %3796 = vmatpush1.msra.mxu0 %v987
        %3797 = vmatprep.subr.mxu0 %v1020
        %3798 = vmatpush1.msra.mxu0 %v1019
        %3799 = vmatprep.subr.mxu0 %v1052
        %3800 = vmatpush1.msra.mxu0 %v1051
        %3801 = vmatprep.subr.mxu0 %v1084
        %3802 = vmatpush1.msra.mxu0 %v1083
        %3803 = vmatprep.subr.mxu0 %v1116
        %3804 = vmatpush1.msra.mxu0 %v1115
        %3805 = vmatprep.subr.mxu0 %v1148
        %3806 = vmatpush1.msra.mxu0 %v1147
        %3807 = vmatprep.subr.mxu0 %v1180
        %3808 = vmatpush1.msra.mxu0 %v1179
        %3809 = vmatprep.subr.mxu0 %v1212
        %3810 = vmatpush1.msra.mxu0 %v1211
        %3811 = vmatprep.subr.mxu0 %v1244
        %3812 = vmatpush1.msra.mxu0 %v1243
        %3813 = vmatprep.mubr.f32.mxu0 %v2465
        %3814 = vmatmul.mubr.f32.gmra.mrb[0].mxu0 %v2457
        %v3815 = vpop.f32.mrb[0].mxu0
        %v3816 = vadd.f32 %v2364, %v3815
        %v3817 = vpop.f32.mrb[0].mxu0
        %v3818 = vadd.f32 %v2368, %v3817
        %3819 = vdwg.mxu0
        %3820 = vmatprep.subr.mxu0 %v1276
        %3821 = vmatpush1.msra.mxu0 %v1275
        %3822 = vmatprep.subr.mxu0 %v1308
        %3823 = vmatpush1.msra.mxu0 %v1307
        %3824 = vmatprep.subr.mxu0 %v1340
        %3825 = vmatpush1.msra.mxu0 %v1339
        %3826 = vmatprep.subr.mxu0 %v1372
        %3827 = vmatpush1.msra.mxu0 %v1371
        %3828 = vmatprep.subr.mxu0 %v1404
        %3829 = vmatpush1.msra.mxu0 %v1403
        %3830 = vmatprep.subr.mxu0 %v1436
        %3831 = vmatpush1.msra.mxu0 %v1435
        %3832 = vmatprep.subr.mxu0 %v1468
        %3833 = vmatpush1.msra.mxu0 %v1467
        %3834 = vmatprep.subr.mxu0 %v1500
        %3835 = vmatpush1.msra.mxu0 %v1499
        %3836 = vmatprep.subr.mxu0 %v1532
        %3837 = vmatpush1.msra.mxu0 %v1531
        %3838 = vmatprep.subr.mxu0 %v1564
        %3839 = vmatpush1.msra.mxu0 %v1563
        %3840 = vmatprep.subr.mxu0 %v1596
        %3841 = vmatpush1.msra.mxu0 %v1595
        %3842 = vmatprep.subr.mxu0 %v1628
        %3843 = vmatpush1.msra.mxu0 %v1627
        %3844 = vmatprep.subr.mxu0 %v1660
        %3845 = vmatpush1.msra.mxu0 %v1659
        %3846 = vmatprep.subr.mxu0 %v1692
        %3847 = vmatpush1.msra.mxu0 %v1691
        %3848 = vmatprep.subr.mxu0 %v1724
        %3849 = vmatpush1.msra.mxu0 %v1723
        %3850 = vmatprep.subr.mxu0 %v1756
        %3851 = vmatpush1.msra.mxu0 %v1755
        %3852 = vmatprep.subr.mxu0 %v1788
        %3853 = vmatpush1.msra.mxu0 %v1787
        %3854 = vmatprep.subr.mxu0 %v1820
        %3855 = vmatpush1.msra.mxu0 %v1819
        %3856 = vmatprep.subr.mxu0 %v1852
        %3857 = vmatpush1.msra.mxu0 %v1851
        %3858 = vmatprep.subr.mxu0 %v1884
        %3859 = vmatpush1.msra.mxu0 %v1883
        %3860 = vmatprep.subr.mxu0 %v1916
        %3861 = vmatpush1.msra.mxu0 %v1915
        %3862 = vmatprep.subr.mxu0 %v1948
        %3863 = vmatpush1.msra.mxu0 %v1947
        %3864 = vmatprep.subr.mxu0 %v1980
        %3865 = vmatpush1.msra.mxu0 %v1979
        %3866 = vmatprep.subr.mxu0 %v2012
        %3867 = vmatpush1.msra.mxu0 %v2011
        %3868 = vmatprep.subr.mxu0 %v2044
        %3869 = vmatpush1.msra.mxu0 %v2043
        %3870 = vmatprep.subr.mxu0 %v2076
        %3871 = vmatpush1.msra.mxu0 %v2075
        %3872 = vmatprep.subr.mxu0 %v2108
        %3873 = vmatpush1.msra.mxu0 %v2107
        %3874 = vmatprep.subr.mxu0 %v2140
        %3875 = vmatpush1.msra.mxu0 %v2139
        %3876 = vmatprep.subr.mxu0 %v2172
        %3877 = vmatpush1.msra.mxu0 %v2171
        %3878 = vmatprep.subr.mxu0 %v2204
        %3879 = vmatpush1.msra.mxu0 %v2203
        %3880 = vmatprep.subr.mxu0 %v2236
        %3881 = vmatpush1.msra.mxu0 %v2235
        %3882 = vmatprep.subr.mxu0 %v2268
        %3883 = vmatpush1.msra.mxu0 %v2267
        %3884 = vmatprep.mubr.f32.mxu0 %v2466
        %3885 = vmatmul.mubr.f32.gmra.mrb[0].mxu0 %v2464
        %v3886 = vpop.f32.mrb[0].mxu0
        %v3887 = vadd.f32 %v3816, %v3886
        %v3888 = vpop.f32.mrb[0].mxu0
        %v3889 = vadd.f32 %v3818, %v3888
        %3890 = vdwg.mxu0
        %3891 = vmatprep.subr.mxu0 %v254
        %3892 = vmatpush1.msra.mxu0 %v253
        %3893 = vmatprep.subr.mxu0 %v286
        %3894 = vmatpush1.msra.mxu0 %v285
        %3895 = vmatprep.subr.mxu0 %v318
        %3896 = vmatpush1.msra.mxu0 %v317
        %3897 = vmatprep.subr.mxu0 %v350
        %3898 = vmatpush1.msra.mxu0 %v349
        %3899 = vmatprep.subr.mxu0 %v382
        %3900 = vmatpush1.msra.mxu0 %v381
        %3901 = vmatprep.subr.mxu0 %v414
        %3902 = vmatpush1.msra.mxu0 %v413
        %3903 = vmatprep.subr.mxu0 %v446
        %3904 = vmatpush1.msra.mxu0 %v445
        %3905 = vmatprep.subr.mxu0 %v478
        %3906 = vmatpush1.msra.mxu0 %v477
        %3907 = vmatprep.subr.mxu0 %v510
        %3908 = vmatpush1.msra.mxu0 %v509
        %3909 = vmatprep.subr.mxu0 %v542
        %3910 = vmatpush1.msra.mxu0 %v541
        %3911 = vmatprep.subr.mxu0 %v574
        %3912 = vmatpush1.msra.mxu0 %v573
        %3913 = vmatprep.subr.mxu0 %v606
        %3914 = vmatpush1.msra.mxu0 %v605
        %3915 = vmatprep.subr.mxu0 %v638
        %3916 = vmatpush1.msra.mxu0 %v637
        %3917 = vmatprep.subr.mxu0 %v670
        %3918 = vmatpush1.msra.mxu0 %v669
        %3919 = vmatprep.subr.mxu0 %v702
        %3920 = vmatpush1.msra.mxu0 %v701
        %3921 = vmatprep.subr.mxu0 %v734
        %3922 = vmatpush1.msra.mxu0 %v733
        %3923 = vmatprep.subr.mxu0 %v766
        %3924 = vmatpush1.msra.mxu0 %v765
        %3925 = vmatprep.subr.mxu0 %v798
        %3926 = vmatpush1.msra.mxu0 %v797
        %3927 = vmatprep.subr.mxu0 %v830
        %3928 = vmatpush1.msra.mxu0 %v829
        %3929 = vmatprep.subr.mxu0 %v862
        %3930 = vmatpush1.msra.mxu0 %v861
        %3931 = vmatprep.subr.mxu0 %v894
        %3932 = vmatpush1.msra.mxu0 %v893
        %3933 = vmatprep.subr.mxu0 %v926
        %3934 = vmatpush1.msra.mxu0 %v925
        %3935 = vmatprep.subr.mxu0 %v958
        %3936 = vmatpush1.msra.mxu0 %v957
        %3937 = vmatprep.subr.mxu0 %v990
        %3938 = vmatpush1.msra.mxu0 %v989
        %3939 = vmatprep.subr.mxu0 %v1022
        %3940 = vmatpush1.msra.mxu0 %v1021
        %3941 = vmatprep.subr.mxu0 %v1054
        %3942 = vmatpush1.msra.mxu0 %v1053
        %3943 = vmatprep.subr.mxu0 %v1086
        %3944 = vmatpush1.msra.mxu0 %v1085
        %3945 = vmatprep.subr.mxu0 %v1118
        %3946 = vmatpush1.msra.mxu0 %v1117
        %3947 = vmatprep.subr.mxu0 %v1150
        %3948 = vmatpush1.msra.mxu0 %v1149
        %3949 = vmatprep.subr.mxu0 %v1182
        %3950 = vmatpush1.msra.mxu0 %v1181
        %3951 = vmatprep.subr.mxu0 %v1214
        %3952 = vmatpush1.msra.mxu0 %v1213
        %3953 = vmatprep.subr.mxu0 %v1246
        %3954 = vmatpush1.msra.mxu0 %v1245
        %3955 = vmatprep.mubr.f32.mxu0 %v2465
        %3956 = vmatmul.mubr.f32.gmra.mrb[0].mxu0 %v2457
        %v3957 = vpop.f32.mrb[0].mxu0
        %v3958 = vadd.f32 %v2372, %v3957
        %v3959 = vpop.f32.mrb[0].mxu0
        %v3960 = vadd.f32 %v2376, %v3959
        %3961 = vdwg.mxu0
        %3962 = vmatprep.subr.mxu0 %v1278
        %3963 = vmatpush1.msra.mxu0 %v1277
        %3964 = vmatprep.subr.mxu0 %v1310
        %3965 = vmatpush1.msra.mxu0 %v1309
        %3966 = vmatprep.subr.mxu0 %v1342
        %3967 = vmatpush1.msra.mxu0 %v1341
        %3968 = vmatprep.subr.mxu0 %v1374
        %3969 = vmatpush1.msra.mxu0 %v1373
        %3970 = vmatprep.subr.mxu0 %v1406
        %3971 = vmatpush1.msra.mxu0 %v1405
        %3972 = vmatprep.subr.mxu0 %v1438
        %3973 = vmatpush1.msra.mxu0 %v1437
        %3974 = vmatprep.subr.mxu0 %v1470
        %3975 = vmatpush1.msra.mxu0 %v1469
        %3976 = vmatprep.subr.mxu0 %v1502
        %3977 = vmatpush1.msra.mxu0 %v1501
        %3978 = vmatprep.subr.mxu0 %v1534
        %3979 = vmatpush1.msra.mxu0 %v1533
        %3980 = vmatprep.subr.mxu0 %v1566
        %3981 = vmatpush1.msra.mxu0 %v1565
        %3982 = vmatprep.subr.mxu0 %v1598
        %3983 = vmatpush1.msra.mxu0 %v1597
        %3984 = vmatprep.subr.mxu0 %v1630
        %3985 = vmatpush1.msra.mxu0 %v1629
        %3986 = vmatprep.subr.mxu0 %v1662
        %3987 = vmatpush1.msra.mxu0 %v1661
        %3988 = vmatprep.subr.mxu0 %v1694
        %3989 = vmatpush1.msra.mxu0 %v1693
        %3990 = vmatprep.subr.mxu0 %v1726
        %3991 = vmatpush1.msra.mxu0 %v1725
        %3992 = vmatprep.subr.mxu0 %v1758
        %3993 = vmatpush1.msra.mxu0 %v1757
        %3994 = vmatprep.subr.mxu0 %v1790
        %3995 = vmatpush1.msra.mxu0 %v1789
        %3996 = vmatprep.subr.mxu0 %v1822
        %3997 = vmatpush1.msra.mxu0 %v1821
        %3998 = vmatprep.subr.mxu0 %v1854
        %3999 = vmatpush1.msra.mxu0 %v1853
        %4000 = vmatprep.subr.mxu0 %v1886
        %4001 = vmatpush1.msra.mxu0 %v1885
        %4002 = vmatprep.subr.mxu0 %v1918
        %4003 = vmatpush1.msra.mxu0 %v1917
        %4004 = vmatprep.subr.mxu0 %v1950
        %4005 = vmatpush1.msra.mxu0 %v1949
        %4006 = vmatprep.subr.mxu0 %v1982
        %4007 = vmatpush1.msra.mxu0 %v1981
        %4008 = vmatprep.subr.mxu0 %v2014
        %4009 = vmatpush1.msra.mxu0 %v2013
        %4010 = vmatprep.subr.mxu0 %v2046
        %4011 = vmatpush1.msra.mxu0 %v2045
        %4012 = vmatprep.subr.mxu0 %v2078
        %4013 = vmatpush1.msra.mxu0 %v2077
        %4014 = vmatprep.subr.mxu0 %v2110
        %4015 = vmatpush1.msra.mxu0 %v2109
        %4016 = vmatprep.subr.mxu0 %v2142
        %4017 = vmatpush1.msra.mxu0 %v2141
        %4018 = vmatprep.subr.mxu0 %v2174
        %4019 = vmatpush1.msra.mxu0 %v2173
        %4020 = vmatprep.subr.mxu0 %v2206
        %4021 = vmatpush1.msra.mxu0 %v2205
        %4022 = vmatprep.subr.mxu0 %v2238
        %4023 = vmatpush1.msra.mxu0 %v2237
        %4024 = vmatprep.subr.mxu0 %v2270
        %4025 = vmatpush1.msra.mxu0 %v2269
        %4026 = vmatprep.mubr.f32.mxu0 %v2466
        %4027 = vmatmul.mubr.f32.gmra.mrb[0].mxu0 %v2464
        %v4028 = vpop.f32.mrb[0].mxu0
        %v4029 = vadd.f32 %v3958, %v4028
        %v4030 = vpop.f32.mrb[0].mxu0
        %v4031 = vadd.f32 %v3960, %v4030
        %4032 = vdwg.mxu0
        %4033 = vmatprep.subr.mxu0 %v256
        %4034 = vmatpush1.msra.mxu0 %v255
        %4035 = vmatprep.subr.mxu0 %v288
        %4036 = vmatpush1.msra.mxu0 %v287
        %4037 = vmatprep.subr.mxu0 %v320
        %4038 = vmatpush1.msra.mxu0 %v319
        %4039 = vmatprep.subr.mxu0 %v352
        %4040 = vmatpush1.msra.mxu0 %v351
        %4041 = vmatprep.subr.mxu0 %v384
        %4042 = vmatpush1.msra.mxu0 %v383
        %4043 = vmatprep.subr.mxu0 %v416
        %4044 = vmatpush1.msra.mxu0 %v415
        %4045 = vmatprep.subr.mxu0 %v448
        %4046 = vmatpush1.msra.mxu0 %v447
        %4047 = vmatprep.subr.mxu0 %v480
        %4048 = vmatpush1.msra.mxu0 %v479
        %4049 = vmatprep.subr.mxu0 %v512
        %4050 = vmatpush1.msra.mxu0 %v511
        %4051 = vmatprep.subr.mxu0 %v544
        %4052 = vmatpush1.msra.mxu0 %v543
        %4053 = vmatprep.subr.mxu0 %v576
        %4054 = vmatpush1.msra.mxu0 %v575
        %4055 = vmatprep.subr.mxu0 %v608
        %4056 = vmatpush1.msra.mxu0 %v607
        %4057 = vmatprep.subr.mxu0 %v640
        %4058 = vmatpush1.msra.mxu0 %v639
        %4059 = vmatprep.subr.mxu0 %v672
        %4060 = vmatpush1.msra.mxu0 %v671
        %4061 = vmatprep.subr.mxu0 %v704
        %4062 = vmatpush1.msra.mxu0 %v703
        %4063 = vmatprep.subr.mxu0 %v736
        %4064 = vmatpush1.msra.mxu0 %v735
        %4065 = vmatprep.subr.mxu0 %v768
        %4066 = vmatpush1.msra.mxu0 %v767
        %4067 = vmatprep.subr.mxu0 %v800
        %4068 = vmatpush1.msra.mxu0 %v799
        %4069 = vmatprep.subr.mxu0 %v832
        %4070 = vmatpush1.msra.mxu0 %v831
        %4071 = vmatprep.subr.mxu0 %v864
        %4072 = vmatpush1.msra.mxu0 %v863
        %4073 = vmatprep.subr.mxu0 %v896
        %4074 = vmatpush1.msra.mxu0 %v895
        %4075 = vmatprep.subr.mxu0 %v928
        %4076 = vmatpush1.msra.mxu0 %v927
        %4077 = vmatprep.subr.mxu0 %v960
        %4078 = vmatpush1.msra.mxu0 %v959
        %4079 = vmatprep.subr.mxu0 %v992
        %4080 = vmatpush1.msra.mxu0 %v991
        %4081 = vmatprep.subr.mxu0 %v1024
        %4082 = vmatpush1.msra.mxu0 %v1023
        %4083 = vmatprep.subr.mxu0 %v1056
        %4084 = vmatpush1.msra.mxu0 %v1055
        %4085 = vmatprep.subr.mxu0 %v1088
        %4086 = vmatpush1.msra.mxu0 %v1087
        %4087 = vmatprep.subr.mxu0 %v1120
        %4088 = vmatpush1.msra.mxu0 %v1119
        %4089 = vmatprep.subr.mxu0 %v1152
        %4090 = vmatpush1.msra.mxu0 %v1151
        %4091 = vmatprep.subr.mxu0 %v1184
        %4092 = vmatpush1.msra.mxu0 %v1183
        %4093 = vmatprep.subr.mxu0 %v1216
        %4094 = vmatpush1.msra.mxu0 %v1215
        %4095 = vmatprep.subr.mxu0 %v1248
        %4096 = vmatpush1.msra.mxu0 %v1247
        %4097 = vmatprep.mubr.f32.mxu0 %v2465
        %4098 = vmatmul.mubr.f32.gmra.mrb[0].mxu0 %v2457
        %v4099 = vpop.f32.mrb[0].mxu0
        %v4100 = vadd.f32 %v2380, %v4099
        %v4101 = vpop.f32.mrb[0].mxu0
        %v4102 = vadd.f32 %v2384, %v4101
        %4103 = vdwg.mxu0
        %4104 = vmatprep.subr.mxu0 %v1280
        %4105 = vmatpush1.msra.mxu0 %v1279
        %4106 = vmatprep.subr.mxu0 %v1312
        %4107 = vmatpush1.msra.mxu0 %v1311
        %4108 = vmatprep.subr.mxu0 %v1344
        %4109 = vmatpush1.msra.mxu0 %v1343
        %4110 = vmatprep.subr.mxu0 %v1376
        %4111 = vmatpush1.msra.mxu0 %v1375
        %4112 = vmatprep.subr.mxu0 %v1408
        %4113 = vmatpush1.msra.mxu0 %v1407
        %4114 = vmatprep.subr.mxu0 %v1440
        %4115 = vmatpush1.msra.mxu0 %v1439
        %4116 = vmatprep.subr.mxu0 %v1472
        %4117 = vmatpush1.msra.mxu0 %v1471
        %4118 = vmatprep.subr.mxu0 %v1504
        %4119 = vmatpush1.msra.mxu0 %v1503
        %4120 = vmatprep.subr.mxu0 %v1536
        %4121 = vmatpush1.msra.mxu0 %v1535
        %4122 = vmatprep.subr.mxu0 %v1568
        %4123 = vmatpush1.msra.mxu0 %v1567
        %4124 = vmatprep.subr.mxu0 %v1600
        %4125 = vmatpush1.msra.mxu0 %v1599
        %4126 = vmatprep.subr.mxu0 %v1632
        %4127 = vmatpush1.msra.mxu0 %v1631
        %4128 = vmatprep.subr.mxu0 %v1664
        %4129 = vmatpush1.msra.mxu0 %v1663
        %4130 = vmatprep.subr.mxu0 %v1696
        %4131 = vmatpush1.msra.mxu0 %v1695
        %4132 = vmatprep.subr.mxu0 %v1728
        %4133 = vmatpush1.msra.mxu0 %v1727
        %4134 = vmatprep.subr.mxu0 %v1760
        %4135 = vmatpush1.msra.mxu0 %v1759
        %4136 = vmatprep.subr.mxu0 %v1792
        %4137 = vmatpush1.msra.mxu0 %v1791
        %4138 = vmatprep.subr.mxu0 %v1824
        %4139 = vmatpush1.msra.mxu0 %v1823
        %4140 = vmatprep.subr.mxu0 %v1856
        %4141 = vmatpush1.msra.mxu0 %v1855
        %4142 = vmatprep.subr.mxu0 %v1888
        %4143 = vmatpush1.msra.mxu0 %v1887
        %4144 = vmatprep.subr.mxu0 %v1920
        %4145 = vmatpush1.msra.mxu0 %v1919
        %4146 = vmatprep.subr.mxu0 %v1952
        %4147 = vmatpush1.msra.mxu0 %v1951
        %4148 = vmatprep.subr.mxu0 %v1984
        %4149 = vmatpush1.msra.mxu0 %v1983
        %4150 = vmatprep.subr.mxu0 %v2016
        %4151 = vmatpush1.msra.mxu0 %v2015
        %4152 = vmatprep.subr.mxu0 %v2048
        %4153 = vmatpush1.msra.mxu0 %v2047
        %4154 = vmatprep.subr.mxu0 %v2080
        %4155 = vmatpush1.msra.mxu0 %v2079
        %4156 = vmatprep.subr.mxu0 %v2112
        %4157 = vmatpush1.msra.mxu0 %v2111
        %4158 = vmatprep.subr.mxu0 %v2144
        %4159 = vmatpush1.msra.mxu0 %v2143
        %4160 = vmatprep.subr.mxu0 %v2176
        %4161 = vmatpush1.msra.mxu0 %v2175
        %4162 = vmatprep.subr.mxu0 %v2208
        %4163 = vmatpush1.msra.mxu0 %v2207
        %4164 = vmatprep.subr.mxu0 %v2240
        %4165 = vmatpush1.msra.mxu0 %v2239
        %4166 = vmatprep.subr.mxu0 %v2272
        %4167 = vmatpush1.msra.mxu0 %v2271
        %4168 = vmatprep.mubr.f32.mxu0 %v2466
        %4169 = vmatmul.mubr.f32.gmra.mrb[0].mxu0 %v2464
        %v4170 = vpop.f32.mrb[0].mxu0
        %v4171 = vadd.f32 %v4100, %v4170
        %v4172 = vpop.f32.mrb[0].mxu0
        %v4173 = vadd.f32 %v4102, %v4172
        %4174 = vdwg.mxu0
        %4175 = vmatprep.subr.mxu0 %v258
        %4176 = vmatpush1.msra.mxu0 %v257
        %4177 = vmatprep.subr.mxu0 %v290
        %4178 = vmatpush1.msra.mxu0 %v289
        %4179 = vmatprep.subr.mxu0 %v322
        %4180 = vmatpush1.msra.mxu0 %v321
        %4181 = vmatprep.subr.mxu0 %v354
        %4182 = vmatpush1.msra.mxu0 %v353
        %4183 = vmatprep.subr.mxu0 %v386
        %4184 = vmatpush1.msra.mxu0 %v385
        %4185 = vmatprep.subr.mxu0 %v418
        %4186 = vmatpush1.msra.mxu0 %v417
        %4187 = vmatprep.subr.mxu0 %v450
        %4188 = vmatpush1.msra.mxu0 %v449
        %4189 = vmatprep.subr.mxu0 %v482
        %4190 = vmatpush1.msra.mxu0 %v481
        %4191 = vmatprep.subr.mxu0 %v514
        %4192 = vmatpush1.msra.mxu0 %v513
        %4193 = vmatprep.subr.mxu0 %v546
        %4194 = vmatpush1.msra.mxu0 %v545
        %4195 = vmatprep.subr.mxu0 %v578
        %4196 = vmatpush1.msra.mxu0 %v577
        %4197 = vmatprep.subr.mxu0 %v610
        %4198 = vmatpush1.msra.mxu0 %v609
        %4199 = vmatprep.subr.mxu0 %v642
        %4200 = vmatpush1.msra.mxu0 %v641
        %4201 = vmatprep.subr.mxu0 %v674
        %4202 = vmatpush1.msra.mxu0 %v673
        %4203 = vmatprep.subr.mxu0 %v706
        %4204 = vmatpush1.msra.mxu0 %v705
        %4205 = vmatprep.subr.mxu0 %v738
        %4206 = vmatpush1.msra.mxu0 %v737
        %4207 = vmatprep.subr.mxu0 %v770
        %4208 = vmatpush1.msra.mxu0 %v769
        %4209 = vmatprep.subr.mxu0 %v802
        %4210 = vmatpush1.msra.mxu0 %v801
        %4211 = vmatprep.subr.mxu0 %v834
        %4212 = vmatpush1.msra.mxu0 %v833
        %4213 = vmatprep.subr.mxu0 %v866
        %4214 = vmatpush1.msra.mxu0 %v865
        %4215 = vmatprep.subr.mxu0 %v898
        %4216 = vmatpush1.msra.mxu0 %v897
        %4217 = vmatprep.subr.mxu0 %v930
        %4218 = vmatpush1.msra.mxu0 %v929
        %4219 = vmatprep.subr.mxu0 %v962
        %4220 = vmatpush1.msra.mxu0 %v961
        %4221 = vmatprep.subr.mxu0 %v994
        %4222 = vmatpush1.msra.mxu0 %v993
        %4223 = vmatprep.subr.mxu0 %v1026
        %4224 = vmatpush1.msra.mxu0 %v1025
        %4225 = vmatprep.subr.mxu0 %v1058
        %4226 = vmatpush1.msra.mxu0 %v1057
        %4227 = vmatprep.subr.mxu0 %v1090
        %4228 = vmatpush1.msra.mxu0 %v1089
        %4229 = vmatprep.subr.mxu0 %v1122
        %4230 = vmatpush1.msra.mxu0 %v1121
        %4231 = vmatprep.subr.mxu0 %v1154
        %4232 = vmatpush1.msra.mxu0 %v1153
        %4233 = vmatprep.subr.mxu0 %v1186
        %4234 = vmatpush1.msra.mxu0 %v1185
        %4235 = vmatprep.subr.mxu0 %v1218
        %4236 = vmatpush1.msra.mxu0 %v1217
        %4237 = vmatprep.subr.mxu0 %v1250
        %4238 = vmatpush1.msra.mxu0 %v1249
        %4239 = vmatprep.mubr.f32.mxu0 %v2465
        %4240 = vmatmul.mubr.f32.gmra.mrb[0].mxu0 %v2457
        %v4241 = vpop.f32.mrb[0].mxu0
        %v4242 = vadd.f32 %v2388, %v4241
        %v4243 = vpop.f32.mrb[0].mxu0
        %v4244 = vadd.f32 %v2392, %v4243
        %4245 = vdwg.mxu0
        %4246 = vmatprep.subr.mxu0 %v1282
        %4247 = vmatpush1.msra.mxu0 %v1281
        %4248 = vmatprep.subr.mxu0 %v1314
        %4249 = vmatpush1.msra.mxu0 %v1313
        %4250 = vmatprep.subr.mxu0 %v1346
        %4251 = vmatpush1.msra.mxu0 %v1345
        %4252 = vmatprep.subr.mxu0 %v1378
        %4253 = vmatpush1.msra.mxu0 %v1377
        %4254 = vmatprep.subr.mxu0 %v1410
        %4255 = vmatpush1.msra.mxu0 %v1409
        %4256 = vmatprep.subr.mxu0 %v1442
        %4257 = vmatpush1.msra.mxu0 %v1441
        %4258 = vmatprep.subr.mxu0 %v1474
        %4259 = vmatpush1.msra.mxu0 %v1473
        %4260 = vmatprep.subr.mxu0 %v1506
        %4261 = vmatpush1.msra.mxu0 %v1505
        %4262 = vmatprep.subr.mxu0 %v1538
        %4263 = vmatpush1.msra.mxu0 %v1537
        %4264 = vmatprep.subr.mxu0 %v1570
        %4265 = vmatpush1.msra.mxu0 %v1569
        %4266 = vmatprep.subr.mxu0 %v1602
        %4267 = vmatpush1.msra.mxu0 %v1601
        %4268 = vmatprep.subr.mxu0 %v1634
        %4269 = vmatpush1.msra.mxu0 %v1633
        %4270 = vmatprep.subr.mxu0 %v1666
        %4271 = vmatpush1.msra.mxu0 %v1665
        %4272 = vmatprep.subr.mxu0 %v1698
        %4273 = vmatpush1.msra.mxu0 %v1697
        %4274 = vmatprep.subr.mxu0 %v1730
        %4275 = vmatpush1.msra.mxu0 %v1729
        %4276 = vmatprep.subr.mxu0 %v1762
        %4277 = vmatpush1.msra.mxu0 %v1761
        %4278 = vmatprep.subr.mxu0 %v1794
        %4279 = vmatpush1.msra.mxu0 %v1793
        %4280 = vmatprep.subr.mxu0 %v1826
        %4281 = vmatpush1.msra.mxu0 %v1825
        %4282 = vmatprep.subr.mxu0 %v1858
        %4283 = vmatpush1.msra.mxu0 %v1857
        %4284 = vmatprep.subr.mxu0 %v1890
        %4285 = vmatpush1.msra.mxu0 %v1889
        %4286 = vmatprep.subr.mxu0 %v1922
        %4287 = vmatpush1.msra.mxu0 %v1921
        %4288 = vmatprep.subr.mxu0 %v1954
        %4289 = vmatpush1.msra.mxu0 %v1953
        %4290 = vmatprep.subr.mxu0 %v1986
        %4291 = vmatpush1.msra.mxu0 %v1985
        %4292 = vmatprep.subr.mxu0 %v2018
        %4293 = vmatpush1.msra.mxu0 %v2017
        %4294 = vmatprep.subr.mxu0 %v2050
        %4295 = vmatpush1.msra.mxu0 %v2049
        %4296 = vmatprep.subr.mxu0 %v2082
        %4297 = vmatpush1.msra.mxu0 %v2081
        %4298 = vmatprep.subr.mxu0 %v2114
        %4299 = vmatpush1.msra.mxu0 %v2113
        %4300 = vmatprep.subr.mxu0 %v2146
        %4301 = vmatpush1.msra.mxu0 %v2145
        %4302 = vmatprep.subr.mxu0 %v2178
        %4303 = vmatpush1.msra.mxu0 %v2177
        %4304 = vmatprep.subr.mxu0 %v2210
        %4305 = vmatpush1.msra.mxu0 %v2209
        %4306 = vmatprep.subr.mxu0 %v2242
        %4307 = vmatpush1.msra.mxu0 %v2241
        %4308 = vmatprep.subr.mxu0 %v2274
        %4309 = vmatpush1.msra.mxu0 %v2273
        %4310 = vmatprep.mubr.f32.mxu0 %v2466
        %4311 = vmatmul.mubr.f32.gmra.mrb[0].mxu0 %v2464
        %v4312 = vpop.f32.mrb[0].mxu0
        %v4313 = vadd.f32 %v4242, %v4312
        %v4314 = vpop.f32.mrb[0].mxu0
        %v4315 = vadd.f32 %v4244, %v4314
        %4316 = vdwg.mxu0
        %4317 = vmatprep.subr.mxu0 %v260
        %4318 = vmatpush1.msra.mxu0 %v259
        %4319 = vmatprep.subr.mxu0 %v292
        %4320 = vmatpush1.msra.mxu0 %v291
        %4321 = vmatprep.subr.mxu0 %v324
        %4322 = vmatpush1.msra.mxu0 %v323
        %4323 = vmatprep.subr.mxu0 %v356
        %4324 = vmatpush1.msra.mxu0 %v355
        %4325 = vmatprep.subr.mxu0 %v388
        %4326 = vmatpush1.msra.mxu0 %v387
        %4327 = vmatprep.subr.mxu0 %v420
        %4328 = vmatpush1.msra.mxu0 %v419
        %4329 = vmatprep.subr.mxu0 %v452
        %4330 = vmatpush1.msra.mxu0 %v451
        %4331 = vmatprep.subr.mxu0 %v484
        %4332 = vmatpush1.msra.mxu0 %v483
        %4333 = vmatprep.subr.mxu0 %v516
        %4334 = vmatpush1.msra.mxu0 %v515
        %4335 = vmatprep.subr.mxu0 %v548
        %4336 = vmatpush1.msra.mxu0 %v547
        %4337 = vmatprep.subr.mxu0 %v580
        %4338 = vmatpush1.msra.mxu0 %v579
        %4339 = vmatprep.subr.mxu0 %v612
        %4340 = vmatpush1.msra.mxu0 %v611
        %4341 = vmatprep.subr.mxu0 %v644
        %4342 = vmatpush1.msra.mxu0 %v643
        %4343 = vmatprep.subr.mxu0 %v676
        %4344 = vmatpush1.msra.mxu0 %v675
        %4345 = vmatprep.subr.mxu0 %v708
        %4346 = vmatpush1.msra.mxu0 %v707
        %4347 = vmatprep.subr.mxu0 %v740
        %4348 = vmatpush1.msra.mxu0 %v739
        %4349 = vmatprep.subr.mxu0 %v772
        %4350 = vmatpush1.msra.mxu0 %v771
        %4351 = vmatprep.subr.mxu0 %v804
        %4352 = vmatpush1.msra.mxu0 %v803
        %4353 = vmatprep.subr.mxu0 %v836
        %4354 = vmatpush1.msra.mxu0 %v835
        %4355 = vmatprep.subr.mxu0 %v868
        %4356 = vmatpush1.msra.mxu0 %v867
        %4357 = vmatprep.subr.mxu0 %v900
        %4358 = vmatpush1.msra.mxu0 %v899
        %4359 = vmatprep.subr.mxu0 %v932
        %4360 = vmatpush1.msra.mxu0 %v931
        %4361 = vmatprep.subr.mxu0 %v964
        %4362 = vmatpush1.msra.mxu0 %v963
        %4363 = vmatprep.subr.mxu0 %v996
        %4364 = vmatpush1.msra.mxu0 %v995
        %4365 = vmatprep.subr.mxu0 %v1028
        %4366 = vmatpush1.msra.mxu0 %v1027
        %4367 = vmatprep.subr.mxu0 %v1060
        %4368 = vmatpush1.msra.mxu0 %v1059
        %4369 = vmatprep.subr.mxu0 %v1092
        %4370 = vmatpush1.msra.mxu0 %v1091
        %4371 = vmatprep.subr.mxu0 %v1124
        %4372 = vmatpush1.msra.mxu0 %v1123
        %4373 = vmatprep.subr.mxu0 %v1156
        %4374 = vmatpush1.msra.mxu0 %v1155
        %4375 = vmatprep.subr.mxu0 %v1188
        %4376 = vmatpush1.msra.mxu0 %v1187
        %4377 = vmatprep.subr.mxu0 %v1220
        %4378 = vmatpush1.msra.mxu0 %v1219
        %4379 = vmatprep.subr.mxu0 %v1252
        %4380 = vmatpush1.msra.mxu0 %v1251
        %4381 = vmatprep.mubr.f32.mxu0 %v2465
        %4382 = vmatmul.mubr.f32.gmra.mrb[0].mxu0 %v2457
        %v4383 = vpop.f32.mrb[0].mxu0
        %v4384 = vadd.f32 %v2396, %v4383
        %v4385 = vpop.f32.mrb[0].mxu0
        %v4386 = vadd.f32 %v2400, %v4385
        %4387 = vdwg.mxu0
        %4388 = vmatprep.subr.mxu0 %v1284
        %4389 = vmatpush1.msra.mxu0 %v1283
        %4390 = vmatprep.subr.mxu0 %v1316
        %4391 = vmatpush1.msra.mxu0 %v1315
        %4392 = vmatprep.subr.mxu0 %v1348
        %4393 = vmatpush1.msra.mxu0 %v1347
        %4394 = vmatprep.subr.mxu0 %v1380
        %4395 = vmatpush1.msra.mxu0 %v1379
        %4396 = vmatprep.subr.mxu0 %v1412
        %4397 = vmatpush1.msra.mxu0 %v1411
        %4398 = vmatprep.subr.mxu0 %v1444
        %4399 = vmatpush1.msra.mxu0 %v1443
        %4400 = vmatprep.subr.mxu0 %v1476
        %4401 = vmatpush1.msra.mxu0 %v1475
        %4402 = vmatprep.subr.mxu0 %v1508
        %4403 = vmatpush1.msra.mxu0 %v1507
        %4404 = vmatprep.subr.mxu0 %v1540
        %4405 = vmatpush1.msra.mxu0 %v1539
        %4406 = vmatprep.subr.mxu0 %v1572
        %4407 = vmatpush1.msra.mxu0 %v1571
        %4408 = vmatprep.subr.mxu0 %v1604
        %4409 = vmatpush1.msra.mxu0 %v1603
        %4410 = vmatprep.subr.mxu0 %v1636
        %4411 = vmatpush1.msra.mxu0 %v1635
        %4412 = vmatprep.subr.mxu0 %v1668
        %4413 = vmatpush1.msra.mxu0 %v1667
        %4414 = vmatprep.subr.mxu0 %v1700
        %4415 = vmatpush1.msra.mxu0 %v1699
        %4416 = vmatprep.subr.mxu0 %v1732
        %4417 = vmatpush1.msra.mxu0 %v1731
        %4418 = vmatprep.subr.mxu0 %v1764
        %4419 = vmatpush1.msra.mxu0 %v1763
        %4420 = vmatprep.subr.mxu0 %v1796
        %4421 = vmatpush1.msra.mxu0 %v1795
        %4422 = vmatprep.subr.mxu0 %v1828
        %4423 = vmatpush1.msra.mxu0 %v1827
        %4424 = vmatprep.subr.mxu0 %v1860
        %4425 = vmatpush1.msra.mxu0 %v1859
        %4426 = vmatprep.subr.mxu0 %v1892
        %4427 = vmatpush1.msra.mxu0 %v1891
        %4428 = vmatprep.subr.mxu0 %v1924
        %4429 = vmatpush1.msra.mxu0 %v1923
        %4430 = vmatprep.subr.mxu0 %v1956
        %4431 = vmatpush1.msra.mxu0 %v1955
        %4432 = vmatprep.subr.mxu0 %v1988
        %4433 = vmatpush1.msra.mxu0 %v1987
        %4434 = vmatprep.subr.mxu0 %v2020
        %4435 = vmatpush1.msra.mxu0 %v2019
        %4436 = vmatprep.subr.mxu0 %v2052
        %4437 = vmatpush1.msra.mxu0 %v2051
        %4438 = vmatprep.subr.mxu0 %v2084
        %4439 = vmatpush1.msra.mxu0 %v2083
        %4440 = vmatprep.subr.mxu0 %v2116
        %4441 = vmatpush1.msra.mxu0 %v2115
        %4442 = vmatprep.subr.mxu0 %v2148
        %4443 = vmatpush1.msra.mxu0 %v2147
        %4444 = vmatprep.subr.mxu0 %v2180
        %4445 = vmatpush1.msra.mxu0 %v2179
        %4446 = vmatprep.subr.mxu0 %v2212
        %4447 = vmatpush1.msra.mxu0 %v2211
        %4448 = vmatprep.subr.mxu0 %v2244
        %4449 = vmatpush1.msra.mxu0 %v2243
        %4450 = vmatprep.subr.mxu0 %v2276
        %4451 = vmatpush1.msra.mxu0 %v2275
        %4452 = vmatprep.mubr.f32.mxu0 %v2466
        %4453 = vmatmul.mubr.f32.gmra.mrb[0].mxu0 %v2464
        %v4454 = vpop.f32.mrb[0].mxu0
        %v4455 = vadd.f32 %v4384, %v4454
        %v4456 = vpop.f32.mrb[0].mxu0
        %v4457 = vadd.f32 %v4386, %v4456
        %4458 = vdwg.mxu0
        %4459 = vmatprep.subr.mxu0 %v262
        %4460 = vmatpush1.msra.mxu0 %v261
        %4461 = vmatprep.subr.mxu0 %v294
        %4462 = vmatpush1.msra.mxu0 %v293
        %4463 = vmatprep.subr.mxu0 %v326
        %4464 = vmatpush1.msra.mxu0 %v325
        %4465 = vmatprep.subr.mxu0 %v358
        %4466 = vmatpush1.msra.mxu0 %v357
        %4467 = vmatprep.subr.mxu0 %v390
        %4468 = vmatpush1.msra.mxu0 %v389
        %4469 = vmatprep.subr.mxu0 %v422
        %4470 = vmatpush1.msra.mxu0 %v421
        %4471 = vmatprep.subr.mxu0 %v454
        %4472 = vmatpush1.msra.mxu0 %v453
        %4473 = vmatprep.subr.mxu0 %v486
        %4474 = vmatpush1.msra.mxu0 %v485
        %4475 = vmatprep.subr.mxu0 %v518
        %4476 = vmatpush1.msra.mxu0 %v517
        %4477 = vmatprep.subr.mxu0 %v550
        %4478 = vmatpush1.msra.mxu0 %v549
        %4479 = vmatprep.subr.mxu0 %v582
        %4480 = vmatpush1.msra.mxu0 %v581
        %4481 = vmatprep.subr.mxu0 %v614
        %4482 = vmatpush1.msra.mxu0 %v613
        %4483 = vmatprep.subr.mxu0 %v646
        %4484 = vmatpush1.msra.mxu0 %v645
        %4485 = vmatprep.subr.mxu0 %v678
        %4486 = vmatpush1.msra.mxu0 %v677
        %4487 = vmatprep.subr.mxu0 %v710
        %4488 = vmatpush1.msra.mxu0 %v709
        %4489 = vmatprep.subr.mxu0 %v742
        %4490 = vmatpush1.msra.mxu0 %v741
        %4491 = vmatprep.subr.mxu0 %v774
        %4492 = vmatpush1.msra.mxu0 %v773
        %4493 = vmatprep.subr.mxu0 %v806
        %4494 = vmatpush1.msra.mxu0 %v805
        %4495 = vmatprep.subr.mxu0 %v838
        %4496 = vmatpush1.msra.mxu0 %v837
        %4497 = vmatprep.subr.mxu0 %v870
        %4498 = vmatpush1.msra.mxu0 %v869
        %4499 = vmatprep.subr.mxu0 %v902
        %4500 = vmatpush1.msra.mxu0 %v901
        %4501 = vmatprep.subr.mxu0 %v934
        %4502 = vmatpush1.msra.mxu0 %v933
        %4503 = vmatprep.subr.mxu0 %v966
        %4504 = vmatpush1.msra.mxu0 %v965
        %4505 = vmatprep.subr.mxu0 %v998
        %4506 = vmatpush1.msra.mxu0 %v997
        %4507 = vmatprep.subr.mxu0 %v1030
        %4508 = vmatpush1.msra.mxu0 %v1029
        %4509 = vmatprep.subr.mxu0 %v1062
        %4510 = vmatpush1.msra.mxu0 %v1061
        %4511 = vmatprep.subr.mxu0 %v1094
        %4512 = vmatpush1.msra.mxu0 %v1093
        %4513 = vmatprep.subr.mxu0 %v1126
        %4514 = vmatpush1.msra.mxu0 %v1125
        %4515 = vmatprep.subr.mxu0 %v1158
        %4516 = vmatpush1.msra.mxu0 %v1157
        %4517 = vmatprep.subr.mxu0 %v1190
        %4518 = vmatpush1.msra.mxu0 %v1189
        %4519 = vmatprep.subr.mxu0 %v1222
        %4520 = vmatpush1.msra.mxu0 %v1221
        %4521 = vmatprep.subr.mxu0 %v1254
        %4522 = vmatpush1.msra.mxu0 %v1253
        %4523 = vmatprep.mubr.f32.mxu0 %v2465
        %4524 = vmatmul.mubr.f32.gmra.mrb[0].mxu0 %v2457
        %v4525 = vpop.f32.mrb[0].mxu0
        %v4526 = vadd.f32 %v2404, %v4525
        %v4527 = vpop.f32.mrb[0].mxu0
        %v4528 = vadd.f32 %v2408, %v4527
        %4529 = vdwg.mxu0
        %4530 = vmatprep.subr.mxu0 %v1286
        %4531 = vmatpush1.msra.mxu0 %v1285
        %4532 = vmatprep.subr.mxu0 %v1318
        %4533 = vmatpush1.msra.mxu0 %v1317
        %4534 = vmatprep.subr.mxu0 %v1350
        %4535 = vmatpush1.msra.mxu0 %v1349
        %4536 = vmatprep.subr.mxu0 %v1382
        %4537 = vmatpush1.msra.mxu0 %v1381
        %4538 = vmatprep.subr.mxu0 %v1414
        %4539 = vmatpush1.msra.mxu0 %v1413
        %4540 = vmatprep.subr.mxu0 %v1446
        %4541 = vmatpush1.msra.mxu0 %v1445
        %4542 = vmatprep.subr.mxu0 %v1478
        %4543 = vmatpush1.msra.mxu0 %v1477
        %4544 = vmatprep.subr.mxu0 %v1510
        %4545 = vmatpush1.msra.mxu0 %v1509
        %4546 = vmatprep.subr.mxu0 %v1542
        %4547 = vmatpush1.msra.mxu0 %v1541
        %4548 = vmatprep.subr.mxu0 %v1574
        %4549 = vmatpush1.msra.mxu0 %v1573
        %4550 = vmatprep.subr.mxu0 %v1606
        %4551 = vmatpush1.msra.mxu0 %v1605
        %4552 = vmatprep.subr.mxu0 %v1638
        %4553 = vmatpush1.msra.mxu0 %v1637
        %4554 = vmatprep.subr.mxu0 %v1670
        %4555 = vmatpush1.msra.mxu0 %v1669
        %4556 = vmatprep.subr.mxu0 %v1702
        %4557 = vmatpush1.msra.mxu0 %v1701
        %4558 = vmatprep.subr.mxu0 %v1734
        %4559 = vmatpush1.msra.mxu0 %v1733
        %4560 = vmatprep.subr.mxu0 %v1766
        %4561 = vmatpush1.msra.mxu0 %v1765
        %4562 = vmatprep.subr.mxu0 %v1798
        %4563 = vmatpush1.msra.mxu0 %v1797
        %4564 = vmatprep.subr.mxu0 %v1830
        %4565 = vmatpush1.msra.mxu0 %v1829
        %4566 = vmatprep.subr.mxu0 %v1862
        %4567 = vmatpush1.msra.mxu0 %v1861
        %4568 = vmatprep.subr.mxu0 %v1894
        %4569 = vmatpush1.msra.mxu0 %v1893
        %4570 = vmatprep.subr.mxu0 %v1926
        %4571 = vmatpush1.msra.mxu0 %v1925
        %4572 = vmatprep.subr.mxu0 %v1958
        %4573 = vmatpush1.msra.mxu0 %v1957
        %4574 = vmatprep.subr.mxu0 %v1990
        %4575 = vmatpush1.msra.mxu0 %v1989
        %4576 = vmatprep.subr.mxu0 %v2022
        %4577 = vmatpush1.msra.mxu0 %v2021
        %4578 = vmatprep.subr.mxu0 %v2054
        %4579 = vmatpush1.msra.mxu0 %v2053
        %4580 = vmatprep.subr.mxu0 %v2086
        %4581 = vmatpush1.msra.mxu0 %v2085
        %4582 = vmatprep.subr.mxu0 %v2118
        %4583 = vmatpush1.msra.mxu0 %v2117
        %4584 = vmatprep.subr.mxu0 %v2150
        %4585 = vmatpush1.msra.mxu0 %v2149
        %4586 = vmatprep.subr.mxu0 %v2182
        %4587 = vmatpush1.msra.mxu0 %v2181
        %4588 = vmatprep.subr.mxu0 %v2214
        %4589 = vmatpush1.msra.mxu0 %v2213
        %4590 = vmatprep.subr.mxu0 %v2246
        %4591 = vmatpush1.msra.mxu0 %v2245
        %4592 = vmatprep.subr.mxu0 %v2278
        %4593 = vmatpush1.msra.mxu0 %v2277
        %4594 = vmatprep.mubr.f32.mxu0 %v2466
        %4595 = vmatmul.mubr.f32.gmra.mrb[0].mxu0 %v2464
        %v4596 = vpop.f32.mrb[0].mxu0
        %v4597 = vadd.f32 %v4526, %v4596
        %v4598 = vpop.f32.mrb[0].mxu0
        %v4599 = vadd.f32 %v4528, %v4598
        %4600 = vdwg.mxu0
        %4601 = vmatprep.subr.mxu0 %v264
        %4602 = vmatpush1.msra.mxu0 %v263
        %4603 = vmatprep.subr.mxu0 %v296
        %4604 = vmatpush1.msra.mxu0 %v295
        %4605 = vmatprep.subr.mxu0 %v328
        %4606 = vmatpush1.msra.mxu0 %v327
        %4607 = vmatprep.subr.mxu0 %v360
        %4608 = vmatpush1.msra.mxu0 %v359
        %4609 = vmatprep.subr.mxu0 %v392
        %4610 = vmatpush1.msra.mxu0 %v391
        %4611 = vmatprep.subr.mxu0 %v424
        %4612 = vmatpush1.msra.mxu0 %v423
        %4613 = vmatprep.subr.mxu0 %v456
        %4614 = vmatpush1.msra.mxu0 %v455
        %4615 = vmatprep.subr.mxu0 %v488
        %4616 = vmatpush1.msra.mxu0 %v487
        %4617 = vmatprep.subr.mxu0 %v520
        %4618 = vmatpush1.msra.mxu0 %v519
        %4619 = vmatprep.subr.mxu0 %v552
        %4620 = vmatpush1.msra.mxu0 %v551
        %4621 = vmatprep.subr.mxu0 %v584
        %4622 = vmatpush1.msra.mxu0 %v583
        %4623 = vmatprep.subr.mxu0 %v616
        %4624 = vmatpush1.msra.mxu0 %v615
        %4625 = vmatprep.subr.mxu0 %v648
        %4626 = vmatpush1.msra.mxu0 %v647
        %4627 = vmatprep.subr.mxu0 %v680
        %4628 = vmatpush1.msra.mxu0 %v679
        %4629 = vmatprep.subr.mxu0 %v712
        %4630 = vmatpush1.msra.mxu0 %v711
        %4631 = vmatprep.subr.mxu0 %v744
        %4632 = vmatpush1.msra.mxu0 %v743
        %4633 = vmatprep.subr.mxu0 %v776
        %4634 = vmatpush1.msra.mxu0 %v775
        %4635 = vmatprep.subr.mxu0 %v808
        %4636 = vmatpush1.msra.mxu0 %v807
        %4637 = vmatprep.subr.mxu0 %v840
        %4638 = vmatpush1.msra.mxu0 %v839
        %4639 = vmatprep.subr.mxu0 %v872
        %4640 = vmatpush1.msra.mxu0 %v871
        %4641 = vmatprep.subr.mxu0 %v904
        %4642 = vmatpush1.msra.mxu0 %v903
        %4643 = vmatprep.subr.mxu0 %v936
        %4644 = vmatpush1.msra.mxu0 %v935
        %4645 = vmatprep.subr.mxu0 %v968
        %4646 = vmatpush1.msra.mxu0 %v967
        %4647 = vmatprep.subr.mxu0 %v1000
        %4648 = vmatpush1.msra.mxu0 %v999
        %4649 = vmatprep.subr.mxu0 %v1032
        %4650 = vmatpush1.msra.mxu0 %v1031
        %4651 = vmatprep.subr.mxu0 %v1064
        %4652 = vmatpush1.msra.mxu0 %v1063
        %4653 = vmatprep.subr.mxu0 %v1096
        %4654 = vmatpush1.msra.mxu0 %v1095
        %4655 = vmatprep.subr.mxu0 %v1128
        %4656 = vmatpush1.msra.mxu0 %v1127
        %4657 = vmatprep.subr.mxu0 %v1160
        %4658 = vmatpush1.msra.mxu0 %v1159
        %4659 = vmatprep.subr.mxu0 %v1192
        %4660 = vmatpush1.msra.mxu0 %v1191
        %4661 = vmatprep.subr.mxu0 %v1224
        %4662 = vmatpush1.msra.mxu0 %v1223
        %4663 = vmatprep.subr.mxu0 %v1256
        %4664 = vmatpush1.msra.mxu0 %v1255
        %4665 = vmatprep.mubr.f32.mxu0 %v2465
        %4666 = vmatmul.mubr.f32.gmra.mrb[0].mxu0 %v2457
        %v4667 = vpop.f32.mrb[0].mxu0
        %v4668 = vadd.f32 %v2412, %v4667
        %v4669 = vpop.f32.mrb[0].mxu0
        %v4670 = vadd.f32 %v2416, %v4669
        %4671 = vdwg.mxu0
        %4672 = vmatprep.subr.mxu0 %v1288
        %4673 = vmatpush1.msra.mxu0 %v1287
        %4674 = vmatprep.subr.mxu0 %v1320
        %4675 = vmatpush1.msra.mxu0 %v1319
        %4676 = vmatprep.subr.mxu0 %v1352
        %4677 = vmatpush1.msra.mxu0 %v1351
        %4678 = vmatprep.subr.mxu0 %v1384
        %4679 = vmatpush1.msra.mxu0 %v1383
        %4680 = vmatprep.subr.mxu0 %v1416
        %4681 = vmatpush1.msra.mxu0 %v1415
        %4682 = vmatprep.subr.mxu0 %v1448
        %4683 = vmatpush1.msra.mxu0 %v1447
        %4684 = vmatprep.subr.mxu0 %v1480
        %4685 = vmatpush1.msra.mxu0 %v1479
        %4686 = vmatprep.subr.mxu0 %v1512
        %4687 = vmatpush1.msra.mxu0 %v1511
        %4688 = vmatprep.subr.mxu0 %v1544
        %4689 = vmatpush1.msra.mxu0 %v1543
        %4690 = vmatprep.subr.mxu0 %v1576
        %4691 = vmatpush1.msra.mxu0 %v1575
        %4692 = vmatprep.subr.mxu0 %v1608
        %4693 = vmatpush1.msra.mxu0 %v1607
        %4694 = vmatprep.subr.mxu0 %v1640
        %4695 = vmatpush1.msra.mxu0 %v1639
        %4696 = vmatprep.subr.mxu0 %v1672
        %4697 = vmatpush1.msra.mxu0 %v1671
        %4698 = vmatprep.subr.mxu0 %v1704
        %4699 = vmatpush1.msra.mxu0 %v1703
        %4700 = vmatprep.subr.mxu0 %v1736
        %4701 = vmatpush1.msra.mxu0 %v1735
        %4702 = vmatprep.subr.mxu0 %v1768
        %4703 = vmatpush1.msra.mxu0 %v1767
        %4704 = vmatprep.subr.mxu0 %v1800
        %4705 = vmatpush1.msra.mxu0 %v1799
        %4706 = vmatprep.subr.mxu0 %v1832
        %4707 = vmatpush1.msra.mxu0 %v1831
        %4708 = vmatprep.subr.mxu0 %v1864
        %4709 = vmatpush1.msra.mxu0 %v1863
        %4710 = vmatprep.subr.mxu0 %v1896
        %4711 = vmatpush1.msra.mxu0 %v1895
        %4712 = vmatprep.subr.mxu0 %v1928
        %4713 = vmatpush1.msra.mxu0 %v1927
        %4714 = vmatprep.subr.mxu0 %v1960
        %4715 = vmatpush1.msra.mxu0 %v1959
        %4716 = vmatprep.subr.mxu0 %v1992
        %4717 = vmatpush1.msra.mxu0 %v1991
        %4718 = vmatprep.subr.mxu0 %v2024
        %4719 = vmatpush1.msra.mxu0 %v2023
        %4720 = vmatprep.subr.mxu0 %v2056
        %4721 = vmatpush1.msra.mxu0 %v2055
        %4722 = vmatprep.subr.mxu0 %v2088
        %4723 = vmatpush1.msra.mxu0 %v2087
        %4724 = vmatprep.subr.mxu0 %v2120
        %4725 = vmatpush1.msra.mxu0 %v2119
        %4726 = vmatprep.subr.mxu0 %v2152
        %4727 = vmatpush1.msra.mxu0 %v2151
        %4728 = vmatprep.subr.mxu0 %v2184
        %4729 = vmatpush1.msra.mxu0 %v2183
        %4730 = vmatprep.subr.mxu0 %v2216
        %4731 = vmatpush1.msra.mxu0 %v2215
        %4732 = vmatprep.subr.mxu0 %v2248
        %4733 = vmatpush1.msra.mxu0 %v2247
        %4734 = vmatprep.subr.mxu0 %v2280
        %4735 = vmatpush1.msra.mxu0 %v2279
        %4736 = vmatprep.mubr.f32.mxu0 %v2466
        %4737 = vmatmul.mubr.f32.gmra.mrb[0].mxu0 %v2464
        %v4738 = vpop.f32.mrb[0].mxu0
        %v4739 = vadd.f32 %v4668, %v4738
        %v4740 = vpop.f32.mrb[0].mxu0
        %v4741 = vadd.f32 %v4670, %v4740
        %4742 = vdwg.mxu0
        %v4743 = vtanh.pop %v2609
        %v4744 = vtanh.pop %v2611
        %v4745 = vtanh.pop %v2751
        %v4746 = vtanh.pop %v2753
        %v4747 = vtanh.pop %v2893
        %v4748 = vtanh.pop %v2895
        %v4749 = vtanh.pop %v3035
        %v4750 = vtanh.pop %v3037
        %v4751 = vtanh.pop %v3177
        %v4752 = vtanh.pop %v3179
        %v4753 = vtanh.pop %v3319
        %v4754 = vtanh.pop %v3321
        %v4755 = vtanh.pop %v3461
        %v4756 = vtanh.pop %v3463
        %v4757 = vtanh.pop %v3603
        %v4758 = vtanh.pop %v3605
        %v4759 = vtanh.pop %v3745
        %v4760 = vtanh.pop %v3747
        %v4761 = vtanh.pop %v3887
        %v4762 = vtanh.pop %v3889
        %v4763 = vtanh.pop %v4029
        %v4764 = vtanh.pop %v4031
        %v4765 = vtanh.pop %v4171
        %v4766 = vtanh.pop %v4173
        %v4767 = vtanh.pop %v4313
        %v4768 = vtanh.pop %v4315
        %v4769 = vtanh.pop %v4455
        %v4770 = vtanh.pop %v4457
        %v4771 = vtanh.pop %v4597
        %v4772 = vtanh.pop %v4599
        %v4773 = vtanh.pop %v4739
        %v4774 = vtanh.pop %v4741
        %v4807 = vcombine.low %v4743, %v4744
        %v4808 = vcombine.low %v4745, %v4746
        %v4810 = vunpack.c.l.s4 1983009808
        %v4811 = vunpack.c.0.s8 %v4810
        %v4812 = vlaneseq
        %v4813 = vshrl.u32 %v4812, 7
        %v4814 = vsub.s32 %v4811, %v4813
        %v4815 = vrot.slane %v4807, %v4814
        %v4817 = vunpack.c.l.s4 1983009808
        %v4818 = vunpack.c.0.s8 %v4817
        %v4819 = vlaneseq
        %v4820 = vshrl.u32 %v4819, 7
        %v4821 = vsub.s32 %v4818, %v4820
        %v4822 = vrot.slane %v4808, %v4821
        %v4823 = vcombine.low %v4815, %v4822
        %v4824 = vcombine.low %v4747, %v4748
        %v4825 = vcombine.low %v4749, %v4750
        %v4827 = vunpack.c.l.s4 1983009808
        %v4828 = vunpack.c.0.s8 %v4827
        %v4829 = vlaneseq
        %v4830 = vshrl.u32 %v4829, 7
        %v4831 = vsub.s32 %v4828, %v4830
        %v4832 = vrot.slane %v4824, %v4831
        %v4834 = vunpack.c.l.s4 1983009808
        %v4835 = vunpack.c.0.s8 %v4834
        %v4836 = vlaneseq
        %v4837 = vshrl.u32 %v4836, 7
        %v4838 = vsub.s32 %v4835, %v4837
        %v4839 = vrot.slane %v4825, %v4838
        %v4840 = vcombine.low %v4832, %v4839
        %v4841 = vcombine.low %v4751, %v4752
        %v4842 = vcombine.low %v4753, %v4754
        %v4844 = vunpack.c.l.s4 1983009808
        %v4845 = vunpack.c.0.s8 %v4844
        %v4846 = vlaneseq
        %v4847 = vshrl.u32 %v4846, 7
        %v4848 = vsub.s32 %v4845, %v4847
        %v4849 = vrot.slane %v4841, %v4848
        %v4851 = vunpack.c.l.s4 1983009808
        %v4852 = vunpack.c.0.s8 %v4851
        %v4853 = vlaneseq
        %v4854 = vshrl.u32 %v4853, 7
        %v4855 = vsub.s32 %v4852, %v4854
        %v4856 = vrot.slane %v4842, %v4855
        %v4857 = vcombine.low %v4849, %v4856
        %v4858 = vcombine.low %v4755, %v4756
        %v4859 = vcombine.low %v4757, %v4758
        %v4861 = vunpack.c.l.s4 1983009808
        %v4862 = vunpack.c.0.s8 %v4861
        %v4863 = vlaneseq
        %v4864 = vshrl.u32 %v4863, 7
        %v4865 = vsub.s32 %v4862, %v4864
        %v4866 = vrot.slane %v4858, %v4865
        %v4868 = vunpack.c.l.s4 1983009808
        %v4869 = vunpack.c.0.s8 %v4868
        %v4870 = vlaneseq
        %v4871 = vshrl.u32 %v4870, 7
        %v4872 = vsub.s32 %v4869, %v4871
        %v4873 = vrot.slane %v4859, %v4872
        %v4874 = vcombine.low %v4866, %v4873
        %v4875 = vcombine.low %v4759, %v4760
        %v4876 = vcombine.low %v4761, %v4762
        %v4878 = vunpack.c.l.s4 1983009808
        %v4879 = vunpack.c.0.s8 %v4878
        %v4880 = vlaneseq
        %v4881 = vshrl.u32 %v4880, 7
        %v4882 = vsub.s32 %v4879, %v4881
        %v4883 = vrot.slane %v4875, %v4882
        %v4885 = vunpack.c.l.s4 1983009808
        %v4886 = vunpack.c.0.s8 %v4885
        %v4887 = vlaneseq
        %v4888 = vshrl.u32 %v4887, 7
        %v4889 = vsub.s32 %v4886, %v4888
        %v4890 = vrot.slane %v4876, %v4889
        %v4891 = vcombine.low %v4883, %v4890
        %v4892 = vcombine.low %v4763, %v4764
        %v4893 = vcombine.low %v4765, %v4766
        %v4895 = vunpack.c.l.s4 1983009808
        %v4896 = vunpack.c.0.s8 %v4895
        %v4897 = vlaneseq
        %v4898 = vshrl.u32 %v4897, 7
        %v4899 = vsub.s32 %v4896, %v4898
        %v4900 = vrot.slane %v4892, %v4899
        %v4902 = vunpack.c.l.s4 1983009808
        %v4903 = vunpack.c.0.s8 %v4902
        %v4904 = vlaneseq
        %v4905 = vshrl.u32 %v4904, 7
        %v4906 = vsub.s32 %v4903, %v4905
        %v4907 = vrot.slane %v4893, %v4906
        %v4908 = vcombine.low %v4900, %v4907
        %v4909 = vcombine.low %v4767, %v4768
        %v4910 = vcombine.low %v4769, %v4770
        %v4912 = vunpack.c.l.s4 1983009808
        %v4913 = vunpack.c.0.s8 %v4912
        %v4914 = vlaneseq
        %v4915 = vshrl.u32 %v4914, 7
        %v4916 = vsub.s32 %v4913, %v4915
        %v4917 = vrot.slane %v4909, %v4916
        %v4919 = vunpack.c.l.s4 1983009808
        %v4920 = vunpack.c.0.s8 %v4919
        %v4921 = vlaneseq
        %v4922 = vshrl.u32 %v4921, 7
        %v4923 = vsub.s32 %v4920, %v4922
        %v4924 = vrot.slane %v4910, %v4923
        %v4925 = vcombine.low %v4917, %v4924
        %v4926 = vcombine.low %v4771, %v4772
        %v4927 = vcombine.low %v4773, %v4774
        %v4929 = vunpack.c.l.s4 1983009808
        %v4930 = vunpack.c.0.s8 %v4929
        %v4931 = vlaneseq
        %v4932 = vshrl.u32 %v4931, 7
        %v4933 = vsub.s32 %v4930, %v4932
        %v4934 = vrot.slane %v4926, %v4933
        %v4936 = vunpack.c.l.s4 1983009808
        %v4937 = vunpack.c.0.s8 %v4936
        %v4938 = vlaneseq
        %v4939 = vshrl.u32 %v4938, 7
        %v4940 = vsub.s32 %v4937, %v4939
        %v4941 = vrot.slane %v4927, %v4940
        %v4942 = vcombine.low %v4934, %v4941
        %4951 = vst [vmem:[%s230] sm:$0xff] %v4823
        %4952 = vst [vmem:[%s230 + $0x8] sm:$0xff] %v4840
        %4953 = vst [vmem:[%s230 + $0x10] sm:$0xff] %v4857
        %4954 = vst [vmem:[%s230 + $0x18] sm:$0xff] %v4874
        %4955 = vst [vmem:[%s230 + $0x20] sm:$0xff] %v4891
        %4956 = vst [vmem:[%s230 + $0x28] sm:$0xff] %v4908
        %4957 = vst [vmem:[%s230 + $0x30] sm:$0xff] %v4925
        %4958 = vst [vmem:[%s230 + $0x38] sm:$0xff] %v4942
        %s4959 = smul.u32 32, %s20
        %p4960 = scmp.lt.s32.totalorder %s4959, 2559
        %s4961 = scalar_select %p4960, %s4959, 2559
        %s4962 = smul.addr %s4961, 2
        %s4963 = scalar_lea.vmem %s3, %s4962
        // Predicated region
        $region41: #{generator_forward.3} parent=31 // pred_check
          %p4964 = pneg %p111
        $region42: #{generator_forward.3} parent=31 // pred_check_branch
          %4966 = sbr.rel (%p4964) target = $region44
        $region43: #{generator_forward.3} parent=31 // pred_region
          %s4967 = smul.u32 32, %s20
        $region44: #{generator_forward.3} parent=31 // pred_fallthru
          _
      $region32: #{generator_forward.3} parent=5 // pred_fallthru
        _
      %p4968 = scmp.le.s32.totalorder 2, %s15
      // Predicated region
      $region45: #{generator_forward.3} parent=5 // pred_check
        %p4969 = pneg %p4968
      $region46: #{generator_forward.3} parent=5 // pred_check_branch
        %4971 = sbr.rel (%p4969) target = $region48
      $region47: #{generator_forward.3} parent=5 // pred_region
        %s4972 = ssub.s32 %s15, 2
        // Predicated region
        $region49: #{generator_forward.3} parent=47 // pred_check
          %p4973 = pneg %p117
        $region50: #{generator_forward.3} parent=47 // pred_check_branch
          %4975 = sbr.rel (%p4973) target = $region52
        $region51: #{generator_forward.3} parent=47 // pred_region
          %s4976 = smul.u32 32, %s21
          %p4977 = scmp.lt.s32.totalorder %s4976, 2559
          %s4978 = scalar_select %p4977, %s4976, 2559
          %s4979 = smul.addr %s4978, 2
          %s4980 = scalar_lea.vmem %s3, %s4979
        $region52: #{generator_forward.3} parent=47 // pred_fallthru
          _
      $region48: #{generator_forward.3} parent=5 // pred_fallthru
        _
    $region6: #{generator_forward.3} parent=1 // loop_footer
      %s19 = sadd.s32 1, %s15
    $region7: #{generator_forward.3} parent=1 // loop_footer_branch
      %14 = sbr.rel target = $region3
    $region8: #{generator_forward.3} parent=1 // loop_exit
      _
    %4981 = vsyncpa [#allocation3], 1
    %s4982 = scalar_lea.sflag [#allocation3], 1
    %4983 = vsyncpa %s4982, 1
    %4984 = vsyncpa [#allocation5], 1
    %s4985 = scalar_lea.sflag [#allocation5], 1
    %4986 = vsyncpa %s4985, 1

</llo_original>
